<compile_context>
chip_gen: v6e
topology: v6e:2x2x1
jax: 0.10.0
libtpu: 0.0.40
codegen_flags: <defaults>
</compile_context>

<pallas_src>
import functools
import math

import jax
import jax.numpy as jnp
from jax.experimental import pallas as pl
from jax.experimental.pallas import tpu as pltpu


# ----------------------------------------------------------------------------
# in-kernel helpers (traced inside the Pallas body)
# ----------------------------------------------------------------------------
def _softmax_last(x):
    m = jnp.max(x, axis=-1, keepdims=True)
    e = jnp.exp(x - m)
    return e * pl.reciprocal(jnp.sum(e, axis=-1, keepdims=True), approx=True)


def _squash(s, eps=1e-8):
    sq = jnp.sum(s * s, axis=-1, keepdims=True)
    return (sq / (1.0 + sq)) * s / jnp.sqrt(sq + eps)


# ----------------------------------------------------------------------------
# the fused forward kernel
# ----------------------------------------------------------------------------
def _gcn_caps_kernel(text_ref, audio_ref, video_ref,
                     wp_t_ref, wp_a_ref, wp_v_ref,
                     wqkv_ref, wcaps_ref, wg_ref, bg_ref,
                     w1_ref, b1_ref, w2_ref, b2_ref,
                     o_ref, *, B, T_t, T_a, T_v, d, n, d_c, routing):
    f32 = jnp.float32
    mods = ("t", "a", "v")
    mi = {"t": 0, "a": 1, "v": 2}
    T = {"t": T_t, "a": T_a, "v": T_v}
    srcs = {"t": ("a", "v"), "a": ("t", "v"), "v": ("t", "a")}

    # ---- (1) input projections: one full-batch [B*T, in] @ [in, d] matmul ----
    z_flat = {
        "t": jnp.dot(text_ref[...], wp_t_ref[...], preferred_element_type=f32),
        "a": jnp.dot(audio_ref[...], wp_a_ref[...], preferred_element_type=f32),
        "v": jnp.dot(video_ref[...], wp_v_ref[...], preferred_element_type=f32),
    }
    z3 = {m: z_flat[m].reshape(B, T[m], d) for m in mods}

    # ---- (2) crossmodal transformer (simplified single-head MULT), batched ----
    inv_sqrt_d = 1.0 / math.sqrt(d)
    Z = {}                                            # Z[m] : [B, T_m, d]
    for m in mods:
        wqkv = wqkv_ref[mi[m]]                        # [d, 3d] = [Wq | Wk | Wv]
        wq = wqkv[:, 0:d]
        wk = wqkv[:, d:2 * d]
        wv = wqkv[:, 2 * d:3 * d]
        q3 = jnp.dot(z_flat[m], wq, preferred_element_type=f32).reshape(B, T[m], d)
        out = z3[m]
        for s in srcs[m]:
            k3 = jnp.dot(z_flat[s], wk, preferred_element_type=f32).reshape(B, T[s], d)
            v3 = jnp.dot(z_flat[s], wv, preferred_element_type=f32).reshape(B, T[s], d)
            sc = jnp.einsum("bqd,bkd->bqk", q3, k3,
                            preferred_element_type=f32) * inv_sqrt_d
            p = _softmax_last(sc)
            out = out + jnp.einsum("bqk,bkd->bqd", p, v3,
                                   preferred_element_type=f32)
        Z[m] = out

    # ---- (3) capsule StoG (dynamic routing) + graph conv + mean/max readout ----
    # TODO(synk): the original repo's exact routing / adjacency formulation is
    # unavailable; standard capsule dynamic routing + similarity adjacency used.
    inv_sqrt_dc = 1.0 / math.sqrt(d_c)
    means, maxes = {}, {}                             # per modality [B, d_c]
    for m in mods:
        Tm = T[m]
        wcaps = wcaps_ref[mi[m]]                      # [d, n*d_c]
        u_flat = jnp.dot(Z[m].reshape(B * Tm, d), wcaps,
                         preferred_element_type=f32)  # [B*T, n*d_c]
        u3 = u_flat.reshape(B, Tm, n * d_c)
        u_caps = [u3[:, :, j * d_c:(j + 1) * d_c] for j in range(n)]  # n x [B,T,d_c]
        col_ids = jax.lax.broadcasted_iota(jnp.int32, (B, Tm, n), 2)
        cap_ids = jax.lax.broadcasted_iota(jnp.int32, (B, n, d_c), 1)
        b_log = jnp.zeros((B, Tm, n), f32)
        vert = None
        for it in range(routing):
            c = _softmax_last(b_log)                                   # [B,T,n]
            v_rows = [_squash(jnp.sum(c[:, :, j:j + 1] * u_caps[j],
                                      axis=1, keepdims=True))
                      for j in range(n)]                               # n x [B,1,d_c]
            vert = jnp.zeros((B, n, d_c), f32)
            for j in range(n):
                vert = vert + jnp.where(cap_ids == j, v_rows[j], 0.0)  # [B,n,d_c]
            if it + 1 < routing:                                       # last update is dead
                upd = jnp.zeros((B, Tm, n), f32)
                for j in range(n):
                    upd_j = jnp.sum(u_caps[j] * v_rows[j], axis=2,
                                    keepdims=True)                     # [B,T,1]
                    upd = upd + jnp.where(col_ids == j, upd_j, 0.0)
                b_log = b_log + upd
        # similarity adjacency over the n vertex capsules (batched)
        sim = jnp.einsum("bnc,bmc->bnm", vert, vert,
                         preferred_element_type=f32) * inv_sqrt_dc
        adj = _softmax_last(sim)                                       # [B,n,n]
        # graph conv: relu(adj @ vert @ Wg + bg), batched over B
        h = jnp.einsum("bnm,bmc->bnc", adj, vert, preferred_element_type=f32)
        wg3 = jnp.broadcast_to(wg_ref[mi[m]][None], (B, d_c, d_c))
        h = jnp.einsum("bnc,bcd->bnd", h, wg3,
                       preferred_element_type=f32) + bg_ref[mi[m]]
        h = jnp.maximum(h, 0.0)                                        # [B,n,d_c]
        means[m] = jnp.mean(h, axis=1)                                 # [B,d_c]
        maxes[m] = jnp.max(h, axis=1)                                  # [B,d_c]

    # ---- (4) hypergraph over the 3 modality nodes, fused with (5) the head ----
    inv_sqrt_2dc = 1.0 / math.sqrt(2 * d_c)
    mean_l = [means["t"], means["a"], means["v"]]
    max_l = [maxes["t"], maxes["a"], maxes["v"]]
    # pairwise node similarities (nodes_list row = [mean | max])
    sim_nm = [[None] * 3 for _ in range(3)]
    for i in range(3):
        for j in range(i, 3):
            s = jnp.sum(mean_l[i] * mean_l[j] + max_l[i] * max_l[j],
                        axis=-1, keepdims=True) * inv_sqrt_2dc          # [B,1]
            sim_nm[i][j] = s
            sim_nm[j][i] = s
    col3 = jax.lax.broadcasted_iota(jnp.int32, (B, 3), 1)

    # fc1 applied block-wise: logits @ W1 == sum_k block_k @ W1[k*d_c:(k+1)*d_c]
    w1 = w1_ref[...]                                                    # [6*d_c, 2*d_c]
    h1 = jnp.zeros((B, w1.shape[1]), f32) + b1_ref[...]
    for i in range(3):
        row = jnp.zeros((B, 3), f32)
        for j in range(3):
            row = row + jnp.where(col3 == j, sim_nm[i][j], 0.0)         # [B,3]
        ci = _softmax_last(row)                                         # adjacency row i
        hyp_mean_i = sum(ci[:, j:j + 1] * mean_l[j] for j in range(3))  # [B,d_c]
        hyp_max_i = sum(ci[:, j:j + 1] * max_l[j] for j in range(3))    # [B,d_c]
        h1 = h1 + jnp.dot(hyp_mean_i, w1[(2 * i) * d_c:(2 * i + 1) * d_c, :],
                          preferred_element_type=f32)
        h1 = h1 + jnp.dot(hyp_max_i, w1[(2 * i + 1) * d_c:(2 * i + 2) * d_c, :],
                          preferred_element_type=f32)
    h1 = jnp.tanh(h1)
    # dropout: eval-mode identity
    o_ref[...] = (jnp.dot(h1, w2_ref[...], preferred_element_type=f32)
                  + b2_ref[...]) * 10.0


# ----------------------------------------------------------------------------
# parameters + wrapper
# ----------------------------------------------------------------------------
def xavier_normal(key, shape):
    fan_in, fan_out = shape[-2], shape[-1]
    std = math.sqrt(2.0 / (fan_in + fan_out))
    return std * jax.random.normal(key, shape, dtype=jnp.float32)


def init_params(key, *, t_in, a_in, v_in, MULT_d, d_c, n, label_dim):
    keys = jax.random.split(key, 32)
    p = {}
    # MULTModel: per-modality input projections + fused crossmodal Q|K|V.
    p["Wp_t"] = xavier_normal(keys[0], (t_in, MULT_d))
    p["Wp_a"] = xavier_normal(keys[1], (a_in, MULT_d))
    p["Wp_v"] = xavier_normal(keys[2], (v_in, MULT_d))
    wqkv = []
    for i in range(3):
        wq = xavier_normal(keys[3 + 3 * i], (MULT_d, MULT_d))
        wk = xavier_normal(keys[4 + 3 * i], (MULT_d, MULT_d))
        wv = xavier_normal(keys[5 + 3 * i], (MULT_d, MULT_d))
        wqkv.append(jnp.concatenate([wq, wk, wv], axis=1))
    p["Wqkv"] = jnp.stack(wqkv, axis=0)                       # [3, d, 3d]
    # CapsuleSequenceToGraph primary-capsule projections (stacked t,a,v).
    p["Wcaps"] = jnp.stack([xavier_normal(keys[12 + i], (MULT_d, n * d_c))
                            for i in range(3)], axis=0)       # [3, d, n*d_c]
    # GraphCAGE graph-conv weights.
    p["Wg"] = jnp.stack([xavier_normal(keys[15 + i], (d_c, d_c))
                         for i in range(3)], axis=0)          # [3, d_c, d_c]
    p["bg"] = jnp.zeros((3, 1, d_c), jnp.float32)
    # Classifier head: fc1 (6*d_c -> 2*d_c), fc2 (2*d_c -> label_dim).
    p["W1"] = xavier_normal(keys[20], (3 * d_c * 2, 2 * d_c))
    p["b1"] = jnp.zeros((1, 2 * d_c), jnp.float32)
    p["W2"] = xavier_normal(keys[21], (2 * d_c, label_dim))
    p["b2"] = jnp.zeros((1, label_dim), jnp.float32)
    return p


def gcn_caps_forward(params, text, audio, video, *, d_c, n, routing, label_dim):
    B, T_t, t_in = text.shape
    _, T_a, a_in = audio.shape
    _, T_v, v_in = video.shape
    MULT_d = params["Wp_t"].shape[1]
    kernel = functools.partial(
        _gcn_caps_kernel, B=B, T_t=T_t, T_a=T_a, T_v=T_v,
        d=MULT_d, n=n, d_c=d_c, routing=routing)
    # Single grid-less pallas_call: whole arrays live in VMEM, one launch total.
    return pl.pallas_call(
        kernel,
        out_shape=jax.ShapeDtypeStruct((B, label_dim), jnp.float32),
        compiler_params=pltpu.CompilerParams(vmem_limit_bytes=32 * 1024 * 1024),
    )(
        text.reshape(B * T_t, t_in),    # flatten in the wrapper: full matmuls
        audio.reshape(B * T_a, a_in),
        video.reshape(B * T_v, v_in),
        params["Wp_t"], params["Wp_a"], params["Wp_v"],
        params["Wqkv"], params["Wcaps"], params["Wg"], params["bg"],
        params["W1"], params["b1"], params["W2"], params["b2"],
    )


# ----------------------------------------------------------------------------
# Main
# ----------------------------------------------------------------------------
if __name__ == "__main__":
    # Small, model-consistent hyper-parameters.
    B = 2
    T_t, T_a, T_v = 8, 8, 8
    t_in, a_in, v_in = 16, 12, 8
    MULT_d = 32
    d_c = 16          # dim_capsule
    n = 4             # vertex_num
    routing = 3
    label_dim = 1

    key = jax.random.PRNGKey(0)
    k_text, k_audio, k_video, k_params = jax.random.split(key, 4)
    text = jax.random.normal(k_text, (B, T_t, t_in), dtype=jnp.float32)
    audio = jax.random.normal(k_audio, (B, T_a, a_in), dtype=jnp.float32)
    video = jax.random.normal(k_video, (B, T_v, v_in), dtype=jnp.float32)

    params = init_params(
        k_params, t_in=t_in, a_in=a_in, v_in=v_in,
        MULT_d=MULT_d, d_c=d_c, n=n, label_dim=label_dim)

    fwd = jax.jit(functools.partial(gcn_caps_forward, d_c=d_c, n=n,
                                    routing=routing, label_dim=label_dim))
    preds = fwd(params, text, audio, video)
    jax.block_until_ready(preds)
    assert preds.shape == (B, label_dim) and preds.dtype == jnp.float32
    assert bool(jnp.all(jnp.isfinite(preds)))
    print("KERNEL_OK")
</pallas_src>

<mosaic_0001>
module attributes {stable_mosaic.version = 11 : i64} {
  func.func @_gcn_caps_kernel(%arg0: memref<16x16xf32, #tpu.memory_space<vmem>>, %arg1: memref<16x12xf32, #tpu.memory_space<vmem>>, %arg2: memref<16x8xf32, #tpu.memory_space<vmem>>, %arg3: memref<16x32xf32, #tpu.memory_space<vmem>>, %arg4: memref<12x32xf32, #tpu.memory_space<vmem>>, %arg5: memref<8x32xf32, #tpu.memory_space<vmem>>, %arg6: memref<3x32x96xf32, #tpu.memory_space<vmem>>, %arg7: memref<3x32x64xf32, #tpu.memory_space<vmem>>, %arg8: memref<3x16x16xf32, #tpu.memory_space<vmem>>, %arg9: memref<3x1x16xf32, #tpu.memory_space<vmem>>, %arg10: memref<96x32xf32, #tpu.memory_space<vmem>>, %arg11: memref<1x32xf32, #tpu.memory_space<vmem>>, %arg12: memref<32x1xf32, #tpu.memory_space<vmem>>, %arg13: memref<1x1xf32, #tpu.memory_space<vmem>>, %arg14: memref<2x1xf32, #tpu.memory_space<vmem>>) attributes {dimension_semantics = [], scalar_prefetch = 0 : i64, scratch_operands = 0 : i64, tpu.core_type = #tpu.core_type<tc>} {
    %c0 = arith.constant 0 : index
    %c0_0 = arith.constant 0 : index
    %0 = vector.load %arg0[%c0, %c0_0] : memref<16x16xf32, #tpu.memory_space<vmem>>, vector<16x16xf32>
    %c0_1 = arith.constant 0 : index
    %c0_2 = arith.constant 0 : index
    %1 = vector.load %arg3[%c0_1, %c0_2] : memref<16x32xf32, #tpu.memory_space<vmem>>, vector<16x32xf32>
    %cst = arith.constant dense<0.000000e+00> : vector<16x32xf32>
    %2 = tpu.matmul %0, %1, %cst {dimension_numbers = #tpu.dot_dimension_numbers<[1], [0], [0], [1], [0, 0, 1, 1], [], []>} : vector<16x16xf32>, vector<16x32xf32>, vector<16x32xf32> -> vector<16x32xf32>
    %c0_3 = arith.constant 0 : index
    %c0_4 = arith.constant 0 : index
    %3 = vector.load %arg1[%c0_3, %c0_4] : memref<16x12xf32, #tpu.memory_space<vmem>>, vector<16x12xf32>
    %c0_5 = arith.constant 0 : index
    %c0_6 = arith.constant 0 : index
    %4 = vector.load %arg4[%c0_5, %c0_6] : memref<12x32xf32, #tpu.memory_space<vmem>>, vector<12x32xf32>
    %cst_7 = arith.constant dense<0.000000e+00> : vector<16x32xf32>
    %5 = tpu.matmul %3, %4, %cst_7 {dimension_numbers = #tpu.dot_dimension_numbers<[1], [0], [0], [1], [0, 0, 1, 1], [], []>} : vector<16x12xf32>, vector<12x32xf32>, vector<16x32xf32> -> vector<16x32xf32>
    %c0_8 = arith.constant 0 : index
    %c0_9 = arith.constant 0 : index
    %6 = vector.load %arg2[%c0_8, %c0_9] : memref<16x8xf32, #tpu.memory_space<vmem>>, vector<16x8xf32>
    %c0_10 = arith.constant 0 : index
    %c0_11 = arith.constant 0 : index
    %7 = vector.load %arg5[%c0_10, %c0_11] : memref<8x32xf32, #tpu.memory_space<vmem>>, vector<8x32xf32>
    %cst_12 = arith.constant dense<0.000000e+00> : vector<16x32xf32>
    %8 = tpu.matmul %6, %7, %cst_12 {dimension_numbers = #tpu.dot_dimension_numbers<[1], [0], [0], [1], [0, 0, 1, 1], [], []>} : vector<16x8xf32>, vector<8x32xf32>, vector<16x32xf32> -> vector<16x32xf32>
    %9 = vector.shape_cast %2 : vector<16x32xf32> to vector<2x8x32xf32>
    %10 = vector.shape_cast %5 : vector<16x32xf32> to vector<2x8x32xf32>
    %11 = vector.shape_cast %8 : vector<16x32xf32> to vector<2x8x32xf32>
    %c0_13 = arith.constant 0 : index
    %c0_14 = arith.constant 0 : index
    %c0_15 = arith.constant 0 : index
    %12 = vector.load %arg6[%c0_13, %c0_14, %c0_15] : memref<3x32x96xf32, #tpu.memory_space<vmem>>, vector<1x32x96xf32>
    %13 = vector.shape_cast %12 : vector<1x32x96xf32> to vector<32x96xf32>
    %14 = vector.extract_strided_slice %13 {offsets = [0, 0], sizes = [32, 32], strides = [1, 1]} : vector<32x96xf32> to vector<32x32xf32>
    %15 = vector.extract_strided_slice %13 {offsets = [0, 32], sizes = [32, 32], strides = [1, 1]} : vector<32x96xf32> to vector<32x32xf32>
    %16 = vector.extract_strided_slice %13 {offsets = [0, 64], sizes = [32, 32], strides = [1, 1]} : vector<32x96xf32> to vector<32x32xf32>
    %cst_16 = arith.constant dense<0.000000e+00> : vector<16x32xf32>
    %17 = tpu.matmul %2, %14, %cst_16 {dimension_numbers = #tpu.dot_dimension_numbers<[1], [0], [0], [1], [0, 0, 1, 1], [], []>} : vector<16x32xf32>, vector<32x32xf32>, vector<16x32xf32> -> vector<16x32xf32>
    %18 = vector.shape_cast %17 : vector<16x32xf32> to vector<2x8x32xf32>
    %cst_17 = arith.constant dense<0.000000e+00> : vector<16x32xf32>
    %19 = tpu.matmul %5, %15, %cst_17 {dimension_numbers = #tpu.dot_dimension_numbers<[1], [0], [0], [1], [0, 0, 1, 1], [], []>} : vector<16x32xf32>, vector<32x32xf32>, vector<16x32xf32> -> vector<16x32xf32>
    %20 = vector.shape_cast %19 : vector<16x32xf32> to vector<2x8x32xf32>
    %cst_18 = arith.constant dense<0.000000e+00> : vector<16x32xf32>
    %21 = tpu.matmul %5, %16, %cst_18 {dimension_numbers = #tpu.dot_dimension_numbers<[1], [0], [0], [1], [0, 0, 1, 1], [], []>} : vector<16x32xf32>, vector<32x32xf32>, vector<16x32xf32> -> vector<16x32xf32>
    %22 = vector.shape_cast %21 : vector<16x32xf32> to vector<2x8x32xf32>
    "tpu.trace_start"() <{level = 10 : i32, message = "bqd,bkd->bqk"}> : () -> ()
    %cst_19 = arith.constant dense<0.000000e+00> : vector<2x8x8xf32>
    %23 = tpu.matmul %18, %20, %cst_19 {dimension_numbers = #tpu.dot_dimension_numbers<[2], [2], [1], [1], [0, 0, 0, 1, 1, 1], [0], [0]>} : vector<2x8x32xf32>, vector<2x8x32xf32>, vector<2x8x8xf32> -> vector<2x8x8xf32>
    "tpu.trace_stop"() : () -> ()
    %cst_20 = arith.constant 0.176776692 : f32
    %24 = vector.broadcast %cst_20 : f32 to vector<2x8x8xf32>
    %25 = arith.mulf %23, %24 : vector<2x8x8xf32>
    %cst_21 = arith.constant dense<0xFF800000> : vector<2x8xf32>
    %26 = vector.multi_reduction <maximumf>, %25, %cst_21 [2] : vector<2x8x8xf32> to vector<2x8xf32>
    %27 = vector.shape_cast %26 : vector<2x8xf32> to vector<2x8x1xf32>
    %28 = vector.broadcast %27 : vector<2x8x1xf32> to vector<2x8x8xf32>
    %29 = arith.subf %25, %28 : vector<2x8x8xf32>
    %30 = math.exp %29 : vector<2x8x8xf32>
    %cst_22 = arith.constant dense<0.000000e+00> : vector<2x8xf32>
    %31 = vector.multi_reduction <add>, %30, %cst_22 [2] : vector<2x8x8xf32> to vector<2x8xf32>
    %32 = vector.shape_cast %31 : vector<2x8xf32> to vector<2x8x1xf32>
    %33 = tpu.reciprocal %32 {approx = true} : vector<2x8x1xf32> -> vector<2x8x1xf32>
    %34 = vector.broadcast %33 : vector<2x8x1xf32> to vector<2x8x8xf32>
    %35 = arith.mulf %30, %34 : vector<2x8x8xf32>
    "tpu.trace_start"() <{level = 10 : i32, message = "bqk,bkd->bqd"}> : () -> ()
    %cst_23 = arith.constant dense<0.000000e+00> : vector<2x8x32xf32>
    %36 = tpu.matmul %35, %22, %cst_23 {dimension_numbers = #tpu.dot_dimension_numbers<[2], [1], [1], [2], [0, 0, 0, 1, 1, 2], [0], [0]>} : vector<2x8x8xf32>, vector<2x8x32xf32>, vector<2x8x32xf32> -> vector<2x8x32xf32>
    "tpu.trace_stop"() : () -> ()
    %37 = arith.addf %9, %36 : vector<2x8x32xf32>
    %cst_24 = arith.constant dense<0.000000e+00> : vector<16x32xf32>
    %38 = tpu.matmul %8, %15, %cst_24 {dimension_numbers = #tpu.dot_dimension_numbers<[1], [0], [0], [1], [0, 0, 1, 1], [], []>} : vector<16x32xf32>, vector<32x32xf32>, vector<16x32xf32> -> vector<16x32xf32>
    %39 = vector.shape_cast %38 : vector<16x32xf32> to vector<2x8x32xf32>
    %cst_25 = arith.constant dense<0.000000e+00> : vector<16x32xf32>
    %40 = tpu.matmul %8, %16, %cst_25 {dimension_numbers = #tpu.dot_dimension_numbers<[1], [0], [0], [1], [0, 0, 1, 1], [], []>} : vector<16x32xf32>, vector<32x32xf32>, vector<16x32xf32> -> vector<16x32xf32>
    %41 = vector.shape_cast %40 : vector<16x32xf32> to vector<2x8x32xf32>
    "tpu.trace_start"() <{level = 10 : i32, message = "bqd,bkd->bqk"}> : () -> ()
    %cst_26 = arith.constant dense<0.000000e+00> : vector<2x8x8xf32>
    %42 = tpu.matmul %18, %39, %cst_26 {dimension_numbers = #tpu.dot_dimension_numbers<[2], [2], [1], [1], [0, 0, 0, 1, 1, 1], [0], [0]>} : vector<2x8x32xf32>, vector<2x8x32xf32>, vector<2x8x8xf32> -> vector<2x8x8xf32>
    "tpu.trace_stop"() : () -> ()
    %cst_27 = arith.constant 0.176776692 : f32
    %43 = vector.broadcast %cst_27 : f32 to vector<2x8x8xf32>
    %44 = arith.mulf %42, %43 : vector<2x8x8xf32>
    %cst_28 = arith.constant dense<0xFF800000> : vector<2x8xf32>
    %45 = vector.multi_reduction <maximumf>, %44, %cst_28 [2] : vector<2x8x8xf32> to vector<2x8xf32>
    %46 = vector.shape_cast %45 : vector<2x8xf32> to vector<2x8x1xf32>
    %47 = vector.broadcast %46 : vector<2x8x1xf32> to vector<2x8x8xf32>
    %48 = arith.subf %44, %47 : vector<2x8x8xf32>
    %49 = math.exp %48 : vector<2x8x8xf32>
    %cst_29 = arith.constant dense<0.000000e+00> : vector<2x8xf32>
    %50 = vector.multi_reduction <add>, %49, %cst_29 [2] : vector<2x8x8xf32> to vector<2x8xf32>
    %51 = vector.shape_cast %50 : vector<2x8xf32> to vector<2x8x1xf32>
    %52 = tpu.reciprocal %51 {approx = true} : vector<2x8x1xf32> -> vector<2x8x1xf32>
    %53 = vector.broadcast %52 : vector<2x8x1xf32> to vector<2x8x8xf32>
    %54 = arith.mulf %49, %53 : vector<2x8x8xf32>
    "tpu.trace_start"() <{level = 10 : i32, message = "bqk,bkd->bqd"}> : () -> ()
    %cst_30 = arith.constant dense<0.000000e+00> : vector<2x8x32xf32>
    %55 = tpu.matmul %54, %41, %cst_30 {dimension_numbers = #tpu.dot_dimension_numbers<[2], [1], [1], [2], [0, 0, 0, 1, 1, 2], [0], [0]>} : vector<2x8x8xf32>, vector<2x8x32xf32>, vector<2x8x32xf32> -> vector<2x8x32xf32>
    "tpu.trace_stop"() : () -> ()
    %56 = arith.addf %37, %55 : vector<2x8x32xf32>
    %c1 = arith.constant 1 : index
    %c0_31 = arith.constant 0 : index
    %c0_32 = arith.constant 0 : index
    %57 = vector.load %arg6[%c1, %c0_31, %c0_32] : memref<3x32x96xf32, #tpu.memory_space<vmem>>, vector<1x32x96xf32>
    %58 = vector.shape_cast %57 : vector<1x32x96xf32> to vector<32x96xf32>
    %59 = vector.extract_strided_slice %58 {offsets = [0, 0], sizes = [32, 32], strides = [1, 1]} : vector<32x96xf32> to vector<32x32xf32>
    %60 = vector.extract_strided_slice %58 {offsets = [0, 32], sizes = [32, 32], strides = [1, 1]} : vector<32x96xf32> to vector<32x32xf32>
    %61 = vector.extract_strided_slice %58 {offsets = [0, 64], sizes = [32, 32], strides = [1, 1]} : vector<32x96xf32> to vector<32x32xf32>
    %cst_33 = arith.constant dense<0.000000e+00> : vector<16x32xf32>
    %62 = tpu.matmul %5, %59, %cst_33 {dimension_numbers = #tpu.dot_dimension_numbers<[1], [0], [0], [1], [0, 0, 1, 1], [], []>} : vector<16x32xf32>, vector<32x32xf32>, vector<16x32xf32> -> vector<16x32xf32>
    %63 = vector.shape_cast %62 : vector<16x32xf32> to vector<2x8x32xf32>
    %cst_34 = arith.constant dense<0.000000e+00> : vector<16x32xf32>
    %64 = tpu.matmul %2, %60, %cst_34 {dimension_numbers = #tpu.dot_dimension_numbers<[1], [0], [0], [1], [0, 0, 1, 1], [], []>} : vector<16x32xf32>, vector<32x32xf32>, vector<16x32xf32> -> vector<16x32xf32>
    %65 = vector.shape_cast %64 : vector<16x32xf32> to vector<2x8x32xf32>
    %cst_35 = arith.constant dense<0.000000e+00> : vector<16x32xf32>
    %66 = tpu.matmul %2, %61, %cst_35 {dimension_numbers = #tpu.dot_dimension_numbers<[1], [0], [0], [1], [0, 0, 1, 1], [], []>} : vector<16x32xf32>, vector<32x32xf32>, vector<16x32xf32> -> vector<16x32xf32>
    %67 = vector.shape_cast %66 : vector<16x32xf32> to vector<2x8x32xf32>
    "tpu.trace_start"() <{level = 10 : i32, message = "bqd,bkd->bqk"}> : () -> ()
    %cst_36 = arith.constant dense<0.000000e+00> : vector<2x8x8xf32>
    %68 = tpu.matmul %63, %65, %cst_36 {dimension_numbers = #tpu.dot_dimension_numbers<[2], [2], [1], [1], [0, 0, 0, 1, 1, 1], [0], [0]>} : vector<2x8x32xf32>, vector<2x8x32xf32>, vector<2x8x8xf32> -> vector<2x8x8xf32>
    "tpu.trace_stop"() : () -> ()
    %cst_37 = arith.constant 0.176776692 : f32
    %69 = vector.broadcast %cst_37 : f32 to vector<2x8x8xf32>
    %70 = arith.mulf %68, %69 : vector<2x8x8xf32>
    %cst_38 = arith.constant dense<0xFF800000> : vector<2x8xf32>
    %71 = vector.multi_reduction <maximumf>, %70, %cst_38 [2] : vector<2x8x8xf32> to vector<2x8xf32>
    %72 = vector.shape_cast %71 : vector<2x8xf32> to vector<2x8x1xf32>
    %73 = vector.broadcast %72 : vector<2x8x1xf32> to vector<2x8x8xf32>
    %74 = arith.subf %70, %73 : vector<2x8x8xf32>
    %75 = math.exp %74 : vector<2x8x8xf32>
    %cst_39 = arith.constant dense<0.000000e+00> : vector<2x8xf32>
    %76 = vector.multi_reduction <add>, %75, %cst_39 [2] : vector<2x8x8xf32> to vector<2x8xf32>
    %77 = vector.shape_cast %76 : vector<2x8xf32> to vector<2x8x1xf32>
    %78 = tpu.reciprocal %77 {approx = true} : vector<2x8x1xf32> -> vector<2x8x1xf32>
    %79 = vector.broadcast %78 : vector<2x8x1xf32> to vector<2x8x8xf32>
    %80 = arith.mulf %75, %79 : vector<2x8x8xf32>
    "tpu.trace_start"() <{level = 10 : i32, message = "bqk,bkd->bqd"}> : () -> ()
    %cst_40 = arith.constant dense<0.000000e+00> : vector<2x8x32xf32>
    %81 = tpu.matmul %80, %67, %cst_40 {dimension_numbers = #tpu.dot_dimension_numbers<[2], [1], [1], [2], [0, 0, 0, 1, 1, 2], [0], [0]>} : vector<2x8x8xf32>, vector<2x8x32xf32>, vector<2x8x32xf32> -> vector<2x8x32xf32>
    "tpu.trace_stop"() : () -> ()
    %82 = arith.addf %10, %81 : vector<2x8x32xf32>
    %cst_41 = arith.constant dense<0.000000e+00> : vector<16x32xf32>
    %83 = tpu.matmul %8, %60, %cst_41 {dimension_numbers = #tpu.dot_dimension_numbers<[1], [0], [0], [1], [0, 0, 1, 1], [], []>} : vector<16x32xf32>, vector<32x32xf32>, vector<16x32xf32> -> vector<16x32xf32>
    %84 = vector.shape_cast %83 : vector<16x32xf32> to vector<2x8x32xf32>
    %cst_42 = arith.constant dense<0.000000e+00> : vector<16x32xf32>
    %85 = tpu.matmul %8, %61, %cst_42 {dimension_numbers = #tpu.dot_dimension_numbers<[1], [0], [0], [1], [0, 0, 1, 1], [], []>} : vector<16x32xf32>, vector<32x32xf32>, vector<16x32xf32> -> vector<16x32xf32>
    %86 = vector.shape_cast %85 : vector<16x32xf32> to vector<2x8x32xf32>
    "tpu.trace_start"() <{level = 10 : i32, message = "bqd,bkd->bqk"}> : () -> ()
    %cst_43 = arith.constant dense<0.000000e+00> : vector<2x8x8xf32>
    %87 = tpu.matmul %63, %84, %cst_43 {dimension_numbers = #tpu.dot_dimension_numbers<[2], [2], [1], [1], [0, 0, 0, 1, 1, 1], [0], [0]>} : vector<2x8x32xf32>, vector<2x8x32xf32>, vector<2x8x8xf32> -> vector<2x8x8xf32>
    "tpu.trace_stop"() : () -> ()
    %cst_44 = arith.constant 0.176776692 : f32
    %88 = vector.broadcast %cst_44 : f32 to vector<2x8x8xf32>
    %89 = arith.mulf %87, %88 : vector<2x8x8xf32>
    %cst_45 = arith.constant dense<0xFF800000> : vector<2x8xf32>
    %90 = vector.multi_reduction <maximumf>, %89, %cst_45 [2] : vector<2x8x8xf32> to vector<2x8xf32>
    %91 = vector.shape_cast %90 : vector<2x8xf32> to vector<2x8x1xf32>
    %92 = vector.broadcast %91 : vector<2x8x1xf32> to vector<2x8x8xf32>
    %93 = arith.subf %89, %92 : vector<2x8x8xf32>
    %94 = math.exp %93 : vector<2x8x8xf32>
    %cst_46 = arith.constant dense<0.000000e+00> : vector<2x8xf32>
    %95 = vector.multi_reduction <add>, %94, %cst_46 [2] : vector<2x8x8xf32> to vector<2x8xf32>
    %96 = vector.shape_cast %95 : vector<2x8xf32> to vector<2x8x1xf32>
    %97 = tpu.reciprocal %96 {approx = true} : vector<2x8x1xf32> -> vector<2x8x1xf32>
    %98 = vector.broadcast %97 : vector<2x8x1xf32> to vector<2x8x8xf32>
    %99 = arith.mulf %94, %98 : vector<2x8x8xf32>
    "tpu.trace_start"() <{level = 10 : i32, message = "bqk,bkd->bqd"}> : () -> ()
    %cst_47 = arith.constant dense<0.000000e+00> : vector<2x8x32xf32>
    %100 = tpu.matmul %99, %86, %cst_47 {dimension_numbers = #tpu.dot_dimension_numbers<[2], [1], [1], [2], [0, 0, 0, 1, 1, 2], [0], [0]>} : vector<2x8x8xf32>, vector<2x8x32xf32>, vector<2x8x32xf32> -> vector<2x8x32xf32>
    "tpu.trace_stop"() : () -> ()
    %101 = arith.addf %82, %100 : vector<2x8x32xf32>
    %c2 = arith.constant 2 : index
    %c0_48 = arith.constant 0 : index
    %c0_49 = arith.constant 0 : index
    %102 = vector.load %arg6[%c2, %c0_48, %c0_49] : memref<3x32x96xf32, #tpu.memory_space<vmem>>, vector<1x32x96xf32>
    %103 = vector.shape_cast %102 : vector<1x32x96xf32> to vector<32x96xf32>
    %104 = vector.extract_strided_slice %103 {offsets = [0, 0], sizes = [32, 32], strides = [1, 1]} : vector<32x96xf32> to vector<32x32xf32>
    %105 = vector.extract_strided_slice %103 {offsets = [0, 32], sizes = [32, 32], strides = [1, 1]} : vector<32x96xf32> to vector<32x32xf32>
    %106 = vector.extract_strided_slice %103 {offsets = [0, 64], sizes = [32, 32], strides = [1, 1]} : vector<32x96xf32> to vector<32x32xf32>
    %cst_50 = arith.constant dense<0.000000e+00> : vector<16x32xf32>
    %107 = tpu.matmul %8, %104, %cst_50 {dimension_numbers = #tpu.dot_dimension_numbers<[1], [0], [0], [1], [0, 0, 1, 1], [], []>} : vector<16x32xf32>, vector<32x32xf32>, vector<16x32xf32> -> vector<16x32xf32>
    %108 = vector.shape_cast %107 : vector<16x32xf32> to vector<2x8x32xf32>
    %cst_51 = arith.constant dense<0.000000e+00> : vector<16x32xf32>
    %109 = tpu.matmul %2, %105, %cst_51 {dimension_numbers = #tpu.dot_dimension_numbers<[1], [0], [0], [1], [0, 0, 1, 1], [], []>} : vector<16x32xf32>, vector<32x32xf32>, vector<16x32xf32> -> vector<16x32xf32>
    %110 = vector.shape_cast %109 : vector<16x32xf32> to vector<2x8x32xf32>
    %cst_52 = arith.constant dense<0.000000e+00> : vector<16x32xf32>
    %111 = tpu.matmul %2, %106, %cst_52 {dimension_numbers = #tpu.dot_dimension_numbers<[1], [0], [0], [1], [0, 0, 1, 1], [], []>} : vector<16x32xf32>, vector<32x32xf32>, vector<16x32xf32> -> vector<16x32xf32>
    %112 = vector.shape_cast %111 : vector<16x32xf32> to vector<2x8x32xf32>
    "tpu.trace_start"() <{level = 10 : i32, message = "bqd,bkd->bqk"}> : () -> ()
    %cst_53 = arith.constant dense<0.000000e+00> : vector<2x8x8xf32>
    %113 = tpu.matmul %108, %110, %cst_53 {dimension_numbers = #tpu.dot_dimension_numbers<[2], [2], [1], [1], [0, 0, 0, 1, 1, 1], [0], [0]>} : vector<2x8x32xf32>, vector<2x8x32xf32>, vector<2x8x8xf32> -> vector<2x8x8xf32>
    "tpu.trace_stop"() : () -> ()
    %cst_54 = arith.constant 0.176776692 : f32
    %114 = vector.broadcast %cst_54 : f32 to vector<2x8x8xf32>
    %115 = arith.mulf %113, %114 : vector<2x8x8xf32>
    %cst_55 = arith.constant dense<0xFF800000> : vector<2x8xf32>
    %116 = vector.multi_reduction <maximumf>, %115, %cst_55 [2] : vector<2x8x8xf32> to vector<2x8xf32>
    %117 = vector.shape_cast %116 : vector<2x8xf32> to vector<2x8x1xf32>
    %118 = vector.broadcast %117 : vector<2x8x1xf32> to vector<2x8x8xf32>
    %119 = arith.subf %115, %118 : vector<2x8x8xf32>
    %120 = math.exp %119 : vector<2x8x8xf32>
    %cst_56 = arith.constant dense<0.000000e+00> : vector<2x8xf32>
    %121 = vector.multi_reduction <add>, %120, %cst_56 [2] : vector<2x8x8xf32> to vector<2x8xf32>
    %122 = vector.shape_cast %121 : vector<2x8xf32> to vector<2x8x1xf32>
    %123 = tpu.reciprocal %122 {approx = true} : vector<2x8x1xf32> -> vector<2x8x1xf32>
    %124 = vector.broadcast %123 : vector<2x8x1xf32> to vector<2x8x8xf32>
    %125 = arith.mulf %120, %124 : vector<2x8x8xf32>
    "tpu.trace_start"() <{level = 10 : i32, message = "bqk,bkd->bqd"}> : () -> ()
    %cst_57 = arith.constant dense<0.000000e+00> : vector<2x8x32xf32>
    %126 = tpu.matmul %125, %112, %cst_57 {dimension_numbers = #tpu.dot_dimension_numbers<[2], [1], [1], [2], [0, 0, 0, 1, 1, 2], [0], [0]>} : vector<2x8x8xf32>, vector<2x8x32xf32>, vector<2x8x32xf32> -> vector<2x8x32xf32>
    "tpu.trace_stop"() : () -> ()
    %127 = arith.addf %11, %126 : vector<2x8x32xf32>
    %cst_58 = arith.constant dense<0.000000e+00> : vector<16x32xf32>
    %128 = tpu.matmul %5, %105, %cst_58 {dimension_numbers = #tpu.dot_dimension_numbers<[1], [0], [0], [1], [0, 0, 1, 1], [], []>} : vector<16x32xf32>, vector<32x32xf32>, vector<16x32xf32> -> vector<16x32xf32>
    %129 = vector.shape_cast %128 : vector<16x32xf32> to vector<2x8x32xf32>
    %cst_59 = arith.constant dense<0.000000e+00> : vector<16x32xf32>
    %130 = tpu.matmul %5, %106, %cst_59 {dimension_numbers = #tpu.dot_dimension_numbers<[1], [0], [0], [1], [0, 0, 1, 1], [], []>} : vector<16x32xf32>, vector<32x32xf32>, vector<16x32xf32> -> vector<16x32xf32>
    %131 = vector.shape_cast %130 : vector<16x32xf32> to vector<2x8x32xf32>
    "tpu.trace_start"() <{level = 10 : i32, message = "bqd,bkd->bqk"}> : () -> ()
    %cst_60 = arith.constant dense<0.000000e+00> : vector<2x8x8xf32>
    %132 = tpu.matmul %108, %129, %cst_60 {dimension_numbers = #tpu.dot_dimension_numbers<[2], [2], [1], [1], [0, 0, 0, 1, 1, 1], [0], [0]>} : vector<2x8x32xf32>, vector<2x8x32xf32>, vector<2x8x8xf32> -> vector<2x8x8xf32>
    "tpu.trace_stop"() : () -> ()
    %cst_61 = arith.constant 0.176776692 : f32
    %133 = vector.broadcast %cst_61 : f32 to vector<2x8x8xf32>
    %134 = arith.mulf %132, %133 : vector<2x8x8xf32>
    %cst_62 = arith.constant dense<0xFF800000> : vector<2x8xf32>
    %135 = vector.multi_reduction <maximumf>, %134, %cst_62 [2] : vector<2x8x8xf32> to vector<2x8xf32>
    %136 = vector.shape_cast %135 : vector<2x8xf32> to vector<2x8x1xf32>
    %137 = vector.broadcast %136 : vector<2x8x1xf32> to vector<2x8x8xf32>
    %138 = arith.subf %134, %137 : vector<2x8x8xf32>
    %139 = math.exp %138 : vector<2x8x8xf32>
    %cst_63 = arith.constant dense<0.000000e+00> : vector<2x8xf32>
    %140 = vector.multi_reduction <add>, %139, %cst_63 [2] : vector<2x8x8xf32> to vector<2x8xf32>
    %141 = vector.shape_cast %140 : vector<2x8xf32> to vector<2x8x1xf32>
    %142 = tpu.reciprocal %141 {approx = true} : vector<2x8x1xf32> -> vector<2x8x1xf32>
    %143 = vector.broadcast %142 : vector<2x8x1xf32> to vector<2x8x8xf32>
    %144 = arith.mulf %139, %143 : vector<2x8x8xf32>
    "tpu.trace_start"() <{level = 10 : i32, message = "bqk,bkd->bqd"}> : () -> ()
    %cst_64 = arith.constant dense<0.000000e+00> : vector<2x8x32xf32>
    %145 = tpu.matmul %144, %131, %cst_64 {dimension_numbers = #tpu.dot_dimension_numbers<[2], [1], [1], [2], [0, 0, 0, 1, 1, 2], [0], [0]>} : vector<2x8x8xf32>, vector<2x8x32xf32>, vector<2x8x32xf32> -> vector<2x8x32xf32>
    "tpu.trace_stop"() : () -> ()
    %146 = arith.addf %127, %145 : vector<2x8x32xf32>
    %c0_65 = arith.constant 0 : index
    %c0_66 = arith.constant 0 : index
    %c0_67 = arith.constant 0 : index
    %147 = vector.load %arg7[%c0_65, %c0_66, %c0_67] : memref<3x32x64xf32, #tpu.memory_space<vmem>>, vector<1x32x64xf32>
    %148 = vector.shape_cast %147 : vector<1x32x64xf32> to vector<32x64xf32>
    %149 = vector.shape_cast %56 : vector<2x8x32xf32> to vector<16x32xf32>
    %cst_68 = arith.constant dense<0.000000e+00> : vector<16x64xf32>
    %150 = tpu.matmul %149, %148, %cst_68 {dimension_numbers = #tpu.dot_dimension_numbers<[1], [0], [0], [1], [0, 0, 1, 1], [], []>} : vector<16x32xf32>, vector<32x64xf32>, vector<16x64xf32> -> vector<16x64xf32>
    %151 = vector.shape_cast %150 : vector<16x64xf32> to vector<2x8x64xf32>
    %152 = vector.extract_strided_slice %151 {offsets = [0, 0, 0], sizes = [2, 8, 16], strides = [1, 1, 1]} : vector<2x8x64xf32> to vector<2x8x16xf32>
    %153 = vector.extract_strided_slice %151 {offsets = [0, 0, 16], sizes = [2, 8, 16], strides = [1, 1, 1]} : vector<2x8x64xf32> to vector<2x8x16xf32>
    %154 = vector.extract_strided_slice %151 {offsets = [0, 0, 32], sizes = [2, 8, 16], strides = [1, 1, 1]} : vector<2x8x64xf32> to vector<2x8x16xf32>
    %155 = vector.extract_strided_slice %151 {offsets = [0, 0, 48], sizes = [2, 8, 16], strides = [1, 1, 1]} : vector<2x8x64xf32> to vector<2x8x16xf32>
    %156 = tpu.iota {dimensions = array<i32: 2>} : vector<2x8x4xi32>
    %157 = tpu.iota {dimensions = array<i32: 1>} : vector<2x4x16xi32>
    %cst_69 = arith.constant 0.000000e+00 : f32
    %158 = vector.broadcast %cst_69 : f32 to vector<2x8x4xf32>
    %cst_70 = arith.constant dense<0xFF800000> : vector<2x8xf32>
    %159 = vector.multi_reduction <maximumf>, %158, %cst_70 [2] : vector<2x8x4xf32> to vector<2x8xf32>
    %160 = vector.shape_cast %159 : vector<2x8xf32> to vector<2x8x1xf32>
    %161 = vector.broadcast %160 : vector<2x8x1xf32> to vector<2x8x4xf32>
    %162 = arith.subf %158, %161 : vector<2x8x4xf32>
    %163 = math.exp %162 : vector<2x8x4xf32>
    %cst_71 = arith.constant dense<0.000000e+00> : vector<2x8xf32>
    %164 = vector.multi_reduction <add>, %163, %cst_71 [2] : vector<2x8x4xf32> to vector<2x8xf32>
    %165 = vector.shape_cast %164 : vector<2x8xf32> to vector<2x8x1xf32>
    %166 = tpu.reciprocal %165 {approx = true} : vector<2x8x1xf32> -> vector<2x8x1xf32>
    %167 = vector.broadcast %166 : vector<2x8x1xf32> to vector<2x8x4xf32>
    %168 = arith.mulf %163, %167 : vector<2x8x4xf32>
    %169 = vector.extract_strided_slice %168 {offsets = [0, 0, 0], sizes = [2, 8, 1], strides = [1, 1, 1]} : vector<2x8x4xf32> to vector<2x8x1xf32>
    %170 = vector.broadcast %169 : vector<2x8x1xf32> to vector<2x8x16xf32>
    %171 = arith.mulf %170, %152 : vector<2x8x16xf32>
    %cst_72 = arith.constant dense<0.000000e+00> : vector<2x16xf32>
    %172 = vector.multi_reduction <add>, %171, %cst_72 [1] : vector<2x8x16xf32> to vector<2x16xf32>
    %173 = vector.shape_cast %172 : vector<2x16xf32> to vector<2x1x16xf32>
    %174 = arith.mulf %173, %173 : vector<2x1x16xf32>
    %cst_73 = arith.constant dense<0.000000e+00> : vector<2x1xf32>
    %175 = vector.multi_reduction <add>, %174, %cst_73 [2] : vector<2x1x16xf32> to vector<2x1xf32>
    %176 = vector.shape_cast %175 : vector<2x1xf32> to vector<2x1x1xf32>
    %cst_74 = arith.constant 1.000000e+00 : f32
    %177 = vector.broadcast %cst_74 : f32 to vector<2x1x1xf32>
    %178 = arith.addf %177, %176 : vector<2x1x1xf32>
    %179 = arith.divf %176, %178 : vector<2x1x1xf32>
    %180 = vector.broadcast %179 : vector<2x1x1xf32> to vector<2x1x16xf32>
    %181 = arith.mulf %180, %173 : vector<2x1x16xf32>
    %cst_75 = arith.constant 9.99999993E-9 : f32
    %182 = vector.broadcast %cst_75 : f32 to vector<2x1x1xf32>
    %183 = arith.addf %176, %182 : vector<2x1x1xf32>
    %184 = math.sqrt %183 : vector<2x1x1xf32>
    %185 = vector.broadcast %184 : vector<2x1x1xf32> to vector<2x1x16xf32>
    %186 = arith.divf %181, %185 : vector<2x1x16xf32>
    %187 = vector.extract_strided_slice %168 {offsets = [0, 0, 1], sizes = [2, 8, 1], strides = [1, 1, 1]} : vector<2x8x4xf32> to vector<2x8x1xf32>
    %188 = vector.broadcast %187 : vector<2x8x1xf32> to vector<2x8x16xf32>
    %189 = arith.mulf %188, %153 : vector<2x8x16xf32>
    %cst_76 = arith.constant dense<0.000000e+00> : vector<2x16xf32>
    %190 = vector.multi_reduction <add>, %189, %cst_76 [1] : vector<2x8x16xf32> to vector<2x16xf32>
    %191 = vector.shape_cast %190 : vector<2x16xf32> to vector<2x1x16xf32>
    %192 = arith.mulf %191, %191 : vector<2x1x16xf32>
    %cst_77 = arith.constant dense<0.000000e+00> : vector<2x1xf32>
    %193 = vector.multi_reduction <add>, %192, %cst_77 [2] : vector<2x1x16xf32> to vector<2x1xf32>
    %194 = vector.shape_cast %193 : vector<2x1xf32> to vector<2x1x1xf32>
    %cst_78 = arith.constant 1.000000e+00 : f32
    %195 = vector.broadcast %cst_78 : f32 to vector<2x1x1xf32>
    %196 = arith.addf %195, %194 : vector<2x1x1xf32>
    %197 = arith.divf %194, %196 : vector<2x1x1xf32>
    %198 = vector.broadcast %197 : vector<2x1x1xf32> to vector<2x1x16xf32>
    %199 = arith.mulf %198, %191 : vector<2x1x16xf32>
    %cst_79 = arith.constant 9.99999993E-9 : f32
    %200 = vector.broadcast %cst_79 : f32 to vector<2x1x1xf32>
    %201 = arith.addf %194, %200 : vector<2x1x1xf32>
    %202 = math.sqrt %201 : vector<2x1x1xf32>
    %203 = vector.broadcast %202 : vector<2x1x1xf32> to vector<2x1x16xf32>
    %204 = arith.divf %199, %203 : vector<2x1x16xf32>
    %205 = vector.extract_strided_slice %168 {offsets = [0, 0, 2], sizes = [2, 8, 1], strides = [1, 1, 1]} : vector<2x8x4xf32> to vector<2x8x1xf32>
    %206 = vector.broadcast %205 : vector<2x8x1xf32> to vector<2x8x16xf32>
    %207 = arith.mulf %206, %154 : vector<2x8x16xf32>
    %cst_80 = arith.constant dense<0.000000e+00> : vector<2x16xf32>
    %208 = vector.multi_reduction <add>, %207, %cst_80 [1] : vector<2x8x16xf32> to vector<2x16xf32>
    %209 = vector.shape_cast %208 : vector<2x16xf32> to vector<2x1x16xf32>
    %210 = arith.mulf %209, %209 : vector<2x1x16xf32>
    %cst_81 = arith.constant dense<0.000000e+00> : vector<2x1xf32>
    %211 = vector.multi_reduction <add>, %210, %cst_81 [2] : vector<2x1x16xf32> to vector<2x1xf32>
    %212 = vector.shape_cast %211 : vector<2x1xf32> to vector<2x1x1xf32>
    %cst_82 = arith.constant 1.000000e+00 : f32
    %213 = vector.broadcast %cst_82 : f32 to vector<2x1x1xf32>
    %214 = arith.addf %213, %212 : vector<2x1x1xf32>
    %215 = arith.divf %212, %214 : vector<2x1x1xf32>
    %216 = vector.broadcast %215 : vector<2x1x1xf32> to vector<2x1x16xf32>
    %217 = arith.mulf %216, %209 : vector<2x1x16xf32>
    %cst_83 = arith.constant 9.99999993E-9 : f32
    %218 = vector.broadcast %cst_83 : f32 to vector<2x1x1xf32>
    %219 = arith.addf %212, %218 : vector<2x1x1xf32>
    %220 = math.sqrt %219 : vector<2x1x1xf32>
    %221 = vector.broadcast %220 : vector<2x1x1xf32> to vector<2x1x16xf32>
    %222 = arith.divf %217, %221 : vector<2x1x16xf32>
    %223 = vector.extract_strided_slice %168 {offsets = [0, 0, 3], sizes = [2, 8, 1], strides = [1, 1, 1]} : vector<2x8x4xf32> to vector<2x8x1xf32>
    %224 = vector.broadcast %223 : vector<2x8x1xf32> to vector<2x8x16xf32>
    %225 = arith.mulf %224, %155 : vector<2x8x16xf32>
    %cst_84 = arith.constant dense<0.000000e+00> : vector<2x16xf32>
    %226 = vector.multi_reduction <add>, %225, %cst_84 [1] : vector<2x8x16xf32> to vector<2x16xf32>
    %227 = vector.shape_cast %226 : vector<2x16xf32> to vector<2x1x16xf32>
    %228 = arith.mulf %227, %227 : vector<2x1x16xf32>
    %cst_85 = arith.constant dense<0.000000e+00> : vector<2x1xf32>
    %229 = vector.multi_reduction <add>, %228, %cst_85 [2] : vector<2x1x16xf32> to vector<2x1xf32>
    %230 = vector.shape_cast %229 : vector<2x1xf32> to vector<2x1x1xf32>
    %cst_86 = arith.constant 1.000000e+00 : f32
    %231 = vector.broadcast %cst_86 : f32 to vector<2x1x1xf32>
    %232 = arith.addf %231, %230 : vector<2x1x1xf32>
    %233 = arith.divf %230, %232 : vector<2x1x1xf32>
    %234 = vector.broadcast %233 : vector<2x1x1xf32> to vector<2x1x16xf32>
    %235 = arith.mulf %234, %227 : vector<2x1x16xf32>
    %cst_87 = arith.constant 9.99999993E-9 : f32
    %236 = vector.broadcast %cst_87 : f32 to vector<2x1x1xf32>
    %237 = arith.addf %230, %236 : vector<2x1x1xf32>
    %238 = math.sqrt %237 : vector<2x1x1xf32>
    %239 = vector.broadcast %238 : vector<2x1x1xf32> to vector<2x1x16xf32>
    %240 = arith.divf %235, %239 : vector<2x1x16xf32>
    %cst_88 = arith.constant 0.000000e+00 : f32
    %241 = vector.broadcast %cst_88 : f32 to vector<2x8x4xf32>
    %242 = vector.broadcast %186 : vector<2x1x16xf32> to vector<2x8x16xf32>
    %243 = arith.mulf %152, %242 : vector<2x8x16xf32>
    %cst_89 = arith.constant dense<0.000000e+00> : vector<2x8xf32>
    %244 = vector.multi_reduction <add>, %243, %cst_89 [2] : vector<2x8x16xf32> to vector<2x8xf32>
    %245 = vector.shape_cast %244 : vector<2x8xf32> to vector<2x8x1xf32>
    %c0_i32 = arith.constant 0 : i32
    %246 = vector.broadcast %c0_i32 : i32 to vector<2x8x4xi32>
    %247 = arith.cmpi eq, %156, %246 : vector<2x8x4xi32>
    %cst_90 = arith.constant 0.000000e+00 : f32
    %248 = vector.shape_cast %245 : vector<2x8x1xf32> to vector<2x8x1xf32>
    %249 = vector.broadcast %248 : vector<2x8x1xf32> to vector<2x8x4xf32>
    %250 = vector.broadcast %cst_90 : f32 to vector<2x8x4xf32>
    %251 = arith.select %247, %249, %250 : vector<2x8x4xi1>, vector<2x8x4xf32>
    %252 = arith.addf %241, %251 : vector<2x8x4xf32>
    %253 = vector.broadcast %204 : vector<2x1x16xf32> to vector<2x8x16xf32>
    %254 = arith.mulf %153, %253 : vector<2x8x16xf32>
    %cst_91 = arith.constant dense<0.000000e+00> : vector<2x8xf32>
    %255 = vector.multi_reduction <add>, %254, %cst_91 [2] : vector<2x8x16xf32> to vector<2x8xf32>
    %256 = vector.shape_cast %255 : vector<2x8xf32> to vector<2x8x1xf32>
    %c1_i32 = arith.constant 1 : i32
    %257 = vector.broadcast %c1_i32 : i32 to vector<2x8x4xi32>
    %258 = arith.cmpi eq, %156, %257 : vector<2x8x4xi32>
    %cst_92 = arith.constant 0.000000e+00 : f32
    %259 = vector.shape_cast %256 : vector<2x8x1xf32> to vector<2x8x1xf32>
    %260 = vector.broadcast %259 : vector<2x8x1xf32> to vector<2x8x4xf32>
    %261 = vector.broadcast %cst_92 : f32 to vector<2x8x4xf32>
    %262 = arith.select %258, %260, %261 : vector<2x8x4xi1>, vector<2x8x4xf32>
    %263 = arith.addf %252, %262 : vector<2x8x4xf32>
    %264 = vector.broadcast %222 : vector<2x1x16xf32> to vector<2x8x16xf32>
    %265 = arith.mulf %154, %264 : vector<2x8x16xf32>
    %cst_93 = arith.constant dense<0.000000e+00> : vector<2x8xf32>
    %266 = vector.multi_reduction <add>, %265, %cst_93 [2] : vector<2x8x16xf32> to vector<2x8xf32>
    %267 = vector.shape_cast %266 : vector<2x8xf32> to vector<2x8x1xf32>
    %c2_i32 = arith.constant 2 : i32
    %268 = vector.broadcast %c2_i32 : i32 to vector<2x8x4xi32>
    %269 = arith.cmpi eq, %156, %268 : vector<2x8x4xi32>
    %cst_94 = arith.constant 0.000000e+00 : f32
    %270 = vector.shape_cast %267 : vector<2x8x1xf32> to vector<2x8x1xf32>
    %271 = vector.broadcast %270 : vector<2x8x1xf32> to vector<2x8x4xf32>
    %272 = vector.broadcast %cst_94 : f32 to vector<2x8x4xf32>
    %273 = arith.select %269, %271, %272 : vector<2x8x4xi1>, vector<2x8x4xf32>
    %274 = arith.addf %263, %273 : vector<2x8x4xf32>
    %275 = vector.broadcast %240 : vector<2x1x16xf32> to vector<2x8x16xf32>
    %276 = arith.mulf %155, %275 : vector<2x8x16xf32>
    %cst_95 = arith.constant dense<0.000000e+00> : vector<2x8xf32>
    %277 = vector.multi_reduction <add>, %276, %cst_95 [2] : vector<2x8x16xf32> to vector<2x8xf32>
    %278 = vector.shape_cast %277 : vector<2x8xf32> to vector<2x8x1xf32>
    %c3_i32 = arith.constant 3 : i32
    %279 = vector.broadcast %c3_i32 : i32 to vector<2x8x4xi32>
    %280 = arith.cmpi eq, %156, %279 : vector<2x8x4xi32>
    %cst_96 = arith.constant 0.000000e+00 : f32
    %281 = vector.shape_cast %278 : vector<2x8x1xf32> to vector<2x8x1xf32>
    %282 = vector.broadcast %281 : vector<2x8x1xf32> to vector<2x8x4xf32>
    %283 = vector.broadcast %cst_96 : f32 to vector<2x8x4xf32>
    %284 = arith.select %280, %282, %283 : vector<2x8x4xi1>, vector<2x8x4xf32>
    %285 = arith.addf %274, %284 : vector<2x8x4xf32>
    %286 = arith.addf %158, %285 : vector<2x8x4xf32>
    %cst_97 = arith.constant dense<0xFF800000> : vector<2x8xf32>
    %287 = vector.multi_reduction <maximumf>, %286, %cst_97 [2] : vector<2x8x4xf32> to vector<2x8xf32>
    %288 = vector.shape_cast %287 : vector<2x8xf32> to vector<2x8x1xf32>
    %289 = vector.broadcast %288 : vector<2x8x1xf32> to vector<2x8x4xf32>
    %290 = arith.subf %286, %289 : vector<2x8x4xf32>
    %291 = math.exp %290 : vector<2x8x4xf32>
    %cst_98 = arith.constant dense<0.000000e+00> : vector<2x8xf32>
    %292 = vector.multi_reduction <add>, %291, %cst_98 [2] : vector<2x8x4xf32> to vector<2x8xf32>
    %293 = vector.shape_cast %292 : vector<2x8xf32> to vector<2x8x1xf32>
    %294 = tpu.reciprocal %293 {approx = true} : vector<2x8x1xf32> -> vector<2x8x1xf32>
    %295 = vector.broadcast %294 : vector<2x8x1xf32> to vector<2x8x4xf32>
    %296 = arith.mulf %291, %295 : vector<2x8x4xf32>
    %297 = vector.extract_strided_slice %296 {offsets = [0, 0, 0], sizes = [2, 8, 1], strides = [1, 1, 1]} : vector<2x8x4xf32> to vector<2x8x1xf32>
    %298 = vector.broadcast %297 : vector<2x8x1xf32> to vector<2x8x16xf32>
    %299 = arith.mulf %298, %152 : vector<2x8x16xf32>
    %cst_99 = arith.constant dense<0.000000e+00> : vector<2x16xf32>
    %300 = vector.multi_reduction <add>, %299, %cst_99 [1] : vector<2x8x16xf32> to vector<2x16xf32>
    %301 = vector.shape_cast %300 : vector<2x16xf32> to vector<2x1x16xf32>
    %302 = arith.mulf %301, %301 : vector<2x1x16xf32>
    %cst_100 = arith.constant dense<0.000000e+00> : vector<2x1xf32>
    %303 = vector.multi_reduction <add>, %302, %cst_100 [2] : vector<2x1x16xf32> to vector<2x1xf32>
    %304 = vector.shape_cast %303 : vector<2x1xf32> to vector<2x1x1xf32>
    %cst_101 = arith.constant 1.000000e+00 : f32
    %305 = vector.broadcast %cst_101 : f32 to vector<2x1x1xf32>
    %306 = arith.addf %305, %304 : vector<2x1x1xf32>
    %307 = arith.divf %304, %306 : vector<2x1x1xf32>
    %308 = vector.broadcast %307 : vector<2x1x1xf32> to vector<2x1x16xf32>
    %309 = arith.mulf %308, %301 : vector<2x1x16xf32>
    %cst_102 = arith.constant 9.99999993E-9 : f32
    %310 = vector.broadcast %cst_102 : f32 to vector<2x1x1xf32>
    %311 = arith.addf %304, %310 : vector<2x1x1xf32>
    %312 = math.sqrt %311 : vector<2x1x1xf32>
    %313 = vector.broadcast %312 : vector<2x1x1xf32> to vector<2x1x16xf32>
    %314 = arith.divf %309, %313 : vector<2x1x16xf32>
    %315 = vector.extract_strided_slice %296 {offsets = [0, 0, 1], sizes = [2, 8, 1], strides = [1, 1, 1]} : vector<2x8x4xf32> to vector<2x8x1xf32>
    %316 = vector.broadcast %315 : vector<2x8x1xf32> to vector<2x8x16xf32>
    %317 = arith.mulf %316, %153 : vector<2x8x16xf32>
    %cst_103 = arith.constant dense<0.000000e+00> : vector<2x16xf32>
    %318 = vector.multi_reduction <add>, %317, %cst_103 [1] : vector<2x8x16xf32> to vector<2x16xf32>
    %319 = vector.shape_cast %318 : vector<2x16xf32> to vector<2x1x16xf32>
    %320 = arith.mulf %319, %319 : vector<2x1x16xf32>
    %cst_104 = arith.constant dense<0.000000e+00> : vector<2x1xf32>
    %321 = vector.multi_reduction <add>, %320, %cst_104 [2] : vector<2x1x16xf32> to vector<2x1xf32>
    %322 = vector.shape_cast %321 : vector<2x1xf32> to vector<2x1x1xf32>
    %cst_105 = arith.constant 1.000000e+00 : f32
    %323 = vector.broadcast %cst_105 : f32 to vector<2x1x1xf32>
    %324 = arith.addf %323, %322 : vector<2x1x1xf32>
    %325 = arith.divf %322, %324 : vector<2x1x1xf32>
    %326 = vector.broadcast %325 : vector<2x1x1xf32> to vector<2x1x16xf32>
    %327 = arith.mulf %326, %319 : vector<2x1x16xf32>
    %cst_106 = arith.constant 9.99999993E-9 : f32
    %328 = vector.broadcast %cst_106 : f32 to vector<2x1x1xf32>
    %329 = arith.addf %322, %328 : vector<2x1x1xf32>
    %330 = math.sqrt %329 : vector<2x1x1xf32>
    %331 = vector.broadcast %330 : vector<2x1x1xf32> to vector<2x1x16xf32>
    %332 = arith.divf %327, %331 : vector<2x1x16xf32>
    %333 = vector.extract_strided_slice %296 {offsets = [0, 0, 2], sizes = [2, 8, 1], strides = [1, 1, 1]} : vector<2x8x4xf32> to vector<2x8x1xf32>
    %334 = vector.broadcast %333 : vector<2x8x1xf32> to vector<2x8x16xf32>
    %335 = arith.mulf %334, %154 : vector<2x8x16xf32>
    %cst_107 = arith.constant dense<0.000000e+00> : vector<2x16xf32>
    %336 = vector.multi_reduction <add>, %335, %cst_107 [1] : vector<2x8x16xf32> to vector<2x16xf32>
    %337 = vector.shape_cast %336 : vector<2x16xf32> to vector<2x1x16xf32>
    %338 = arith.mulf %337, %337 : vector<2x1x16xf32>
    %cst_108 = arith.constant dense<0.000000e+00> : vector<2x1xf32>
    %339 = vector.multi_reduction <add>, %338, %cst_108 [2] : vector<2x1x16xf32> to vector<2x1xf32>
    %340 = vector.shape_cast %339 : vector<2x1xf32> to vector<2x1x1xf32>
    %cst_109 = arith.constant 1.000000e+00 : f32
    %341 = vector.broadcast %cst_109 : f32 to vector<2x1x1xf32>
    %342 = arith.addf %341, %340 : vector<2x1x1xf32>
    %343 = arith.divf %340, %342 : vector<2x1x1xf32>
    %344 = vector.broadcast %343 : vector<2x1x1xf32> to vector<2x1x16xf32>
    %345 = arith.mulf %344, %337 : vector<2x1x16xf32>
    %cst_110 = arith.constant 9.99999993E-9 : f32
    %346 = vector.broadcast %cst_110 : f32 to vector<2x1x1xf32>
    %347 = arith.addf %340, %346 : vector<2x1x1xf32>
    %348 = math.sqrt %347 : vector<2x1x1xf32>
    %349 = vector.broadcast %348 : vector<2x1x1xf32> to vector<2x1x16xf32>
    %350 = arith.divf %345, %349 : vector<2x1x16xf32>
    %351 = vector.extract_strided_slice %296 {offsets = [0, 0, 3], sizes = [2, 8, 1], strides = [1, 1, 1]} : vector<2x8x4xf32> to vector<2x8x1xf32>
    %352 = vector.broadcast %351 : vector<2x8x1xf32> to vector<2x8x16xf32>
    %353 = arith.mulf %352, %155 : vector<2x8x16xf32>
    %cst_111 = arith.constant dense<0.000000e+00> : vector<2x16xf32>
    %354 = vector.multi_reduction <add>, %353, %cst_111 [1] : vector<2x8x16xf32> to vector<2x16xf32>
    %355 = vector.shape_cast %354 : vector<2x16xf32> to vector<2x1x16xf32>
    %356 = arith.mulf %355, %355 : vector<2x1x16xf32>
    %cst_112 = arith.constant dense<0.000000e+00> : vector<2x1xf32>
    %357 = vector.multi_reduction <add>, %356, %cst_112 [2] : vector<2x1x16xf32> to vector<2x1xf32>
    %358 = vector.shape_cast %357 : vector<2x1xf32> to vector<2x1x1xf32>
    %cst_113 = arith.constant 1.000000e+00 : f32
    %359 = vector.broadcast %cst_113 : f32 to vector<2x1x1xf32>
    %360 = arith.addf %359, %358 : vector<2x1x1xf32>
    %361 = arith.divf %358, %360 : vector<2x1x1xf32>
    %362 = vector.broadcast %361 : vector<2x1x1xf32> to vector<2x1x16xf32>
    %363 = arith.mulf %362, %355 : vector<2x1x16xf32>
    %cst_114 = arith.constant 9.99999993E-9 : f32
    %364 = vector.broadcast %cst_114 : f32 to vector<2x1x1xf32>
    %365 = arith.addf %358, %364 : vector<2x1x1xf32>
    %366 = math.sqrt %365 : vector<2x1x1xf32>
    %367 = vector.broadcast %366 : vector<2x1x1xf32> to vector<2x1x16xf32>
    %368 = arith.divf %363, %367 : vector<2x1x16xf32>
    %cst_115 = arith.constant 0.000000e+00 : f32
    %369 = vector.broadcast %cst_115 : f32 to vector<2x8x4xf32>
    %370 = vector.broadcast %314 : vector<2x1x16xf32> to vector<2x8x16xf32>
    %371 = arith.mulf %152, %370 : vector<2x8x16xf32>
    %cst_116 = arith.constant dense<0.000000e+00> : vector<2x8xf32>
    %372 = vector.multi_reduction <add>, %371, %cst_116 [2] : vector<2x8x16xf32> to vector<2x8xf32>
    %373 = vector.shape_cast %372 : vector<2x8xf32> to vector<2x8x1xf32>
    %c0_i32_117 = arith.constant 0 : i32
    %374 = vector.broadcast %c0_i32_117 : i32 to vector<2x8x4xi32>
    %375 = arith.cmpi eq, %156, %374 : vector<2x8x4xi32>
    %cst_118 = arith.constant 0.000000e+00 : f32
    %376 = vector.shape_cast %373 : vector<2x8x1xf32> to vector<2x8x1xf32>
    %377 = vector.broadcast %376 : vector<2x8x1xf32> to vector<2x8x4xf32>
    %378 = vector.broadcast %cst_118 : f32 to vector<2x8x4xf32>
    %379 = arith.select %375, %377, %378 : vector<2x8x4xi1>, vector<2x8x4xf32>
    %380 = arith.addf %369, %379 : vector<2x8x4xf32>
    %381 = vector.broadcast %332 : vector<2x1x16xf32> to vector<2x8x16xf32>
    %382 = arith.mulf %153, %381 : vector<2x8x16xf32>
    %cst_119 = arith.constant dense<0.000000e+00> : vector<2x8xf32>
    %383 = vector.multi_reduction <add>, %382, %cst_119 [2] : vector<2x8x16xf32> to vector<2x8xf32>
    %384 = vector.shape_cast %383 : vector<2x8xf32> to vector<2x8x1xf32>
    %c1_i32_120 = arith.constant 1 : i32
    %385 = vector.broadcast %c1_i32_120 : i32 to vector<2x8x4xi32>
    %386 = arith.cmpi eq, %156, %385 : vector<2x8x4xi32>
    %cst_121 = arith.constant 0.000000e+00 : f32
    %387 = vector.shape_cast %384 : vector<2x8x1xf32> to vector<2x8x1xf32>
    %388 = vector.broadcast %387 : vector<2x8x1xf32> to vector<2x8x4xf32>
    %389 = vector.broadcast %cst_121 : f32 to vector<2x8x4xf32>
    %390 = arith.select %386, %388, %389 : vector<2x8x4xi1>, vector<2x8x4xf32>
    %391 = arith.addf %380, %390 : vector<2x8x4xf32>
    %392 = vector.broadcast %350 : vector<2x1x16xf32> to vector<2x8x16xf32>
    %393 = arith.mulf %154, %392 : vector<2x8x16xf32>
    %cst_122 = arith.constant dense<0.000000e+00> : vector<2x8xf32>
    %394 = vector.multi_reduction <add>, %393, %cst_122 [2] : vector<2x8x16xf32> to vector<2x8xf32>
    %395 = vector.shape_cast %394 : vector<2x8xf32> to vector<2x8x1xf32>
    %c2_i32_123 = arith.constant 2 : i32
    %396 = vector.broadcast %c2_i32_123 : i32 to vector<2x8x4xi32>
    %397 = arith.cmpi eq, %156, %396 : vector<2x8x4xi32>
    %cst_124 = arith.constant 0.000000e+00 : f32
    %398 = vector.shape_cast %395 : vector<2x8x1xf32> to vector<2x8x1xf32>
    %399 = vector.broadcast %398 : vector<2x8x1xf32> to vector<2x8x4xf32>
    %400 = vector.broadcast %cst_124 : f32 to vector<2x8x4xf32>
    %401 = arith.select %397, %399, %400 : vector<2x8x4xi1>, vector<2x8x4xf32>
    %402 = arith.addf %391, %401 : vector<2x8x4xf32>
    %403 = vector.broadcast %368 : vector<2x1x16xf32> to vector<2x8x16xf32>
    %404 = arith.mulf %155, %403 : vector<2x8x16xf32>
    %cst_125 = arith.constant dense<0.000000e+00> : vector<2x8xf32>
    %405 = vector.multi_reduction <add>, %404, %cst_125 [2] : vector<2x8x16xf32> to vector<2x8xf32>
    %406 = vector.shape_cast %405 : vector<2x8xf32> to vector<2x8x1xf32>
    %c3_i32_126 = arith.constant 3 : i32
    %407 = vector.broadcast %c3_i32_126 : i32 to vector<2x8x4xi32>
    %408 = arith.cmpi eq, %156, %407 : vector<2x8x4xi32>
    %cst_127 = arith.constant 0.000000e+00 : f32
    %409 = vector.shape_cast %406 : vector<2x8x1xf32> to vector<2x8x1xf32>
    %410 = vector.broadcast %409 : vector<2x8x1xf32> to vector<2x8x4xf32>
    %411 = vector.broadcast %cst_127 : f32 to vector<2x8x4xf32>
    %412 = arith.select %408, %410, %411 : vector<2x8x4xi1>, vector<2x8x4xf32>
    %413 = arith.addf %402, %412 : vector<2x8x4xf32>
    %414 = arith.addf %286, %413 : vector<2x8x4xf32>
    %cst_128 = arith.constant dense<0xFF800000> : vector<2x8xf32>
    %415 = vector.multi_reduction <maximumf>, %414, %cst_128 [2] : vector<2x8x4xf32> to vector<2x8xf32>
    %416 = vector.shape_cast %415 : vector<2x8xf32> to vector<2x8x1xf32>
    %417 = vector.broadcast %416 : vector<2x8x1xf32> to vector<2x8x4xf32>
    %418 = arith.subf %414, %417 : vector<2x8x4xf32>
    %419 = math.exp %418 : vector<2x8x4xf32>
    %cst_129 = arith.constant dense<0.000000e+00> : vector<2x8xf32>
    %420 = vector.multi_reduction <add>, %419, %cst_129 [2] : vector<2x8x4xf32> to vector<2x8xf32>
    %421 = vector.shape_cast %420 : vector<2x8xf32> to vector<2x8x1xf32>
    %422 = tpu.reciprocal %421 {approx = true} : vector<2x8x1xf32> -> vector<2x8x1xf32>
    %423 = vector.broadcast %422 : vector<2x8x1xf32> to vector<2x8x4xf32>
    %424 = arith.mulf %419, %423 : vector<2x8x4xf32>
    %425 = vector.extract_strided_slice %424 {offsets = [0, 0, 0], sizes = [2, 8, 1], strides = [1, 1, 1]} : vector<2x8x4xf32> to vector<2x8x1xf32>
    %426 = vector.broadcast %425 : vector<2x8x1xf32> to vector<2x8x16xf32>
    %427 = arith.mulf %426, %152 : vector<2x8x16xf32>
    %cst_130 = arith.constant dense<0.000000e+00> : vector<2x16xf32>
    %428 = vector.multi_reduction <add>, %427, %cst_130 [1] : vector<2x8x16xf32> to vector<2x16xf32>
    %429 = vector.shape_cast %428 : vector<2x16xf32> to vector<2x1x16xf32>
    %430 = arith.mulf %429, %429 : vector<2x1x16xf32>
    %cst_131 = arith.constant dense<0.000000e+00> : vector<2x1xf32>
    %431 = vector.multi_reduction <add>, %430, %cst_131 [2] : vector<2x1x16xf32> to vector<2x1xf32>
    %432 = vector.shape_cast %431 : vector<2x1xf32> to vector<2x1x1xf32>
    %cst_132 = arith.constant 1.000000e+00 : f32
    %433 = vector.broadcast %cst_132 : f32 to vector<2x1x1xf32>
    %434 = arith.addf %433, %432 : vector<2x1x1xf32>
    %435 = arith.divf %432, %434 : vector<2x1x1xf32>
    %436 = vector.broadcast %435 : vector<2x1x1xf32> to vector<2x1x16xf32>
    %437 = arith.mulf %436, %429 : vector<2x1x16xf32>
    %cst_133 = arith.constant 9.99999993E-9 : f32
    %438 = vector.broadcast %cst_133 : f32 to vector<2x1x1xf32>
    %439 = arith.addf %432, %438 : vector<2x1x1xf32>
    %440 = math.sqrt %439 : vector<2x1x1xf32>
    %441 = vector.broadcast %440 : vector<2x1x1xf32> to vector<2x1x16xf32>
    %442 = arith.divf %437, %441 : vector<2x1x16xf32>
    %443 = vector.extract_strided_slice %424 {offsets = [0, 0, 1], sizes = [2, 8, 1], strides = [1, 1, 1]} : vector<2x8x4xf32> to vector<2x8x1xf32>
    %444 = vector.broadcast %443 : vector<2x8x1xf32> to vector<2x8x16xf32>
    %445 = arith.mulf %444, %153 : vector<2x8x16xf32>
    %cst_134 = arith.constant dense<0.000000e+00> : vector<2x16xf32>
    %446 = vector.multi_reduction <add>, %445, %cst_134 [1] : vector<2x8x16xf32> to vector<2x16xf32>
    %447 = vector.shape_cast %446 : vector<2x16xf32> to vector<2x1x16xf32>
    %448 = arith.mulf %447, %447 : vector<2x1x16xf32>
    %cst_135 = arith.constant dense<0.000000e+00> : vector<2x1xf32>
    %449 = vector.multi_reduction <add>, %448, %cst_135 [2] : vector<2x1x16xf32> to vector<2x1xf32>
    %450 = vector.shape_cast %449 : vector<2x1xf32> to vector<2x1x1xf32>
    %cst_136 = arith.constant 1.000000e+00 : f32
    %451 = vector.broadcast %cst_136 : f32 to vector<2x1x1xf32>
    %452 = arith.addf %451, %450 : vector<2x1x1xf32>
    %453 = arith.divf %450, %452 : vector<2x1x1xf32>
    %454 = vector.broadcast %453 : vector<2x1x1xf32> to vector<2x1x16xf32>
    %455 = arith.mulf %454, %447 : vector<2x1x16xf32>
    %cst_137 = arith.constant 9.99999993E-9 : f32
    %456 = vector.broadcast %cst_137 : f32 to vector<2x1x1xf32>
    %457 = arith.addf %450, %456 : vector<2x1x1xf32>
    %458 = math.sqrt %457 : vector<2x1x1xf32>
    %459 = vector.broadcast %458 : vector<2x1x1xf32> to vector<2x1x16xf32>
    %460 = arith.divf %455, %459 : vector<2x1x16xf32>
    %461 = vector.extract_strided_slice %424 {offsets = [0, 0, 2], sizes = [2, 8, 1], strides = [1, 1, 1]} : vector<2x8x4xf32> to vector<2x8x1xf32>
    %462 = vector.broadcast %461 : vector<2x8x1xf32> to vector<2x8x16xf32>
    %463 = arith.mulf %462, %154 : vector<2x8x16xf32>
    %cst_138 = arith.constant dense<0.000000e+00> : vector<2x16xf32>
    %464 = vector.multi_reduction <add>, %463, %cst_138 [1] : vector<2x8x16xf32> to vector<2x16xf32>
    %465 = vector.shape_cast %464 : vector<2x16xf32> to vector<2x1x16xf32>
    %466 = arith.mulf %465, %465 : vector<2x1x16xf32>
    %cst_139 = arith.constant dense<0.000000e+00> : vector<2x1xf32>
    %467 = vector.multi_reduction <add>, %466, %cst_139 [2] : vector<2x1x16xf32> to vector<2x1xf32>
    %468 = vector.shape_cast %467 : vector<2x1xf32> to vector<2x1x1xf32>
    %cst_140 = arith.constant 1.000000e+00 : f32
    %469 = vector.broadcast %cst_140 : f32 to vector<2x1x1xf32>
    %470 = arith.addf %469, %468 : vector<2x1x1xf32>
    %471 = arith.divf %468, %470 : vector<2x1x1xf32>
    %472 = vector.broadcast %471 : vector<2x1x1xf32> to vector<2x1x16xf32>
    %473 = arith.mulf %472, %465 : vector<2x1x16xf32>
    %cst_141 = arith.constant 9.99999993E-9 : f32
    %474 = vector.broadcast %cst_141 : f32 to vector<2x1x1xf32>
    %475 = arith.addf %468, %474 : vector<2x1x1xf32>
    %476 = math.sqrt %475 : vector<2x1x1xf32>
    %477 = vector.broadcast %476 : vector<2x1x1xf32> to vector<2x1x16xf32>
    %478 = arith.divf %473, %477 : vector<2x1x16xf32>
    %479 = vector.extract_strided_slice %424 {offsets = [0, 0, 3], sizes = [2, 8, 1], strides = [1, 1, 1]} : vector<2x8x4xf32> to vector<2x8x1xf32>
    %480 = vector.broadcast %479 : vector<2x8x1xf32> to vector<2x8x16xf32>
    %481 = arith.mulf %480, %155 : vector<2x8x16xf32>
    %cst_142 = arith.constant dense<0.000000e+00> : vector<2x16xf32>
    %482 = vector.multi_reduction <add>, %481, %cst_142 [1] : vector<2x8x16xf32> to vector<2x16xf32>
    %483 = vector.shape_cast %482 : vector<2x16xf32> to vector<2x1x16xf32>
    %484 = arith.mulf %483, %483 : vector<2x1x16xf32>
    %cst_143 = arith.constant dense<0.000000e+00> : vector<2x1xf32>
    %485 = vector.multi_reduction <add>, %484, %cst_143 [2] : vector<2x1x16xf32> to vector<2x1xf32>
    %486 = vector.shape_cast %485 : vector<2x1xf32> to vector<2x1x1xf32>
    %cst_144 = arith.constant 1.000000e+00 : f32
    %487 = vector.broadcast %cst_144 : f32 to vector<2x1x1xf32>
    %488 = arith.addf %487, %486 : vector<2x1x1xf32>
    %489 = arith.divf %486, %488 : vector<2x1x1xf32>
    %490 = vector.broadcast %489 : vector<2x1x1xf32> to vector<2x1x16xf32>
    %491 = arith.mulf %490, %483 : vector<2x1x16xf32>
    %cst_145 = arith.constant 9.99999993E-9 : f32
    %492 = vector.broadcast %cst_145 : f32 to vector<2x1x1xf32>
    %493 = arith.addf %486, %492 : vector<2x1x1xf32>
    %494 = math.sqrt %493 : vector<2x1x1xf32>
    %495 = vector.broadcast %494 : vector<2x1x1xf32> to vector<2x1x16xf32>
    %496 = arith.divf %491, %495 : vector<2x1x16xf32>
    %cst_146 = arith.constant 0.000000e+00 : f32
    %497 = vector.broadcast %cst_146 : f32 to vector<2x4x16xf32>
    %c0_i32_147 = arith.constant 0 : i32
    %498 = vector.broadcast %c0_i32_147 : i32 to vector<2x4x16xi32>
    %499 = arith.cmpi eq, %157, %498 : vector<2x4x16xi32>
    %cst_148 = arith.constant 0.000000e+00 : f32
    %500 = vector.shape_cast %442 : vector<2x1x16xf32> to vector<2x1x16xf32>
    %501 = vector.broadcast %500 : vector<2x1x16xf32> to vector<2x4x16xf32>
    %502 = vector.broadcast %cst_148 : f32 to vector<2x4x16xf32>
    %503 = arith.select %499, %501, %502 : vector<2x4x16xi1>, vector<2x4x16xf32>
    %504 = arith.addf %497, %503 : vector<2x4x16xf32>
    %c1_i32_149 = arith.constant 1 : i32
    %505 = vector.broadcast %c1_i32_149 : i32 to vector<2x4x16xi32>
    %506 = arith.cmpi eq, %157, %505 : vector<2x4x16xi32>
    %cst_150 = arith.constant 0.000000e+00 : f32
    %507 = vector.shape_cast %460 : vector<2x1x16xf32> to vector<2x1x16xf32>
    %508 = vector.broadcast %507 : vector<2x1x16xf32> to vector<2x4x16xf32>
    %509 = vector.broadcast %cst_150 : f32 to vector<2x4x16xf32>
    %510 = arith.select %506, %508, %509 : vector<2x4x16xi1>, vector<2x4x16xf32>
    %511 = arith.addf %504, %510 : vector<2x4x16xf32>
    %c2_i32_151 = arith.constant 2 : i32
    %512 = vector.broadcast %c2_i32_151 : i32 to vector<2x4x16xi32>
    %513 = arith.cmpi eq, %157, %512 : vector<2x4x16xi32>
    %cst_152 = arith.constant 0.000000e+00 : f32
    %514 = vector.shape_cast %478 : vector<2x1x16xf32> to vector<2x1x16xf32>
    %515 = vector.broadcast %514 : vector<2x1x16xf32> to vector<2x4x16xf32>
    %516 = vector.broadcast %cst_152 : f32 to vector<2x4x16xf32>
    %517 = arith.select %513, %515, %516 : vector<2x4x16xi1>, vector<2x4x16xf32>
    %518 = arith.addf %511, %517 : vector<2x4x16xf32>
    %c3_i32_153 = arith.constant 3 : i32
    %519 = vector.broadcast %c3_i32_153 : i32 to vector<2x4x16xi32>
    %520 = arith.cmpi eq, %157, %519 : vector<2x4x16xi32>
    %cst_154 = arith.constant 0.000000e+00 : f32
    %521 = vector.shape_cast %496 : vector<2x1x16xf32> to vector<2x1x16xf32>
    %522 = vector.broadcast %521 : vector<2x1x16xf32> to vector<2x4x16xf32>
    %523 = vector.broadcast %cst_154 : f32 to vector<2x4x16xf32>
    %524 = arith.select %520, %522, %523 : vector<2x4x16xi1>, vector<2x4x16xf32>
    %525 = arith.addf %518, %524 : vector<2x4x16xf32>
    "tpu.trace_start"() <{level = 10 : i32, message = "bnc,bmc->bnm"}> : () -> ()
    %cst_155 = arith.constant dense<0.000000e+00> : vector<2x4x4xf32>
    %526 = tpu.matmul %525, %525, %cst_155 {dimension_numbers = #tpu.dot_dimension_numbers<[2], [2], [1], [1], [0, 0, 0, 1, 1, 1], [0], [0]>} : vector<2x4x16xf32>, vector<2x4x16xf32>, vector<2x4x4xf32> -> vector<2x4x4xf32>
    "tpu.trace_stop"() : () -> ()
    %cst_156 = arith.constant 2.500000e-01 : f32
    %527 = vector.broadcast %cst_156 : f32 to vector<2x4x4xf32>
    %528 = arith.mulf %526, %527 : vector<2x4x4xf32>
    %cst_157 = arith.constant dense<0xFF800000> : vector<2x4xf32>
    %529 = vector.multi_reduction <maximumf>, %528, %cst_157 [2] : vector<2x4x4xf32> to vector<2x4xf32>
    %530 = vector.shape_cast %529 : vector<2x4xf32> to vector<2x4x1xf32>
    %531 = vector.broadcast %530 : vector<2x4x1xf32> to vector<2x4x4xf32>
    %532 = arith.subf %528, %531 : vector<2x4x4xf32>
    %533 = math.exp %532 : vector<2x4x4xf32>
    %cst_158 = arith.constant dense<0.000000e+00> : vector<2x4xf32>
    %534 = vector.multi_reduction <add>, %533, %cst_158 [2] : vector<2x4x4xf32> to vector<2x4xf32>
    %535 = vector.shape_cast %534 : vector<2x4xf32> to vector<2x4x1xf32>
    %536 = tpu.reciprocal %535 {approx = true} : vector<2x4x1xf32> -> vector<2x4x1xf32>
    %537 = vector.broadcast %536 : vector<2x4x1xf32> to vector<2x4x4xf32>
    %538 = arith.mulf %533, %537 : vector<2x4x4xf32>
    "tpu.trace_start"() <{level = 10 : i32, message = "bnm,bmc->bnc"}> : () -> ()
    %cst_159 = arith.constant dense<0.000000e+00> : vector<2x4x16xf32>
    %539 = tpu.matmul %538, %525, %cst_159 {dimension_numbers = #tpu.dot_dimension_numbers<[2], [1], [1], [2], [0, 0, 0, 1, 1, 2], [0], [0]>} : vector<2x4x4xf32>, vector<2x4x16xf32>, vector<2x4x16xf32> -> vector<2x4x16xf32>
    "tpu.trace_stop"() : () -> ()
    %c0_160 = arith.constant 0 : index
    %c0_161 = arith.constant 0 : index
    %c0_162 = arith.constant 0 : index
    %540 = vector.load %arg8[%c0_160, %c0_161, %c0_162] : memref<3x16x16xf32, #tpu.memory_space<vmem>>, vector<1x16x16xf32>
    %541 = vector.shape_cast %540 : vector<1x16x16xf32> to vector<16x16xf32>
    %542 = vector.shape_cast %541 : vector<16x16xf32> to vector<1x16x16xf32>
    %543 = vector.shape_cast %542 : vector<1x16x16xf32> to vector<1x16x16xf32>
    %544 = vector.broadcast %543 : vector<1x16x16xf32> to vector<2x16x16xf32>
    "tpu.trace_start"() <{level = 10 : i32, message = "bnc,bcd->bnd"}> : () -> ()
    %cst_163 = arith.constant dense<0.000000e+00> : vector<2x4x16xf32>
    %545 = tpu.matmul %539, %544, %cst_163 {dimension_numbers = #tpu.dot_dimension_numbers<[2], [1], [1], [2], [0, 0, 0, 1, 1, 2], [0], [0]>} : vector<2x4x16xf32>, vector<2x16x16xf32>, vector<2x4x16xf32> -> vector<2x4x16xf32>
    "tpu.trace_stop"() : () -> ()
    %c0_164 = arith.constant 0 : index
    %c0_165 = arith.constant 0 : index
    %c0_166 = arith.constant 0 : index
    %546 = vector.load %arg9[%c0_164, %c0_165, %c0_166] : memref<3x1x16xf32, #tpu.memory_space<vmem>>, vector<1x1x16xf32>
    %547 = vector.shape_cast %546 : vector<1x1x16xf32> to vector<1x16xf32>
    %548 = vector.shape_cast %547 : vector<1x16xf32> to vector<1x1x16xf32>
    %549 = vector.broadcast %548 : vector<1x1x16xf32> to vector<2x4x16xf32>
    %550 = arith.addf %545, %549 : vector<2x4x16xf32>
    %cst_167 = arith.constant 0.000000e+00 : f32
    %551 = vector.broadcast %cst_167 : f32 to vector<2x4x16xf32>
    %552 = arith.maximumf %550, %551 : vector<2x4x16xf32>
    %cst_168 = arith.constant dense<0.000000e+00> : vector<2x16xf32>
    %553 = vector.multi_reduction <add>, %552, %cst_168 [1] : vector<2x4x16xf32> to vector<2x16xf32>
    %cst_169 = arith.constant 4.000000e+00 : f32
    %554 = vector.broadcast %cst_169 : f32 to vector<2x16xf32>
    %555 = arith.divf %553, %554 : vector<2x16xf32>
    %cst_170 = arith.constant dense<0xFF800000> : vector<2x16xf32>
    %556 = vector.multi_reduction <maximumf>, %552, %cst_170 [1] : vector<2x4x16xf32> to vector<2x16xf32>
    %c1_171 = arith.constant 1 : index
    %c0_172 = arith.constant 0 : index
    %c0_173 = arith.constant 0 : index
    %557 = vector.load %arg7[%c1_171, %c0_172, %c0_173] : memref<3x32x64xf32, #tpu.memory_space<vmem>>, vector<1x32x64xf32>
    %558 = vector.shape_cast %557 : vector<1x32x64xf32> to vector<32x64xf32>
    %559 = vector.shape_cast %101 : vector<2x8x32xf32> to vector<16x32xf32>
    %cst_174 = arith.constant dense<0.000000e+00> : vector<16x64xf32>
    %560 = tpu.matmul %559, %558, %cst_174 {dimension_numbers = #tpu.dot_dimension_numbers<[1], [0], [0], [1], [0, 0, 1, 1], [], []>} : vector<16x32xf32>, vector<32x64xf32>, vector<16x64xf32> -> vector<16x64xf32>
    %561 = vector.shape_cast %560 : vector<16x64xf32> to vector<2x8x64xf32>
    %562 = vector.extract_strided_slice %561 {offsets = [0, 0, 0], sizes = [2, 8, 16], strides = [1, 1, 1]} : vector<2x8x64xf32> to vector<2x8x16xf32>
    %563 = vector.extract_strided_slice %561 {offsets = [0, 0, 16], sizes = [2, 8, 16], strides = [1, 1, 1]} : vector<2x8x64xf32> to vector<2x8x16xf32>
    %564 = vector.extract_strided_slice %561 {offsets = [0, 0, 32], sizes = [2, 8, 16], strides = [1, 1, 1]} : vector<2x8x64xf32> to vector<2x8x16xf32>
    %565 = vector.extract_strided_slice %561 {offsets = [0, 0, 48], sizes = [2, 8, 16], strides = [1, 1, 1]} : vector<2x8x64xf32> to vector<2x8x16xf32>
    %566 = tpu.iota {dimensions = array<i32: 2>} : vector<2x8x4xi32>
    %567 = tpu.iota {dimensions = array<i32: 1>} : vector<2x4x16xi32>
    %cst_175 = arith.constant 0.000000e+00 : f32
    %568 = vector.broadcast %cst_175 : f32 to vector<2x8x4xf32>
    %cst_176 = arith.constant dense<0xFF800000> : vector<2x8xf32>
    %569 = vector.multi_reduction <maximumf>, %568, %cst_176 [2] : vector<2x8x4xf32> to vector<2x8xf32>
    %570 = vector.shape_cast %569 : vector<2x8xf32> to vector<2x8x1xf32>
    %571 = vector.broadcast %570 : vector<2x8x1xf32> to vector<2x8x4xf32>
    %572 = arith.subf %568, %571 : vector<2x8x4xf32>
    %573 = math.exp %572 : vector<2x8x4xf32>
    %cst_177 = arith.constant dense<0.000000e+00> : vector<2x8xf32>
    %574 = vector.multi_reduction <add>, %573, %cst_177 [2] : vector<2x8x4xf32> to vector<2x8xf32>
    %575 = vector.shape_cast %574 : vector<2x8xf32> to vector<2x8x1xf32>
    %576 = tpu.reciprocal %575 {approx = true} : vector<2x8x1xf32> -> vector<2x8x1xf32>
    %577 = vector.broadcast %576 : vector<2x8x1xf32> to vector<2x8x4xf32>
    %578 = arith.mulf %573, %577 : vector<2x8x4xf32>
    %579 = vector.extract_strided_slice %578 {offsets = [0, 0, 0], sizes = [2, 8, 1], strides = [1, 1, 1]} : vector<2x8x4xf32> to vector<2x8x1xf32>
    %580 = vector.broadcast %579 : vector<2x8x1xf32> to vector<2x8x16xf32>
    %581 = arith.mulf %580, %562 : vector<2x8x16xf32>
    %cst_178 = arith.constant dense<0.000000e+00> : vector<2x16xf32>
    %582 = vector.multi_reduction <add>, %581, %cst_178 [1] : vector<2x8x16xf32> to vector<2x16xf32>
    %583 = vector.shape_cast %582 : vector<2x16xf32> to vector<2x1x16xf32>
    %584 = arith.mulf %583, %583 : vector<2x1x16xf32>
    %cst_179 = arith.constant dense<0.000000e+00> : vector<2x1xf32>
    %585 = vector.multi_reduction <add>, %584, %cst_179 [2] : vector<2x1x16xf32> to vector<2x1xf32>
    %586 = vector.shape_cast %585 : vector<2x1xf32> to vector<2x1x1xf32>
    %cst_180 = arith.constant 1.000000e+00 : f32
    %587 = vector.broadcast %cst_180 : f32 to vector<2x1x1xf32>
    %588 = arith.addf %587, %586 : vector<2x1x1xf32>
    %589 = arith.divf %586, %588 : vector<2x1x1xf32>
    %590 = vector.broadcast %589 : vector<2x1x1xf32> to vector<2x1x16xf32>
    %591 = arith.mulf %590, %583 : vector<2x1x16xf32>
    %cst_181 = arith.constant 9.99999993E-9 : f32
    %592 = vector.broadcast %cst_181 : f32 to vector<2x1x1xf32>
    %593 = arith.addf %586, %592 : vector<2x1x1xf32>
    %594 = math.sqrt %593 : vector<2x1x1xf32>
    %595 = vector.broadcast %594 : vector<2x1x1xf32> to vector<2x1x16xf32>
    %596 = arith.divf %591, %595 : vector<2x1x16xf32>
    %597 = vector.extract_strided_slice %578 {offsets = [0, 0, 1], sizes = [2, 8, 1], strides = [1, 1, 1]} : vector<2x8x4xf32> to vector<2x8x1xf32>
    %598 = vector.broadcast %597 : vector<2x8x1xf32> to vector<2x8x16xf32>
    %599 = arith.mulf %598, %563 : vector<2x8x16xf32>
    %cst_182 = arith.constant dense<0.000000e+00> : vector<2x16xf32>
    %600 = vector.multi_reduction <add>, %599, %cst_182 [1] : vector<2x8x16xf32> to vector<2x16xf32>
    %601 = vector.shape_cast %600 : vector<2x16xf32> to vector<2x1x16xf32>
    %602 = arith.mulf %601, %601 : vector<2x1x16xf32>
    %cst_183 = arith.constant dense<0.000000e+00> : vector<2x1xf32>
    %603 = vector.multi_reduction <add>, %602, %cst_183 [2] : vector<2x1x16xf32> to vector<2x1xf32>
    %604 = vector.shape_cast %603 : vector<2x1xf32> to vector<2x1x1xf32>
    %cst_184 = arith.constant 1.000000e+00 : f32
    %605 = vector.broadcast %cst_184 : f32 to vector<2x1x1xf32>
    %606 = arith.addf %605, %604 : vector<2x1x1xf32>
    %607 = arith.divf %604, %606 : vector<2x1x1xf32>
    %608 = vector.broadcast %607 : vector<2x1x1xf32> to vector<2x1x16xf32>
    %609 = arith.mulf %608, %601 : vector<2x1x16xf32>
    %cst_185 = arith.constant 9.99999993E-9 : f32
    %610 = vector.broadcast %cst_185 : f32 to vector<2x1x1xf32>
    %611 = arith.addf %604, %610 : vector<2x1x1xf32>
    %612 = math.sqrt %611 : vector<2x1x1xf32>
    %613 = vector.broadcast %612 : vector<2x1x1xf32> to vector<2x1x16xf32>
    %614 = arith.divf %609, %613 : vector<2x1x16xf32>
    %615 = vector.extract_strided_slice %578 {offsets = [0, 0, 2], sizes = [2, 8, 1], strides = [1, 1, 1]} : vector<2x8x4xf32> to vector<2x8x1xf32>
    %616 = vector.broadcast %615 : vector<2x8x1xf32> to vector<2x8x16xf32>
    %617 = arith.mulf %616, %564 : vector<2x8x16xf32>
    %cst_186 = arith.constant dense<0.000000e+00> : vector<2x16xf32>
    %618 = vector.multi_reduction <add>, %617, %cst_186 [1] : vector<2x8x16xf32> to vector<2x16xf32>
    %619 = vector.shape_cast %618 : vector<2x16xf32> to vector<2x1x16xf32>
    %620 = arith.mulf %619, %619 : vector<2x1x16xf32>
    %cst_187 = arith.constant dense<0.000000e+00> : vector<2x1xf32>
    %621 = vector.multi_reduction <add>, %620, %cst_187 [2] : vector<2x1x16xf32> to vector<2x1xf32>
    %622 = vector.shape_cast %621 : vector<2x1xf32> to vector<2x1x1xf32>
    %cst_188 = arith.constant 1.000000e+00 : f32
    %623 = vector.broadcast %cst_188 : f32 to vector<2x1x1xf32>
    %624 = arith.addf %623, %622 : vector<2x1x1xf32>
    %625 = arith.divf %622, %624 : vector<2x1x1xf32>
    %626 = vector.broadcast %625 : vector<2x1x1xf32> to vector<2x1x16xf32>
    %627 = arith.mulf %626, %619 : vector<2x1x16xf32>
    %cst_189 = arith.constant 9.99999993E-9 : f32
    %628 = vector.broadcast %cst_189 : f32 to vector<2x1x1xf32>
    %629 = arith.addf %622, %628 : vector<2x1x1xf32>
    %630 = math.sqrt %629 : vector<2x1x1xf32>
    %631 = vector.broadcast %630 : vector<2x1x1xf32> to vector<2x1x16xf32>
    %632 = arith.divf %627, %631 : vector<2x1x16xf32>
    %633 = vector.extract_strided_slice %578 {offsets = [0, 0, 3], sizes = [2, 8, 1], strides = [1, 1, 1]} : vector<2x8x4xf32> to vector<2x8x1xf32>
    %634 = vector.broadcast %633 : vector<2x8x1xf32> to vector<2x8x16xf32>
    %635 = arith.mulf %634, %565 : vector<2x8x16xf32>
    %cst_190 = arith.constant dense<0.000000e+00> : vector<2x16xf32>
    %636 = vector.multi_reduction <add>, %635, %cst_190 [1] : vector<2x8x16xf32> to vector<2x16xf32>
    %637 = vector.shape_cast %636 : vector<2x16xf32> to vector<2x1x16xf32>
    %638 = arith.mulf %637, %637 : vector<2x1x16xf32>
    %cst_191 = arith.constant dense<0.000000e+00> : vector<2x1xf32>
    %639 = vector.multi_reduction <add>, %638, %cst_191 [2] : vector<2x1x16xf32> to vector<2x1xf32>
    %640 = vector.shape_cast %639 : vector<2x1xf32> to vector<2x1x1xf32>
    %cst_192 = arith.constant 1.000000e+00 : f32
    %641 = vector.broadcast %cst_192 : f32 to vector<2x1x1xf32>
    %642 = arith.addf %641, %640 : vector<2x1x1xf32>
    %643 = arith.divf %640, %642 : vector<2x1x1xf32>
    %644 = vector.broadcast %643 : vector<2x1x1xf32> to vector<2x1x16xf32>
    %645 = arith.mulf %644, %637 : vector<2x1x16xf32>
    %cst_193 = arith.constant 9.99999993E-9 : f32
    %646 = vector.broadcast %cst_193 : f32 to vector<2x1x1xf32>
    %647 = arith.addf %640, %646 : vector<2x1x1xf32>
    %648 = math.sqrt %647 : vector<2x1x1xf32>
    %649 = vector.broadcast %648 : vector<2x1x1xf32> to vector<2x1x16xf32>
    %650 = arith.divf %645, %649 : vector<2x1x16xf32>
    %cst_194 = arith.constant 0.000000e+00 : f32
    %651 = vector.broadcast %cst_194 : f32 to vector<2x8x4xf32>
    %652 = vector.broadcast %596 : vector<2x1x16xf32> to vector<2x8x16xf32>
    %653 = arith.mulf %562, %652 : vector<2x8x16xf32>
    %cst_195 = arith.constant dense<0.000000e+00> : vector<2x8xf32>
    %654 = vector.multi_reduction <add>, %653, %cst_195 [2] : vector<2x8x16xf32> to vector<2x8xf32>
    %655 = vector.shape_cast %654 : vector<2x8xf32> to vector<2x8x1xf32>
    %c0_i32_196 = arith.constant 0 : i32
    %656 = vector.broadcast %c0_i32_196 : i32 to vector<2x8x4xi32>
    %657 = arith.cmpi eq, %566, %656 : vector<2x8x4xi32>
    %cst_197 = arith.constant 0.000000e+00 : f32
    %658 = vector.shape_cast %655 : vector<2x8x1xf32> to vector<2x8x1xf32>
    %659 = vector.broadcast %658 : vector<2x8x1xf32> to vector<2x8x4xf32>
    %660 = vector.broadcast %cst_197 : f32 to vector<2x8x4xf32>
    %661 = arith.select %657, %659, %660 : vector<2x8x4xi1>, vector<2x8x4xf32>
    %662 = arith.addf %651, %661 : vector<2x8x4xf32>
    %663 = vector.broadcast %614 : vector<2x1x16xf32> to vector<2x8x16xf32>
    %664 = arith.mulf %563, %663 : vector<2x8x16xf32>
    %cst_198 = arith.constant dense<0.000000e+00> : vector<2x8xf32>
    %665 = vector.multi_reduction <add>, %664, %cst_198 [2] : vector<2x8x16xf32> to vector<2x8xf32>
    %666 = vector.shape_cast %665 : vector<2x8xf32> to vector<2x8x1xf32>
    %c1_i32_199 = arith.constant 1 : i32
    %667 = vector.broadcast %c1_i32_199 : i32 to vector<2x8x4xi32>
    %668 = arith.cmpi eq, %566, %667 : vector<2x8x4xi32>
    %cst_200 = arith.constant 0.000000e+00 : f32
    %669 = vector.shape_cast %666 : vector<2x8x1xf32> to vector<2x8x1xf32>
    %670 = vector.broadcast %669 : vector<2x8x1xf32> to vector<2x8x4xf32>
    %671 = vector.broadcast %cst_200 : f32 to vector<2x8x4xf32>
    %672 = arith.select %668, %670, %671 : vector<2x8x4xi1>, vector<2x8x4xf32>
    %673 = arith.addf %662, %672 : vector<2x8x4xf32>
    %674 = vector.broadcast %632 : vector<2x1x16xf32> to vector<2x8x16xf32>
    %675 = arith.mulf %564, %674 : vector<2x8x16xf32>
    %cst_201 = arith.constant dense<0.000000e+00> : vector<2x8xf32>
    %676 = vector.multi_reduction <add>, %675, %cst_201 [2] : vector<2x8x16xf32> to vector<2x8xf32>
    %677 = vector.shape_cast %676 : vector<2x8xf32> to vector<2x8x1xf32>
    %c2_i32_202 = arith.constant 2 : i32
    %678 = vector.broadcast %c2_i32_202 : i32 to vector<2x8x4xi32>
    %679 = arith.cmpi eq, %566, %678 : vector<2x8x4xi32>
    %cst_203 = arith.constant 0.000000e+00 : f32
    %680 = vector.shape_cast %677 : vector<2x8x1xf32> to vector<2x8x1xf32>
    %681 = vector.broadcast %680 : vector<2x8x1xf32> to vector<2x8x4xf32>
    %682 = vector.broadcast %cst_203 : f32 to vector<2x8x4xf32>
    %683 = arith.select %679, %681, %682 : vector<2x8x4xi1>, vector<2x8x4xf32>
    %684 = arith.addf %673, %683 : vector<2x8x4xf32>
    %685 = vector.broadcast %650 : vector<2x1x16xf32> to vector<2x8x16xf32>
    %686 = arith.mulf %565, %685 : vector<2x8x16xf32>
    %cst_204 = arith.constant dense<0.000000e+00> : vector<2x8xf32>
    %687 = vector.multi_reduction <add>, %686, %cst_204 [2] : vector<2x8x16xf32> to vector<2x8xf32>
    %688 = vector.shape_cast %687 : vector<2x8xf32> to vector<2x8x1xf32>
    %c3_i32_205 = arith.constant 3 : i32
    %689 = vector.broadcast %c3_i32_205 : i32 to vector<2x8x4xi32>
    %690 = arith.cmpi eq, %566, %689 : vector<2x8x4xi32>
    %cst_206 = arith.constant 0.000000e+00 : f32
    %691 = vector.shape_cast %688 : vector<2x8x1xf32> to vector<2x8x1xf32>
    %692 = vector.broadcast %691 : vector<2x8x1xf32> to vector<2x8x4xf32>
    %693 = vector.broadcast %cst_206 : f32 to vector<2x8x4xf32>
    %694 = arith.select %690, %692, %693 : vector<2x8x4xi1>, vector<2x8x4xf32>
    %695 = arith.addf %684, %694 : vector<2x8x4xf32>
    %696 = arith.addf %568, %695 : vector<2x8x4xf32>
    %cst_207 = arith.constant dense<0xFF800000> : vector<2x8xf32>
    %697 = vector.multi_reduction <maximumf>, %696, %cst_207 [2] : vector<2x8x4xf32> to vector<2x8xf32>
    %698 = vector.shape_cast %697 : vector<2x8xf32> to vector<2x8x1xf32>
    %699 = vector.broadcast %698 : vector<2x8x1xf32> to vector<2x8x4xf32>
    %700 = arith.subf %696, %699 : vector<2x8x4xf32>
    %701 = math.exp %700 : vector<2x8x4xf32>
    %cst_208 = arith.constant dense<0.000000e+00> : vector<2x8xf32>
    %702 = vector.multi_reduction <add>, %701, %cst_208 [2] : vector<2x8x4xf32> to vector<2x8xf32>
    %703 = vector.shape_cast %702 : vector<2x8xf32> to vector<2x8x1xf32>
    %704 = tpu.reciprocal %703 {approx = true} : vector<2x8x1xf32> -> vector<2x8x1xf32>
    %705 = vector.broadcast %704 : vector<2x8x1xf32> to vector<2x8x4xf32>
    %706 = arith.mulf %701, %705 : vector<2x8x4xf32>
    %707 = vector.extract_strided_slice %706 {offsets = [0, 0, 0], sizes = [2, 8, 1], strides = [1, 1, 1]} : vector<2x8x4xf32> to vector<2x8x1xf32>
    %708 = vector.broadcast %707 : vector<2x8x1xf32> to vector<2x8x16xf32>
    %709 = arith.mulf %708, %562 : vector<2x8x16xf32>
    %cst_209 = arith.constant dense<0.000000e+00> : vector<2x16xf32>
    %710 = vector.multi_reduction <add>, %709, %cst_209 [1] : vector<2x8x16xf32> to vector<2x16xf32>
    %711 = vector.shape_cast %710 : vector<2x16xf32> to vector<2x1x16xf32>
    %712 = arith.mulf %711, %711 : vector<2x1x16xf32>
    %cst_210 = arith.constant dense<0.000000e+00> : vector<2x1xf32>
    %713 = vector.multi_reduction <add>, %712, %cst_210 [2] : vector<2x1x16xf32> to vector<2x1xf32>
    %714 = vector.shape_cast %713 : vector<2x1xf32> to vector<2x1x1xf32>
    %cst_211 = arith.constant 1.000000e+00 : f32
    %715 = vector.broadcast %cst_211 : f32 to vector<2x1x1xf32>
    %716 = arith.addf %715, %714 : vector<2x1x1xf32>
    %717 = arith.divf %714, %716 : vector<2x1x1xf32>
    %718 = vector.broadcast %717 : vector<2x1x1xf32> to vector<2x1x16xf32>
    %719 = arith.mulf %718, %711 : vector<2x1x16xf32>
    %cst_212 = arith.constant 9.99999993E-9 : f32
    %720 = vector.broadcast %cst_212 : f32 to vector<2x1x1xf32>
    %721 = arith.addf %714, %720 : vector<2x1x1xf32>
    %722 = math.sqrt %721 : vector<2x1x1xf32>
    %723 = vector.broadcast %722 : vector<2x1x1xf32> to vector<2x1x16xf32>
    %724 = arith.divf %719, %723 : vector<2x1x16xf32>
    %725 = vector.extract_strided_slice %706 {offsets = [0, 0, 1], sizes = [2, 8, 1], strides = [1, 1, 1]} : vector<2x8x4xf32> to vector<2x8x1xf32>
    %726 = vector.broadcast %725 : vector<2x8x1xf32> to vector<2x8x16xf32>
    %727 = arith.mulf %726, %563 : vector<2x8x16xf32>
    %cst_213 = arith.constant dense<0.000000e+00> : vector<2x16xf32>
    %728 = vector.multi_reduction <add>, %727, %cst_213 [1] : vector<2x8x16xf32> to vector<2x16xf32>
    %729 = vector.shape_cast %728 : vector<2x16xf32> to vector<2x1x16xf32>
    %730 = arith.mulf %729, %729 : vector<2x1x16xf32>
    %cst_214 = arith.constant dense<0.000000e+00> : vector<2x1xf32>
    %731 = vector.multi_reduction <add>, %730, %cst_214 [2] : vector<2x1x16xf32> to vector<2x1xf32>
    %732 = vector.shape_cast %731 : vector<2x1xf32> to vector<2x1x1xf32>
    %cst_215 = arith.constant 1.000000e+00 : f32
    %733 = vector.broadcast %cst_215 : f32 to vector<2x1x1xf32>
    %734 = arith.addf %733, %732 : vector<2x1x1xf32>
    %735 = arith.divf %732, %734 : vector<2x1x1xf32>
    %736 = vector.broadcast %735 : vector<2x1x1xf32> to vector<2x1x16xf32>
    %737 = arith.mulf %736, %729 : vector<2x1x16xf32>
    %cst_216 = arith.constant 9.99999993E-9 : f32
    %738 = vector.broadcast %cst_216 : f32 to vector<2x1x1xf32>
    %739 = arith.addf %732, %738 : vector<2x1x1xf32>
    %740 = math.sqrt %739 : vector<2x1x1xf32>
    %741 = vector.broadcast %740 : vector<2x1x1xf32> to vector<2x1x16xf32>
    %742 = arith.divf %737, %741 : vector<2x1x16xf32>
    %743 = vector.extract_strided_slice %706 {offsets = [0, 0, 2], sizes = [2, 8, 1], strides = [1, 1, 1]} : vector<2x8x4xf32> to vector<2x8x1xf32>
    %744 = vector.broadcast %743 : vector<2x8x1xf32> to vector<2x8x16xf32>
    %745 = arith.mulf %744, %564 : vector<2x8x16xf32>
    %cst_217 = arith.constant dense<0.000000e+00> : vector<2x16xf32>
    %746 = vector.multi_reduction <add>, %745, %cst_217 [1] : vector<2x8x16xf32> to vector<2x16xf32>
    %747 = vector.shape_cast %746 : vector<2x16xf32> to vector<2x1x16xf32>
    %748 = arith.mulf %747, %747 : vector<2x1x16xf32>
    %cst_218 = arith.constant dense<0.000000e+00> : vector<2x1xf32>
    %749 = vector.multi_reduction <add>, %748, %cst_218 [2] : vector<2x1x16xf32> to vector<2x1xf32>
    %750 = vector.shape_cast %749 : vector<2x1xf32> to vector<2x1x1xf32>
    %cst_219 = arith.constant 1.000000e+00 : f32
    %751 = vector.broadcast %cst_219 : f32 to vector<2x1x1xf32>
    %752 = arith.addf %751, %750 : vector<2x1x1xf32>
    %753 = arith.divf %750, %752 : vector<2x1x1xf32>
    %754 = vector.broadcast %753 : vector<2x1x1xf32> to vector<2x1x16xf32>
    %755 = arith.mulf %754, %747 : vector<2x1x16xf32>
    %cst_220 = arith.constant 9.99999993E-9 : f32
    %756 = vector.broadcast %cst_220 : f32 to vector<2x1x1xf32>
    %757 = arith.addf %750, %756 : vector<2x1x1xf32>
    %758 = math.sqrt %757 : vector<2x1x1xf32>
    %759 = vector.broadcast %758 : vector<2x1x1xf32> to vector<2x1x16xf32>
    %760 = arith.divf %755, %759 : vector<2x1x16xf32>
    %761 = vector.extract_strided_slice %706 {offsets = [0, 0, 3], sizes = [2, 8, 1], strides = [1, 1, 1]} : vector<2x8x4xf32> to vector<2x8x1xf32>
    %762 = vector.broadcast %761 : vector<2x8x1xf32> to vector<2x8x16xf32>
    %763 = arith.mulf %762, %565 : vector<2x8x16xf32>
    %cst_221 = arith.constant dense<0.000000e+00> : vector<2x16xf32>
    %764 = vector.multi_reduction <add>, %763, %cst_221 [1] : vector<2x8x16xf32> to vector<2x16xf32>
    %765 = vector.shape_cast %764 : vector<2x16xf32> to vector<2x1x16xf32>
    %766 = arith.mulf %765, %765 : vector<2x1x16xf32>
    %cst_222 = arith.constant dense<0.000000e+00> : vector<2x1xf32>
    %767 = vector.multi_reduction <add>, %766, %cst_222 [2] : vector<2x1x16xf32> to vector<2x1xf32>
    %768 = vector.shape_cast %767 : vector<2x1xf32> to vector<2x1x1xf32>
    %cst_223 = arith.constant 1.000000e+00 : f32
    %769 = vector.broadcast %cst_223 : f32 to vector<2x1x1xf32>
    %770 = arith.addf %769, %768 : vector<2x1x1xf32>
    %771 = arith.divf %768, %770 : vector<2x1x1xf32>
    %772 = vector.broadcast %771 : vector<2x1x1xf32> to vector<2x1x16xf32>
    %773 = arith.mulf %772, %765 : vector<2x1x16xf32>
    %cst_224 = arith.constant 9.99999993E-9 : f32
    %774 = vector.broadcast %cst_224 : f32 to vector<2x1x1xf32>
    %775 = arith.addf %768, %774 : vector<2x1x1xf32>
    %776 = math.sqrt %775 : vector<2x1x1xf32>
    %777 = vector.broadcast %776 : vector<2x1x1xf32> to vector<2x1x16xf32>
    %778 = arith.divf %773, %777 : vector<2x1x16xf32>
    %cst_225 = arith.constant 0.000000e+00 : f32
    %779 = vector.broadcast %cst_225 : f32 to vector<2x8x4xf32>
    %780 = vector.broadcast %724 : vector<2x1x16xf32> to vector<2x8x16xf32>
    %781 = arith.mulf %562, %780 : vector<2x8x16xf32>
    %cst_226 = arith.constant dense<0.000000e+00> : vector<2x8xf32>
    %782 = vector.multi_reduction <add>, %781, %cst_226 [2] : vector<2x8x16xf32> to vector<2x8xf32>
    %783 = vector.shape_cast %782 : vector<2x8xf32> to vector<2x8x1xf32>
    %c0_i32_227 = arith.constant 0 : i32
    %784 = vector.broadcast %c0_i32_227 : i32 to vector<2x8x4xi32>
    %785 = arith.cmpi eq, %566, %784 : vector<2x8x4xi32>
    %cst_228 = arith.constant 0.000000e+00 : f32
    %786 = vector.shape_cast %783 : vector<2x8x1xf32> to vector<2x8x1xf32>
    %787 = vector.broadcast %786 : vector<2x8x1xf32> to vector<2x8x4xf32>
    %788 = vector.broadcast %cst_228 : f32 to vector<2x8x4xf32>
    %789 = arith.select %785, %787, %788 : vector<2x8x4xi1>, vector<2x8x4xf32>
    %790 = arith.addf %779, %789 : vector<2x8x4xf32>
    %791 = vector.broadcast %742 : vector<2x1x16xf32> to vector<2x8x16xf32>
    %792 = arith.mulf %563, %791 : vector<2x8x16xf32>
    %cst_229 = arith.constant dense<0.000000e+00> : vector<2x8xf32>
    %793 = vector.multi_reduction <add>, %792, %cst_229 [2] : vector<2x8x16xf32> to vector<2x8xf32>
    %794 = vector.shape_cast %793 : vector<2x8xf32> to vector<2x8x1xf32>
    %c1_i32_230 = arith.constant 1 : i32
    %795 = vector.broadcast %c1_i32_230 : i32 to vector<2x8x4xi32>
    %796 = arith.cmpi eq, %566, %795 : vector<2x8x4xi32>
    %cst_231 = arith.constant 0.000000e+00 : f32
    %797 = vector.shape_cast %794 : vector<2x8x1xf32> to vector<2x8x1xf32>
    %798 = vector.broadcast %797 : vector<2x8x1xf32> to vector<2x8x4xf32>
    %799 = vector.broadcast %cst_231 : f32 to vector<2x8x4xf32>
    %800 = arith.select %796, %798, %799 : vector<2x8x4xi1>, vector<2x8x4xf32>
    %801 = arith.addf %790, %800 : vector<2x8x4xf32>
    %802 = vector.broadcast %760 : vector<2x1x16xf32> to vector<2x8x16xf32>
    %803 = arith.mulf %564, %802 : vector<2x8x16xf32>
    %cst_232 = arith.constant dense<0.000000e+00> : vector<2x8xf32>
    %804 = vector.multi_reduction <add>, %803, %cst_232 [2] : vector<2x8x16xf32> to vector<2x8xf32>
    %805 = vector.shape_cast %804 : vector<2x8xf32> to vector<2x8x1xf32>
    %c2_i32_233 = arith.constant 2 : i32
    %806 = vector.broadcast %c2_i32_233 : i32 to vector<2x8x4xi32>
    %807 = arith.cmpi eq, %566, %806 : vector<2x8x4xi32>
    %cst_234 = arith.constant 0.000000e+00 : f32
    %808 = vector.shape_cast %805 : vector<2x8x1xf32> to vector<2x8x1xf32>
    %809 = vector.broadcast %808 : vector<2x8x1xf32> to vector<2x8x4xf32>
    %810 = vector.broadcast %cst_234 : f32 to vector<2x8x4xf32>
    %811 = arith.select %807, %809, %810 : vector<2x8x4xi1>, vector<2x8x4xf32>
    %812 = arith.addf %801, %811 : vector<2x8x4xf32>
    %813 = vector.broadcast %778 : vector<2x1x16xf32> to vector<2x8x16xf32>
    %814 = arith.mulf %565, %813 : vector<2x8x16xf32>
    %cst_235 = arith.constant dense<0.000000e+00> : vector<2x8xf32>
    %815 = vector.multi_reduction <add>, %814, %cst_235 [2] : vector<2x8x16xf32> to vector<2x8xf32>
    %816 = vector.shape_cast %815 : vector<2x8xf32> to vector<2x8x1xf32>
    %c3_i32_236 = arith.constant 3 : i32
    %817 = vector.broadcast %c3_i32_236 : i32 to vector<2x8x4xi32>
    %818 = arith.cmpi eq, %566, %817 : vector<2x8x4xi32>
    %cst_237 = arith.constant 0.000000e+00 : f32
    %819 = vector.shape_cast %816 : vector<2x8x1xf32> to vector<2x8x1xf32>
    %820 = vector.broadcast %819 : vector<2x8x1xf32> to vector<2x8x4xf32>
    %821 = vector.broadcast %cst_237 : f32 to vector<2x8x4xf32>
    %822 = arith.select %818, %820, %821 : vector<2x8x4xi1>, vector<2x8x4xf32>
    %823 = arith.addf %812, %822 : vector<2x8x4xf32>
    %824 = arith.addf %696, %823 : vector<2x8x4xf32>
    %cst_238 = arith.constant dense<0xFF800000> : vector<2x8xf32>
    %825 = vector.multi_reduction <maximumf>, %824, %cst_238 [2] : vector<2x8x4xf32> to vector<2x8xf32>
    %826 = vector.shape_cast %825 : vector<2x8xf32> to vector<2x8x1xf32>
    %827 = vector.broadcast %826 : vector<2x8x1xf32> to vector<2x8x4xf32>
    %828 = arith.subf %824, %827 : vector<2x8x4xf32>
    %829 = math.exp %828 : vector<2x8x4xf32>
    %cst_239 = arith.constant dense<0.000000e+00> : vector<2x8xf32>
    %830 = vector.multi_reduction <add>, %829, %cst_239 [2] : vector<2x8x4xf32> to vector<2x8xf32>
    %831 = vector.shape_cast %830 : vector<2x8xf32> to vector<2x8x1xf32>
    %832 = tpu.reciprocal %831 {approx = true} : vector<2x8x1xf32> -> vector<2x8x1xf32>
    %833 = vector.broadcast %832 : vector<2x8x1xf32> to vector<2x8x4xf32>
    %834 = arith.mulf %829, %833 : vector<2x8x4xf32>
    %835 = vector.extract_strided_slice %834 {offsets = [0, 0, 0], sizes = [2, 8, 1], strides = [1, 1, 1]} : vector<2x8x4xf32> to vector<2x8x1xf32>
    %836 = vector.broadcast %835 : vector<2x8x1xf32> to vector<2x8x16xf32>
    %837 = arith.mulf %836, %562 : vector<2x8x16xf32>
    %cst_240 = arith.constant dense<0.000000e+00> : vector<2x16xf32>
    %838 = vector.multi_reduction <add>, %837, %cst_240 [1] : vector<2x8x16xf32> to vector<2x16xf32>
    %839 = vector.shape_cast %838 : vector<2x16xf32> to vector<2x1x16xf32>
    %840 = arith.mulf %839, %839 : vector<2x1x16xf32>
    %cst_241 = arith.constant dense<0.000000e+00> : vector<2x1xf32>
    %841 = vector.multi_reduction <add>, %840, %cst_241 [2] : vector<2x1x16xf32> to vector<2x1xf32>
    %842 = vector.shape_cast %841 : vector<2x1xf32> to vector<2x1x1xf32>
    %cst_242 = arith.constant 1.000000e+00 : f32
    %843 = vector.broadcast %cst_242 : f32 to vector<2x1x1xf32>
    %844 = arith.addf %843, %842 : vector<2x1x1xf32>
    %845 = arith.divf %842, %844 : vector<2x1x1xf32>
    %846 = vector.broadcast %845 : vector<2x1x1xf32> to vector<2x1x16xf32>
    %847 = arith.mulf %846, %839 : vector<2x1x16xf32>
    %cst_243 = arith.constant 9.99999993E-9 : f32
    %848 = vector.broadcast %cst_243 : f32 to vector<2x1x1xf32>
    %849 = arith.addf %842, %848 : vector<2x1x1xf32>
    %850 = math.sqrt %849 : vector<2x1x1xf32>
    %851 = vector.broadcast %850 : vector<2x1x1xf32> to vector<2x1x16xf32>
    %852 = arith.divf %847, %851 : vector<2x1x16xf32>
    %853 = vector.extract_strided_slice %834 {offsets = [0, 0, 1], sizes = [2, 8, 1], strides = [1, 1, 1]} : vector<2x8x4xf32> to vector<2x8x1xf32>
    %854 = vector.broadcast %853 : vector<2x8x1xf32> to vector<2x8x16xf32>
    %855 = arith.mulf %854, %563 : vector<2x8x16xf32>
    %cst_244 = arith.constant dense<0.000000e+00> : vector<2x16xf32>
    %856 = vector.multi_reduction <add>, %855, %cst_244 [1] : vector<2x8x16xf32> to vector<2x16xf32>
    %857 = vector.shape_cast %856 : vector<2x16xf32> to vector<2x1x16xf32>
    %858 = arith.mulf %857, %857 : vector<2x1x16xf32>
    %cst_245 = arith.constant dense<0.000000e+00> : vector<2x1xf32>
    %859 = vector.multi_reduction <add>, %858, %cst_245 [2] : vector<2x1x16xf32> to vector<2x1xf32>
    %860 = vector.shape_cast %859 : vector<2x1xf32> to vector<2x1x1xf32>
    %cst_246 = arith.constant 1.000000e+00 : f32
    %861 = vector.broadcast %cst_246 : f32 to vector<2x1x1xf32>
    %862 = arith.addf %861, %860 : vector<2x1x1xf32>
    %863 = arith.divf %860, %862 : vector<2x1x1xf32>
    %864 = vector.broadcast %863 : vector<2x1x1xf32> to vector<2x1x16xf32>
    %865 = arith.mulf %864, %857 : vector<2x1x16xf32>
    %cst_247 = arith.constant 9.99999993E-9 : f32
    %866 = vector.broadcast %cst_247 : f32 to vector<2x1x1xf32>
    %867 = arith.addf %860, %866 : vector<2x1x1xf32>
    %868 = math.sqrt %867 : vector<2x1x1xf32>
    %869 = vector.broadcast %868 : vector<2x1x1xf32> to vector<2x1x16xf32>
    %870 = arith.divf %865, %869 : vector<2x1x16xf32>
    %871 = vector.extract_strided_slice %834 {offsets = [0, 0, 2], sizes = [2, 8, 1], strides = [1, 1, 1]} : vector<2x8x4xf32> to vector<2x8x1xf32>
    %872 = vector.broadcast %871 : vector<2x8x1xf32> to vector<2x8x16xf32>
    %873 = arith.mulf %872, %564 : vector<2x8x16xf32>
    %cst_248 = arith.constant dense<0.000000e+00> : vector<2x16xf32>
    %874 = vector.multi_reduction <add>, %873, %cst_248 [1] : vector<2x8x16xf32> to vector<2x16xf32>
    %875 = vector.shape_cast %874 : vector<2x16xf32> to vector<2x1x16xf32>
    %876 = arith.mulf %875, %875 : vector<2x1x16xf32>
    %cst_249 = arith.constant dense<0.000000e+00> : vector<2x1xf32>
    %877 = vector.multi_reduction <add>, %876, %cst_249 [2] : vector<2x1x16xf32> to vector<2x1xf32>
    %878 = vector.shape_cast %877 : vector<2x1xf32> to vector<2x1x1xf32>
    %cst_250 = arith.constant 1.000000e+00 : f32
    %879 = vector.broadcast %cst_250 : f32 to vector<2x1x1xf32>
    %880 = arith.addf %879, %878 : vector<2x1x1xf32>
    %881 = arith.divf %878, %880 : vector<2x1x1xf32>
    %882 = vector.broadcast %881 : vector<2x1x1xf32> to vector<2x1x16xf32>
    %883 = arith.mulf %882, %875 : vector<2x1x16xf32>
    %cst_251 = arith.constant 9.99999993E-9 : f32
    %884 = vector.broadcast %cst_251 : f32 to vector<2x1x1xf32>
    %885 = arith.addf %878, %884 : vector<2x1x1xf32>
    %886 = math.sqrt %885 : vector<2x1x1xf32>
    %887 = vector.broadcast %886 : vector<2x1x1xf32> to vector<2x1x16xf32>
    %888 = arith.divf %883, %887 : vector<2x1x16xf32>
    %889 = vector.extract_strided_slice %834 {offsets = [0, 0, 3], sizes = [2, 8, 1], strides = [1, 1, 1]} : vector<2x8x4xf32> to vector<2x8x1xf32>
    %890 = vector.broadcast %889 : vector<2x8x1xf32> to vector<2x8x16xf32>
    %891 = arith.mulf %890, %565 : vector<2x8x16xf32>
    %cst_252 = arith.constant dense<0.000000e+00> : vector<2x16xf32>
    %892 = vector.multi_reduction <add>, %891, %cst_252 [1] : vector<2x8x16xf32> to vector<2x16xf32>
    %893 = vector.shape_cast %892 : vector<2x16xf32> to vector<2x1x16xf32>
    %894 = arith.mulf %893, %893 : vector<2x1x16xf32>
    %cst_253 = arith.constant dense<0.000000e+00> : vector<2x1xf32>
    %895 = vector.multi_reduction <add>, %894, %cst_253 [2] : vector<2x1x16xf32> to vector<2x1xf32>
    %896 = vector.shape_cast %895 : vector<2x1xf32> to vector<2x1x1xf32>
    %cst_254 = arith.constant 1.000000e+00 : f32
    %897 = vector.broadcast %cst_254 : f32 to vector<2x1x1xf32>
    %898 = arith.addf %897, %896 : vector<2x1x1xf32>
    %899 = arith.divf %896, %898 : vector<2x1x1xf32>
    %900 = vector.broadcast %899 : vector<2x1x1xf32> to vector<2x1x16xf32>
    %901 = arith.mulf %900, %893 : vector<2x1x16xf32>
    %cst_255 = arith.constant 9.99999993E-9 : f32
    %902 = vector.broadcast %cst_255 : f32 to vector<2x1x1xf32>
    %903 = arith.addf %896, %902 : vector<2x1x1xf32>
    %904 = math.sqrt %903 : vector<2x1x1xf32>
    %905 = vector.broadcast %904 : vector<2x1x1xf32> to vector<2x1x16xf32>
    %906 = arith.divf %901, %905 : vector<2x1x16xf32>
    %cst_256 = arith.constant 0.000000e+00 : f32
    %907 = vector.broadcast %cst_256 : f32 to vector<2x4x16xf32>
    %c0_i32_257 = arith.constant 0 : i32
    %908 = vector.broadcast %c0_i32_257 : i32 to vector<2x4x16xi32>
    %909 = arith.cmpi eq, %567, %908 : vector<2x4x16xi32>
    %cst_258 = arith.constant 0.000000e+00 : f32
    %910 = vector.shape_cast %852 : vector<2x1x16xf32> to vector<2x1x16xf32>
    %911 = vector.broadcast %910 : vector<2x1x16xf32> to vector<2x4x16xf32>
    %912 = vector.broadcast %cst_258 : f32 to vector<2x4x16xf32>
    %913 = arith.select %909, %911, %912 : vector<2x4x16xi1>, vector<2x4x16xf32>
    %914 = arith.addf %907, %913 : vector<2x4x16xf32>
    %c1_i32_259 = arith.constant 1 : i32
    %915 = vector.broadcast %c1_i32_259 : i32 to vector<2x4x16xi32>
    %916 = arith.cmpi eq, %567, %915 : vector<2x4x16xi32>
    %cst_260 = arith.constant 0.000000e+00 : f32
    %917 = vector.shape_cast %870 : vector<2x1x16xf32> to vector<2x1x16xf32>
    %918 = vector.broadcast %917 : vector<2x1x16xf32> to vector<2x4x16xf32>
    %919 = vector.broadcast %cst_260 : f32 to vector<2x4x16xf32>
    %920 = arith.select %916, %918, %919 : vector<2x4x16xi1>, vector<2x4x16xf32>
    %921 = arith.addf %914, %920 : vector<2x4x16xf32>
    %c2_i32_261 = arith.constant 2 : i32
    %922 = vector.broadcast %c2_i32_261 : i32 to vector<2x4x16xi32>
    %923 = arith.cmpi eq, %567, %922 : vector<2x4x16xi32>
    %cst_262 = arith.constant 0.000000e+00 : f32
    %924 = vector.shape_cast %888 : vector<2x1x16xf32> to vector<2x1x16xf32>
    %925 = vector.broadcast %924 : vector<2x1x16xf32> to vector<2x4x16xf32>
    %926 = vector.broadcast %cst_262 : f32 to vector<2x4x16xf32>
    %927 = arith.select %923, %925, %926 : vector<2x4x16xi1>, vector<2x4x16xf32>
    %928 = arith.addf %921, %927 : vector<2x4x16xf32>
    %c3_i32_263 = arith.constant 3 : i32
    %929 = vector.broadcast %c3_i32_263 : i32 to vector<2x4x16xi32>
    %930 = arith.cmpi eq, %567, %929 : vector<2x4x16xi32>
    %cst_264 = arith.constant 0.000000e+00 : f32
    %931 = vector.shape_cast %906 : vector<2x1x16xf32> to vector<2x1x16xf32>
    %932 = vector.broadcast %931 : vector<2x1x16xf32> to vector<2x4x16xf32>
    %933 = vector.broadcast %cst_264 : f32 to vector<2x4x16xf32>
    %934 = arith.select %930, %932, %933 : vector<2x4x16xi1>, vector<2x4x16xf32>
    %935 = arith.addf %928, %934 : vector<2x4x16xf32>
    "tpu.trace_start"() <{level = 10 : i32, message = "bnc,bmc->bnm"}> : () -> ()
    %cst_265 = arith.constant dense<0.000000e+00> : vector<2x4x4xf32>
    %936 = tpu.matmul %935, %935, %cst_265 {dimension_numbers = #tpu.dot_dimension_numbers<[2], [2], [1], [1], [0, 0, 0, 1, 1, 1], [0], [0]>} : vector<2x4x16xf32>, vector<2x4x16xf32>, vector<2x4x4xf32> -> vector<2x4x4xf32>
    "tpu.trace_stop"() : () -> ()
    %cst_266 = arith.constant 2.500000e-01 : f32
    %937 = vector.broadcast %cst_266 : f32 to vector<2x4x4xf32>
    %938 = arith.mulf %936, %937 : vector<2x4x4xf32>
    %cst_267 = arith.constant dense<0xFF800000> : vector<2x4xf32>
    %939 = vector.multi_reduction <maximumf>, %938, %cst_267 [2] : vector<2x4x4xf32> to vector<2x4xf32>
    %940 = vector.shape_cast %939 : vector<2x4xf32> to vector<2x4x1xf32>
    %941 = vector.broadcast %940 : vector<2x4x1xf32> to vector<2x4x4xf32>
    %942 = arith.subf %938, %941 : vector<2x4x4xf32>
    %943 = math.exp %942 : vector<2x4x4xf32>
    %cst_268 = arith.constant dense<0.000000e+00> : vector<2x4xf32>
    %944 = vector.multi_reduction <add>, %943, %cst_268 [2] : vector<2x4x4xf32> to vector<2x4xf32>
    %945 = vector.shape_cast %944 : vector<2x4xf32> to vector<2x4x1xf32>
    %946 = tpu.reciprocal %945 {approx = true} : vector<2x4x1xf32> -> vector<2x4x1xf32>
    %947 = vector.broadcast %946 : vector<2x4x1xf32> to vector<2x4x4xf32>
    %948 = arith.mulf %943, %947 : vector<2x4x4xf32>
    "tpu.trace_start"() <{level = 10 : i32, message = "bnm,bmc->bnc"}> : () -> ()
    %cst_269 = arith.constant dense<0.000000e+00> : vector<2x4x16xf32>
    %949 = tpu.matmul %948, %935, %cst_269 {dimension_numbers = #tpu.dot_dimension_numbers<[2], [1], [1], [2], [0, 0, 0, 1, 1, 2], [0], [0]>} : vector<2x4x4xf32>, vector<2x4x16xf32>, vector<2x4x16xf32> -> vector<2x4x16xf32>
    "tpu.trace_stop"() : () -> ()
    %c1_270 = arith.constant 1 : index
    %c0_271 = arith.constant 0 : index
    %c0_272 = arith.constant 0 : index
    %950 = vector.load %arg8[%c1_270, %c0_271, %c0_272] : memref<3x16x16xf32, #tpu.memory_space<vmem>>, vector<1x16x16xf32>
    %951 = vector.shape_cast %950 : vector<1x16x16xf32> to vector<16x16xf32>
    %952 = vector.shape_cast %951 : vector<16x16xf32> to vector<1x16x16xf32>
    %953 = vector.shape_cast %952 : vector<1x16x16xf32> to vector<1x16x16xf32>
    %954 = vector.broadcast %953 : vector<1x16x16xf32> to vector<2x16x16xf32>
    "tpu.trace_start"() <{level = 10 : i32, message = "bnc,bcd->bnd"}> : () -> ()
    %cst_273 = arith.constant dense<0.000000e+00> : vector<2x4x16xf32>
    %955 = tpu.matmul %949, %954, %cst_273 {dimension_numbers = #tpu.dot_dimension_numbers<[2], [1], [1], [2], [0, 0, 0, 1, 1, 2], [0], [0]>} : vector<2x4x16xf32>, vector<2x16x16xf32>, vector<2x4x16xf32> -> vector<2x4x16xf32>
    "tpu.trace_stop"() : () -> ()
    %c1_274 = arith.constant 1 : index
    %c0_275 = arith.constant 0 : index
    %c0_276 = arith.constant 0 : index
    %956 = vector.load %arg9[%c1_274, %c0_275, %c0_276] : memref<3x1x16xf32, #tpu.memory_space<vmem>>, vector<1x1x16xf32>
    %957 = vector.shape_cast %956 : vector<1x1x16xf32> to vector<1x16xf32>
    %958 = vector.shape_cast %957 : vector<1x16xf32> to vector<1x1x16xf32>
    %959 = vector.broadcast %958 : vector<1x1x16xf32> to vector<2x4x16xf32>
    %960 = arith.addf %955, %959 : vector<2x4x16xf32>
    %cst_277 = arith.constant 0.000000e+00 : f32
    %961 = vector.broadcast %cst_277 : f32 to vector<2x4x16xf32>
    %962 = arith.maximumf %960, %961 : vector<2x4x16xf32>
    %cst_278 = arith.constant dense<0.000000e+00> : vector<2x16xf32>
    %963 = vector.multi_reduction <add>, %962, %cst_278 [1] : vector<2x4x16xf32> to vector<2x16xf32>
    %cst_279 = arith.constant 4.000000e+00 : f32
    %964 = vector.broadcast %cst_279 : f32 to vector<2x16xf32>
    %965 = arith.divf %963, %964 : vector<2x16xf32>
    %cst_280 = arith.constant dense<0xFF800000> : vector<2x16xf32>
    %966 = vector.multi_reduction <maximumf>, %962, %cst_280 [1] : vector<2x4x16xf32> to vector<2x16xf32>
    %c2_281 = arith.constant 2 : index
    %c0_282 = arith.constant 0 : index
    %c0_283 = arith.constant 0 : index
    %967 = vector.load %arg7[%c2_281, %c0_282, %c0_283] : memref<3x32x64xf32, #tpu.memory_space<vmem>>, vector<1x32x64xf32>
    %968 = vector.shape_cast %967 : vector<1x32x64xf32> to vector<32x64xf32>
    %969 = vector.shape_cast %146 : vector<2x8x32xf32> to vector<16x32xf32>
    %cst_284 = arith.constant dense<0.000000e+00> : vector<16x64xf32>
    %970 = tpu.matmul %969, %968, %cst_284 {dimension_numbers = #tpu.dot_dimension_numbers<[1], [0], [0], [1], [0, 0, 1, 1], [], []>} : vector<16x32xf32>, vector<32x64xf32>, vector<16x64xf32> -> vector<16x64xf32>
    %971 = vector.shape_cast %970 : vector<16x64xf32> to vector<2x8x64xf32>
    %972 = vector.extract_strided_slice %971 {offsets = [0, 0, 0], sizes = [2, 8, 16], strides = [1, 1, 1]} : vector<2x8x64xf32> to vector<2x8x16xf32>
    %973 = vector.extract_strided_slice %971 {offsets = [0, 0, 16], sizes = [2, 8, 16], strides = [1, 1, 1]} : vector<2x8x64xf32> to vector<2x8x16xf32>
    %974 = vector.extract_strided_slice %971 {offsets = [0, 0, 32], sizes = [2, 8, 16], strides = [1, 1, 1]} : vector<2x8x64xf32> to vector<2x8x16xf32>
    %975 = vector.extract_strided_slice %971 {offsets = [0, 0, 48], sizes = [2, 8, 16], strides = [1, 1, 1]} : vector<2x8x64xf32> to vector<2x8x16xf32>
    %976 = tpu.iota {dimensions = array<i32: 2>} : vector<2x8x4xi32>
    %977 = tpu.iota {dimensions = array<i32: 1>} : vector<2x4x16xi32>
    %cst_285 = arith.constant 0.000000e+00 : f32
    %978 = vector.broadcast %cst_285 : f32 to vector<2x8x4xf32>
    %cst_286 = arith.constant dense<0xFF800000> : vector<2x8xf32>
    %979 = vector.multi_reduction <maximumf>, %978, %cst_286 [2] : vector<2x8x4xf32> to vector<2x8xf32>
    %980 = vector.shape_cast %979 : vector<2x8xf32> to vector<2x8x1xf32>
    %981 = vector.broadcast %980 : vector<2x8x1xf32> to vector<2x8x4xf32>
    %982 = arith.subf %978, %981 : vector<2x8x4xf32>
    %983 = math.exp %982 : vector<2x8x4xf32>
    %cst_287 = arith.constant dense<0.000000e+00> : vector<2x8xf32>
    %984 = vector.multi_reduction <add>, %983, %cst_287 [2] : vector<2x8x4xf32> to vector<2x8xf32>
    %985 = vector.shape_cast %984 : vector<2x8xf32> to vector<2x8x1xf32>
    %986 = tpu.reciprocal %985 {approx = true} : vector<2x8x1xf32> -> vector<2x8x1xf32>
    %987 = vector.broadcast %986 : vector<2x8x1xf32> to vector<2x8x4xf32>
    %988 = arith.mulf %983, %987 : vector<2x8x4xf32>
    %989 = vector.extract_strided_slice %988 {offsets = [0, 0, 0], sizes = [2, 8, 1], strides = [1, 1, 1]} : vector<2x8x4xf32> to vector<2x8x1xf32>
    %990 = vector.broadcast %989 : vector<2x8x1xf32> to vector<2x8x16xf32>
    %991 = arith.mulf %990, %972 : vector<2x8x16xf32>
    %cst_288 = arith.constant dense<0.000000e+00> : vector<2x16xf32>
    %992 = vector.multi_reduction <add>, %991, %cst_288 [1] : vector<2x8x16xf32> to vector<2x16xf32>
    %993 = vector.shape_cast %992 : vector<2x16xf32> to vector<2x1x16xf32>
    %994 = arith.mulf %993, %993 : vector<2x1x16xf32>
    %cst_289 = arith.constant dense<0.000000e+00> : vector<2x1xf32>
    %995 = vector.multi_reduction <add>, %994, %cst_289 [2] : vector<2x1x16xf32> to vector<2x1xf32>
    %996 = vector.shape_cast %995 : vector<2x1xf32> to vector<2x1x1xf32>
    %cst_290 = arith.constant 1.000000e+00 : f32
    %997 = vector.broadcast %cst_290 : f32 to vector<2x1x1xf32>
    %998 = arith.addf %997, %996 : vector<2x1x1xf32>
    %999 = arith.divf %996, %998 : vector<2x1x1xf32>
    %1000 = vector.broadcast %999 : vector<2x1x1xf32> to vector<2x1x16xf32>
    %1001 = arith.mulf %1000, %993 : vector<2x1x16xf32>
    %cst_291 = arith.constant 9.99999993E-9 : f32
    %1002 = vector.broadcast %cst_291 : f32 to vector<2x1x1xf32>
    %1003 = arith.addf %996, %1002 : vector<2x1x1xf32>
    %1004 = math.sqrt %1003 : vector<2x1x1xf32>
    %1005 = vector.broadcast %1004 : vector<2x1x1xf32> to vector<2x1x16xf32>
    %1006 = arith.divf %1001, %1005 : vector<2x1x16xf32>
    %1007 = vector.extract_strided_slice %988 {offsets = [0, 0, 1], sizes = [2, 8, 1], strides = [1, 1, 1]} : vector<2x8x4xf32> to vector<2x8x1xf32>
    %1008 = vector.broadcast %1007 : vector<2x8x1xf32> to vector<2x8x16xf32>
    %1009 = arith.mulf %1008, %973 : vector<2x8x16xf32>
    %cst_292 = arith.constant dense<0.000000e+00> : vector<2x16xf32>
    %1010 = vector.multi_reduction <add>, %1009, %cst_292 [1] : vector<2x8x16xf32> to vector<2x16xf32>
    %1011 = vector.shape_cast %1010 : vector<2x16xf32> to vector<2x1x16xf32>
    %1012 = arith.mulf %1011, %1011 : vector<2x1x16xf32>
    %cst_293 = arith.constant dense<0.000000e+00> : vector<2x1xf32>
    %1013 = vector.multi_reduction <add>, %1012, %cst_293 [2] : vector<2x1x16xf32> to vector<2x1xf32>
    %1014 = vector.shape_cast %1013 : vector<2x1xf32> to vector<2x1x1xf32>
    %cst_294 = arith.constant 1.000000e+00 : f32
    %1015 = vector.broadcast %cst_294 : f32 to vector<2x1x1xf32>
    %1016 = arith.addf %1015, %1014 : vector<2x1x1xf32>
    %1017 = arith.divf %1014, %1016 : vector<2x1x1xf32>
    %1018 = vector.broadcast %1017 : vector<2x1x1xf32> to vector<2x1x16xf32>
    %1019 = arith.mulf %1018, %1011 : vector<2x1x16xf32>
    %cst_295 = arith.constant 9.99999993E-9 : f32
    %1020 = vector.broadcast %cst_295 : f32 to vector<2x1x1xf32>
    %1021 = arith.addf %1014, %1020 : vector<2x1x1xf32>
    %1022 = math.sqrt %1021 : vector<2x1x1xf32>
    %1023 = vector.broadcast %1022 : vector<2x1x1xf32> to vector<2x1x16xf32>
    %1024 = arith.divf %1019, %1023 : vector<2x1x16xf32>
    %1025 = vector.extract_strided_slice %988 {offsets = [0, 0, 2], sizes = [2, 8, 1], strides = [1, 1, 1]} : vector<2x8x4xf32> to vector<2x8x1xf32>
    %1026 = vector.broadcast %1025 : vector<2x8x1xf32> to vector<2x8x16xf32>
    %1027 = arith.mulf %1026, %974 : vector<2x8x16xf32>
    %cst_296 = arith.constant dense<0.000000e+00> : vector<2x16xf32>
    %1028 = vector.multi_reduction <add>, %1027, %cst_296 [1] : vector<2x8x16xf32> to vector<2x16xf32>
    %1029 = vector.shape_cast %1028 : vector<2x16xf32> to vector<2x1x16xf32>
    %1030 = arith.mulf %1029, %1029 : vector<2x1x16xf32>
    %cst_297 = arith.constant dense<0.000000e+00> : vector<2x1xf32>
    %1031 = vector.multi_reduction <add>, %1030, %cst_297 [2] : vector<2x1x16xf32> to vector<2x1xf32>
    %1032 = vector.shape_cast %1031 : vector<2x1xf32> to vector<2x1x1xf32>
    %cst_298 = arith.constant 1.000000e+00 : f32
    %1033 = vector.broadcast %cst_298 : f32 to vector<2x1x1xf32>
    %1034 = arith.addf %1033, %1032 : vector<2x1x1xf32>
    %1035 = arith.divf %1032, %1034 : vector<2x1x1xf32>
    %1036 = vector.broadcast %1035 : vector<2x1x1xf32> to vector<2x1x16xf32>
    %1037 = arith.mulf %1036, %1029 : vector<2x1x16xf32>
    %cst_299 = arith.constant 9.99999993E-9 : f32
    %1038 = vector.broadcast %cst_299 : f32 to vector<2x1x1xf32>
    %1039 = arith.addf %1032, %1038 : vector<2x1x1xf32>
    %1040 = math.sqrt %1039 : vector<2x1x1xf32>
    %1041 = vector.broadcast %1040 : vector<2x1x1xf32> to vector<2x1x16xf32>
    %1042 = arith.divf %1037, %1041 : vector<2x1x16xf32>
    %1043 = vector.extract_strided_slice %988 {offsets = [0, 0, 3], sizes = [2, 8, 1], strides = [1, 1, 1]} : vector<2x8x4xf32> to vector<2x8x1xf32>
    %1044 = vector.broadcast %1043 : vector<2x8x1xf32> to vector<2x8x16xf32>
    %1045 = arith.mulf %1044, %975 : vector<2x8x16xf32>
    %cst_300 = arith.constant dense<0.000000e+00> : vector<2x16xf32>
    %1046 = vector.multi_reduction <add>, %1045, %cst_300 [1] : vector<2x8x16xf32> to vector<2x16xf32>
    %1047 = vector.shape_cast %1046 : vector<2x16xf32> to vector<2x1x16xf32>
    %1048 = arith.mulf %1047, %1047 : vector<2x1x16xf32>
    %cst_301 = arith.constant dense<0.000000e+00> : vector<2x1xf32>
    %1049 = vector.multi_reduction <add>, %1048, %cst_301 [2] : vector<2x1x16xf32> to vector<2x1xf32>
    %1050 = vector.shape_cast %1049 : vector<2x1xf32> to vector<2x1x1xf32>
    %cst_302 = arith.constant 1.000000e+00 : f32
    %1051 = vector.broadcast %cst_302 : f32 to vector<2x1x1xf32>
    %1052 = arith.addf %1051, %1050 : vector<2x1x1xf32>
    %1053 = arith.divf %1050, %1052 : vector<2x1x1xf32>
    %1054 = vector.broadcast %1053 : vector<2x1x1xf32> to vector<2x1x16xf32>
    %1055 = arith.mulf %1054, %1047 : vector<2x1x16xf32>
    %cst_303 = arith.constant 9.99999993E-9 : f32
    %1056 = vector.broadcast %cst_303 : f32 to vector<2x1x1xf32>
    %1057 = arith.addf %1050, %1056 : vector<2x1x1xf32>
    %1058 = math.sqrt %1057 : vector<2x1x1xf32>
    %1059 = vector.broadcast %1058 : vector<2x1x1xf32> to vector<2x1x16xf32>
    %1060 = arith.divf %1055, %1059 : vector<2x1x16xf32>
    %cst_304 = arith.constant 0.000000e+00 : f32
    %1061 = vector.broadcast %cst_304 : f32 to vector<2x8x4xf32>
    %1062 = vector.broadcast %1006 : vector<2x1x16xf32> to vector<2x8x16xf32>
    %1063 = arith.mulf %972, %1062 : vector<2x8x16xf32>
    %cst_305 = arith.constant dense<0.000000e+00> : vector<2x8xf32>
    %1064 = vector.multi_reduction <add>, %1063, %cst_305 [2] : vector<2x8x16xf32> to vector<2x8xf32>
    %1065 = vector.shape_cast %1064 : vector<2x8xf32> to vector<2x8x1xf32>
    %c0_i32_306 = arith.constant 0 : i32
    %1066 = vector.broadcast %c0_i32_306 : i32 to vector<2x8x4xi32>
    %1067 = arith.cmpi eq, %976, %1066 : vector<2x8x4xi32>
    %cst_307 = arith.constant 0.000000e+00 : f32
    %1068 = vector.shape_cast %1065 : vector<2x8x1xf32> to vector<2x8x1xf32>
    %1069 = vector.broadcast %1068 : vector<2x8x1xf32> to vector<2x8x4xf32>
    %1070 = vector.broadcast %cst_307 : f32 to vector<2x8x4xf32>
    %1071 = arith.select %1067, %1069, %1070 : vector<2x8x4xi1>, vector<2x8x4xf32>
    %1072 = arith.addf %1061, %1071 : vector<2x8x4xf32>
    %1073 = vector.broadcast %1024 : vector<2x1x16xf32> to vector<2x8x16xf32>
    %1074 = arith.mulf %973, %1073 : vector<2x8x16xf32>
    %cst_308 = arith.constant dense<0.000000e+00> : vector<2x8xf32>
    %1075 = vector.multi_reduction <add>, %1074, %cst_308 [2] : vector<2x8x16xf32> to vector<2x8xf32>
    %1076 = vector.shape_cast %1075 : vector<2x8xf32> to vector<2x8x1xf32>
    %c1_i32_309 = arith.constant 1 : i32
    %1077 = vector.broadcast %c1_i32_309 : i32 to vector<2x8x4xi32>
    %1078 = arith.cmpi eq, %976, %1077 : vector<2x8x4xi32>
    %cst_310 = arith.constant 0.000000e+00 : f32
    %1079 = vector.shape_cast %1076 : vector<2x8x1xf32> to vector<2x8x1xf32>
    %1080 = vector.broadcast %1079 : vector<2x8x1xf32> to vector<2x8x4xf32>
    %1081 = vector.broadcast %cst_310 : f32 to vector<2x8x4xf32>
    %1082 = arith.select %1078, %1080, %1081 : vector<2x8x4xi1>, vector<2x8x4xf32>
    %1083 = arith.addf %1072, %1082 : vector<2x8x4xf32>
    %1084 = vector.broadcast %1042 : vector<2x1x16xf32> to vector<2x8x16xf32>
    %1085 = arith.mulf %974, %1084 : vector<2x8x16xf32>
    %cst_311 = arith.constant dense<0.000000e+00> : vector<2x8xf32>
    %1086 = vector.multi_reduction <add>, %1085, %cst_311 [2] : vector<2x8x16xf32> to vector<2x8xf32>
    %1087 = vector.shape_cast %1086 : vector<2x8xf32> to vector<2x8x1xf32>
    %c2_i32_312 = arith.constant 2 : i32
    %1088 = vector.broadcast %c2_i32_312 : i32 to vector<2x8x4xi32>
    %1089 = arith.cmpi eq, %976, %1088 : vector<2x8x4xi32>
    %cst_313 = arith.constant 0.000000e+00 : f32
    %1090 = vector.shape_cast %1087 : vector<2x8x1xf32> to vector<2x8x1xf32>
    %1091 = vector.broadcast %1090 : vector<2x8x1xf32> to vector<2x8x4xf32>
    %1092 = vector.broadcast %cst_313 : f32 to vector<2x8x4xf32>
    %1093 = arith.select %1089, %1091, %1092 : vector<2x8x4xi1>, vector<2x8x4xf32>
    %1094 = arith.addf %1083, %1093 : vector<2x8x4xf32>
    %1095 = vector.broadcast %1060 : vector<2x1x16xf32> to vector<2x8x16xf32>
    %1096 = arith.mulf %975, %1095 : vector<2x8x16xf32>
    %cst_314 = arith.constant dense<0.000000e+00> : vector<2x8xf32>
    %1097 = vector.multi_reduction <add>, %1096, %cst_314 [2] : vector<2x8x16xf32> to vector<2x8xf32>
    %1098 = vector.shape_cast %1097 : vector<2x8xf32> to vector<2x8x1xf32>
    %c3_i32_315 = arith.constant 3 : i32
    %1099 = vector.broadcast %c3_i32_315 : i32 to vector<2x8x4xi32>
    %1100 = arith.cmpi eq, %976, %1099 : vector<2x8x4xi32>
    %cst_316 = arith.constant 0.000000e+00 : f32
    %1101 = vector.shape_cast %1098 : vector<2x8x1xf32> to vector<2x8x1xf32>
    %1102 = vector.broadcast %1101 : vector<2x8x1xf32> to vector<2x8x4xf32>
    %1103 = vector.broadcast %cst_316 : f32 to vector<2x8x4xf32>
    %1104 = arith.select %1100, %1102, %1103 : vector<2x8x4xi1>, vector<2x8x4xf32>
    %1105 = arith.addf %1094, %1104 : vector<2x8x4xf32>
    %1106 = arith.addf %978, %1105 : vector<2x8x4xf32>
    %cst_317 = arith.constant dense<0xFF800000> : vector<2x8xf32>
    %1107 = vector.multi_reduction <maximumf>, %1106, %cst_317 [2] : vector<2x8x4xf32> to vector<2x8xf32>
    %1108 = vector.shape_cast %1107 : vector<2x8xf32> to vector<2x8x1xf32>
    %1109 = vector.broadcast %1108 : vector<2x8x1xf32> to vector<2x8x4xf32>
    %1110 = arith.subf %1106, %1109 : vector<2x8x4xf32>
    %1111 = math.exp %1110 : vector<2x8x4xf32>
    %cst_318 = arith.constant dense<0.000000e+00> : vector<2x8xf32>
    %1112 = vector.multi_reduction <add>, %1111, %cst_318 [2] : vector<2x8x4xf32> to vector<2x8xf32>
    %1113 = vector.shape_cast %1112 : vector<2x8xf32> to vector<2x8x1xf32>
    %1114 = tpu.reciprocal %1113 {approx = true} : vector<2x8x1xf32> -> vector<2x8x1xf32>
    %1115 = vector.broadcast %1114 : vector<2x8x1xf32> to vector<2x8x4xf32>
    %1116 = arith.mulf %1111, %1115 : vector<2x8x4xf32>
    %1117 = vector.extract_strided_slice %1116 {offsets = [0, 0, 0], sizes = [2, 8, 1], strides = [1, 1, 1]} : vector<2x8x4xf32> to vector<2x8x1xf32>
    %1118 = vector.broadcast %1117 : vector<2x8x1xf32> to vector<2x8x16xf32>
    %1119 = arith.mulf %1118, %972 : vector<2x8x16xf32>
    %cst_319 = arith.constant dense<0.000000e+00> : vector<2x16xf32>
    %1120 = vector.multi_reduction <add>, %1119, %cst_319 [1] : vector<2x8x16xf32> to vector<2x16xf32>
    %1121 = vector.shape_cast %1120 : vector<2x16xf32> to vector<2x1x16xf32>
    %1122 = arith.mulf %1121, %1121 : vector<2x1x16xf32>
    %cst_320 = arith.constant dense<0.000000e+00> : vector<2x1xf32>
    %1123 = vector.multi_reduction <add>, %1122, %cst_320 [2] : vector<2x1x16xf32> to vector<2x1xf32>
    %1124 = vector.shape_cast %1123 : vector<2x1xf32> to vector<2x1x1xf32>
    %cst_321 = arith.constant 1.000000e+00 : f32
    %1125 = vector.broadcast %cst_321 : f32 to vector<2x1x1xf32>
    %1126 = arith.addf %1125, %1124 : vector<2x1x1xf32>
    %1127 = arith.divf %1124, %1126 : vector<2x1x1xf32>
    %1128 = vector.broadcast %1127 : vector<2x1x1xf32> to vector<2x1x16xf32>
    %1129 = arith.mulf %1128, %1121 : vector<2x1x16xf32>
    %cst_322 = arith.constant 9.99999993E-9 : f32
    %1130 = vector.broadcast %cst_322 : f32 to vector<2x1x1xf32>
    %1131 = arith.addf %1124, %1130 : vector<2x1x1xf32>
    %1132 = math.sqrt %1131 : vector<2x1x1xf32>
    %1133 = vector.broadcast %1132 : vector<2x1x1xf32> to vector<2x1x16xf32>
    %1134 = arith.divf %1129, %1133 : vector<2x1x16xf32>
    %1135 = vector.extract_strided_slice %1116 {offsets = [0, 0, 1], sizes = [2, 8, 1], strides = [1, 1, 1]} : vector<2x8x4xf32> to vector<2x8x1xf32>
    %1136 = vector.broadcast %1135 : vector<2x8x1xf32> to vector<2x8x16xf32>
    %1137 = arith.mulf %1136, %973 : vector<2x8x16xf32>
    %cst_323 = arith.constant dense<0.000000e+00> : vector<2x16xf32>
    %1138 = vector.multi_reduction <add>, %1137, %cst_323 [1] : vector<2x8x16xf32> to vector<2x16xf32>
    %1139 = vector.shape_cast %1138 : vector<2x16xf32> to vector<2x1x16xf32>
    %1140 = arith.mulf %1139, %1139 : vector<2x1x16xf32>
    %cst_324 = arith.constant dense<0.000000e+00> : vector<2x1xf32>
    %1141 = vector.multi_reduction <add>, %1140, %cst_324 [2] : vector<2x1x16xf32> to vector<2x1xf32>
    %1142 = vector.shape_cast %1141 : vector<2x1xf32> to vector<2x1x1xf32>
    %cst_325 = arith.constant 1.000000e+00 : f32
    %1143 = vector.broadcast %cst_325 : f32 to vector<2x1x1xf32>
    %1144 = arith.addf %1143, %1142 : vector<2x1x1xf32>
    %1145 = arith.divf %1142, %1144 : vector<2x1x1xf32>
    %1146 = vector.broadcast %1145 : vector<2x1x1xf32> to vector<2x1x16xf32>
    %1147 = arith.mulf %1146, %1139 : vector<2x1x16xf32>
    %cst_326 = arith.constant 9.99999993E-9 : f32
    %1148 = vector.broadcast %cst_326 : f32 to vector<2x1x1xf32>
    %1149 = arith.addf %1142, %1148 : vector<2x1x1xf32>
    %1150 = math.sqrt %1149 : vector<2x1x1xf32>
    %1151 = vector.broadcast %1150 : vector<2x1x1xf32> to vector<2x1x16xf32>
    %1152 = arith.divf %1147, %1151 : vector<2x1x16xf32>
    %1153 = vector.extract_strided_slice %1116 {offsets = [0, 0, 2], sizes = [2, 8, 1], strides = [1, 1, 1]} : vector<2x8x4xf32> to vector<2x8x1xf32>
    %1154 = vector.broadcast %1153 : vector<2x8x1xf32> to vector<2x8x16xf32>
    %1155 = arith.mulf %1154, %974 : vector<2x8x16xf32>
    %cst_327 = arith.constant dense<0.000000e+00> : vector<2x16xf32>
    %1156 = vector.multi_reduction <add>, %1155, %cst_327 [1] : vector<2x8x16xf32> to vector<2x16xf32>
    %1157 = vector.shape_cast %1156 : vector<2x16xf32> to vector<2x1x16xf32>
    %1158 = arith.mulf %1157, %1157 : vector<2x1x16xf32>
    %cst_328 = arith.constant dense<0.000000e+00> : vector<2x1xf32>
    %1159 = vector.multi_reduction <add>, %1158, %cst_328 [2] : vector<2x1x16xf32> to vector<2x1xf32>
    %1160 = vector.shape_cast %1159 : vector<2x1xf32> to vector<2x1x1xf32>
    %cst_329 = arith.constant 1.000000e+00 : f32
    %1161 = vector.broadcast %cst_329 : f32 to vector<2x1x1xf32>
    %1162 = arith.addf %1161, %1160 : vector<2x1x1xf32>
    %1163 = arith.divf %1160, %1162 : vector<2x1x1xf32>
    %1164 = vector.broadcast %1163 : vector<2x1x1xf32> to vector<2x1x16xf32>
    %1165 = arith.mulf %1164, %1157 : vector<2x1x16xf32>
    %cst_330 = arith.constant 9.99999993E-9 : f32
    %1166 = vector.broadcast %cst_330 : f32 to vector<2x1x1xf32>
    %1167 = arith.addf %1160, %1166 : vector<2x1x1xf32>
    %1168 = math.sqrt %1167 : vector<2x1x1xf32>
    %1169 = vector.broadcast %1168 : vector<2x1x1xf32> to vector<2x1x16xf32>
    %1170 = arith.divf %1165, %1169 : vector<2x1x16xf32>
    %1171 = vector.extract_strided_slice %1116 {offsets = [0, 0, 3], sizes = [2, 8, 1], strides = [1, 1, 1]} : vector<2x8x4xf32> to vector<2x8x1xf32>
    %1172 = vector.broadcast %1171 : vector<2x8x1xf32> to vector<2x8x16xf32>
    %1173 = arith.mulf %1172, %975 : vector<2x8x16xf32>
    %cst_331 = arith.constant dense<0.000000e+00> : vector<2x16xf32>
    %1174 = vector.multi_reduction <add>, %1173, %cst_331 [1] : vector<2x8x16xf32> to vector<2x16xf32>
    %1175 = vector.shape_cast %1174 : vector<2x16xf32> to vector<2x1x16xf32>
    %1176 = arith.mulf %1175, %1175 : vector<2x1x16xf32>
    %cst_332 = arith.constant dense<0.000000e+00> : vector<2x1xf32>
    %1177 = vector.multi_reduction <add>, %1176, %cst_332 [2] : vector<2x1x16xf32> to vector<2x1xf32>
    %1178 = vector.shape_cast %1177 : vector<2x1xf32> to vector<2x1x1xf32>
    %cst_333 = arith.constant 1.000000e+00 : f32
    %1179 = vector.broadcast %cst_333 : f32 to vector<2x1x1xf32>
    %1180 = arith.addf %1179, %1178 : vector<2x1x1xf32>
    %1181 = arith.divf %1178, %1180 : vector<2x1x1xf32>
    %1182 = vector.broadcast %1181 : vector<2x1x1xf32> to vector<2x1x16xf32>
    %1183 = arith.mulf %1182, %1175 : vector<2x1x16xf32>
    %cst_334 = arith.constant 9.99999993E-9 : f32
    %1184 = vector.broadcast %cst_334 : f32 to vector<2x1x1xf32>
    %1185 = arith.addf %1178, %1184 : vector<2x1x1xf32>
    %1186 = math.sqrt %1185 : vector<2x1x1xf32>
    %1187 = vector.broadcast %1186 : vector<2x1x1xf32> to vector<2x1x16xf32>
    %1188 = arith.divf %1183, %1187 : vector<2x1x16xf32>
    %cst_335 = arith.constant 0.000000e+00 : f32
    %1189 = vector.broadcast %cst_335 : f32 to vector<2x8x4xf32>
    %1190 = vector.broadcast %1134 : vector<2x1x16xf32> to vector<2x8x16xf32>
    %1191 = arith.mulf %972, %1190 : vector<2x8x16xf32>
    %cst_336 = arith.constant dense<0.000000e+00> : vector<2x8xf32>
    %1192 = vector.multi_reduction <add>, %1191, %cst_336 [2] : vector<2x8x16xf32> to vector<2x8xf32>
    %1193 = vector.shape_cast %1192 : vector<2x8xf32> to vector<2x8x1xf32>
    %c0_i32_337 = arith.constant 0 : i32
    %1194 = vector.broadcast %c0_i32_337 : i32 to vector<2x8x4xi32>
    %1195 = arith.cmpi eq, %976, %1194 : vector<2x8x4xi32>
    %cst_338 = arith.constant 0.000000e+00 : f32
    %1196 = vector.shape_cast %1193 : vector<2x8x1xf32> to vector<2x8x1xf32>
    %1197 = vector.broadcast %1196 : vector<2x8x1xf32> to vector<2x8x4xf32>
    %1198 = vector.broadcast %cst_338 : f32 to vector<2x8x4xf32>
    %1199 = arith.select %1195, %1197, %1198 : vector<2x8x4xi1>, vector<2x8x4xf32>
    %1200 = arith.addf %1189, %1199 : vector<2x8x4xf32>
    %1201 = vector.broadcast %1152 : vector<2x1x16xf32> to vector<2x8x16xf32>
    %1202 = arith.mulf %973, %1201 : vector<2x8x16xf32>
    %cst_339 = arith.constant dense<0.000000e+00> : vector<2x8xf32>
    %1203 = vector.multi_reduction <add>, %1202, %cst_339 [2] : vector<2x8x16xf32> to vector<2x8xf32>
    %1204 = vector.shape_cast %1203 : vector<2x8xf32> to vector<2x8x1xf32>
    %c1_i32_340 = arith.constant 1 : i32
    %1205 = vector.broadcast %c1_i32_340 : i32 to vector<2x8x4xi32>
    %1206 = arith.cmpi eq, %976, %1205 : vector<2x8x4xi32>
    %cst_341 = arith.constant 0.000000e+00 : f32
    %1207 = vector.shape_cast %1204 : vector<2x8x1xf32> to vector<2x8x1xf32>
    %1208 = vector.broadcast %1207 : vector<2x8x1xf32> to vector<2x8x4xf32>
    %1209 = vector.broadcast %cst_341 : f32 to vector<2x8x4xf32>
    %1210 = arith.select %1206, %1208, %1209 : vector<2x8x4xi1>, vector<2x8x4xf32>
    %1211 = arith.addf %1200, %1210 : vector<2x8x4xf32>
    %1212 = vector.broadcast %1170 : vector<2x1x16xf32> to vector<2x8x16xf32>
    %1213 = arith.mulf %974, %1212 : vector<2x8x16xf32>
    %cst_342 = arith.constant dense<0.000000e+00> : vector<2x8xf32>
    %1214 = vector.multi_reduction <add>, %1213, %cst_342 [2] : vector<2x8x16xf32> to vector<2x8xf32>
    %1215 = vector.shape_cast %1214 : vector<2x8xf32> to vector<2x8x1xf32>
    %c2_i32_343 = arith.constant 2 : i32
    %1216 = vector.broadcast %c2_i32_343 : i32 to vector<2x8x4xi32>
    %1217 = arith.cmpi eq, %976, %1216 : vector<2x8x4xi32>
    %cst_344 = arith.constant 0.000000e+00 : f32
    %1218 = vector.shape_cast %1215 : vector<2x8x1xf32> to vector<2x8x1xf32>
    %1219 = vector.broadcast %1218 : vector<2x8x1xf32> to vector<2x8x4xf32>
    %1220 = vector.broadcast %cst_344 : f32 to vector<2x8x4xf32>
    %1221 = arith.select %1217, %1219, %1220 : vector<2x8x4xi1>, vector<2x8x4xf32>
    %1222 = arith.addf %1211, %1221 : vector<2x8x4xf32>
    %1223 = vector.broadcast %1188 : vector<2x1x16xf32> to vector<2x8x16xf32>
    %1224 = arith.mulf %975, %1223 : vector<2x8x16xf32>
    %cst_345 = arith.constant dense<0.000000e+00> : vector<2x8xf32>
    %1225 = vector.multi_reduction <add>, %1224, %cst_345 [2] : vector<2x8x16xf32> to vector<2x8xf32>
    %1226 = vector.shape_cast %1225 : vector<2x8xf32> to vector<2x8x1xf32>
    %c3_i32_346 = arith.constant 3 : i32
    %1227 = vector.broadcast %c3_i32_346 : i32 to vector<2x8x4xi32>
    %1228 = arith.cmpi eq, %976, %1227 : vector<2x8x4xi32>
    %cst_347 = arith.constant 0.000000e+00 : f32
    %1229 = vector.shape_cast %1226 : vector<2x8x1xf32> to vector<2x8x1xf32>
    %1230 = vector.broadcast %1229 : vector<2x8x1xf32> to vector<2x8x4xf32>
    %1231 = vector.broadcast %cst_347 : f32 to vector<2x8x4xf32>
    %1232 = arith.select %1228, %1230, %1231 : vector<2x8x4xi1>, vector<2x8x4xf32>
    %1233 = arith.addf %1222, %1232 : vector<2x8x4xf32>
    %1234 = arith.addf %1106, %1233 : vector<2x8x4xf32>
    %cst_348 = arith.constant dense<0xFF800000> : vector<2x8xf32>
    %1235 = vector.multi_reduction <maximumf>, %1234, %cst_348 [2] : vector<2x8x4xf32> to vector<2x8xf32>
    %1236 = vector.shape_cast %1235 : vector<2x8xf32> to vector<2x8x1xf32>
    %1237 = vector.broadcast %1236 : vector<2x8x1xf32> to vector<2x8x4xf32>
    %1238 = arith.subf %1234, %1237 : vector<2x8x4xf32>
    %1239 = math.exp %1238 : vector<2x8x4xf32>
    %cst_349 = arith.constant dense<0.000000e+00> : vector<2x8xf32>
    %1240 = vector.multi_reduction <add>, %1239, %cst_349 [2] : vector<2x8x4xf32> to vector<2x8xf32>
    %1241 = vector.shape_cast %1240 : vector<2x8xf32> to vector<2x8x1xf32>
    %1242 = tpu.reciprocal %1241 {approx = true} : vector<2x8x1xf32> -> vector<2x8x1xf32>
    %1243 = vector.broadcast %1242 : vector<2x8x1xf32> to vector<2x8x4xf32>
    %1244 = arith.mulf %1239, %1243 : vector<2x8x4xf32>
    %1245 = vector.extract_strided_slice %1244 {offsets = [0, 0, 0], sizes = [2, 8, 1], strides = [1, 1, 1]} : vector<2x8x4xf32> to vector<2x8x1xf32>
    %1246 = vector.broadcast %1245 : vector<2x8x1xf32> to vector<2x8x16xf32>
    %1247 = arith.mulf %1246, %972 : vector<2x8x16xf32>
    %cst_350 = arith.constant dense<0.000000e+00> : vector<2x16xf32>
    %1248 = vector.multi_reduction <add>, %1247, %cst_350 [1] : vector<2x8x16xf32> to vector<2x16xf32>
    %1249 = vector.shape_cast %1248 : vector<2x16xf32> to vector<2x1x16xf32>
    %1250 = arith.mulf %1249, %1249 : vector<2x1x16xf32>
    %cst_351 = arith.constant dense<0.000000e+00> : vector<2x1xf32>
    %1251 = vector.multi_reduction <add>, %1250, %cst_351 [2] : vector<2x1x16xf32> to vector<2x1xf32>
    %1252 = vector.shape_cast %1251 : vector<2x1xf32> to vector<2x1x1xf32>
    %cst_352 = arith.constant 1.000000e+00 : f32
    %1253 = vector.broadcast %cst_352 : f32 to vector<2x1x1xf32>
    %1254 = arith.addf %1253, %1252 : vector<2x1x1xf32>
    %1255 = arith.divf %1252, %1254 : vector<2x1x1xf32>
    %1256 = vector.broadcast %1255 : vector<2x1x1xf32> to vector<2x1x16xf32>
    %1257 = arith.mulf %1256, %1249 : vector<2x1x16xf32>
    %cst_353 = arith.constant 9.99999993E-9 : f32
    %1258 = vector.broadcast %cst_353 : f32 to vector<2x1x1xf32>
    %1259 = arith.addf %1252, %1258 : vector<2x1x1xf32>
    %1260 = math.sqrt %1259 : vector<2x1x1xf32>
    %1261 = vector.broadcast %1260 : vector<2x1x1xf32> to vector<2x1x16xf32>
    %1262 = arith.divf %1257, %1261 : vector<2x1x16xf32>
    %1263 = vector.extract_strided_slice %1244 {offsets = [0, 0, 1], sizes = [2, 8, 1], strides = [1, 1, 1]} : vector<2x8x4xf32> to vector<2x8x1xf32>
    %1264 = vector.broadcast %1263 : vector<2x8x1xf32> to vector<2x8x16xf32>
    %1265 = arith.mulf %1264, %973 : vector<2x8x16xf32>
    %cst_354 = arith.constant dense<0.000000e+00> : vector<2x16xf32>
    %1266 = vector.multi_reduction <add>, %1265, %cst_354 [1] : vector<2x8x16xf32> to vector<2x16xf32>
    %1267 = vector.shape_cast %1266 : vector<2x16xf32> to vector<2x1x16xf32>
    %1268 = arith.mulf %1267, %1267 : vector<2x1x16xf32>
    %cst_355 = arith.constant dense<0.000000e+00> : vector<2x1xf32>
    %1269 = vector.multi_reduction <add>, %1268, %cst_355 [2] : vector<2x1x16xf32> to vector<2x1xf32>
    %1270 = vector.shape_cast %1269 : vector<2x1xf32> to vector<2x1x1xf32>
    %cst_356 = arith.constant 1.000000e+00 : f32
    %1271 = vector.broadcast %cst_356 : f32 to vector<2x1x1xf32>
    %1272 = arith.addf %1271, %1270 : vector<2x1x1xf32>
    %1273 = arith.divf %1270, %1272 : vector<2x1x1xf32>
    %1274 = vector.broadcast %1273 : vector<2x1x1xf32> to vector<2x1x16xf32>
    %1275 = arith.mulf %1274, %1267 : vector<2x1x16xf32>
    %cst_357 = arith.constant 9.99999993E-9 : f32
    %1276 = vector.broadcast %cst_357 : f32 to vector<2x1x1xf32>
    %1277 = arith.addf %1270, %1276 : vector<2x1x1xf32>
    %1278 = math.sqrt %1277 : vector<2x1x1xf32>
    %1279 = vector.broadcast %1278 : vector<2x1x1xf32> to vector<2x1x16xf32>
    %1280 = arith.divf %1275, %1279 : vector<2x1x16xf32>
    %1281 = vector.extract_strided_slice %1244 {offsets = [0, 0, 2], sizes = [2, 8, 1], strides = [1, 1, 1]} : vector<2x8x4xf32> to vector<2x8x1xf32>
    %1282 = vector.broadcast %1281 : vector<2x8x1xf32> to vector<2x8x16xf32>
    %1283 = arith.mulf %1282, %974 : vector<2x8x16xf32>
    %cst_358 = arith.constant dense<0.000000e+00> : vector<2x16xf32>
    %1284 = vector.multi_reduction <add>, %1283, %cst_358 [1] : vector<2x8x16xf32> to vector<2x16xf32>
    %1285 = vector.shape_cast %1284 : vector<2x16xf32> to vector<2x1x16xf32>
    %1286 = arith.mulf %1285, %1285 : vector<2x1x16xf32>
    %cst_359 = arith.constant dense<0.000000e+00> : vector<2x1xf32>
    %1287 = vector.multi_reduction <add>, %1286, %cst_359 [2] : vector<2x1x16xf32> to vector<2x1xf32>
    %1288 = vector.shape_cast %1287 : vector<2x1xf32> to vector<2x1x1xf32>
    %cst_360 = arith.constant 1.000000e+00 : f32
    %1289 = vector.broadcast %cst_360 : f32 to vector<2x1x1xf32>
    %1290 = arith.addf %1289, %1288 : vector<2x1x1xf32>
    %1291 = arith.divf %1288, %1290 : vector<2x1x1xf32>
    %1292 = vector.broadcast %1291 : vector<2x1x1xf32> to vector<2x1x16xf32>
    %1293 = arith.mulf %1292, %1285 : vector<2x1x16xf32>
    %cst_361 = arith.constant 9.99999993E-9 : f32
    %1294 = vector.broadcast %cst_361 : f32 to vector<2x1x1xf32>
    %1295 = arith.addf %1288, %1294 : vector<2x1x1xf32>
    %1296 = math.sqrt %1295 : vector<2x1x1xf32>
    %1297 = vector.broadcast %1296 : vector<2x1x1xf32> to vector<2x1x16xf32>
    %1298 = arith.divf %1293, %1297 : vector<2x1x16xf32>
    %1299 = vector.extract_strided_slice %1244 {offsets = [0, 0, 3], sizes = [2, 8, 1], strides = [1, 1, 1]} : vector<2x8x4xf32> to vector<2x8x1xf32>
    %1300 = vector.broadcast %1299 : vector<2x8x1xf32> to vector<2x8x16xf32>
    %1301 = arith.mulf %1300, %975 : vector<2x8x16xf32>
    %cst_362 = arith.constant dense<0.000000e+00> : vector<2x16xf32>
    %1302 = vector.multi_reduction <add>, %1301, %cst_362 [1] : vector<2x8x16xf32> to vector<2x16xf32>
    %1303 = vector.shape_cast %1302 : vector<2x16xf32> to vector<2x1x16xf32>
    %1304 = arith.mulf %1303, %1303 : vector<2x1x16xf32>
    %cst_363 = arith.constant dense<0.000000e+00> : vector<2x1xf32>
    %1305 = vector.multi_reduction <add>, %1304, %cst_363 [2] : vector<2x1x16xf32> to vector<2x1xf32>
    %1306 = vector.shape_cast %1305 : vector<2x1xf32> to vector<2x1x1xf32>
    %cst_364 = arith.constant 1.000000e+00 : f32
    %1307 = vector.broadcast %cst_364 : f32 to vector<2x1x1xf32>
    %1308 = arith.addf %1307, %1306 : vector<2x1x1xf32>
    %1309 = arith.divf %1306, %1308 : vector<2x1x1xf32>
    %1310 = vector.broadcast %1309 : vector<2x1x1xf32> to vector<2x1x16xf32>
    %1311 = arith.mulf %1310, %1303 : vector<2x1x16xf32>
    %cst_365 = arith.constant 9.99999993E-9 : f32
    %1312 = vector.broadcast %cst_365 : f32 to vector<2x1x1xf32>
    %1313 = arith.addf %1306, %1312 : vector<2x1x1xf32>
    %1314 = math.sqrt %1313 : vector<2x1x1xf32>
    %1315 = vector.broadcast %1314 : vector<2x1x1xf32> to vector<2x1x16xf32>
    %1316 = arith.divf %1311, %1315 : vector<2x1x16xf32>
    %cst_366 = arith.constant 0.000000e+00 : f32
    %1317 = vector.broadcast %cst_366 : f32 to vector<2x4x16xf32>
    %c0_i32_367 = arith.constant 0 : i32
    %1318 = vector.broadcast %c0_i32_367 : i32 to vector<2x4x16xi32>
    %1319 = arith.cmpi eq, %977, %1318 : vector<2x4x16xi32>
    %cst_368 = arith.constant 0.000000e+00 : f32
    %1320 = vector.shape_cast %1262 : vector<2x1x16xf32> to vector<2x1x16xf32>
    %1321 = vector.broadcast %1320 : vector<2x1x16xf32> to vector<2x4x16xf32>
    %1322 = vector.broadcast %cst_368 : f32 to vector<2x4x16xf32>
    %1323 = arith.select %1319, %1321, %1322 : vector<2x4x16xi1>, vector<2x4x16xf32>
    %1324 = arith.addf %1317, %1323 : vector<2x4x16xf32>
    %c1_i32_369 = arith.constant 1 : i32
    %1325 = vector.broadcast %c1_i32_369 : i32 to vector<2x4x16xi32>
    %1326 = arith.cmpi eq, %977, %1325 : vector<2x4x16xi32>
    %cst_370 = arith.constant 0.000000e+00 : f32
    %1327 = vector.shape_cast %1280 : vector<2x1x16xf32> to vector<2x1x16xf32>
    %1328 = vector.broadcast %1327 : vector<2x1x16xf32> to vector<2x4x16xf32>
    %1329 = vector.broadcast %cst_370 : f32 to vector<2x4x16xf32>
    %1330 = arith.select %1326, %1328, %1329 : vector<2x4x16xi1>, vector<2x4x16xf32>
    %1331 = arith.addf %1324, %1330 : vector<2x4x16xf32>
    %c2_i32_371 = arith.constant 2 : i32
    %1332 = vector.broadcast %c2_i32_371 : i32 to vector<2x4x16xi32>
    %1333 = arith.cmpi eq, %977, %1332 : vector<2x4x16xi32>
    %cst_372 = arith.constant 0.000000e+00 : f32
    %1334 = vector.shape_cast %1298 : vector<2x1x16xf32> to vector<2x1x16xf32>
    %1335 = vector.broadcast %1334 : vector<2x1x16xf32> to vector<2x4x16xf32>
    %1336 = vector.broadcast %cst_372 : f32 to vector<2x4x16xf32>
    %1337 = arith.select %1333, %1335, %1336 : vector<2x4x16xi1>, vector<2x4x16xf32>
    %1338 = arith.addf %1331, %1337 : vector<2x4x16xf32>
    %c3_i32_373 = arith.constant 3 : i32
    %1339 = vector.broadcast %c3_i32_373 : i32 to vector<2x4x16xi32>
    %1340 = arith.cmpi eq, %977, %1339 : vector<2x4x16xi32>
    %cst_374 = arith.constant 0.000000e+00 : f32
    %1341 = vector.shape_cast %1316 : vector<2x1x16xf32> to vector<2x1x16xf32>
    %1342 = vector.broadcast %1341 : vector<2x1x16xf32> to vector<2x4x16xf32>
    %1343 = vector.broadcast %cst_374 : f32 to vector<2x4x16xf32>
    %1344 = arith.select %1340, %1342, %1343 : vector<2x4x16xi1>, vector<2x4x16xf32>
    %1345 = arith.addf %1338, %1344 : vector<2x4x16xf32>
    "tpu.trace_start"() <{level = 10 : i32, message = "bnc,bmc->bnm"}> : () -> ()
    %cst_375 = arith.constant dense<0.000000e+00> : vector<2x4x4xf32>
    %1346 = tpu.matmul %1345, %1345, %cst_375 {dimension_numbers = #tpu.dot_dimension_numbers<[2], [2], [1], [1], [0, 0, 0, 1, 1, 1], [0], [0]>} : vector<2x4x16xf32>, vector<2x4x16xf32>, vector<2x4x4xf32> -> vector<2x4x4xf32>
    "tpu.trace_stop"() : () -> ()
    %cst_376 = arith.constant 2.500000e-01 : f32
    %1347 = vector.broadcast %cst_376 : f32 to vector<2x4x4xf32>
    %1348 = arith.mulf %1346, %1347 : vector<2x4x4xf32>
    %cst_377 = arith.constant dense<0xFF800000> : vector<2x4xf32>
    %1349 = vector.multi_reduction <maximumf>, %1348, %cst_377 [2] : vector<2x4x4xf32> to vector<2x4xf32>
    %1350 = vector.shape_cast %1349 : vector<2x4xf32> to vector<2x4x1xf32>
    %1351 = vector.broadcast %1350 : vector<2x4x1xf32> to vector<2x4x4xf32>
    %1352 = arith.subf %1348, %1351 : vector<2x4x4xf32>
    %1353 = math.exp %1352 : vector<2x4x4xf32>
    %cst_378 = arith.constant dense<0.000000e+00> : vector<2x4xf32>
    %1354 = vector.multi_reduction <add>, %1353, %cst_378 [2] : vector<2x4x4xf32> to vector<2x4xf32>
    %1355 = vector.shape_cast %1354 : vector<2x4xf32> to vector<2x4x1xf32>
    %1356 = tpu.reciprocal %1355 {approx = true} : vector<2x4x1xf32> -> vector<2x4x1xf32>
    %1357 = vector.broadcast %1356 : vector<2x4x1xf32> to vector<2x4x4xf32>
    %1358 = arith.mulf %1353, %1357 : vector<2x4x4xf32>
    "tpu.trace_start"() <{level = 10 : i32, message = "bnm,bmc->bnc"}> : () -> ()
    %cst_379 = arith.constant dense<0.000000e+00> : vector<2x4x16xf32>
    %1359 = tpu.matmul %1358, %1345, %cst_379 {dimension_numbers = #tpu.dot_dimension_numbers<[2], [1], [1], [2], [0, 0, 0, 1, 1, 2], [0], [0]>} : vector<2x4x4xf32>, vector<2x4x16xf32>, vector<2x4x16xf32> -> vector<2x4x16xf32>
    "tpu.trace_stop"() : () -> ()
    %c2_380 = arith.constant 2 : index
    %c0_381 = arith.constant 0 : index
    %c0_382 = arith.constant 0 : index
    %1360 = vector.load %arg8[%c2_380, %c0_381, %c0_382] : memref<3x16x16xf32, #tpu.memory_space<vmem>>, vector<1x16x16xf32>
    %1361 = vector.shape_cast %1360 : vector<1x16x16xf32> to vector<16x16xf32>
    %1362 = vector.shape_cast %1361 : vector<16x16xf32> to vector<1x16x16xf32>
    %1363 = vector.shape_cast %1362 : vector<1x16x16xf32> to vector<1x16x16xf32>
    %1364 = vector.broadcast %1363 : vector<1x16x16xf32> to vector<2x16x16xf32>
    "tpu.trace_start"() <{level = 10 : i32, message = "bnc,bcd->bnd"}> : () -> ()
    %cst_383 = arith.constant dense<0.000000e+00> : vector<2x4x16xf32>
    %1365 = tpu.matmul %1359, %1364, %cst_383 {dimension_numbers = #tpu.dot_dimension_numbers<[2], [1], [1], [2], [0, 0, 0, 1, 1, 2], [0], [0]>} : vector<2x4x16xf32>, vector<2x16x16xf32>, vector<2x4x16xf32> -> vector<2x4x16xf32>
    "tpu.trace_stop"() : () -> ()
    %c2_384 = arith.constant 2 : index
    %c0_385 = arith.constant 0 : index
    %c0_386 = arith.constant 0 : index
    %1366 = vector.load %arg9[%c2_384, %c0_385, %c0_386] : memref<3x1x16xf32, #tpu.memory_space<vmem>>, vector<1x1x16xf32>
    %1367 = vector.shape_cast %1366 : vector<1x1x16xf32> to vector<1x16xf32>
    %1368 = vector.shape_cast %1367 : vector<1x16xf32> to vector<1x1x16xf32>
    %1369 = vector.broadcast %1368 : vector<1x1x16xf32> to vector<2x4x16xf32>
    %1370 = arith.addf %1365, %1369 : vector<2x4x16xf32>
    %cst_387 = arith.constant 0.000000e+00 : f32
    %1371 = vector.broadcast %cst_387 : f32 to vector<2x4x16xf32>
    %1372 = arith.maximumf %1370, %1371 : vector<2x4x16xf32>
    %cst_388 = arith.constant dense<0.000000e+00> : vector<2x16xf32>
    %1373 = vector.multi_reduction <add>, %1372, %cst_388 [1] : vector<2x4x16xf32> to vector<2x16xf32>
    %cst_389 = arith.constant 4.000000e+00 : f32
    %1374 = vector.broadcast %cst_389 : f32 to vector<2x16xf32>
    %1375 = arith.divf %1373, %1374 : vector<2x16xf32>
    %cst_390 = arith.constant dense<0xFF800000> : vector<2x16xf32>
    %1376 = vector.multi_reduction <maximumf>, %1372, %cst_390 [1] : vector<2x4x16xf32> to vector<2x16xf32>
    %1377 = arith.mulf %555, %555 : vector<2x16xf32>
    %1378 = arith.mulf %556, %556 : vector<2x16xf32>
    %1379 = arith.addf %1377, %1378 : vector<2x16xf32>
    %cst_391 = arith.constant dense<0.000000e+00> : vector<2xf32>
    %1380 = vector.multi_reduction <add>, %1379, %cst_391 [1] : vector<2x16xf32> to vector<2xf32>
    %1381 = vector.shape_cast %1380 : vector<2xf32> to vector<2x1xf32>
    %cst_392 = arith.constant 0.176776692 : f32
    %1382 = vector.broadcast %cst_392 : f32 to vector<2x1xf32>
    %1383 = arith.mulf %1381, %1382 : vector<2x1xf32>
    %1384 = arith.mulf %555, %965 : vector<2x16xf32>
    %1385 = arith.mulf %556, %966 : vector<2x16xf32>
    %1386 = arith.addf %1384, %1385 : vector<2x16xf32>
    %cst_393 = arith.constant dense<0.000000e+00> : vector<2xf32>
    %1387 = vector.multi_reduction <add>, %1386, %cst_393 [1] : vector<2x16xf32> to vector<2xf32>
    %1388 = vector.shape_cast %1387 : vector<2xf32> to vector<2x1xf32>
    %cst_394 = arith.constant 0.176776692 : f32
    %1389 = vector.broadcast %cst_394 : f32 to vector<2x1xf32>
    %1390 = arith.mulf %1388, %1389 : vector<2x1xf32>
    %1391 = arith.mulf %555, %1375 : vector<2x16xf32>
    %1392 = arith.mulf %556, %1376 : vector<2x16xf32>
    %1393 = arith.addf %1391, %1392 : vector<2x16xf32>
    %cst_395 = arith.constant dense<0.000000e+00> : vector<2xf32>
    %1394 = vector.multi_reduction <add>, %1393, %cst_395 [1] : vector<2x16xf32> to vector<2xf32>
    %1395 = vector.shape_cast %1394 : vector<2xf32> to vector<2x1xf32>
    %cst_396 = arith.constant 0.176776692 : f32
    %1396 = vector.broadcast %cst_396 : f32 to vector<2x1xf32>
    %1397 = arith.mulf %1395, %1396 : vector<2x1xf32>
    %1398 = arith.mulf %965, %965 : vector<2x16xf32>
    %1399 = arith.mulf %966, %966 : vector<2x16xf32>
    %1400 = arith.addf %1398, %1399 : vector<2x16xf32>
    %cst_397 = arith.constant dense<0.000000e+00> : vector<2xf32>
    %1401 = vector.multi_reduction <add>, %1400, %cst_397 [1] : vector<2x16xf32> to vector<2xf32>
    %1402 = vector.shape_cast %1401 : vector<2xf32> to vector<2x1xf32>
    %cst_398 = arith.constant 0.176776692 : f32
    %1403 = vector.broadcast %cst_398 : f32 to vector<2x1xf32>
    %1404 = arith.mulf %1402, %1403 : vector<2x1xf32>
    %1405 = arith.mulf %965, %1375 : vector<2x16xf32>
    %1406 = arith.mulf %966, %1376 : vector<2x16xf32>
    %1407 = arith.addf %1405, %1406 : vector<2x16xf32>
    %cst_399 = arith.constant dense<0.000000e+00> : vector<2xf32>
    %1408 = vector.multi_reduction <add>, %1407, %cst_399 [1] : vector<2x16xf32> to vector<2xf32>
    %1409 = vector.shape_cast %1408 : vector<2xf32> to vector<2x1xf32>
    %cst_400 = arith.constant 0.176776692 : f32
    %1410 = vector.broadcast %cst_400 : f32 to vector<2x1xf32>
    %1411 = arith.mulf %1409, %1410 : vector<2x1xf32>
    %1412 = arith.mulf %1375, %1375 : vector<2x16xf32>
    %1413 = arith.mulf %1376, %1376 : vector<2x16xf32>
    %1414 = arith.addf %1412, %1413 : vector<2x16xf32>
    %cst_401 = arith.constant dense<0.000000e+00> : vector<2xf32>
    %1415 = vector.multi_reduction <add>, %1414, %cst_401 [1] : vector<2x16xf32> to vector<2xf32>
    %1416 = vector.shape_cast %1415 : vector<2xf32> to vector<2x1xf32>
    %cst_402 = arith.constant 0.176776692 : f32
    %1417 = vector.broadcast %cst_402 : f32 to vector<2x1xf32>
    %1418 = arith.mulf %1416, %1417 : vector<2x1xf32>
    %1419 = tpu.iota {dimensions = array<i32: 1>} : vector<2x3xi32>
    %c0_403 = arith.constant 0 : index
    %c0_404 = arith.constant 0 : index
    %1420 = vector.load %arg10[%c0_403, %c0_404] : memref<96x32xf32, #tpu.memory_space<vmem>>, vector<96x32xf32>
    %cst_405 = arith.constant 0.000000e+00 : f32
    %1421 = vector.broadcast %cst_405 : f32 to vector<2x32xf32>
    %c0_406 = arith.constant 0 : index
    %c0_407 = arith.constant 0 : index
    %1422 = vector.load %arg11[%c0_406, %c0_407] : memref<1x32xf32, #tpu.memory_space<vmem>>, vector<1x32xf32>
    %1423 = vector.broadcast %1422 : vector<1x32xf32> to vector<2x32xf32>
    %1424 = arith.addf %1421, %1423 : vector<2x32xf32>
    %cst_408 = arith.constant 0.000000e+00 : f32
    %1425 = vector.broadcast %cst_408 : f32 to vector<2x3xf32>
    %c0_i32_409 = arith.constant 0 : i32
    %1426 = vector.broadcast %c0_i32_409 : i32 to vector<2x3xi32>
    %1427 = arith.cmpi eq, %1419, %1426 : vector<2x3xi32>
    %cst_410 = arith.constant 0.000000e+00 : f32
    %1428 = vector.shape_cast %1383 : vector<2x1xf32> to vector<2x1xf32>
    %1429 = vector.broadcast %1428 : vector<2x1xf32> to vector<2x3xf32>
    %1430 = vector.broadcast %cst_410 : f32 to vector<2x3xf32>
    %1431 = arith.select %1427, %1429, %1430 : vector<2x3xi1>, vector<2x3xf32>
    %1432 = arith.addf %1425, %1431 : vector<2x3xf32>
    %c1_i32_411 = arith.constant 1 : i32
    %1433 = vector.broadcast %c1_i32_411 : i32 to vector<2x3xi32>
    %1434 = arith.cmpi eq, %1419, %1433 : vector<2x3xi32>
    %cst_412 = arith.constant 0.000000e+00 : f32
    %1435 = vector.shape_cast %1390 : vector<2x1xf32> to vector<2x1xf32>
    %1436 = vector.broadcast %1435 : vector<2x1xf32> to vector<2x3xf32>
    %1437 = vector.broadcast %cst_412 : f32 to vector<2x3xf32>
    %1438 = arith.select %1434, %1436, %1437 : vector<2x3xi1>, vector<2x3xf32>
    %1439 = arith.addf %1432, %1438 : vector<2x3xf32>
    %c2_i32_413 = arith.constant 2 : i32
    %1440 = vector.broadcast %c2_i32_413 : i32 to vector<2x3xi32>
    %1441 = arith.cmpi eq, %1419, %1440 : vector<2x3xi32>
    %cst_414 = arith.constant 0.000000e+00 : f32
    %1442 = vector.shape_cast %1397 : vector<2x1xf32> to vector<2x1xf32>
    %1443 = vector.broadcast %1442 : vector<2x1xf32> to vector<2x3xf32>
    %1444 = vector.broadcast %cst_414 : f32 to vector<2x3xf32>
    %1445 = arith.select %1441, %1443, %1444 : vector<2x3xi1>, vector<2x3xf32>
    %1446 = arith.addf %1439, %1445 : vector<2x3xf32>
    %cst_415 = arith.constant dense<0xFF800000> : vector<2xf32>
    %1447 = vector.multi_reduction <maximumf>, %1446, %cst_415 [1] : vector<2x3xf32> to vector<2xf32>
    %1448 = vector.shape_cast %1447 : vector<2xf32> to vector<2x1xf32>
    %1449 = vector.broadcast %1448 : vector<2x1xf32> to vector<2x3xf32>
    %1450 = arith.subf %1446, %1449 : vector<2x3xf32>
    %1451 = math.exp %1450 : vector<2x3xf32>
    %cst_416 = arith.constant dense<0.000000e+00> : vector<2xf32>
    %1452 = vector.multi_reduction <add>, %1451, %cst_416 [1] : vector<2x3xf32> to vector<2xf32>
    %1453 = vector.shape_cast %1452 : vector<2xf32> to vector<2x1xf32>
    %1454 = tpu.reciprocal %1453 {approx = true} : vector<2x1xf32> -> vector<2x1xf32>
    %1455 = vector.broadcast %1454 : vector<2x1xf32> to vector<2x3xf32>
    %1456 = arith.mulf %1451, %1455 : vector<2x3xf32>
    %1457 = vector.extract_strided_slice %1456 {offsets = [0, 0], sizes = [2, 1], strides = [1, 1]} : vector<2x3xf32> to vector<2x1xf32>
    %1458 = vector.broadcast %1457 : vector<2x1xf32> to vector<2x16xf32>
    %1459 = arith.mulf %1458, %555 : vector<2x16xf32>
    %cst_417 = arith.constant 0.000000e+00 : f32
    %1460 = vector.broadcast %cst_417 : f32 to vector<2x16xf32>
    %1461 = arith.addf %1460, %1459 : vector<2x16xf32>
    %1462 = vector.extract_strided_slice %1456 {offsets = [0, 1], sizes = [2, 1], strides = [1, 1]} : vector<2x3xf32> to vector<2x1xf32>
    %1463 = vector.broadcast %1462 : vector<2x1xf32> to vector<2x16xf32>
    %1464 = arith.mulf %1463, %965 : vector<2x16xf32>
    %1465 = arith.addf %1461, %1464 : vector<2x16xf32>
    %1466 = vector.extract_strided_slice %1456 {offsets = [0, 2], sizes = [2, 1], strides = [1, 1]} : vector<2x3xf32> to vector<2x1xf32>
    %1467 = vector.broadcast %1466 : vector<2x1xf32> to vector<2x16xf32>
    %1468 = arith.mulf %1467, %1375 : vector<2x16xf32>
    %1469 = arith.addf %1465, %1468 : vector<2x16xf32>
    %1470 = vector.extract_strided_slice %1456 {offsets = [0, 0], sizes = [2, 1], strides = [1, 1]} : vector<2x3xf32> to vector<2x1xf32>
    %1471 = vector.broadcast %1470 : vector<2x1xf32> to vector<2x16xf32>
    %1472 = arith.mulf %1471, %556 : vector<2x16xf32>
    %cst_418 = arith.constant 0.000000e+00 : f32
    %1473 = vector.broadcast %cst_418 : f32 to vector<2x16xf32>
    %1474 = arith.addf %1473, %1472 : vector<2x16xf32>
    %1475 = vector.extract_strided_slice %1456 {offsets = [0, 1], sizes = [2, 1], strides = [1, 1]} : vector<2x3xf32> to vector<2x1xf32>
    %1476 = vector.broadcast %1475 : vector<2x1xf32> to vector<2x16xf32>
    %1477 = arith.mulf %1476, %966 : vector<2x16xf32>
    %1478 = arith.addf %1474, %1477 : vector<2x16xf32>
    %1479 = vector.extract_strided_slice %1456 {offsets = [0, 2], sizes = [2, 1], strides = [1, 1]} : vector<2x3xf32> to vector<2x1xf32>
    %1480 = vector.broadcast %1479 : vector<2x1xf32> to vector<2x16xf32>
    %1481 = arith.mulf %1480, %1376 : vector<2x16xf32>
    %1482 = arith.addf %1478, %1481 : vector<2x16xf32>
    %1483 = vector.extract_strided_slice %1420 {offsets = [0, 0], sizes = [16, 32], strides = [1, 1]} : vector<96x32xf32> to vector<16x32xf32>
    %cst_419 = arith.constant dense<0.000000e+00> : vector<2x32xf32>
    %1484 = tpu.matmul %1469, %1483, %cst_419 {dimension_numbers = #tpu.dot_dimension_numbers<[1], [0], [0], [1], [0, 0, 1, 1], [], []>} : vector<2x16xf32>, vector<16x32xf32>, vector<2x32xf32> -> vector<2x32xf32>
    %1485 = arith.addf %1424, %1484 : vector<2x32xf32>
    %1486 = vector.extract_strided_slice %1420 {offsets = [16, 0], sizes = [16, 32], strides = [1, 1]} : vector<96x32xf32> to vector<16x32xf32>
    %cst_420 = arith.constant dense<0.000000e+00> : vector<2x32xf32>
    %1487 = tpu.matmul %1482, %1486, %cst_420 {dimension_numbers = #tpu.dot_dimension_numbers<[1], [0], [0], [1], [0, 0, 1, 1], [], []>} : vector<2x16xf32>, vector<16x32xf32>, vector<2x32xf32> -> vector<2x32xf32>
    %1488 = arith.addf %1485, %1487 : vector<2x32xf32>
    %cst_421 = arith.constant 0.000000e+00 : f32
    %1489 = vector.broadcast %cst_421 : f32 to vector<2x3xf32>
    %c0_i32_422 = arith.constant 0 : i32
    %1490 = vector.broadcast %c0_i32_422 : i32 to vector<2x3xi32>
    %1491 = arith.cmpi eq, %1419, %1490 : vector<2x3xi32>
    %cst_423 = arith.constant 0.000000e+00 : f32
    %1492 = vector.shape_cast %1390 : vector<2x1xf32> to vector<2x1xf32>
    %1493 = vector.broadcast %1492 : vector<2x1xf32> to vector<2x3xf32>
    %1494 = vector.broadcast %cst_423 : f32 to vector<2x3xf32>
    %1495 = arith.select %1491, %1493, %1494 : vector<2x3xi1>, vector<2x3xf32>
    %1496 = arith.addf %1489, %1495 : vector<2x3xf32>
    %c1_i32_424 = arith.constant 1 : i32
    %1497 = vector.broadcast %c1_i32_424 : i32 to vector<2x3xi32>
    %1498 = arith.cmpi eq, %1419, %1497 : vector<2x3xi32>
    %cst_425 = arith.constant 0.000000e+00 : f32
    %1499 = vector.shape_cast %1404 : vector<2x1xf32> to vector<2x1xf32>
    %1500 = vector.broadcast %1499 : vector<2x1xf32> to vector<2x3xf32>
    %1501 = vector.broadcast %cst_425 : f32 to vector<2x3xf32>
    %1502 = arith.select %1498, %1500, %1501 : vector<2x3xi1>, vector<2x3xf32>
    %1503 = arith.addf %1496, %1502 : vector<2x3xf32>
    %c2_i32_426 = arith.constant 2 : i32
    %1504 = vector.broadcast %c2_i32_426 : i32 to vector<2x3xi32>
    %1505 = arith.cmpi eq, %1419, %1504 : vector<2x3xi32>
    %cst_427 = arith.constant 0.000000e+00 : f32
    %1506 = vector.shape_cast %1411 : vector<2x1xf32> to vector<2x1xf32>
    %1507 = vector.broadcast %1506 : vector<2x1xf32> to vector<2x3xf32>
    %1508 = vector.broadcast %cst_427 : f32 to vector<2x3xf32>
    %1509 = arith.select %1505, %1507, %1508 : vector<2x3xi1>, vector<2x3xf32>
    %1510 = arith.addf %1503, %1509 : vector<2x3xf32>
    %cst_428 = arith.constant dense<0xFF800000> : vector<2xf32>
    %1511 = vector.multi_reduction <maximumf>, %1510, %cst_428 [1] : vector<2x3xf32> to vector<2xf32>
    %1512 = vector.shape_cast %1511 : vector<2xf32> to vector<2x1xf32>
    %1513 = vector.broadcast %1512 : vector<2x1xf32> to vector<2x3xf32>
    %1514 = arith.subf %1510, %1513 : vector<2x3xf32>
    %1515 = math.exp %1514 : vector<2x3xf32>
    %cst_429 = arith.constant dense<0.000000e+00> : vector<2xf32>
    %1516 = vector.multi_reduction <add>, %1515, %cst_429 [1] : vector<2x3xf32> to vector<2xf32>
    %1517 = vector.shape_cast %1516 : vector<2xf32> to vector<2x1xf32>
    %1518 = tpu.reciprocal %1517 {approx = true} : vector<2x1xf32> -> vector<2x1xf32>
    %1519 = vector.broadcast %1518 : vector<2x1xf32> to vector<2x3xf32>
    %1520 = arith.mulf %1515, %1519 : vector<2x3xf32>
    %1521 = vector.extract_strided_slice %1520 {offsets = [0, 0], sizes = [2, 1], strides = [1, 1]} : vector<2x3xf32> to vector<2x1xf32>
    %1522 = vector.broadcast %1521 : vector<2x1xf32> to vector<2x16xf32>
    %1523 = arith.mulf %1522, %555 : vector<2x16xf32>
    %cst_430 = arith.constant 0.000000e+00 : f32
    %1524 = vector.broadcast %cst_430 : f32 to vector<2x16xf32>
    %1525 = arith.addf %1524, %1523 : vector<2x16xf32>
    %1526 = vector.extract_strided_slice %1520 {offsets = [0, 1], sizes = [2, 1], strides = [1, 1]} : vector<2x3xf32> to vector<2x1xf32>
    %1527 = vector.broadcast %1526 : vector<2x1xf32> to vector<2x16xf32>
    %1528 = arith.mulf %1527, %965 : vector<2x16xf32>
    %1529 = arith.addf %1525, %1528 : vector<2x16xf32>
    %1530 = vector.extract_strided_slice %1520 {offsets = [0, 2], sizes = [2, 1], strides = [1, 1]} : vector<2x3xf32> to vector<2x1xf32>
    %1531 = vector.broadcast %1530 : vector<2x1xf32> to vector<2x16xf32>
    %1532 = arith.mulf %1531, %1375 : vector<2x16xf32>
    %1533 = arith.addf %1529, %1532 : vector<2x16xf32>
    %1534 = vector.extract_strided_slice %1520 {offsets = [0, 0], sizes = [2, 1], strides = [1, 1]} : vector<2x3xf32> to vector<2x1xf32>
    %1535 = vector.broadcast %1534 : vector<2x1xf32> to vector<2x16xf32>
    %1536 = arith.mulf %1535, %556 : vector<2x16xf32>
    %cst_431 = arith.constant 0.000000e+00 : f32
    %1537 = vector.broadcast %cst_431 : f32 to vector<2x16xf32>
    %1538 = arith.addf %1537, %1536 : vector<2x16xf32>
    %1539 = vector.extract_strided_slice %1520 {offsets = [0, 1], sizes = [2, 1], strides = [1, 1]} : vector<2x3xf32> to vector<2x1xf32>
    %1540 = vector.broadcast %1539 : vector<2x1xf32> to vector<2x16xf32>
    %1541 = arith.mulf %1540, %966 : vector<2x16xf32>
    %1542 = arith.addf %1538, %1541 : vector<2x16xf32>
    %1543 = vector.extract_strided_slice %1520 {offsets = [0, 2], sizes = [2, 1], strides = [1, 1]} : vector<2x3xf32> to vector<2x1xf32>
    %1544 = vector.broadcast %1543 : vector<2x1xf32> to vector<2x16xf32>
    %1545 = arith.mulf %1544, %1376 : vector<2x16xf32>
    %1546 = arith.addf %1542, %1545 : vector<2x16xf32>
    %1547 = vector.extract_strided_slice %1420 {offsets = [32, 0], sizes = [16, 32], strides = [1, 1]} : vector<96x32xf32> to vector<16x32xf32>
    %cst_432 = arith.constant dense<0.000000e+00> : vector<2x32xf32>
    %1548 = tpu.matmul %1533, %1547, %cst_432 {dimension_numbers = #tpu.dot_dimension_numbers<[1], [0], [0], [1], [0, 0, 1, 1], [], []>} : vector<2x16xf32>, vector<16x32xf32>, vector<2x32xf32> -> vector<2x32xf32>
    %1549 = arith.addf %1488, %1548 : vector<2x32xf32>
    %1550 = vector.extract_strided_slice %1420 {offsets = [48, 0], sizes = [16, 32], strides = [1, 1]} : vector<96x32xf32> to vector<16x32xf32>
    %cst_433 = arith.constant dense<0.000000e+00> : vector<2x32xf32>
    %1551 = tpu.matmul %1546, %1550, %cst_433 {dimension_numbers = #tpu.dot_dimension_numbers<[1], [0], [0], [1], [0, 0, 1, 1], [], []>} : vector<2x16xf32>, vector<16x32xf32>, vector<2x32xf32> -> vector<2x32xf32>
    %1552 = arith.addf %1549, %1551 : vector<2x32xf32>
    %cst_434 = arith.constant 0.000000e+00 : f32
    %1553 = vector.broadcast %cst_434 : f32 to vector<2x3xf32>
    %c0_i32_435 = arith.constant 0 : i32
    %1554 = vector.broadcast %c0_i32_435 : i32 to vector<2x3xi32>
    %1555 = arith.cmpi eq, %1419, %1554 : vector<2x3xi32>
    %cst_436 = arith.constant 0.000000e+00 : f32
    %1556 = vector.shape_cast %1397 : vector<2x1xf32> to vector<2x1xf32>
    %1557 = vector.broadcast %1556 : vector<2x1xf32> to vector<2x3xf32>
    %1558 = vector.broadcast %cst_436 : f32 to vector<2x3xf32>
    %1559 = arith.select %1555, %1557, %1558 : vector<2x3xi1>, vector<2x3xf32>
    %1560 = arith.addf %1553, %1559 : vector<2x3xf32>
    %c1_i32_437 = arith.constant 1 : i32
    %1561 = vector.broadcast %c1_i32_437 : i32 to vector<2x3xi32>
    %1562 = arith.cmpi eq, %1419, %1561 : vector<2x3xi32>
    %cst_438 = arith.constant 0.000000e+00 : f32
    %1563 = vector.shape_cast %1411 : vector<2x1xf32> to vector<2x1xf32>
    %1564 = vector.broadcast %1563 : vector<2x1xf32> to vector<2x3xf32>
    %1565 = vector.broadcast %cst_438 : f32 to vector<2x3xf32>
    %1566 = arith.select %1562, %1564, %1565 : vector<2x3xi1>, vector<2x3xf32>
    %1567 = arith.addf %1560, %1566 : vector<2x3xf32>
    %c2_i32_439 = arith.constant 2 : i32
    %1568 = vector.broadcast %c2_i32_439 : i32 to vector<2x3xi32>
    %1569 = arith.cmpi eq, %1419, %1568 : vector<2x3xi32>
    %cst_440 = arith.constant 0.000000e+00 : f32
    %1570 = vector.shape_cast %1418 : vector<2x1xf32> to vector<2x1xf32>
    %1571 = vector.broadcast %1570 : vector<2x1xf32> to vector<2x3xf32>
    %1572 = vector.broadcast %cst_440 : f32 to vector<2x3xf32>
    %1573 = arith.select %1569, %1571, %1572 : vector<2x3xi1>, vector<2x3xf32>
    %1574 = arith.addf %1567, %1573 : vector<2x3xf32>
    %cst_441 = arith.constant dense<0xFF800000> : vector<2xf32>
    %1575 = vector.multi_reduction <maximumf>, %1574, %cst_441 [1] : vector<2x3xf32> to vector<2xf32>
    %1576 = vector.shape_cast %1575 : vector<2xf32> to vector<2x1xf32>
    %1577 = vector.broadcast %1576 : vector<2x1xf32> to vector<2x3xf32>
    %1578 = arith.subf %1574, %1577 : vector<2x3xf32>
    %1579 = math.exp %1578 : vector<2x3xf32>
    %cst_442 = arith.constant dense<0.000000e+00> : vector<2xf32>
    %1580 = vector.multi_reduction <add>, %1579, %cst_442 [1] : vector<2x3xf32> to vector<2xf32>
    %1581 = vector.shape_cast %1580 : vector<2xf32> to vector<2x1xf32>
    %1582 = tpu.reciprocal %1581 {approx = true} : vector<2x1xf32> -> vector<2x1xf32>
    %1583 = vector.broadcast %1582 : vector<2x1xf32> to vector<2x3xf32>
    %1584 = arith.mulf %1579, %1583 : vector<2x3xf32>
    %1585 = vector.extract_strided_slice %1584 {offsets = [0, 0], sizes = [2, 1], strides = [1, 1]} : vector<2x3xf32> to vector<2x1xf32>
    %1586 = vector.broadcast %1585 : vector<2x1xf32> to vector<2x16xf32>
    %1587 = arith.mulf %1586, %555 : vector<2x16xf32>
    %cst_443 = arith.constant 0.000000e+00 : f32
    %1588 = vector.broadcast %cst_443 : f32 to vector<2x16xf32>
    %1589 = arith.addf %1588, %1587 : vector<2x16xf32>
    %1590 = vector.extract_strided_slice %1584 {offsets = [0, 1], sizes = [2, 1], strides = [1, 1]} : vector<2x3xf32> to vector<2x1xf32>
    %1591 = vector.broadcast %1590 : vector<2x1xf32> to vector<2x16xf32>
    %1592 = arith.mulf %1591, %965 : vector<2x16xf32>
    %1593 = arith.addf %1589, %1592 : vector<2x16xf32>
    %1594 = vector.extract_strided_slice %1584 {offsets = [0, 2], sizes = [2, 1], strides = [1, 1]} : vector<2x3xf32> to vector<2x1xf32>
    %1595 = vector.broadcast %1594 : vector<2x1xf32> to vector<2x16xf32>
    %1596 = arith.mulf %1595, %1375 : vector<2x16xf32>
    %1597 = arith.addf %1593, %1596 : vector<2x16xf32>
    %1598 = vector.extract_strided_slice %1584 {offsets = [0, 0], sizes = [2, 1], strides = [1, 1]} : vector<2x3xf32> to vector<2x1xf32>
    %1599 = vector.broadcast %1598 : vector<2x1xf32> to vector<2x16xf32>
    %1600 = arith.mulf %1599, %556 : vector<2x16xf32>
    %cst_444 = arith.constant 0.000000e+00 : f32
    %1601 = vector.broadcast %cst_444 : f32 to vector<2x16xf32>
    %1602 = arith.addf %1601, %1600 : vector<2x16xf32>
    %1603 = vector.extract_strided_slice %1584 {offsets = [0, 1], sizes = [2, 1], strides = [1, 1]} : vector<2x3xf32> to vector<2x1xf32>
    %1604 = vector.broadcast %1603 : vector<2x1xf32> to vector<2x16xf32>
    %1605 = arith.mulf %1604, %966 : vector<2x16xf32>
    %1606 = arith.addf %1602, %1605 : vector<2x16xf32>
    %1607 = vector.extract_strided_slice %1584 {offsets = [0, 2], sizes = [2, 1], strides = [1, 1]} : vector<2x3xf32> to vector<2x1xf32>
    %1608 = vector.broadcast %1607 : vector<2x1xf32> to vector<2x16xf32>
    %1609 = arith.mulf %1608, %1376 : vector<2x16xf32>
    %1610 = arith.addf %1606, %1609 : vector<2x16xf32>
    %1611 = vector.extract_strided_slice %1420 {offsets = [64, 0], sizes = [16, 32], strides = [1, 1]} : vector<96x32xf32> to vector<16x32xf32>
    %cst_445 = arith.constant dense<0.000000e+00> : vector<2x32xf32>
    %1612 = tpu.matmul %1597, %1611, %cst_445 {dimension_numbers = #tpu.dot_dimension_numbers<[1], [0], [0], [1], [0, 0, 1, 1], [], []>} : vector<2x16xf32>, vector<16x32xf32>, vector<2x32xf32> -> vector<2x32xf32>
    %1613 = arith.addf %1552, %1612 : vector<2x32xf32>
    %1614 = vector.extract_strided_slice %1420 {offsets = [80, 0], sizes = [16, 32], strides = [1, 1]} : vector<96x32xf32> to vector<16x32xf32>
    %cst_446 = arith.constant dense<0.000000e+00> : vector<2x32xf32>
    %1615 = tpu.matmul %1610, %1614, %cst_446 {dimension_numbers = #tpu.dot_dimension_numbers<[1], [0], [0], [1], [0, 0, 1, 1], [], []>} : vector<2x16xf32>, vector<16x32xf32>, vector<2x32xf32> -> vector<2x32xf32>
    %1616 = arith.addf %1613, %1615 : vector<2x32xf32>
    %1617 = math.tanh %1616 : vector<2x32xf32>
    %c0_447 = arith.constant 0 : index
    %c0_448 = arith.constant 0 : index
    %1618 = vector.load %arg12[%c0_447, %c0_448] : memref<32x1xf32, #tpu.memory_space<vmem>>, vector<32x1xf32>
    %cst_449 = arith.constant dense<0.000000e+00> : vector<2x1xf32>
    %1619 = tpu.matmul %1617, %1618, %cst_449 {dimension_numbers = #tpu.dot_dimension_numbers<[1], [0], [0], [1], [0, 0, 1, 1], [], []>} : vector<2x32xf32>, vector<32x1xf32>, vector<2x1xf32> -> vector<2x1xf32>
    %c0_450 = arith.constant 0 : index
    %c0_451 = arith.constant 0 : index
    %1620 = vector.load %arg13[%c0_450, %c0_451] : memref<1x1xf32, #tpu.memory_space<vmem>>, vector<1x1xf32>
    %1621 = vector.broadcast %1620 : vector<1x1xf32> to vector<2x1xf32>
    %1622 = arith.addf %1619, %1621 : vector<2x1xf32>
    %cst_452 = arith.constant 1.000000e+01 : f32
    %1623 = vector.broadcast %cst_452 : f32 to vector<2x1xf32>
    %1624 = arith.mulf %1622, %1623 : vector<2x1xf32>
    %c0_453 = arith.constant 0 : index
    %c0_454 = arith.constant 0 : index
    %1625 = vector.load %arg14[%c0_453, %c0_454] : memref<2x1xf32, #tpu.memory_space<vmem>>, vector<2x1xf32>
    tpu.vector_store %arg14[%c0_453, %c0_454], %1624 {strides = array<i32>} : memref<2x1xf32, #tpu.memory_space<vmem>>, vector<2x1xf32>,
    return
  }
}

</mosaic_0001>

<llo_original>
// kernel: gcn_caps_forward.1
$region0: #{gcn_caps_forward.1}
  #allocation0 [shape = 'u32[]', space=smem, size = 0x4, offset = 0x4, fixed_abs, tag = 'smem constant byte address 0x4 - core index']
  #allocation1 [shape = 'u32[144,128]{1,0:T(1,128)}', space=vmem, size = 0x12000, scoped, tag = 'internal scratch']
  #allocation2 [shape = 'f32[1,1]{1,0:T(1,128)S(1)}', space=vmem, size = 0x200, scoped, tag = 'scoped memory for gcn_caps_forward.1']
  %s0 = inlined_call_operand.vmem [shape: f32[16,16], index: 0, kind: input, shape index: {}]
  %s1 = inlined_call_operand.vmem [shape: f32[16,12], index: 1, kind: input, shape index: {}]
  %s2 = inlined_call_operand.hbm [shape: f32[16,8], index: 2, kind: input, shape index: {}]
  %s3 = inlined_call_operand.hbm [shape: f32[16,32], index: 3, kind: input, shape index: {}]
  %s4 = inlined_call_operand.hbm [shape: f32[12,32], index: 4, kind: input, shape index: {}]
  %s5 = inlined_call_operand.hbm [shape: f32[8,32], index: 5, kind: input, shape index: {}]
  %s6 = inlined_call_operand.vmem [shape: f32[3,32,96], index: 6, kind: input, shape index: {}]
  %s7 = inlined_call_operand.hbm [shape: f32[3,32,64], index: 7, kind: input, shape index: {}]
  %s8 = inlined_call_operand.vmem [shape: f32[3,16,16], index: 8, kind: input, shape index: {}]
  %s9 = inlined_call_operand.vmem [shape: f32[3,1,16], index: 9, kind: input, shape index: {}]
  %s10 = inlined_call_operand.vmem [shape: f32[96,32], index: 10, kind: input, shape index: {}]
  %s11 = inlined_call_operand.vmem [shape: f32[1,32], index: 11, kind: input, shape index: {}]
  %s12 = inlined_call_operand.vmem [shape: f32[32,1], index: 12, kind: input, shape index: {}]
  %s13 = inlined_call_operand.<no memory space> [shape: f32[1,1], index: 13, kind: input, shape index: {}]
  %s14 = inlined_call_operand.vmem [shape: f32[2,1], index: 14, kind: output, shape index: {}]
  %s15 = sld [smem:[#allocation0]]
  $region86: #{gcn_caps_forward.1} parent=0
    _
  %s17 = ssub.s32 1, %s15
  %s18 = scalar_select 0, %s17, %s15
  %v19 = vstv %s13
  %20 = vst [vmem:[#allocation2] sm:$0x1] %v19
  $region1: #{gcn_caps_forward.1} parent=0
    #allocation3 [shape = 'u8[8192]{0}', space=vmem, size = 0x2000, scoped, tag = 'input window, operand 2, single buffered']
    #allocation4 [shape = 's32[1]{0}', space=sflag, size = 0x4, scoped, tag = 'scoped memory for gcn_caps_forward.1']
    #allocation5 [shape = 'u8[8192]{0}', space=vmem, size = 0x2000, scoped, tag = 'input window, operand 3, single buffered']
    #allocation6 [shape = 's32[1]{0}', space=sflag, size = 0x4, scoped, tag = 'scoped memory for gcn_caps_forward.1']
    #allocation7 [shape = 'u8[8192]{0}', space=vmem, size = 0x2000, scoped, tag = 'input window, operand 4, single buffered']
    #allocation8 [shape = 'u8[4096]{0}', space=vmem, size = 0x1000, scoped, tag = 'input window, operand 5, single buffered']
    #allocation9 [shape = 's32[1]{0}', space=sflag, size = 0x4, scoped, tag = 'scoped memory for gcn_caps_forward.1']
    #allocation10 [shape = 'u8[49152]{0}', space=vmem, size = 0xc000, scoped, tag = 'input window, operand 7, single buffered']
    %21 = vsyncpa [#allocation4], 0
    %22 = vsyncpa [#allocation6], 0
    %23 = vsyncpa [#allocation9], 0
    // Predicated region
    $region2: #{gcn_caps_forward.1} parent=1 // pred_check
      _
    $region3: #{gcn_caps_forward.1} parent=1 // pred_check_branch
      %25 = sbr.rel (0) target = $region5
    $region4: #{gcn_caps_forward.1} parent=1 // pred_region
      _
    $region5: #{gcn_caps_forward.1} parent=1 // pred_fallthru
      _
    // Predicated region
    $region6: #{gcn_caps_forward.1} parent=1 // pred_check
      _
    $region7: #{gcn_caps_forward.1} parent=1 // pred_check_branch
      %27 = sbr.rel (0) target = $region9
    $region8: #{gcn_caps_forward.1} parent=1 // pred_region
      _
    $region9: #{gcn_caps_forward.1} parent=1 // pred_fallthru
      _
    // Predicated region
    $region10: #{gcn_caps_forward.1} parent=1 // pred_check
      _
    $region11: #{gcn_caps_forward.1} parent=1 // pred_check_branch
      %29 = sbr.rel (0) target = $region13
    $region12: #{gcn_caps_forward.1} parent=1 // pred_region
      %s31 = ssub.s32 256, 256
      %32 = vsyncadd [#allocation4], %s31
      %s33 = sshll.u32 [#allocation3], 4
      %s34 = int_to_ptr.vmem [resolvable:$true] %s33
      %39 = dma.hbm_to_vmem [thread:$0]  %s2, 256, %s34, [#allocation4], 128, 128, 8
    $region13: #{gcn_caps_forward.1} parent=1 // pred_fallthru
      _
    // Predicated region
    $region14: #{gcn_caps_forward.1} parent=1 // pred_check
      _
    $region15: #{gcn_caps_forward.1} parent=1 // pred_check_branch
      %41 = sbr.rel (0) target = $region17
    $region16: #{gcn_caps_forward.1} parent=1 // pred_region
      %s43 = ssub.s32 256, 256
      %44 = vsyncadd [#allocation6], %s43
      %s45 = sshll.u32 [#allocation5], 4
      %s46 = int_to_ptr.vmem [resolvable:$true] %s45
      %51 = dma.hbm_to_vmem [thread:$0]  %s3, 256, %s46, [#allocation6], 128, 128, 8
    $region17: #{gcn_caps_forward.1} parent=1 // pred_fallthru
      _
    // Predicated region
    $region18: #{gcn_caps_forward.1} parent=1 // pred_check
      _
    $region19: #{gcn_caps_forward.1} parent=1 // pred_check_branch
      %53 = sbr.rel (0) target = $region21
    $region20: #{gcn_caps_forward.1} parent=1 // pred_region
      %s55 = ssub.s32 256, 256
      %56 = vsyncadd [#allocation6], %s55
      %s57 = sshll.u32 [#allocation7], 4
      %s58 = int_to_ptr.vmem [resolvable:$true] %s57
      %63 = dma.hbm_to_vmem [thread:$0]  %s4, 256, %s58, [#allocation6], 128, 128, 8
    $region21: #{gcn_caps_forward.1} parent=1 // pred_fallthru
      _
    // Predicated region
    $region22: #{gcn_caps_forward.1} parent=1 // pred_check
      _
    $region23: #{gcn_caps_forward.1} parent=1 // pred_check_branch
      %65 = sbr.rel (0) target = $region25
    $region24: #{gcn_caps_forward.1} parent=1 // pred_region
      %s67 = ssub.s32 128, 128
      %68 = vsyncadd [#allocation9], %s67
      %s70 = sshll.u32 [#allocation8], 4
      %s71 = int_to_ptr.vmem [resolvable:$true] %s70
      %73 = dma.hbm_to_vmem [thread:$0]  %s5, 128, %s71, [#allocation9]
    $region25: #{gcn_caps_forward.1} parent=1 // pred_fallthru
      _
    // Predicated region
    $region26: #{gcn_caps_forward.1} parent=1 // pred_check
      _
    $region27: #{gcn_caps_forward.1} parent=1 // pred_check_branch
      %75 = sbr.rel (0) target = $region29
    $region28: #{gcn_caps_forward.1} parent=1 // pred_region
      _
    $region29: #{gcn_caps_forward.1} parent=1 // pred_fallthru
      _
    // Predicated region
    $region30: #{gcn_caps_forward.1} parent=1 // pred_check
      _
    $region31: #{gcn_caps_forward.1} parent=1 // pred_check_branch
      %77 = sbr.rel (0) target = $region33
    $region32: #{gcn_caps_forward.1} parent=1 // pred_region
      %s79 = ssub.s32 1536, 1536
      %80 = vsyncadd [#allocation9], %s79
      %s81 = sshll.u32 [#allocation10], 4
      %s82 = int_to_ptr.vmem [resolvable:$true] %s81
      %87 = dma.hbm_to_vmem [thread:$0]  %s7, 1536, %s82, [#allocation9], 128, 128, 8
    $region33: #{gcn_caps_forward.1} parent=1 // pred_fallthru
      _
    // Predicated region
    $region34: #{gcn_caps_forward.1} parent=1 // pred_check
      _
    $region35: #{gcn_caps_forward.1} parent=1 // pred_check_branch
      %89 = sbr.rel (0) target = $region37
    $region36: #{gcn_caps_forward.1} parent=1 // pred_region
      _
    $region37: #{gcn_caps_forward.1} parent=1 // pred_fallthru
      _
    // Predicated region
    $region38: #{gcn_caps_forward.1} parent=1 // pred_check
      _
    $region39: #{gcn_caps_forward.1} parent=1 // pred_check_branch
      %91 = sbr.rel (0) target = $region41
    $region40: #{gcn_caps_forward.1} parent=1 // pred_region
      _
    $region41: #{gcn_caps_forward.1} parent=1 // pred_fallthru
      _
    // Predicated region
    $region42: #{gcn_caps_forward.1} parent=1 // pred_check
      _
    $region43: #{gcn_caps_forward.1} parent=1 // pred_check_branch
      %93 = sbr.rel (0) target = $region45
    $region44: #{gcn_caps_forward.1} parent=1 // pred_region
      _
    $region45: #{gcn_caps_forward.1} parent=1 // pred_fallthru
      _
    // Predicated region
    $region46: #{gcn_caps_forward.1} parent=1 // pred_check
      _
    $region47: #{gcn_caps_forward.1} parent=1 // pred_check_branch
      %95 = sbr.rel (0) target = $region49
    $region48: #{gcn_caps_forward.1} parent=1 // pred_region
      _
    $region49: #{gcn_caps_forward.1} parent=1 // pred_fallthru
      _
    // Predicated region
    $region50: #{gcn_caps_forward.1} parent=1 // pred_check
      _
    $region51: #{gcn_caps_forward.1} parent=1 // pred_check_branch
      %97 = sbr.rel (0) target = $region53
    $region52: #{gcn_caps_forward.1} parent=1 // pred_region
      _
    $region53: #{gcn_caps_forward.1} parent=1 // pred_fallthru
      _
    // Predicated region
    $region54: #{gcn_caps_forward.1} parent=1 // pred_check
      _
    $region55: #{gcn_caps_forward.1} parent=1 // pred_check_branch
      %99 = sbr.rel (0) target = $region57
    $region56: #{gcn_caps_forward.1} parent=1 // pred_region
      _
    $region57: #{gcn_caps_forward.1} parent=1 // pred_fallthru
      _
    // Predicated region
    $region58: #{gcn_caps_forward.1} parent=1 // pred_check
      _
    $region59: #{gcn_caps_forward.1} parent=1 // pred_check_branch
      %101 = sbr.rel (0) target = $region61
    $region60: #{gcn_caps_forward.1} parent=1 // pred_region
      %102 = dma.done [#allocation4], 256
    $region61: #{gcn_caps_forward.1} parent=1 // pred_fallthru
      _
    // Predicated region
    $region62: #{gcn_caps_forward.1} parent=1 // pred_check
      _
    $region63: #{gcn_caps_forward.1} parent=1 // pred_check_branch
      %104 = sbr.rel (0) target = $region65
    $region64: #{gcn_caps_forward.1} parent=1 // pred_region
      %105 = dma.done [#allocation6], 256
    $region65: #{gcn_caps_forward.1} parent=1 // pred_fallthru
      _
    // Predicated region
    $region66: #{gcn_caps_forward.1} parent=1 // pred_check
      _
    $region67: #{gcn_caps_forward.1} parent=1 // pred_check_branch
      %107 = sbr.rel (0) target = $region69
    $region68: #{gcn_caps_forward.1} parent=1 // pred_region
      %108 = dma.done [#allocation6], 256
    $region69: #{gcn_caps_forward.1} parent=1 // pred_fallthru
      _
    // Predicated region
    $region70: #{gcn_caps_forward.1} parent=1 // pred_check
      _
    $region71: #{gcn_caps_forward.1} parent=1 // pred_check_branch
      %110 = sbr.rel (0) target = $region73
    $region72: #{gcn_caps_forward.1} parent=1 // pred_region
      %111 = dma.done [#allocation9], 128
    $region73: #{gcn_caps_forward.1} parent=1 // pred_fallthru
      _
    // Predicated region
    $region74: #{gcn_caps_forward.1} parent=1 // pred_check
      _
    $region75: #{gcn_caps_forward.1} parent=1 // pred_check_branch
      %113 = sbr.rel (0) target = $region77
    $region76: #{gcn_caps_forward.1} parent=1 // pred_region
      %114 = dma.done [#allocation9], 1536
    $region77: #{gcn_caps_forward.1} parent=1 // pred_fallthru
      _
    %v115 = vld [vmem:[%s0] sm:$0xff]
    %v116 = vld [vmem:[%s0 + $0x8] sm:$0xff]
    %v117 = vld [vmem:[#allocation5] sm:$0xff]
    %v118 = vld [vmem:[#allocation5 + $0x8] sm:$0xff]
    %vm119 = vcmask 130048
    %v121 = vsel %vm119, %v115, 0
    %v124 = vsel %vm119, %v116, 0
    %126 = vmatprep.subr.mxu0 0.0
    %127 = vmatpush1.msra.mxu0 0.0
    %128 = vmatprep.subr.mxu0 0.0
    %129 = vmatpush1.msra.mxu0 0.0
    %130 = vmatprep.subr.mxu0 0.0
    %131 = vmatpush1.msra.mxu0 0.0
    %132 = vmatprep.subr.mxu0 0.0
    %133 = vmatpush1.msra.mxu0 0.0
    %134 = vmatprep.subr.mxu0 0.0
    %135 = vmatpush1.msra.mxu0 0.0
    %136 = vmatprep.subr.mxu0 0.0
    %137 = vmatpush1.msra.mxu0 0.0
    %138 = vmatprep.subr.mxu0 0.0
    %139 = vmatpush1.msra.mxu0 0.0
    %140 = vmatprep.subr.mxu0 0.0
    %141 = vmatpush1.msra.mxu0 0.0
    %142 = vmatprep.subr.mxu0 0.0
    %143 = vmatpush1.msra.mxu0 0.0
    %144 = vmatprep.subr.mxu0 0.0
    %145 = vmatpush1.msra.mxu0 0.0
    %146 = vmatprep.subr.mxu0 0.0
    %147 = vmatpush1.msra.mxu0 0.0
    %148 = vmatprep.subr.mxu0 0.0
    %149 = vmatpush1.msra.mxu0 0.0
    %150 = vmatprep.subr.mxu0 0.0
    %151 = vmatpush1.msra.mxu0 0.0
    %152 = vmatprep.subr.mxu0 0.0
    %153 = vmatpush1.msra.mxu0 0.0
    %154 = vmatprep.subr.mxu0 0.0
    %155 = vmatpush1.msra.mxu0 %v118
    %156 = vmatprep.subr.mxu0 0.0
    %157 = vmatpush1.msra.mxu0 %v117
    %158 = vmatprep.subr.mxu0 0.0
    %159 = vmatpush2.msra.mxu0 0.0
    %160 = vmatprep.subr.mxu0 0.0
    %161 = vmatpush2.msra.mxu0 0.0
    %162 = vmatprep.subr.mxu0 0.0
    %163 = vmatpush2.msra.mxu0 0.0
    %164 = vmatprep.subr.mxu0 0.0
    %165 = vmatpush2.msra.mxu0 0.0
    %166 = vmatprep.subr.mxu0 0.0
    %167 = vmatpush2.msra.mxu0 0.0
    %168 = vmatprep.subr.mxu0 0.0
    %169 = vmatpush2.msra.mxu0 0.0
    %170 = vmatprep.subr.mxu0 0.0
    %171 = vmatpush2.msra.mxu0 0.0
    %172 = vmatprep.subr.mxu0 0.0
    %173 = vmatpush2.msra.mxu0 0.0
    %174 = vmatprep.subr.mxu0 0.0
    %175 = vmatpush2.msra.mxu0 0.0
    %176 = vmatprep.subr.mxu0 0.0
    %177 = vmatpush2.msra.mxu0 0.0
    %178 = vmatprep.subr.mxu0 0.0
    %179 = vmatpush2.msra.mxu0 0.0
    %180 = vmatprep.subr.mxu0 0.0
    %181 = vmatpush2.msra.mxu0 0.0
    %182 = vmatprep.subr.mxu0 0.0
    %183 = vmatpush2.msra.mxu0 0.0
    %184 = vmatprep.subr.mxu0 0.0
    %185 = vmatpush2.msra.mxu0 0.0
    %186 = vmatprep.subr.mxu0 0.0
    %187 = vmatpush2.msra.mxu0 0.0
    %188 = vmatprep.subr.mxu0 0.0
    %189 = vmatpush2.msra.mxu0 0.0
    %190 = vmatprep.mubr.f32.mxu0 0.0
    %191 = vmatmul.mubr.f32.gmra.mxu0 %v121
    %v192 = vpop.f32.mrf.mxu0
    %v193 = vadd.f32 0.0, %v192
    %v194 = vpop.f32.mrf.mxu0
    %195 = vmatprep.mubr.f32.mxu0 0.0
    %196 = vmatmul.mubr.f32.gmra.mxu0 %v124
    %v197 = vpop.f32.mrf.mxu0
    %v198 = vadd.f32 0.0, %v197
    %v199 = vpop.f32.mrf.mxu0
    %200 = vdwg.mxu0
    %v201 = vld [vmem:[%s1] sm:$0xff]
    %v202 = vld [vmem:[%s1 + $0x8] sm:$0xff]
    %v203 = vld [vmem:[#allocation7] sm:$0xff]
    %v204 = vld [vmem:[#allocation7 + $0x8] sm:$0xf]
    %vm205 = vcmask 97280
    %v207 = vsel %vm205, %v201, 0
    %v210 = vsel %vm205, %v202, 0
    %vm212 = vcmask 1043456
    %v214 = vsel %vm212, %v204, 0
    %216 = vmatprep.subr.mxu0 0.0
    %217 = vmatpush1.msra.mxu0 0.0
    %218 = vmatprep.subr.mxu0 0.0
    %219 = vmatpush1.msra.mxu0 0.0
    %220 = vmatprep.subr.mxu0 0.0
    %221 = vmatpush1.msra.mxu0 0.0
    %222 = vmatprep.subr.mxu0 0.0
    %223 = vmatpush1.msra.mxu0 0.0
    %224 = vmatprep.subr.mxu0 0.0
    %225 = vmatpush1.msra.mxu0 0.0
    %226 = vmatprep.subr.mxu0 0.0
    %227 = vmatpush1.msra.mxu0 0.0
    %228 = vmatprep.subr.mxu0 0.0
    %229 = vmatpush1.msra.mxu0 0.0
    %230 = vmatprep.subr.mxu0 0.0
    %231 = vmatpush1.msra.mxu0 0.0
    %232 = vmatprep.subr.mxu0 0.0
    %233 = vmatpush1.msra.mxu0 0.0
    %234 = vmatprep.subr.mxu0 0.0
    %235 = vmatpush1.msra.mxu0 0.0
    %236 = vmatprep.subr.mxu0 0.0
    %237 = vmatpush1.msra.mxu0 0.0
    %238 = vmatprep.subr.mxu0 0.0
    %239 = vmatpush1.msra.mxu0 0.0
    %240 = vmatprep.subr.mxu0 0.0
    %241 = vmatpush1.msra.mxu0 0.0
    %242 = vmatprep.subr.mxu0 0.0
    %243 = vmatpush1.msra.mxu0 0.0
    %244 = vmatprep.subr.mxu0 0.0
    %245 = vmatpush1.msra.mxu0 %v214
    %246 = vmatprep.subr.mxu0 0.0
    %247 = vmatpush1.msra.mxu0 %v203
    %248 = vmatprep.subr.mxu0 0.0
    %249 = vmatpush2.msra.mxu0 0.0
    %250 = vmatprep.subr.mxu0 0.0
    %251 = vmatpush2.msra.mxu0 0.0
    %252 = vmatprep.subr.mxu0 0.0
    %253 = vmatpush2.msra.mxu0 0.0
    %254 = vmatprep.subr.mxu0 0.0
    %255 = vmatpush2.msra.mxu0 0.0
    %256 = vmatprep.subr.mxu0 0.0
    %257 = vmatpush2.msra.mxu0 0.0
    %258 = vmatprep.subr.mxu0 0.0
    %259 = vmatpush2.msra.mxu0 0.0
    %260 = vmatprep.subr.mxu0 0.0
    %261 = vmatpush2.msra.mxu0 0.0
    %262 = vmatprep.subr.mxu0 0.0
    %263 = vmatpush2.msra.mxu0 0.0
    %264 = vmatprep.subr.mxu0 0.0
    %265 = vmatpush2.msra.mxu0 0.0
    %266 = vmatprep.subr.mxu0 0.0
    %267 = vmatpush2.msra.mxu0 0.0
    %268 = vmatprep.subr.mxu0 0.0
    %269 = vmatpush2.msra.mxu0 0.0
    %270 = vmatprep.subr.mxu0 0.0
    %271 = vmatpush2.msra.mxu0 0.0
    %272 = vmatprep.subr.mxu0 0.0
    %273 = vmatpush2.msra.mxu0 0.0
    %274 = vmatprep.subr.mxu0 0.0
    %275 = vmatpush2.msra.mxu0 0.0
    %276 = vmatprep.subr.mxu0 0.0
    %277 = vmatpush2.msra.mxu0 0.0
    %278 = vmatprep.subr.mxu0 0.0
    %279 = vmatpush2.msra.mxu0 0.0
    %280 = vmatprep.mubr.f32.mxu0 0.0
    %281 = vmatmul.mubr.f32.gmra.mxu0 %v207
    %v282 = vpop.f32.mrf.mxu0
    %v283 = vadd.f32 0.0, %v282
    %v284 = vpop.f32.mrf.mxu0
    %285 = vmatprep.mubr.f32.mxu0 0.0
    %286 = vmatmul.mubr.f32.gmra.mxu0 %v210
    %v287 = vpop.f32.mrf.mxu0
    %v288 = vadd.f32 0.0, %v287
    %v289 = vpop.f32.mrf.mxu0
    %290 = vdwg.mxu0
    %v291 = vld [vmem:[#allocation3] sm:$0xff]
    %v292 = vld [vmem:[#allocation3 + $0x8] sm:$0xff]
    %v293 = vld [vmem:[#allocation8] sm:$0xff]
    %vm294 = vcmask 64512
    %v296 = vsel %vm294, %v291, 0
    %v299 = vsel %vm294, %v292, 0
    %301 = vmatprep.subr.mxu0 0.0
    %302 = vmatpush1.msra.mxu0 0.0
    %303 = vmatprep.subr.mxu0 0.0
    %304 = vmatpush1.msra.mxu0 0.0
    %305 = vmatprep.subr.mxu0 0.0
    %306 = vmatpush1.msra.mxu0 0.0
    %307 = vmatprep.subr.mxu0 0.0
    %308 = vmatpush1.msra.mxu0 0.0
    %309 = vmatprep.subr.mxu0 0.0
    %310 = vmatpush1.msra.mxu0 0.0
    %311 = vmatprep.subr.mxu0 0.0
    %312 = vmatpush1.msra.mxu0 0.0
    %313 = vmatprep.subr.mxu0 0.0
    %314 = vmatpush1.msra.mxu0 0.0
    %315 = vmatprep.subr.mxu0 0.0
    %316 = vmatpush1.msra.mxu0 0.0
    %317 = vmatprep.subr.mxu0 0.0
    %318 = vmatpush1.msra.mxu0 0.0
    %319 = vmatprep.subr.mxu0 0.0
    %320 = vmatpush1.msra.mxu0 0.0
    %321 = vmatprep.subr.mxu0 0.0
    %322 = vmatpush1.msra.mxu0 0.0
    %323 = vmatprep.subr.mxu0 0.0
    %324 = vmatpush1.msra.mxu0 0.0
    %325 = vmatprep.subr.mxu0 0.0
    %326 = vmatpush1.msra.mxu0 0.0
    %327 = vmatprep.subr.mxu0 0.0
    %328 = vmatpush1.msra.mxu0 0.0
    %329 = vmatprep.subr.mxu0 0.0
    %330 = vmatpush1.msra.mxu0 0.0
    %331 = vmatprep.subr.mxu0 0.0
    %332 = vmatpush1.msra.mxu0 %v293
    %333 = vmatprep.subr.mxu0 0.0
    %334 = vmatpush2.msra.mxu0 0.0
    %335 = vmatprep.subr.mxu0 0.0
    %336 = vmatpush2.msra.mxu0 0.0
    %337 = vmatprep.subr.mxu0 0.0
    %338 = vmatpush2.msra.mxu0 0.0
    %339 = vmatprep.subr.mxu0 0.0
    %340 = vmatpush2.msra.mxu0 0.0
    %341 = vmatprep.subr.mxu0 0.0
    %342 = vmatpush2.msra.mxu0 0.0
    %343 = vmatprep.subr.mxu0 0.0
    %344 = vmatpush2.msra.mxu0 0.0
    %345 = vmatprep.subr.mxu0 0.0
    %346 = vmatpush2.msra.mxu0 0.0
    %347 = vmatprep.subr.mxu0 0.0
    %348 = vmatpush2.msra.mxu0 0.0
    %349 = vmatprep.subr.mxu0 0.0
    %350 = vmatpush2.msra.mxu0 0.0
    %351 = vmatprep.subr.mxu0 0.0
    %352 = vmatpush2.msra.mxu0 0.0
    %353 = vmatprep.subr.mxu0 0.0
    %354 = vmatpush2.msra.mxu0 0.0
    %355 = vmatprep.subr.mxu0 0.0
    %356 = vmatpush2.msra.mxu0 0.0
    %357 = vmatprep.subr.mxu0 0.0
    %358 = vmatpush2.msra.mxu0 0.0
    %359 = vmatprep.subr.mxu0 0.0
    %360 = vmatpush2.msra.mxu0 0.0
    %361 = vmatprep.subr.mxu0 0.0
    %362 = vmatpush2.msra.mxu0 0.0
    %363 = vmatprep.subr.mxu0 0.0
    %364 = vmatpush2.msra.mxu0 0.0
    %365 = vmatprep.mubr.f32.mxu0 0.0
    %366 = vmatmul.mubr.f32.gmra.mxu0 %v296
    %v367 = vpop.f32.mrf.mxu0
    %v368 = vadd.f32 0.0, %v367
    %v369 = vpop.f32.mrf.mxu0
    %370 = vmatprep.mubr.f32.mxu0 0.0
    %371 = vmatmul.mubr.f32.gmra.mxu0 %v299
    %v372 = vpop.f32.mrf.mxu0
    %v373 = vadd.f32 0.0, %v372
    %v374 = vpop.f32.mrf.mxu0
    %375 = vdwg.mxu0
    %v376 = vld [vmem:[%s6] sm:$0xff]
    %v377 = vld [vmem:[%s6 + $0x8] sm:$0xff]
    %v378 = vld [vmem:[%s6 + $0x10] sm:$0xff]
    %v379 = vld [vmem:[%s6 + $0x18] sm:$0xff]
    %vm380 = vcmask 261120
    %v382 = vsel %vm380, %v193, 0
    %v385 = vsel %vm380, %v198, 0
    %387 = vmatprep.subr.mxu0 0.0
    %388 = vmatpush1.msra.mxu0 0.0
    %389 = vmatprep.subr.mxu0 0.0
    %390 = vmatpush1.msra.mxu0 0.0
    %391 = vmatprep.subr.mxu0 0.0
    %392 = vmatpush1.msra.mxu0 0.0
    %393 = vmatprep.subr.mxu0 0.0
    %394 = vmatpush1.msra.mxu0 0.0
    %395 = vmatprep.subr.mxu0 0.0
    %396 = vmatpush1.msra.mxu0 0.0
    %397 = vmatprep.subr.mxu0 0.0
    %398 = vmatpush1.msra.mxu0 0.0
    %399 = vmatprep.subr.mxu0 0.0
    %400 = vmatpush1.msra.mxu0 0.0
    %401 = vmatprep.subr.mxu0 0.0
    %402 = vmatpush1.msra.mxu0 0.0
    %403 = vmatprep.subr.mxu0 0.0
    %404 = vmatpush1.msra.mxu0 0.0
    %405 = vmatprep.subr.mxu0 0.0
    %406 = vmatpush1.msra.mxu0 0.0
    %407 = vmatprep.subr.mxu0 0.0
    %408 = vmatpush1.msra.mxu0 0.0
    %409 = vmatprep.subr.mxu0 0.0
    %410 = vmatpush1.msra.mxu0 0.0
    %411 = vmatprep.subr.mxu0 0.0
    %412 = vmatpush1.msra.mxu0 %v379
    %413 = vmatprep.subr.mxu0 0.0
    %414 = vmatpush1.msra.mxu0 %v378
    %415 = vmatprep.subr.mxu0 0.0
    %416 = vmatpush1.msra.mxu0 %v377
    %417 = vmatprep.subr.mxu0 0.0
    %418 = vmatpush1.msra.mxu0 %v376
    %419 = vmatprep.subr.mxu0 0.0
    %420 = vmatpush2.msra.mxu0 0.0
    %421 = vmatprep.subr.mxu0 0.0
    %422 = vmatpush2.msra.mxu0 0.0
    %423 = vmatprep.subr.mxu0 0.0
    %424 = vmatpush2.msra.mxu0 0.0
    %425 = vmatprep.subr.mxu0 0.0
    %426 = vmatpush2.msra.mxu0 0.0
    %427 = vmatprep.subr.mxu0 0.0
    %428 = vmatpush2.msra.mxu0 0.0
    %429 = vmatprep.subr.mxu0 0.0
    %430 = vmatpush2.msra.mxu0 0.0
    %431 = vmatprep.subr.mxu0 0.0
    %432 = vmatpush2.msra.mxu0 0.0
    %433 = vmatprep.subr.mxu0 0.0
    %434 = vmatpush2.msra.mxu0 0.0
    %435 = vmatprep.subr.mxu0 0.0
    %436 = vmatpush2.msra.mxu0 0.0
    %437 = vmatprep.subr.mxu0 0.0
    %438 = vmatpush2.msra.mxu0 0.0
    %439 = vmatprep.subr.mxu0 0.0
    %440 = vmatpush2.msra.mxu0 0.0
    %441 = vmatprep.subr.mxu0 0.0
    %442 = vmatpush2.msra.mxu0 0.0
    %443 = vmatprep.subr.mxu0 0.0
    %444 = vmatpush2.msra.mxu0 0.0
    %445 = vmatprep.subr.mxu0 0.0
    %446 = vmatpush2.msra.mxu0 0.0
    %447 = vmatprep.subr.mxu0 0.0
    %448 = vmatpush2.msra.mxu0 0.0
    %449 = vmatprep.subr.mxu0 0.0
    %450 = vmatpush2.msra.mxu0 0.0
    %451 = vmatprep.mubr.f32.mxu0 0.0
    %452 = vmatmul.mubr.f32.gmra.mxu0 %v382
    %v453 = vpop.f32.mrf.mxu0
    %v454 = vadd.f32 0.0, %v453
    %v455 = vpop.f32.mrf.mxu0
    %456 = vmatprep.mubr.f32.mxu0 0.0
    %457 = vmatmul.mubr.f32.gmra.mxu0 %v385
    %v458 = vpop.f32.mrf.mxu0
    %v459 = vadd.f32 0.0, %v458
    %v460 = vpop.f32.mrf.mxu0
    %461 = vdwg.mxu0
    %466 = vrot.lane.b32.xlu0 %v376, 96
    %v467 = vpop.permute.xlu0 %466
    %468 = vrot.lane.b32.xlu0 %v377, 96
    %v469 = vpop.permute.xlu0 %468
    %470 = vrot.lane.b32.xlu0 %v378, 96
    %v471 = vpop.permute.xlu0 %470
    %472 = vrot.lane.b32.xlu0 %v379, 96
    %v473 = vpop.permute.xlu0 %472
    %v479 = vsel %vm380, %v283, 0
    %v482 = vsel %vm380, %v288, 0
    %484 = vmatprep.subr.mxu0 0.0
    %485 = vmatpush1.msra.mxu0 0.0
    %486 = vmatprep.subr.mxu0 0.0
    %487 = vmatpush1.msra.mxu0 0.0
    %488 = vmatprep.subr.mxu0 0.0
    %489 = vmatpush1.msra.mxu0 0.0
    %490 = vmatprep.subr.mxu0 0.0
    %491 = vmatpush1.msra.mxu0 0.0
    %492 = vmatprep.subr.mxu0 0.0
    %493 = vmatpush1.msra.mxu0 0.0
    %494 = vmatprep.subr.mxu0 0.0
    %495 = vmatpush1.msra.mxu0 0.0
    %496 = vmatprep.subr.mxu0 0.0
    %497 = vmatpush1.msra.mxu0 0.0
    %498 = vmatprep.subr.mxu0 0.0
    %499 = vmatpush1.msra.mxu0 0.0
    %500 = vmatprep.subr.mxu0 0.0
    %501 = vmatpush1.msra.mxu0 0.0
    %502 = vmatprep.subr.mxu0 0.0
    %503 = vmatpush1.msra.mxu0 0.0
    %504 = vmatprep.subr.mxu0 0.0
    %505 = vmatpush1.msra.mxu0 0.0
    %506 = vmatprep.subr.mxu0 0.0
    %507 = vmatpush1.msra.mxu0 0.0
    %508 = vmatprep.subr.mxu0 0.0
    %509 = vmatpush1.msra.mxu0 %v473
    %510 = vmatprep.subr.mxu0 0.0
    %511 = vmatpush1.msra.mxu0 %v471
    %512 = vmatprep.subr.mxu0 0.0
    %513 = vmatpush1.msra.mxu0 %v469
    %514 = vmatprep.subr.mxu0 0.0
    %515 = vmatpush1.msra.mxu0 %v467
    %516 = vmatprep.subr.mxu0 0.0
    %517 = vmatpush2.msra.mxu0 0.0
    %518 = vmatprep.subr.mxu0 0.0
    %519 = vmatpush2.msra.mxu0 0.0
    %520 = vmatprep.subr.mxu0 0.0
    %521 = vmatpush2.msra.mxu0 0.0
    %522 = vmatprep.subr.mxu0 0.0
    %523 = vmatpush2.msra.mxu0 0.0
    %524 = vmatprep.subr.mxu0 0.0
    %525 = vmatpush2.msra.mxu0 0.0
    %526 = vmatprep.subr.mxu0 0.0
    %527 = vmatpush2.msra.mxu0 0.0
    %528 = vmatprep.subr.mxu0 0.0
    %529 = vmatpush2.msra.mxu0 0.0
    %530 = vmatprep.subr.mxu0 0.0
    %531 = vmatpush2.msra.mxu0 0.0
    %532 = vmatprep.subr.mxu0 0.0
    %533 = vmatpush2.msra.mxu0 0.0
    %534 = vmatprep.subr.mxu0 0.0
    %535 = vmatpush2.msra.mxu0 0.0
    %536 = vmatprep.subr.mxu0 0.0
    %537 = vmatpush2.msra.mxu0 0.0
    %538 = vmatprep.subr.mxu0 0.0
    %539 = vmatpush2.msra.mxu0 0.0
    %540 = vmatprep.subr.mxu0 0.0
    %541 = vmatpush2.msra.mxu0 0.0
    %542 = vmatprep.subr.mxu0 0.0
    %543 = vmatpush2.msra.mxu0 0.0
    %544 = vmatprep.subr.mxu0 0.0
    %545 = vmatpush2.msra.mxu0 0.0
    %546 = vmatprep.subr.mxu0 0.0
    %547 = vmatpush2.msra.mxu0 0.0
    %548 = vmatprep.mubr.f32.mxu0 0.0
    %549 = vmatmul.mubr.f32.gmra.mxu0 %v479
    %v550 = vpop.f32.mrf.mxu0
    %v551 = vadd.f32 0.0, %v550
    %v552 = vpop.f32.mrf.mxu0
    %553 = vmatprep.mubr.f32.mxu0 0.0
    %554 = vmatmul.mubr.f32.gmra.mxu0 %v482
    %v555 = vpop.f32.mrf.mxu0
    %v556 = vadd.f32 0.0, %v555
    %v557 = vpop.f32.mrf.mxu0
    %558 = vdwg.mxu0
    %559 = vrot.lane.b32.xlu0 %v376, 64
    %v560 = vpop.permute.xlu0 %559
    %561 = vrot.lane.b32.xlu0 %v377, 64
    %v562 = vpop.permute.xlu0 %561
    %563 = vrot.lane.b32.xlu0 %v378, 64
    %v564 = vpop.permute.xlu0 %563
    %565 = vrot.lane.b32.xlu0 %v379, 64
    %v566 = vpop.permute.xlu0 %565
    %571 = vmatprep.subr.mxu0 0.0
    %572 = vmatpush1.msra.mxu0 0.0
    %573 = vmatprep.subr.mxu0 0.0
    %574 = vmatpush1.msra.mxu0 0.0
    %575 = vmatprep.subr.mxu0 0.0
    %576 = vmatpush1.msra.mxu0 0.0
    %577 = vmatprep.subr.mxu0 0.0
    %578 = vmatpush1.msra.mxu0 0.0
    %579 = vmatprep.subr.mxu0 0.0
    %580 = vmatpush1.msra.mxu0 0.0
    %581 = vmatprep.subr.mxu0 0.0
    %582 = vmatpush1.msra.mxu0 0.0
    %583 = vmatprep.subr.mxu0 0.0
    %584 = vmatpush1.msra.mxu0 0.0
    %585 = vmatprep.subr.mxu0 0.0
    %586 = vmatpush1.msra.mxu0 0.0
    %587 = vmatprep.subr.mxu0 0.0
    %588 = vmatpush1.msra.mxu0 0.0
    %589 = vmatprep.subr.mxu0 0.0
    %590 = vmatpush1.msra.mxu0 0.0
    %591 = vmatprep.subr.mxu0 0.0
    %592 = vmatpush1.msra.mxu0 0.0
    %593 = vmatprep.subr.mxu0 0.0
    %594 = vmatpush1.msra.mxu0 0.0
    %595 = vmatprep.subr.mxu0 0.0
    %596 = vmatpush1.msra.mxu0 %v566
    %597 = vmatprep.subr.mxu0 0.0
    %598 = vmatpush1.msra.mxu0 %v564
    %599 = vmatprep.subr.mxu0 0.0
    %600 = vmatpush1.msra.mxu0 %v562
    %601 = vmatprep.subr.mxu0 0.0
    %602 = vmatpush1.msra.mxu0 %v560
    %603 = vmatprep.subr.mxu0 0.0
    %604 = vmatpush2.msra.mxu0 0.0
    %605 = vmatprep.subr.mxu0 0.0
    %606 = vmatpush2.msra.mxu0 0.0
    %607 = vmatprep.subr.mxu0 0.0
    %608 = vmatpush2.msra.mxu0 0.0
    %609 = vmatprep.subr.mxu0 0.0
    %610 = vmatpush2.msra.mxu0 0.0
    %611 = vmatprep.subr.mxu0 0.0
    %612 = vmatpush2.msra.mxu0 0.0
    %613 = vmatprep.subr.mxu0 0.0
    %614 = vmatpush2.msra.mxu0 0.0
    %615 = vmatprep.subr.mxu0 0.0
    %616 = vmatpush2.msra.mxu0 0.0
    %617 = vmatprep.subr.mxu0 0.0
    %618 = vmatpush2.msra.mxu0 0.0
    %619 = vmatprep.subr.mxu0 0.0
    %620 = vmatpush2.msra.mxu0 0.0
    %621 = vmatprep.subr.mxu0 0.0
    %622 = vmatpush2.msra.mxu0 0.0
    %623 = vmatprep.subr.mxu0 0.0
    %624 = vmatpush2.msra.mxu0 0.0
    %625 = vmatprep.subr.mxu0 0.0
    %626 = vmatpush2.msra.mxu0 0.0
    %627 = vmatprep.subr.mxu0 0.0
    %628 = vmatpush2.msra.mxu0 0.0
    %629 = vmatprep.subr.mxu0 0.0
    %630 = vmatpush2.msra.mxu0 0.0
    %631 = vmatprep.subr.mxu0 0.0
    %632 = vmatpush2.msra.mxu0 0.0
    %633 = vmatprep.subr.mxu0 0.0
    %634 = vmatpush2.msra.mxu0 0.0
    %635 = vmatprep.mubr.f32.mxu0 0.0
    %636 = vmatmul.mubr.f32.gmra.mxu0 %v479
    %v637 = vpop.f32.mrf.mxu0
    %v638 = vadd.f32 0.0, %v637
    %v639 = vpop.f32.mrf.mxu0
    %640 = vmatprep.mubr.f32.mxu0 0.0
    %641 = vmatmul.mubr.f32.gmra.mxu0 %v482
    %v642 = vpop.f32.mrf.mxu0
    %v643 = vadd.f32 0.0, %v642
    %v644 = vpop.f32.mrf.mxu0
    %645 = vdwg.mxu0
    %v647 = vsel %vm380, %v454, 0
    %v650 = vsel %vm380, %v551, 0
    %652 = vmatprep.subr.mxu0 0.0
    %653 = vmatpush1.xpose.msra.mxu0 0.0
    %654 = vmatprep.subr.mxu0 0.0
    %655 = vmatpush1.xpose.msra.mxu0 0.0
    %656 = vmatprep.subr.mxu0 0.0
    %657 = vmatpush1.xpose.msra.mxu0 0.0
    %658 = vmatprep.subr.mxu0 0.0
    %659 = vmatpush1.xpose.msra.mxu0 0.0
    %660 = vmatprep.subr.mxu0 0.0
    %661 = vmatpush1.xpose.msra.mxu0 0.0
    %662 = vmatprep.subr.mxu0 0.0
    %663 = vmatpush1.xpose.msra.mxu0 0.0
    %664 = vmatprep.subr.mxu0 0.0
    %665 = vmatpush1.xpose.msra.mxu0 0.0
    %666 = vmatprep.subr.mxu0 0.0
    %667 = vmatpush1.xpose.msra.mxu0 0.0
    %668 = vmatprep.subr.mxu0 0.0
    %669 = vmatpush1.xpose.msra.mxu0 0.0
    %670 = vmatprep.subr.mxu0 0.0
    %671 = vmatpush1.xpose.msra.mxu0 0.0
    %672 = vmatprep.subr.mxu0 0.0
    %673 = vmatpush1.xpose.msra.mxu0 0.0
    %674 = vmatprep.subr.mxu0 0.0
    %675 = vmatpush1.xpose.msra.mxu0 0.0
    %676 = vmatprep.subr.mxu0 0.0
    %677 = vmatpush1.xpose.msra.mxu0 0.0
    %678 = vmatprep.subr.mxu0 0.0
    %679 = vmatpush1.xpose.msra.mxu0 0.0
    %680 = vmatprep.subr.mxu0 0.0
    %681 = vmatpush1.xpose.msra.mxu0 0.0
    %682 = vmatprep.subr.mxu0 0.0
    %683 = vmatpush1.xpose.msra.mxu0 %v650
    %684 = vmatprep.subr.mxu0 0.0
    %685 = vmatpush2.xpose.msra.mxu0 0.0
    %686 = vmatprep.subr.mxu0 0.0
    %687 = vmatpush2.xpose.msra.mxu0 0.0
    %688 = vmatprep.subr.mxu0 0.0
    %689 = vmatpush2.xpose.msra.mxu0 0.0
    %690 = vmatprep.subr.mxu0 0.0
    %691 = vmatpush2.xpose.msra.mxu0 0.0
    %692 = vmatprep.subr.mxu0 0.0
    %693 = vmatpush2.xpose.msra.mxu0 0.0
    %694 = vmatprep.subr.mxu0 0.0
    %695 = vmatpush2.xpose.msra.mxu0 0.0
    %696 = vmatprep.subr.mxu0 0.0
    %697 = vmatpush2.xpose.msra.mxu0 0.0
    %698 = vmatprep.subr.mxu0 0.0
    %699 = vmatpush2.xpose.msra.mxu0 0.0
    %700 = vmatprep.subr.mxu0 0.0
    %701 = vmatpush2.xpose.msra.mxu0 0.0
    %702 = vmatprep.subr.mxu0 0.0
    %703 = vmatpush2.xpose.msra.mxu0 0.0
    %704 = vmatprep.subr.mxu0 0.0
    %705 = vmatpush2.xpose.msra.mxu0 0.0
    %706 = vmatprep.subr.mxu0 0.0
    %707 = vmatpush2.xpose.msra.mxu0 0.0
    %708 = vmatprep.subr.mxu0 0.0
    %709 = vmatpush2.xpose.msra.mxu0 0.0
    %710 = vmatprep.subr.mxu0 0.0
    %711 = vmatpush2.xpose.msra.mxu0 0.0
    %712 = vmatprep.subr.mxu0 0.0
    %713 = vmatpush2.xpose.msra.mxu0 0.0
    %714 = vmatprep.subr.mxu0 0.0
    %715 = vmatpush2.xpose.msra.mxu0 0.0
    %716 = vmatprep.mubr.f32.mxu0 0.0
    %717 = vmatmul.mubr.f32.gmra.mxu0 %v647
    %v718 = vpop.f32.mrf.mxu0
    %v719 = vadd.f32 0.0, %v718
    %v720 = vpop.f32.mrf.mxu0
    %721 = vdwg.mxu0
    %v723 = vsel %vm380, %v459, 0
    %v726 = vsel %vm380, %v556, 0
    %728 = vmatprep.subr.mxu0 0.0
    %729 = vmatpush1.xpose.msra.mxu0 0.0
    %730 = vmatprep.subr.mxu0 0.0
    %731 = vmatpush1.xpose.msra.mxu0 0.0
    %732 = vmatprep.subr.mxu0 0.0
    %733 = vmatpush1.xpose.msra.mxu0 0.0
    %734 = vmatprep.subr.mxu0 0.0
    %735 = vmatpush1.xpose.msra.mxu0 0.0
    %736 = vmatprep.subr.mxu0 0.0
    %737 = vmatpush1.xpose.msra.mxu0 0.0
    %738 = vmatprep.subr.mxu0 0.0
    %739 = vmatpush1.xpose.msra.mxu0 0.0
    %740 = vmatprep.subr.mxu0 0.0
    %741 = vmatpush1.xpose.msra.mxu0 0.0
    %742 = vmatprep.subr.mxu0 0.0
    %743 = vmatpush1.xpose.msra.mxu0 0.0
    %744 = vmatprep.subr.mxu0 0.0
    %745 = vmatpush1.xpose.msra.mxu0 0.0
    %746 = vmatprep.subr.mxu0 0.0
    %747 = vmatpush1.xpose.msra.mxu0 0.0
    %748 = vmatprep.subr.mxu0 0.0
    %749 = vmatpush1.xpose.msra.mxu0 0.0
    %750 = vmatprep.subr.mxu0 0.0
    %751 = vmatpush1.xpose.msra.mxu0 0.0
    %752 = vmatprep.subr.mxu0 0.0
    %753 = vmatpush1.xpose.msra.mxu0 0.0
    %754 = vmatprep.subr.mxu0 0.0
    %755 = vmatpush1.xpose.msra.mxu0 0.0
    %756 = vmatprep.subr.mxu0 0.0
    %757 = vmatpush1.xpose.msra.mxu0 0.0
    %758 = vmatprep.subr.mxu0 0.0
    %759 = vmatpush1.xpose.msra.mxu0 %v726
    %760 = vmatprep.subr.mxu0 0.0
    %761 = vmatpush2.xpose.msra.mxu0 0.0
    %762 = vmatprep.subr.mxu0 0.0
    %763 = vmatpush2.xpose.msra.mxu0 0.0
    %764 = vmatprep.subr.mxu0 0.0
    %765 = vmatpush2.xpose.msra.mxu0 0.0
    %766 = vmatprep.subr.mxu0 0.0
    %767 = vmatpush2.xpose.msra.mxu0 0.0
    %768 = vmatprep.subr.mxu0 0.0
    %769 = vmatpush2.xpose.msra.mxu0 0.0
    %770 = vmatprep.subr.mxu0 0.0
    %771 = vmatpush2.xpose.msra.mxu0 0.0
    %772 = vmatprep.subr.mxu0 0.0
    %773 = vmatpush2.xpose.msra.mxu0 0.0
    %774 = vmatprep.subr.mxu0 0.0
    %775 = vmatpush2.xpose.msra.mxu0 0.0
    %776 = vmatprep.subr.mxu0 0.0
    %777 = vmatpush2.xpose.msra.mxu0 0.0
    %778 = vmatprep.subr.mxu0 0.0
    %779 = vmatpush2.xpose.msra.mxu0 0.0
    %780 = vmatprep.subr.mxu0 0.0
    %781 = vmatpush2.xpose.msra.mxu0 0.0
    %782 = vmatprep.subr.mxu0 0.0
    %783 = vmatpush2.xpose.msra.mxu0 0.0
    %784 = vmatprep.subr.mxu0 0.0
    %785 = vmatpush2.xpose.msra.mxu0 0.0
    %786 = vmatprep.subr.mxu0 0.0
    %787 = vmatpush2.xpose.msra.mxu0 0.0
    %788 = vmatprep.subr.mxu0 0.0
    %789 = vmatpush2.xpose.msra.mxu0 0.0
    %790 = vmatprep.subr.mxu0 0.0
    %791 = vmatpush2.xpose.msra.mxu0 0.0
    %792 = vmatprep.mubr.f32.mxu0 0.0
    %793 = vmatmul.mubr.f32.gmra.mxu0 %v723
    %v794 = vpop.f32.mrf.mxu0
    %v795 = vadd.f32 0.0, %v794
    %v796 = vpop.f32.mrf.mxu0
    %797 = vdwg.mxu0
    %v798 = vmul.f32 %v719, 0.17677669
    %v799 = vmul.f32 %v795, 0.17677669
    %v800 = vsel %vm294, %v798, -inf
    %801 = vmax.xlane.f32.xlu0 %v800
    %v802 = vpop.xlane.xlu0 %801
    %v803 = vsel %vm294, %v799, -inf
    %804 = vmax.xlane.f32.xlu0 %v803
    %v805 = vpop.xlane.xlu0 %804
    %v806 = vsub.f32 %v798, %v802
    %v807 = vsub.f32 %v799, %v805
    %v808 = vmul.f32 %v806, 1.442695
    %v809 = vpow.pop %v808
    %v810 = vmul.f32 %v807, 1.442695
    %v811 = vpow.pop %v810
    %v812 = vsel %vm294, %v809, 0.0
    %813 = vadd.xlane.f32.xlu0 %v812
    %v814 = vpop.xlane.xlu0 %813
    %v815 = vsel %vm294, %v811, 0.0
    %816 = vadd.xlane.f32.xlu0 %v815
    %v817 = vpop.xlane.xlu0 %816
    %v818 = vrcp.pop %v814
    %v819 = vrcp.pop %v817
    %v820 = vmul.f32 %v809, %v818
    %v821 = vmul.f32 %v811, %v819
    %v823 = vsel %vm294, %v820, 0
    %825 = vmatprep.subr.mxu0 0.0
    %826 = vmatpush1.msra.mxu0 0.0
    %827 = vmatprep.subr.mxu0 0.0
    %828 = vmatpush1.msra.mxu0 0.0
    %829 = vmatprep.subr.mxu0 0.0
    %830 = vmatpush1.msra.mxu0 0.0
    %831 = vmatprep.subr.mxu0 0.0
    %832 = vmatpush1.msra.mxu0 0.0
    %833 = vmatprep.subr.mxu0 0.0
    %834 = vmatpush1.msra.mxu0 0.0
    %835 = vmatprep.subr.mxu0 0.0
    %836 = vmatpush1.msra.mxu0 0.0
    %837 = vmatprep.subr.mxu0 0.0
    %838 = vmatpush1.msra.mxu0 0.0
    %839 = vmatprep.subr.mxu0 0.0
    %840 = vmatpush1.msra.mxu0 0.0
    %841 = vmatprep.subr.mxu0 0.0
    %842 = vmatpush1.msra.mxu0 0.0
    %843 = vmatprep.subr.mxu0 0.0
    %844 = vmatpush1.msra.mxu0 0.0
    %845 = vmatprep.subr.mxu0 0.0
    %846 = vmatpush1.msra.mxu0 0.0
    %847 = vmatprep.subr.mxu0 0.0
    %848 = vmatpush1.msra.mxu0 0.0
    %849 = vmatprep.subr.mxu0 0.0
    %850 = vmatpush1.msra.mxu0 0.0
    %851 = vmatprep.subr.mxu0 0.0
    %852 = vmatpush1.msra.mxu0 0.0
    %853 = vmatprep.subr.mxu0 0.0
    %854 = vmatpush1.msra.mxu0 0.0
    %855 = vmatprep.subr.mxu0 0.0
    %856 = vmatpush1.msra.mxu0 %v638
    %857 = vmatprep.subr.mxu0 0.0
    %858 = vmatpush2.msra.mxu0 0.0
    %859 = vmatprep.subr.mxu0 0.0
    %860 = vmatpush2.msra.mxu0 0.0
    %861 = vmatprep.subr.mxu0 0.0
    %862 = vmatpush2.msra.mxu0 0.0
    %863 = vmatprep.subr.mxu0 0.0
    %864 = vmatpush2.msra.mxu0 0.0
    %865 = vmatprep.subr.mxu0 0.0
    %866 = vmatpush2.msra.mxu0 0.0
    %867 = vmatprep.subr.mxu0 0.0
    %868 = vmatpush2.msra.mxu0 0.0
    %869 = vmatprep.subr.mxu0 0.0
    %870 = vmatpush2.msra.mxu0 0.0
    %871 = vmatprep.subr.mxu0 0.0
    %872 = vmatpush2.msra.mxu0 0.0
    %873 = vmatprep.subr.mxu0 0.0
    %874 = vmatpush2.msra.mxu0 0.0
    %875 = vmatprep.subr.mxu0 0.0
    %876 = vmatpush2.msra.mxu0 0.0
    %877 = vmatprep.subr.mxu0 0.0
    %878 = vmatpush2.msra.mxu0 0.0
    %879 = vmatprep.subr.mxu0 0.0
    %880 = vmatpush2.msra.mxu0 0.0
    %881 = vmatprep.subr.mxu0 0.0
    %882 = vmatpush2.msra.mxu0 0.0
    %883 = vmatprep.subr.mxu0 0.0
    %884 = vmatpush2.msra.mxu0 0.0
    %885 = vmatprep.subr.mxu0 0.0
    %886 = vmatpush2.msra.mxu0 0.0
    %887 = vmatprep.subr.mxu0 0.0
    %888 = vmatpush2.msra.mxu0 0.0
    %889 = vmatprep.mubr.f32.mxu0 0.0
    %890 = vmatmul.mubr.f32.gmra.mxu0 %v823
    %v891 = vpop.f32.mrf.mxu0
    %v892 = vadd.f32 0.0, %v891
    %v893 = vpop.f32.mrf.mxu0
    %894 = vdwg.mxu0
    %v896 = vsel %vm294, %v821, 0
    %898 = vmatprep.subr.mxu0 0.0
    %899 = vmatpush1.msra.mxu0 0.0
    %900 = vmatprep.subr.mxu0 0.0
    %901 = vmatpush1.msra.mxu0 0.0
    %902 = vmatprep.subr.mxu0 0.0
    %903 = vmatpush1.msra.mxu0 0.0
    %904 = vmatprep.subr.mxu0 0.0
    %905 = vmatpush1.msra.mxu0 0.0
    %906 = vmatprep.subr.mxu0 0.0
    %907 = vmatpush1.msra.mxu0 0.0
    %908 = vmatprep.subr.mxu0 0.0
    %909 = vmatpush1.msra.mxu0 0.0
    %910 = vmatprep.subr.mxu0 0.0
    %911 = vmatpush1.msra.mxu0 0.0
    %912 = vmatprep.subr.mxu0 0.0
    %913 = vmatpush1.msra.mxu0 0.0
    %914 = vmatprep.subr.mxu0 0.0
    %915 = vmatpush1.msra.mxu0 0.0
    %916 = vmatprep.subr.mxu0 0.0
    %917 = vmatpush1.msra.mxu0 0.0
    %918 = vmatprep.subr.mxu0 0.0
    %919 = vmatpush1.msra.mxu0 0.0
    %920 = vmatprep.subr.mxu0 0.0
    %921 = vmatpush1.msra.mxu0 0.0
    %922 = vmatprep.subr.mxu0 0.0
    %923 = vmatpush1.msra.mxu0 0.0
    %924 = vmatprep.subr.mxu0 0.0
    %925 = vmatpush1.msra.mxu0 0.0
    %926 = vmatprep.subr.mxu0 0.0
    %927 = vmatpush1.msra.mxu0 0.0
    %928 = vmatprep.subr.mxu0 0.0
    %929 = vmatpush1.msra.mxu0 %v643
    %930 = vmatprep.subr.mxu0 0.0
    %931 = vmatpush2.msra.mxu0 0.0
    %932 = vmatprep.subr.mxu0 0.0
    %933 = vmatpush2.msra.mxu0 0.0
    %934 = vmatprep.subr.mxu0 0.0
    %935 = vmatpush2.msra.mxu0 0.0
    %936 = vmatprep.subr.mxu0 0.0
    %937 = vmatpush2.msra.mxu0 0.0
    %938 = vmatprep.subr.mxu0 0.0
    %939 = vmatpush2.msra.mxu0 0.0
    %940 = vmatprep.subr.mxu0 0.0
    %941 = vmatpush2.msra.mxu0 0.0
    %942 = vmatprep.subr.mxu0 0.0
    %943 = vmatpush2.msra.mxu0 0.0
    %944 = vmatprep.subr.mxu0 0.0
    %945 = vmatpush2.msra.mxu0 0.0
    %946 = vmatprep.subr.mxu0 0.0
    %947 = vmatpush2.msra.mxu0 0.0
    %948 = vmatprep.subr.mxu0 0.0
    %949 = vmatpush2.msra.mxu0 0.0
    %950 = vmatprep.subr.mxu0 0.0
    %951 = vmatpush2.msra.mxu0 0.0
    %952 = vmatprep.subr.mxu0 0.0
    %953 = vmatpush2.msra.mxu0 0.0
    %954 = vmatprep.subr.mxu0 0.0
    %955 = vmatpush2.msra.mxu0 0.0
    %956 = vmatprep.subr.mxu0 0.0
    %957 = vmatpush2.msra.mxu0 0.0
    %958 = vmatprep.subr.mxu0 0.0
    %959 = vmatpush2.msra.mxu0 0.0
    %960 = vmatprep.subr.mxu0 0.0
    %961 = vmatpush2.msra.mxu0 0.0
    %962 = vmatprep.mubr.f32.mxu0 0.0
    %963 = vmatmul.mubr.f32.gmra.mxu0 %v896
    %v964 = vpop.f32.mrf.mxu0
    %v965 = vadd.f32 0.0, %v964
    %v966 = vpop.f32.mrf.mxu0
    %967 = vdwg.mxu0
    %v968 = vadd.f32 %v193, %v892
    %v969 = vadd.f32 %v198, %v965
    %v971 = vsel %vm380, %v368, 0
    %v974 = vsel %vm380, %v373, 0
    %976 = vmatprep.subr.mxu0 0.0
    %977 = vmatpush1.msra.mxu0 0.0
    %978 = vmatprep.subr.mxu0 0.0
    %979 = vmatpush1.msra.mxu0 0.0
    %980 = vmatprep.subr.mxu0 0.0
    %981 = vmatpush1.msra.mxu0 0.0
    %982 = vmatprep.subr.mxu0 0.0
    %983 = vmatpush1.msra.mxu0 0.0
    %984 = vmatprep.subr.mxu0 0.0
    %985 = vmatpush1.msra.mxu0 0.0
    %986 = vmatprep.subr.mxu0 0.0
    %987 = vmatpush1.msra.mxu0 0.0
    %988 = vmatprep.subr.mxu0 0.0
    %989 = vmatpush1.msra.mxu0 0.0
    %990 = vmatprep.subr.mxu0 0.0
    %991 = vmatpush1.msra.mxu0 0.0
    %992 = vmatprep.subr.mxu0 0.0
    %993 = vmatpush1.msra.mxu0 0.0
    %994 = vmatprep.subr.mxu0 0.0
    %995 = vmatpush1.msra.mxu0 0.0
    %996 = vmatprep.subr.mxu0 0.0
    %997 = vmatpush1.msra.mxu0 0.0
    %998 = vmatprep.subr.mxu0 0.0
    %999 = vmatpush1.msra.mxu0 0.0
    %1000 = vmatprep.subr.mxu0 0.0
    %1001 = vmatpush1.msra.mxu0 %v473
    %1002 = vmatprep.subr.mxu0 0.0
    %1003 = vmatpush1.msra.mxu0 %v471
    %1004 = vmatprep.subr.mxu0 0.0
    %1005 = vmatpush1.msra.mxu0 %v469
    %1006 = vmatprep.subr.mxu0 0.0
    %1007 = vmatpush1.msra.mxu0 %v467
    %1008 = vmatprep.subr.mxu0 0.0
    %1009 = vmatpush2.msra.mxu0 0.0
    %1010 = vmatprep.subr.mxu0 0.0
    %1011 = vmatpush2.msra.mxu0 0.0
    %1012 = vmatprep.subr.mxu0 0.0
    %1013 = vmatpush2.msra.mxu0 0.0
    %1014 = vmatprep.subr.mxu0 0.0
    %1015 = vmatpush2.msra.mxu0 0.0
    %1016 = vmatprep.subr.mxu0 0.0
    %1017 = vmatpush2.msra.mxu0 0.0
    %1018 = vmatprep.subr.mxu0 0.0
    %1019 = vmatpush2.msra.mxu0 0.0
    %1020 = vmatprep.subr.mxu0 0.0
    %1021 = vmatpush2.msra.mxu0 0.0
    %1022 = vmatprep.subr.mxu0 0.0
    %1023 = vmatpush2.msra.mxu0 0.0
    %1024 = vmatprep.subr.mxu0 0.0
    %1025 = vmatpush2.msra.mxu0 0.0
    %1026 = vmatprep.subr.mxu0 0.0
    %1027 = vmatpush2.msra.mxu0 0.0
    %1028 = vmatprep.subr.mxu0 0.0
    %1029 = vmatpush2.msra.mxu0 0.0
    %1030 = vmatprep.subr.mxu0 0.0
    %1031 = vmatpush2.msra.mxu0 0.0
    %1032 = vmatprep.subr.mxu0 0.0
    %1033 = vmatpush2.msra.mxu0 0.0
    %1034 = vmatprep.subr.mxu0 0.0
    %1035 = vmatpush2.msra.mxu0 0.0
    %1036 = vmatprep.subr.mxu0 0.0
    %1037 = vmatpush2.msra.mxu0 0.0
    %1038 = vmatprep.subr.mxu0 0.0
    %1039 = vmatpush2.msra.mxu0 0.0
    %1040 = vmatprep.mubr.f32.mxu0 0.0
    %1041 = vmatmul.mubr.f32.gmra.mxu0 %v971
    %v1042 = vpop.f32.mrf.mxu0
    %v1043 = vadd.f32 0.0, %v1042
    %v1044 = vpop.f32.mrf.mxu0
    %1045 = vmatprep.mubr.f32.mxu0 0.0
    %1046 = vmatmul.mubr.f32.gmra.mxu0 %v974
    %v1047 = vpop.f32.mrf.mxu0
    %v1048 = vadd.f32 0.0, %v1047
    %v1049 = vpop.f32.mrf.mxu0
    %1050 = vdwg.mxu0
    %1051 = vmatprep.subr.mxu0 0.0
    %1052 = vmatpush1.msra.mxu0 0.0
    %1053 = vmatprep.subr.mxu0 0.0
    %1054 = vmatpush1.msra.mxu0 0.0
    %1055 = vmatprep.subr.mxu0 0.0
    %1056 = vmatpush1.msra.mxu0 0.0
    %1057 = vmatprep.subr.mxu0 0.0
    %1058 = vmatpush1.msra.mxu0 0.0
    %1059 = vmatprep.subr.mxu0 0.0
    %1060 = vmatpush1.msra.mxu0 0.0
    %1061 = vmatprep.subr.mxu0 0.0
    %1062 = vmatpush1.msra.mxu0 0.0
    %1063 = vmatprep.subr.mxu0 0.0
    %1064 = vmatpush1.msra.mxu0 0.0
    %1065 = vmatprep.subr.mxu0 0.0
    %1066 = vmatpush1.msra.mxu0 0.0
    %1067 = vmatprep.subr.mxu0 0.0
    %1068 = vmatpush1.msra.mxu0 0.0
    %1069 = vmatprep.subr.mxu0 0.0
    %1070 = vmatpush1.msra.mxu0 0.0
    %1071 = vmatprep.subr.mxu0 0.0
    %1072 = vmatpush1.msra.mxu0 0.0
    %1073 = vmatprep.subr.mxu0 0.0
    %1074 = vmatpush1.msra.mxu0 0.0
    %1075 = vmatprep.subr.mxu0 0.0
    %1076 = vmatpush1.msra.mxu0 %v566
    %1077 = vmatprep.subr.mxu0 0.0
    %1078 = vmatpush1.msra.mxu0 %v564
    %1079 = vmatprep.subr.mxu0 0.0
    %1080 = vmatpush1.msra.mxu0 %v562
    %1081 = vmatprep.subr.mxu0 0.0
    %1082 = vmatpush1.msra.mxu0 %v560
    %1083 = vmatprep.subr.mxu0 0.0
    %1084 = vmatpush2.msra.mxu0 0.0
    %1085 = vmatprep.subr.mxu0 0.0
    %1086 = vmatpush2.msra.mxu0 0.0
    %1087 = vmatprep.subr.mxu0 0.0
    %1088 = vmatpush2.msra.mxu0 0.0
    %1089 = vmatprep.subr.mxu0 0.0
    %1090 = vmatpush2.msra.mxu0 0.0
    %1091 = vmatprep.subr.mxu0 0.0
    %1092 = vmatpush2.msra.mxu0 0.0
    %1093 = vmatprep.subr.mxu0 0.0
    %1094 = vmatpush2.msra.mxu0 0.0
    %1095 = vmatprep.subr.mxu0 0.0
    %1096 = vmatpush2.msra.mxu0 0.0
    %1097 = vmatprep.subr.mxu0 0.0
    %1098 = vmatpush2.msra.mxu0 0.0
    %1099 = vmatprep.subr.mxu0 0.0
    %1100 = vmatpush2.msra.mxu0 0.0
    %1101 = vmatprep.subr.mxu0 0.0
    %1102 = vmatpush2.msra.mxu0 0.0
    %1103 = vmatprep.subr.mxu0 0.0
    %1104 = vmatpush2.msra.mxu0 0.0
    %1105 = vmatprep.subr.mxu0 0.0
    %1106 = vmatpush2.msra.mxu0 0.0
    %1107 = vmatprep.subr.mxu0 0.0
    %1108 = vmatpush2.msra.mxu0 0.0
    %1109 = vmatprep.subr.mxu0 0.0
    %1110 = vmatpush2.msra.mxu0 0.0
    %1111 = vmatprep.subr.mxu0 0.0
    %1112 = vmatpush2.msra.mxu0 0.0
    %1113 = vmatprep.subr.mxu0 0.0
    %1114 = vmatpush2.msra.mxu0 0.0
    %1115 = vmatprep.mubr.f32.mxu0 0.0
    %1116 = vmatmul.mubr.f32.gmra.mxu0 %v971
    %v1117 = vpop.f32.mrf.mxu0
    %v1118 = vadd.f32 0.0, %v1117
    %v1119 = vpop.f32.mrf.mxu0
    %1120 = vmatprep.mubr.f32.mxu0 0.0
    %1121 = vmatmul.mubr.f32.gmra.mxu0 %v974
    %v1122 = vpop.f32.mrf.mxu0
    %v1123 = vadd.f32 0.0, %v1122
    %v1124 = vpop.f32.mrf.mxu0
    %1125 = vdwg.mxu0
    %v1127 = vsel %vm380, %v1043, 0
    %1129 = vmatprep.subr.mxu0 0.0
    %1130 = vmatpush1.xpose.msra.mxu0 0.0
    %1131 = vmatprep.subr.mxu0 0.0
    %1132 = vmatpush1.xpose.msra.mxu0 0.0
    %1133 = vmatprep.subr.mxu0 0.0
    %1134 = vmatpush1.xpose.msra.mxu0 0.0
    %1135 = vmatprep.subr.mxu0 0.0
    %1136 = vmatpush1.xpose.msra.mxu0 0.0
    %1137 = vmatprep.subr.mxu0 0.0
    %1138 = vmatpush1.xpose.msra.mxu0 0.0
    %1139 = vmatprep.subr.mxu0 0.0
    %1140 = vmatpush1.xpose.msra.mxu0 0.0
    %1141 = vmatprep.subr.mxu0 0.0
    %1142 = vmatpush1.xpose.msra.mxu0 0.0
    %1143 = vmatprep.subr.mxu0 0.0
    %1144 = vmatpush1.xpose.msra.mxu0 0.0
    %1145 = vmatprep.subr.mxu0 0.0
    %1146 = vmatpush1.xpose.msra.mxu0 0.0
    %1147 = vmatprep.subr.mxu0 0.0
    %1148 = vmatpush1.xpose.msra.mxu0 0.0
    %1149 = vmatprep.subr.mxu0 0.0
    %1150 = vmatpush1.xpose.msra.mxu0 0.0
    %1151 = vmatprep.subr.mxu0 0.0
    %1152 = vmatpush1.xpose.msra.mxu0 0.0
    %1153 = vmatprep.subr.mxu0 0.0
    %1154 = vmatpush1.xpose.msra.mxu0 0.0
    %1155 = vmatprep.subr.mxu0 0.0
    %1156 = vmatpush1.xpose.msra.mxu0 0.0
    %1157 = vmatprep.subr.mxu0 0.0
    %1158 = vmatpush1.xpose.msra.mxu0 0.0
    %1159 = vmatprep.subr.mxu0 0.0
    %1160 = vmatpush1.xpose.msra.mxu0 %v1127
    %1161 = vmatprep.subr.mxu0 0.0
    %1162 = vmatpush2.xpose.msra.mxu0 0.0
    %1163 = vmatprep.subr.mxu0 0.0
    %1164 = vmatpush2.xpose.msra.mxu0 0.0
    %1165 = vmatprep.subr.mxu0 0.0
    %1166 = vmatpush2.xpose.msra.mxu0 0.0
    %1167 = vmatprep.subr.mxu0 0.0
    %1168 = vmatpush2.xpose.msra.mxu0 0.0
    %1169 = vmatprep.subr.mxu0 0.0
    %1170 = vmatpush2.xpose.msra.mxu0 0.0
    %1171 = vmatprep.subr.mxu0 0.0
    %1172 = vmatpush2.xpose.msra.mxu0 0.0
    %1173 = vmatprep.subr.mxu0 0.0
    %1174 = vmatpush2.xpose.msra.mxu0 0.0
    %1175 = vmatprep.subr.mxu0 0.0
    %1176 = vmatpush2.xpose.msra.mxu0 0.0
    %1177 = vmatprep.subr.mxu0 0.0
    %1178 = vmatpush2.xpose.msra.mxu0 0.0
    %1179 = vmatprep.subr.mxu0 0.0
    %1180 = vmatpush2.xpose.msra.mxu0 0.0
    %1181 = vmatprep.subr.mxu0 0.0
    %1182 = vmatpush2.xpose.msra.mxu0 0.0
    %1183 = vmatprep.subr.mxu0 0.0
    %1184 = vmatpush2.xpose.msra.mxu0 0.0
    %1185 = vmatprep.subr.mxu0 0.0
    %1186 = vmatpush2.xpose.msra.mxu0 0.0
    %1187 = vmatprep.subr.mxu0 0.0
    %1188 = vmatpush2.xpose.msra.mxu0 0.0
    %1189 = vmatprep.subr.mxu0 0.0
    %1190 = vmatpush2.xpose.msra.mxu0 0.0
    %1191 = vmatprep.subr.mxu0 0.0
    %1192 = vmatpush2.xpose.msra.mxu0 0.0
    %1193 = vmatprep.mubr.f32.mxu0 0.0
    %1194 = vmatmul.mubr.f32.gmra.mxu0 %v647
    %v1195 = vpop.f32.mrf.mxu0
    %v1196 = vadd.f32 0.0, %v1195
    %v1197 = vpop.f32.mrf.mxu0
    %1198 = vdwg.mxu0
    %v1200 = vsel %vm380, %v1048, 0
    %1202 = vmatprep.subr.mxu0 0.0
    %1203 = vmatpush1.xpose.msra.mxu0 0.0
    %1204 = vmatprep.subr.mxu0 0.0
    %1205 = vmatpush1.xpose.msra.mxu0 0.0
    %1206 = vmatprep.subr.mxu0 0.0
    %1207 = vmatpush1.xpose.msra.mxu0 0.0
    %1208 = vmatprep.subr.mxu0 0.0
    %1209 = vmatpush1.xpose.msra.mxu0 0.0
    %1210 = vmatprep.subr.mxu0 0.0
    %1211 = vmatpush1.xpose.msra.mxu0 0.0
    %1212 = vmatprep.subr.mxu0 0.0
    %1213 = vmatpush1.xpose.msra.mxu0 0.0
    %1214 = vmatprep.subr.mxu0 0.0
    %1215 = vmatpush1.xpose.msra.mxu0 0.0
    %1216 = vmatprep.subr.mxu0 0.0
    %1217 = vmatpush1.xpose.msra.mxu0 0.0
    %1218 = vmatprep.subr.mxu0 0.0
    %1219 = vmatpush1.xpose.msra.mxu0 0.0
    %1220 = vmatprep.subr.mxu0 0.0
    %1221 = vmatpush1.xpose.msra.mxu0 0.0
    %1222 = vmatprep.subr.mxu0 0.0
    %1223 = vmatpush1.xpose.msra.mxu0 0.0
    %1224 = vmatprep.subr.mxu0 0.0
    %1225 = vmatpush1.xpose.msra.mxu0 0.0
    %1226 = vmatprep.subr.mxu0 0.0
    %1227 = vmatpush1.xpose.msra.mxu0 0.0
    %1228 = vmatprep.subr.mxu0 0.0
    %1229 = vmatpush1.xpose.msra.mxu0 0.0
    %1230 = vmatprep.subr.mxu0 0.0
    %1231 = vmatpush1.xpose.msra.mxu0 0.0
    %1232 = vmatprep.subr.mxu0 0.0
    %1233 = vmatpush1.xpose.msra.mxu0 %v1200
    %1234 = vmatprep.subr.mxu0 0.0
    %1235 = vmatpush2.xpose.msra.mxu0 0.0
    %1236 = vmatprep.subr.mxu0 0.0
    %1237 = vmatpush2.xpose.msra.mxu0 0.0
    %1238 = vmatprep.subr.mxu0 0.0
    %1239 = vmatpush2.xpose.msra.mxu0 0.0
    %1240 = vmatprep.subr.mxu0 0.0
    %1241 = vmatpush2.xpose.msra.mxu0 0.0
    %1242 = vmatprep.subr.mxu0 0.0
    %1243 = vmatpush2.xpose.msra.mxu0 0.0
    %1244 = vmatprep.subr.mxu0 0.0
    %1245 = vmatpush2.xpose.msra.mxu0 0.0
    %1246 = vmatprep.subr.mxu0 0.0
    %1247 = vmatpush2.xpose.msra.mxu0 0.0
    %1248 = vmatprep.subr.mxu0 0.0
    %1249 = vmatpush2.xpose.msra.mxu0 0.0
    %1250 = vmatprep.subr.mxu0 0.0
    %1251 = vmatpush2.xpose.msra.mxu0 0.0
    %1252 = vmatprep.subr.mxu0 0.0
    %1253 = vmatpush2.xpose.msra.mxu0 0.0
    %1254 = vmatprep.subr.mxu0 0.0
    %1255 = vmatpush2.xpose.msra.mxu0 0.0
    %1256 = vmatprep.subr.mxu0 0.0
    %1257 = vmatpush2.xpose.msra.mxu0 0.0
    %1258 = vmatprep.subr.mxu0 0.0
    %1259 = vmatpush2.xpose.msra.mxu0 0.0
    %1260 = vmatprep.subr.mxu0 0.0
    %1261 = vmatpush2.xpose.msra.mxu0 0.0
    %1262 = vmatprep.subr.mxu0 0.0
    %1263 = vmatpush2.xpose.msra.mxu0 0.0
    %1264 = vmatprep.subr.mxu0 0.0
    %1265 = vmatpush2.xpose.msra.mxu0 0.0
    %1266 = vmatprep.mubr.f32.mxu0 0.0
    %1267 = vmatmul.mubr.f32.gmra.mxu0 %v723
    %v1268 = vpop.f32.mrf.mxu0
    %v1269 = vadd.f32 0.0, %v1268
    %v1270 = vpop.f32.mrf.mxu0
    %1271 = vdwg.mxu0
    %v1272 = vmul.f32 %v1196, 0.17677669
    %v1273 = vmul.f32 %v1269, 0.17677669
    %v1274 = vsel %vm294, %v1272, -inf
    %1275 = vmax.xlane.f32.xlu0 %v1274
    %v1276 = vpop.xlane.xlu0 %1275
    %v1277 = vsel %vm294, %v1273, -inf
    %1278 = vmax.xlane.f32.xlu0 %v1277
    %v1279 = vpop.xlane.xlu0 %1278
    %v1280 = vsub.f32 %v1272, %v1276
    %v1281 = vsub.f32 %v1273, %v1279
    %v1282 = vmul.f32 %v1280, 1.442695
    %v1283 = vpow.pop %v1282
    %v1284 = vmul.f32 %v1281, 1.442695
    %v1285 = vpow.pop %v1284
    %v1286 = vsel %vm294, %v1283, 0.0
    %1287 = vadd.xlane.f32.xlu0 %v1286
    %v1288 = vpop.xlane.xlu0 %1287
    %v1289 = vsel %vm294, %v1285, 0.0
    %1290 = vadd.xlane.f32.xlu0 %v1289
    %v1291 = vpop.xlane.xlu0 %1290
    %v1292 = vrcp.pop %v1288
    %v1293 = vrcp.pop %v1291
    %v1294 = vmul.f32 %v1283, %v1292
    %v1295 = vmul.f32 %v1285, %v1293
    %v1297 = vsel %vm294, %v1294, 0
    %1299 = vmatprep.subr.mxu0 0.0
    %1300 = vmatpush1.msra.mxu0 0.0
    %1301 = vmatprep.subr.mxu0 0.0
    %1302 = vmatpush1.msra.mxu0 0.0
    %1303 = vmatprep.subr.mxu0 0.0
    %1304 = vmatpush1.msra.mxu0 0.0
    %1305 = vmatprep.subr.mxu0 0.0
    %1306 = vmatpush1.msra.mxu0 0.0
    %1307 = vmatprep.subr.mxu0 0.0
    %1308 = vmatpush1.msra.mxu0 0.0
    %1309 = vmatprep.subr.mxu0 0.0
    %1310 = vmatpush1.msra.mxu0 0.0
    %1311 = vmatprep.subr.mxu0 0.0
    %1312 = vmatpush1.msra.mxu0 0.0
    %1313 = vmatprep.subr.mxu0 0.0
    %1314 = vmatpush1.msra.mxu0 0.0
    %1315 = vmatprep.subr.mxu0 0.0
    %1316 = vmatpush1.msra.mxu0 0.0
    %1317 = vmatprep.subr.mxu0 0.0
    %1318 = vmatpush1.msra.mxu0 0.0
    %1319 = vmatprep.subr.mxu0 0.0
    %1320 = vmatpush1.msra.mxu0 0.0
    %1321 = vmatprep.subr.mxu0 0.0
    %1322 = vmatpush1.msra.mxu0 0.0
    %1323 = vmatprep.subr.mxu0 0.0
    %1324 = vmatpush1.msra.mxu0 0.0
    %1325 = vmatprep.subr.mxu0 0.0
    %1326 = vmatpush1.msra.mxu0 0.0
    %1327 = vmatprep.subr.mxu0 0.0
    %1328 = vmatpush1.msra.mxu0 0.0
    %1329 = vmatprep.subr.mxu0 0.0
    %1330 = vmatpush1.msra.mxu0 %v1118
    %1331 = vmatprep.subr.mxu0 0.0
    %1332 = vmatpush2.msra.mxu0 0.0
    %1333 = vmatprep.subr.mxu0 0.0
    %1334 = vmatpush2.msra.mxu0 0.0
    %1335 = vmatprep.subr.mxu0 0.0
    %1336 = vmatpush2.msra.mxu0 0.0
    %1337 = vmatprep.subr.mxu0 0.0
    %1338 = vmatpush2.msra.mxu0 0.0
    %1339 = vmatprep.subr.mxu0 0.0
    %1340 = vmatpush2.msra.mxu0 0.0
    %1341 = vmatprep.subr.mxu0 0.0
    %1342 = vmatpush2.msra.mxu0 0.0
    %1343 = vmatprep.subr.mxu0 0.0
    %1344 = vmatpush2.msra.mxu0 0.0
    %1345 = vmatprep.subr.mxu0 0.0
    %1346 = vmatpush2.msra.mxu0 0.0
    %1347 = vmatprep.subr.mxu0 0.0
    %1348 = vmatpush2.msra.mxu0 0.0
    %1349 = vmatprep.subr.mxu0 0.0
    %1350 = vmatpush2.msra.mxu0 0.0
    %1351 = vmatprep.subr.mxu0 0.0
    %1352 = vmatpush2.msra.mxu0 0.0
    %1353 = vmatprep.subr.mxu0 0.0
    %1354 = vmatpush2.msra.mxu0 0.0
    %1355 = vmatprep.subr.mxu0 0.0
    %1356 = vmatpush2.msra.mxu0 0.0
    %1357 = vmatprep.subr.mxu0 0.0
    %1358 = vmatpush2.msra.mxu0 0.0
    %1359 = vmatprep.subr.mxu0 0.0
    %1360 = vmatpush2.msra.mxu0 0.0
    %1361 = vmatprep.subr.mxu0 0.0
    %1362 = vmatpush2.msra.mxu0 0.0
    %1363 = vmatprep.mubr.f32.mxu0 0.0
    %1364 = vmatmul.mubr.f32.gmra.mxu0 %v1297
    %v1365 = vpop.f32.mrf.mxu0
    %v1366 = vadd.f32 0.0, %v1365
    %v1367 = vpop.f32.mrf.mxu0
    %1368 = vdwg.mxu0
    %v1370 = vsel %vm294, %v1295, 0
    %1372 = vmatprep.subr.mxu0 0.0
    %1373 = vmatpush1.msra.mxu0 0.0
    %1374 = vmatprep.subr.mxu0 0.0
    %1375 = vmatpush1.msra.mxu0 0.0
    %1376 = vmatprep.subr.mxu0 0.0
    %1377 = vmatpush1.msra.mxu0 0.0
    %1378 = vmatprep.subr.mxu0 0.0
    %1379 = vmatpush1.msra.mxu0 0.0
    %1380 = vmatprep.subr.mxu0 0.0
    %1381 = vmatpush1.msra.mxu0 0.0
    %1382 = vmatprep.subr.mxu0 0.0
    %1383 = vmatpush1.msra.mxu0 0.0
    %1384 = vmatprep.subr.mxu0 0.0
    %1385 = vmatpush1.msra.mxu0 0.0
    %1386 = vmatprep.subr.mxu0 0.0
    %1387 = vmatpush1.msra.mxu0 0.0
    %1388 = vmatprep.subr.mxu0 0.0
    %1389 = vmatpush1.msra.mxu0 0.0
    %1390 = vmatprep.subr.mxu0 0.0
    %1391 = vmatpush1.msra.mxu0 0.0
    %1392 = vmatprep.subr.mxu0 0.0
    %1393 = vmatpush1.msra.mxu0 0.0
    %1394 = vmatprep.subr.mxu0 0.0
    %1395 = vmatpush1.msra.mxu0 0.0
    %1396 = vmatprep.subr.mxu0 0.0
    %1397 = vmatpush1.msra.mxu0 0.0
    %1398 = vmatprep.subr.mxu0 0.0
    %1399 = vmatpush1.msra.mxu0 0.0
    %1400 = vmatprep.subr.mxu0 0.0
    %1401 = vmatpush1.msra.mxu0 0.0
    %1402 = vmatprep.subr.mxu0 0.0
    %1403 = vmatpush1.msra.mxu0 %v1123
    %1404 = vmatprep.subr.mxu0 0.0
    %1405 = vmatpush2.msra.mxu0 0.0
    %1406 = vmatprep.subr.mxu0 0.0
    %1407 = vmatpush2.msra.mxu0 0.0
    %1408 = vmatprep.subr.mxu0 0.0
    %1409 = vmatpush2.msra.mxu0 0.0
    %1410 = vmatprep.subr.mxu0 0.0
    %1411 = vmatpush2.msra.mxu0 0.0
    %1412 = vmatprep.subr.mxu0 0.0
    %1413 = vmatpush2.msra.mxu0 0.0
    %1414 = vmatprep.subr.mxu0 0.0
    %1415 = vmatpush2.msra.mxu0 0.0
    %1416 = vmatprep.subr.mxu0 0.0
    %1417 = vmatpush2.msra.mxu0 0.0
    %1418 = vmatprep.subr.mxu0 0.0
    %1419 = vmatpush2.msra.mxu0 0.0
    %1420 = vmatprep.subr.mxu0 0.0
    %1421 = vmatpush2.msra.mxu0 0.0
    %1422 = vmatprep.subr.mxu0 0.0
    %1423 = vmatpush2.msra.mxu0 0.0
    %1424 = vmatprep.subr.mxu0 0.0
    %1425 = vmatpush2.msra.mxu0 0.0
    %1426 = vmatprep.subr.mxu0 0.0
    %1427 = vmatpush2.msra.mxu0 0.0
    %1428 = vmatprep.subr.mxu0 0.0
    %1429 = vmatpush2.msra.mxu0 0.0
    %1430 = vmatprep.subr.mxu0 0.0
    %1431 = vmatpush2.msra.mxu0 0.0
    %1432 = vmatprep.subr.mxu0 0.0
    %1433 = vmatpush2.msra.mxu0 0.0
    %1434 = vmatprep.subr.mxu0 0.0
    %1435 = vmatpush2.msra.mxu0 0.0
    %1436 = vmatprep.mubr.f32.mxu0 0.0
    %1437 = vmatmul.mubr.f32.gmra.mxu0 %v1370
    %v1438 = vpop.f32.mrf.mxu0
    %v1439 = vadd.f32 0.0, %v1438
    %v1440 = vpop.f32.mrf.mxu0
    %1441 = vdwg.mxu0
    %v1442 = vadd.f32 %v968, %v1366
    %v1443 = vadd.f32 %v969, %v1439
    %s1444 = scalar_lea.vmem %s6, 32
    %v1445 = vld [vmem:[%s1444] sm:$0xff]
    %v1446 = vld [vmem:[%s1444 + $0x8] sm:$0xff]
    %v1447 = vld [vmem:[%s1444 + $0x10] sm:$0xff]
    %v1448 = vld [vmem:[%s1444 + $0x18] sm:$0xff]
    %1449 = vmatprep.subr.mxu0 0.0
    %1450 = vmatpush1.msra.mxu0 0.0
    %1451 = vmatprep.subr.mxu0 0.0
    %1452 = vmatpush1.msra.mxu0 0.0
    %1453 = vmatprep.subr.mxu0 0.0
    %1454 = vmatpush1.msra.mxu0 0.0
    %1455 = vmatprep.subr.mxu0 0.0
    %1456 = vmatpush1.msra.mxu0 0.0
    %1457 = vmatprep.subr.mxu0 0.0
    %1458 = vmatpush1.msra.mxu0 0.0
    %1459 = vmatprep.subr.mxu0 0.0
    %1460 = vmatpush1.msra.mxu0 0.0
    %1461 = vmatprep.subr.mxu0 0.0
    %1462 = vmatpush1.msra.mxu0 0.0
    %1463 = vmatprep.subr.mxu0 0.0
    %1464 = vmatpush1.msra.mxu0 0.0
    %1465 = vmatprep.subr.mxu0 0.0
    %1466 = vmatpush1.msra.mxu0 0.0
    %1467 = vmatprep.subr.mxu0 0.0
    %1468 = vmatpush1.msra.mxu0 0.0
    %1469 = vmatprep.subr.mxu0 0.0
    %1470 = vmatpush1.msra.mxu0 0.0
    %1471 = vmatprep.subr.mxu0 0.0
    %1472 = vmatpush1.msra.mxu0 0.0
    %1473 = vmatprep.subr.mxu0 0.0
    %1474 = vmatpush1.msra.mxu0 %v1448
    %1475 = vmatprep.subr.mxu0 0.0
    %1476 = vmatpush1.msra.mxu0 %v1447
    %1477 = vmatprep.subr.mxu0 0.0
    %1478 = vmatpush1.msra.mxu0 %v1446
    %1479 = vmatprep.subr.mxu0 0.0
    %1480 = vmatpush1.msra.mxu0 %v1445
    %1481 = vmatprep.subr.mxu0 0.0
    %1482 = vmatpush2.msra.mxu0 0.0
    %1483 = vmatprep.subr.mxu0 0.0
    %1484 = vmatpush2.msra.mxu0 0.0
    %1485 = vmatprep.subr.mxu0 0.0
    %1486 = vmatpush2.msra.mxu0 0.0
    %1487 = vmatprep.subr.mxu0 0.0
    %1488 = vmatpush2.msra.mxu0 0.0
    %1489 = vmatprep.subr.mxu0 0.0
    %1490 = vmatpush2.msra.mxu0 0.0
    %1491 = vmatprep.subr.mxu0 0.0
    %1492 = vmatpush2.msra.mxu0 0.0
    %1493 = vmatprep.subr.mxu0 0.0
    %1494 = vmatpush2.msra.mxu0 0.0
    %1495 = vmatprep.subr.mxu0 0.0
    %1496 = vmatpush2.msra.mxu0 0.0
    %1497 = vmatprep.subr.mxu0 0.0
    %1498 = vmatpush2.msra.mxu0 0.0
    %1499 = vmatprep.subr.mxu0 0.0
    %1500 = vmatpush2.msra.mxu0 0.0
    %1501 = vmatprep.subr.mxu0 0.0
    %1502 = vmatpush2.msra.mxu0 0.0
    %1503 = vmatprep.subr.mxu0 0.0
    %1504 = vmatpush2.msra.mxu0 0.0
    %1505 = vmatprep.subr.mxu0 0.0
    %1506 = vmatpush2.msra.mxu0 0.0
    %1507 = vmatprep.subr.mxu0 0.0
    %1508 = vmatpush2.msra.mxu0 0.0
    %1509 = vmatprep.subr.mxu0 0.0
    %1510 = vmatpush2.msra.mxu0 0.0
    %1511 = vmatprep.subr.mxu0 0.0
    %1512 = vmatpush2.msra.mxu0 0.0
    %1513 = vmatprep.mubr.f32.mxu0 0.0
    %1514 = vmatmul.mubr.f32.gmra.mxu0 %v479
    %v1515 = vpop.f32.mrf.mxu0
    %v1516 = vadd.f32 0.0, %v1515
    %v1517 = vpop.f32.mrf.mxu0
    %1518 = vmatprep.mubr.f32.mxu0 0.0
    %1519 = vmatmul.mubr.f32.gmra.mxu0 %v482
    %v1520 = vpop.f32.mrf.mxu0
    %v1521 = vadd.f32 0.0, %v1520
    %v1522 = vpop.f32.mrf.mxu0
    %1523 = vdwg.mxu0
    %1528 = vrot.lane.b32.xlu0 %v1445, 96
    %v1529 = vpop.permute.xlu0 %1528
    %1530 = vrot.lane.b32.xlu0 %v1446, 96
    %v1531 = vpop.permute.xlu0 %1530
    %1532 = vrot.lane.b32.xlu0 %v1447, 96
    %v1533 = vpop.permute.xlu0 %1532
    %1534 = vrot.lane.b32.xlu0 %v1448, 96
    %v1535 = vpop.permute.xlu0 %1534
    %1540 = vmatprep.subr.mxu0 0.0
    %1541 = vmatpush1.msra.mxu0 0.0
    %1542 = vmatprep.subr.mxu0 0.0
    %1543 = vmatpush1.msra.mxu0 0.0
    %1544 = vmatprep.subr.mxu0 0.0
    %1545 = vmatpush1.msra.mxu0 0.0
    %1546 = vmatprep.subr.mxu0 0.0
    %1547 = vmatpush1.msra.mxu0 0.0
    %1548 = vmatprep.subr.mxu0 0.0
    %1549 = vmatpush1.msra.mxu0 0.0
    %1550 = vmatprep.subr.mxu0 0.0
    %1551 = vmatpush1.msra.mxu0 0.0
    %1552 = vmatprep.subr.mxu0 0.0
    %1553 = vmatpush1.msra.mxu0 0.0
    %1554 = vmatprep.subr.mxu0 0.0
    %1555 = vmatpush1.msra.mxu0 0.0
    %1556 = vmatprep.subr.mxu0 0.0
    %1557 = vmatpush1.msra.mxu0 0.0
    %1558 = vmatprep.subr.mxu0 0.0
    %1559 = vmatpush1.msra.mxu0 0.0
    %1560 = vmatprep.subr.mxu0 0.0
    %1561 = vmatpush1.msra.mxu0 0.0
    %1562 = vmatprep.subr.mxu0 0.0
    %1563 = vmatpush1.msra.mxu0 0.0
    %1564 = vmatprep.subr.mxu0 0.0
    %1565 = vmatpush1.msra.mxu0 %v1535
    %1566 = vmatprep.subr.mxu0 0.0
    %1567 = vmatpush1.msra.mxu0 %v1533
    %1568 = vmatprep.subr.mxu0 0.0
    %1569 = vmatpush1.msra.mxu0 %v1531
    %1570 = vmatprep.subr.mxu0 0.0
    %1571 = vmatpush1.msra.mxu0 %v1529
    %1572 = vmatprep.subr.mxu0 0.0
    %1573 = vmatpush2.msra.mxu0 0.0
    %1574 = vmatprep.subr.mxu0 0.0
    %1575 = vmatpush2.msra.mxu0 0.0
    %1576 = vmatprep.subr.mxu0 0.0
    %1577 = vmatpush2.msra.mxu0 0.0
    %1578 = vmatprep.subr.mxu0 0.0
    %1579 = vmatpush2.msra.mxu0 0.0
    %1580 = vmatprep.subr.mxu0 0.0
    %1581 = vmatpush2.msra.mxu0 0.0
    %1582 = vmatprep.subr.mxu0 0.0
    %1583 = vmatpush2.msra.mxu0 0.0
    %1584 = vmatprep.subr.mxu0 0.0
    %1585 = vmatpush2.msra.mxu0 0.0
    %1586 = vmatprep.subr.mxu0 0.0
    %1587 = vmatpush2.msra.mxu0 0.0
    %1588 = vmatprep.subr.mxu0 0.0
    %1589 = vmatpush2.msra.mxu0 0.0
    %1590 = vmatprep.subr.mxu0 0.0
    %1591 = vmatpush2.msra.mxu0 0.0
    %1592 = vmatprep.subr.mxu0 0.0
    %1593 = vmatpush2.msra.mxu0 0.0
    %1594 = vmatprep.subr.mxu0 0.0
    %1595 = vmatpush2.msra.mxu0 0.0
    %1596 = vmatprep.subr.mxu0 0.0
    %1597 = vmatpush2.msra.mxu0 0.0
    %1598 = vmatprep.subr.mxu0 0.0
    %1599 = vmatpush2.msra.mxu0 0.0
    %1600 = vmatprep.subr.mxu0 0.0
    %1601 = vmatpush2.msra.mxu0 0.0
    %1602 = vmatprep.subr.mxu0 0.0
    %1603 = vmatpush2.msra.mxu0 0.0
    %1604 = vmatprep.mubr.f32.mxu0 0.0
    %1605 = vmatmul.mubr.f32.gmra.mxu0 %v382
    %v1606 = vpop.f32.mrf.mxu0
    %v1607 = vadd.f32 0.0, %v1606
    %v1608 = vpop.f32.mrf.mxu0
    %1609 = vmatprep.mubr.f32.mxu0 0.0
    %1610 = vmatmul.mubr.f32.gmra.mxu0 %v385
    %v1611 = vpop.f32.mrf.mxu0
    %v1612 = vadd.f32 0.0, %v1611
    %v1613 = vpop.f32.mrf.mxu0
    %1614 = vdwg.mxu0
    %1615 = vrot.lane.b32.xlu0 %v1445, 64
    %v1616 = vpop.permute.xlu0 %1615
    %1617 = vrot.lane.b32.xlu0 %v1446, 64
    %v1618 = vpop.permute.xlu0 %1617
    %1619 = vrot.lane.b32.xlu0 %v1447, 64
    %v1620 = vpop.permute.xlu0 %1619
    %1621 = vrot.lane.b32.xlu0 %v1448, 64
    %v1622 = vpop.permute.xlu0 %1621
    %1627 = vmatprep.subr.mxu0 0.0
    %1628 = vmatpush1.msra.mxu0 0.0
    %1629 = vmatprep.subr.mxu0 0.0
    %1630 = vmatpush1.msra.mxu0 0.0
    %1631 = vmatprep.subr.mxu0 0.0
    %1632 = vmatpush1.msra.mxu0 0.0
    %1633 = vmatprep.subr.mxu0 0.0
    %1634 = vmatpush1.msra.mxu0 0.0
    %1635 = vmatprep.subr.mxu0 0.0
    %1636 = vmatpush1.msra.mxu0 0.0
    %1637 = vmatprep.subr.mxu0 0.0
    %1638 = vmatpush1.msra.mxu0 0.0
    %1639 = vmatprep.subr.mxu0 0.0
    %1640 = vmatpush1.msra.mxu0 0.0
    %1641 = vmatprep.subr.mxu0 0.0
    %1642 = vmatpush1.msra.mxu0 0.0
    %1643 = vmatprep.subr.mxu0 0.0
    %1644 = vmatpush1.msra.mxu0 0.0
    %1645 = vmatprep.subr.mxu0 0.0
    %1646 = vmatpush1.msra.mxu0 0.0
    %1647 = vmatprep.subr.mxu0 0.0
    %1648 = vmatpush1.msra.mxu0 0.0
    %1649 = vmatprep.subr.mxu0 0.0
    %1650 = vmatpush1.msra.mxu0 0.0
    %1651 = vmatprep.subr.mxu0 0.0
    %1652 = vmatpush1.msra.mxu0 %v1622
    %1653 = vmatprep.subr.mxu0 0.0
    %1654 = vmatpush1.msra.mxu0 %v1620
    %1655 = vmatprep.subr.mxu0 0.0
    %1656 = vmatpush1.msra.mxu0 %v1618
    %1657 = vmatprep.subr.mxu0 0.0
    %1658 = vmatpush1.msra.mxu0 %v1616
    %1659 = vmatprep.subr.mxu0 0.0
    %1660 = vmatpush2.msra.mxu0 0.0
    %1661 = vmatprep.subr.mxu0 0.0
    %1662 = vmatpush2.msra.mxu0 0.0
    %1663 = vmatprep.subr.mxu0 0.0
    %1664 = vmatpush2.msra.mxu0 0.0
    %1665 = vmatprep.subr.mxu0 0.0
    %1666 = vmatpush2.msra.mxu0 0.0
    %1667 = vmatprep.subr.mxu0 0.0
    %1668 = vmatpush2.msra.mxu0 0.0
    %1669 = vmatprep.subr.mxu0 0.0
    %1670 = vmatpush2.msra.mxu0 0.0
    %1671 = vmatprep.subr.mxu0 0.0
    %1672 = vmatpush2.msra.mxu0 0.0
    %1673 = vmatprep.subr.mxu0 0.0
    %1674 = vmatpush2.msra.mxu0 0.0
    %1675 = vmatprep.subr.mxu0 0.0
    %1676 = vmatpush2.msra.mxu0 0.0
    %1677 = vmatprep.subr.mxu0 0.0
    %1678 = vmatpush2.msra.mxu0 0.0
    %1679 = vmatprep.subr.mxu0 0.0
    %1680 = vmatpush2.msra.mxu0 0.0
    %1681 = vmatprep.subr.mxu0 0.0
    %1682 = vmatpush2.msra.mxu0 0.0
    %1683 = vmatprep.subr.mxu0 0.0
    %1684 = vmatpush2.msra.mxu0 0.0
    %1685 = vmatprep.subr.mxu0 0.0
    %1686 = vmatpush2.msra.mxu0 0.0
    %1687 = vmatprep.subr.mxu0 0.0
    %1688 = vmatpush2.msra.mxu0 0.0
    %1689 = vmatprep.subr.mxu0 0.0
    %1690 = vmatpush2.msra.mxu0 0.0
    %1691 = vmatprep.mubr.f32.mxu0 0.0
    %1692 = vmatmul.mubr.f32.gmra.mxu0 %v382
    %v1693 = vpop.f32.mrf.mxu0
    %v1694 = vadd.f32 0.0, %v1693
    %v1695 = vpop.f32.mrf.mxu0
    %1696 = vmatprep.mubr.f32.mxu0 0.0
    %1697 = vmatmul.mubr.f32.gmra.mxu0 %v385
    %v1698 = vpop.f32.mrf.mxu0
    %v1699 = vadd.f32 0.0, %v1698
    %v1700 = vpop.f32.mrf.mxu0
    %1701 = vdwg.mxu0
    %v1703 = vsel %vm380, %v1516, 0
    %v1706 = vsel %vm380, %v1607, 0
    %1708 = vmatprep.subr.mxu0 0.0
    %1709 = vmatpush1.xpose.msra.mxu0 0.0
    %1710 = vmatprep.subr.mxu0 0.0
    %1711 = vmatpush1.xpose.msra.mxu0 0.0
    %1712 = vmatprep.subr.mxu0 0.0
    %1713 = vmatpush1.xpose.msra.mxu0 0.0
    %1714 = vmatprep.subr.mxu0 0.0
    %1715 = vmatpush1.xpose.msra.mxu0 0.0
    %1716 = vmatprep.subr.mxu0 0.0
    %1717 = vmatpush1.xpose.msra.mxu0 0.0
    %1718 = vmatprep.subr.mxu0 0.0
    %1719 = vmatpush1.xpose.msra.mxu0 0.0
    %1720 = vmatprep.subr.mxu0 0.0
    %1721 = vmatpush1.xpose.msra.mxu0 0.0
    %1722 = vmatprep.subr.mxu0 0.0
    %1723 = vmatpush1.xpose.msra.mxu0 0.0
    %1724 = vmatprep.subr.mxu0 0.0
    %1725 = vmatpush1.xpose.msra.mxu0 0.0
    %1726 = vmatprep.subr.mxu0 0.0
    %1727 = vmatpush1.xpose.msra.mxu0 0.0
    %1728 = vmatprep.subr.mxu0 0.0
    %1729 = vmatpush1.xpose.msra.mxu0 0.0
    %1730 = vmatprep.subr.mxu0 0.0
    %1731 = vmatpush1.xpose.msra.mxu0 0.0
    %1732 = vmatprep.subr.mxu0 0.0
    %1733 = vmatpush1.xpose.msra.mxu0 0.0
    %1734 = vmatprep.subr.mxu0 0.0
    %1735 = vmatpush1.xpose.msra.mxu0 0.0
    %1736 = vmatprep.subr.mxu0 0.0
    %1737 = vmatpush1.xpose.msra.mxu0 0.0
    %1738 = vmatprep.subr.mxu0 0.0
    %1739 = vmatpush1.xpose.msra.mxu0 %v1706
    %1740 = vmatprep.subr.mxu0 0.0
    %1741 = vmatpush2.xpose.msra.mxu0 0.0
    %1742 = vmatprep.subr.mxu0 0.0
    %1743 = vmatpush2.xpose.msra.mxu0 0.0
    %1744 = vmatprep.subr.mxu0 0.0
    %1745 = vmatpush2.xpose.msra.mxu0 0.0
    %1746 = vmatprep.subr.mxu0 0.0
    %1747 = vmatpush2.xpose.msra.mxu0 0.0
    %1748 = vmatprep.subr.mxu0 0.0
    %1749 = vmatpush2.xpose.msra.mxu0 0.0
    %1750 = vmatprep.subr.mxu0 0.0
    %1751 = vmatpush2.xpose.msra.mxu0 0.0
    %1752 = vmatprep.subr.mxu0 0.0
    %1753 = vmatpush2.xpose.msra.mxu0 0.0
    %1754 = vmatprep.subr.mxu0 0.0
    %1755 = vmatpush2.xpose.msra.mxu0 0.0
    %1756 = vmatprep.subr.mxu0 0.0
    %1757 = vmatpush2.xpose.msra.mxu0 0.0
    %1758 = vmatprep.subr.mxu0 0.0
    %1759 = vmatpush2.xpose.msra.mxu0 0.0
    %1760 = vmatprep.subr.mxu0 0.0
    %1761 = vmatpush2.xpose.msra.mxu0 0.0
    %1762 = vmatprep.subr.mxu0 0.0
    %1763 = vmatpush2.xpose.msra.mxu0 0.0
    %1764 = vmatprep.subr.mxu0 0.0
    %1765 = vmatpush2.xpose.msra.mxu0 0.0
    %1766 = vmatprep.subr.mxu0 0.0
    %1767 = vmatpush2.xpose.msra.mxu0 0.0
    %1768 = vmatprep.subr.mxu0 0.0
    %1769 = vmatpush2.xpose.msra.mxu0 0.0
    %1770 = vmatprep.subr.mxu0 0.0
    %1771 = vmatpush2.xpose.msra.mxu0 0.0
    %1772 = vmatprep.mubr.f32.mxu0 0.0
    %1773 = vmatmul.mubr.f32.gmra.mxu0 %v1703
    %v1774 = vpop.f32.mrf.mxu0
    %v1775 = vadd.f32 0.0, %v1774
    %v1776 = vpop.f32.mrf.mxu0
    %1777 = vdwg.mxu0
    %v1779 = vsel %vm380, %v1521, 0
    %v1782 = vsel %vm380, %v1612, 0
    %1784 = vmatprep.subr.mxu0 0.0
    %1785 = vmatpush1.xpose.msra.mxu0 0.0
    %1786 = vmatprep.subr.mxu0 0.0
    %1787 = vmatpush1.xpose.msra.mxu0 0.0
    %1788 = vmatprep.subr.mxu0 0.0
    %1789 = vmatpush1.xpose.msra.mxu0 0.0
    %1790 = vmatprep.subr.mxu0 0.0
    %1791 = vmatpush1.xpose.msra.mxu0 0.0
    %1792 = vmatprep.subr.mxu0 0.0
    %1793 = vmatpush1.xpose.msra.mxu0 0.0
    %1794 = vmatprep.subr.mxu0 0.0
    %1795 = vmatpush1.xpose.msra.mxu0 0.0
    %1796 = vmatprep.subr.mxu0 0.0
    %1797 = vmatpush1.xpose.msra.mxu0 0.0
    %1798 = vmatprep.subr.mxu0 0.0
    %1799 = vmatpush1.xpose.msra.mxu0 0.0
    %1800 = vmatprep.subr.mxu0 0.0
    %1801 = vmatpush1.xpose.msra.mxu0 0.0
    %1802 = vmatprep.subr.mxu0 0.0
    %1803 = vmatpush1.xpose.msra.mxu0 0.0
    %1804 = vmatprep.subr.mxu0 0.0
    %1805 = vmatpush1.xpose.msra.mxu0 0.0
    %1806 = vmatprep.subr.mxu0 0.0
    %1807 = vmatpush1.xpose.msra.mxu0 0.0
    %1808 = vmatprep.subr.mxu0 0.0
    %1809 = vmatpush1.xpose.msra.mxu0 0.0
    %1810 = vmatprep.subr.mxu0 0.0
    %1811 = vmatpush1.xpose.msra.mxu0 0.0
    %1812 = vmatprep.subr.mxu0 0.0
    %1813 = vmatpush1.xpose.msra.mxu0 0.0
    %1814 = vmatprep.subr.mxu0 0.0
    %1815 = vmatpush1.xpose.msra.mxu0 %v1782
    %1816 = vmatprep.subr.mxu0 0.0
    %1817 = vmatpush2.xpose.msra.mxu0 0.0
    %1818 = vmatprep.subr.mxu0 0.0
    %1819 = vmatpush2.xpose.msra.mxu0 0.0
    %1820 = vmatprep.subr.mxu0 0.0
    %1821 = vmatpush2.xpose.msra.mxu0 0.0
    %1822 = vmatprep.subr.mxu0 0.0
    %1823 = vmatpush2.xpose.msra.mxu0 0.0
    %1824 = vmatprep.subr.mxu0 0.0
    %1825 = vmatpush2.xpose.msra.mxu0 0.0
    %1826 = vmatprep.subr.mxu0 0.0
    %1827 = vmatpush2.xpose.msra.mxu0 0.0
    %1828 = vmatprep.subr.mxu0 0.0
    %1829 = vmatpush2.xpose.msra.mxu0 0.0
    %1830 = vmatprep.subr.mxu0 0.0
    %1831 = vmatpush2.xpose.msra.mxu0 0.0
    %1832 = vmatprep.subr.mxu0 0.0
    %1833 = vmatpush2.xpose.msra.mxu0 0.0
    %1834 = vmatprep.subr.mxu0 0.0
    %1835 = vmatpush2.xpose.msra.mxu0 0.0
    %1836 = vmatprep.subr.mxu0 0.0
    %1837 = vmatpush2.xpose.msra.mxu0 0.0
    %1838 = vmatprep.subr.mxu0 0.0
    %1839 = vmatpush2.xpose.msra.mxu0 0.0
    %1840 = vmatprep.subr.mxu0 0.0
    %1841 = vmatpush2.xpose.msra.mxu0 0.0
    %1842 = vmatprep.subr.mxu0 0.0
    %1843 = vmatpush2.xpose.msra.mxu0 0.0
    %1844 = vmatprep.subr.mxu0 0.0
    %1845 = vmatpush2.xpose.msra.mxu0 0.0
    %1846 = vmatprep.subr.mxu0 0.0
    %1847 = vmatpush2.xpose.msra.mxu0 0.0
    %1848 = vmatprep.mubr.f32.mxu0 0.0
    %1849 = vmatmul.mubr.f32.gmra.mxu0 %v1779
    %v1850 = vpop.f32.mrf.mxu0
    %v1851 = vadd.f32 0.0, %v1850
    %v1852 = vpop.f32.mrf.mxu0
    %1853 = vdwg.mxu0
    %v1854 = vmul.f32 %v1775, 0.17677669
    %v1855 = vmul.f32 %v1851, 0.17677669
    %v1856 = vsel %vm294, %v1854, -inf
    %1857 = vmax.xlane.f32.xlu0 %v1856
    %v1858 = vpop.xlane.xlu0 %1857
    %v1859 = vsel %vm294, %v1855, -inf
    %1860 = vmax.xlane.f32.xlu0 %v1859
    %v1861 = vpop.xlane.xlu0 %1860
    %v1862 = vsub.f32 %v1854, %v1858
    %v1863 = vsub.f32 %v1855, %v1861
    %v1864 = vmul.f32 %v1862, 1.442695
    %v1865 = vpow.pop %v1864
    %v1866 = vmul.f32 %v1863, 1.442695
    %v1867 = vpow.pop %v1866
    %v1868 = vsel %vm294, %v1865, 0.0
    %1869 = vadd.xlane.f32.xlu0 %v1868
    %v1870 = vpop.xlane.xlu0 %1869
    %v1871 = vsel %vm294, %v1867, 0.0
    %1872 = vadd.xlane.f32.xlu0 %v1871
    %v1873 = vpop.xlane.xlu0 %1872
    %v1874 = vrcp.pop %v1870
    %v1875 = vrcp.pop %v1873
    %v1876 = vmul.f32 %v1865, %v1874
    %v1877 = vmul.f32 %v1867, %v1875
    %v1879 = vsel %vm294, %v1876, 0
    %1881 = vmatprep.subr.mxu0 0.0
    %1882 = vmatpush1.msra.mxu0 0.0
    %1883 = vmatprep.subr.mxu0 0.0
    %1884 = vmatpush1.msra.mxu0 0.0
    %1885 = vmatprep.subr.mxu0 0.0
    %1886 = vmatpush1.msra.mxu0 0.0
    %1887 = vmatprep.subr.mxu0 0.0
    %1888 = vmatpush1.msra.mxu0 0.0
    %1889 = vmatprep.subr.mxu0 0.0
    %1890 = vmatpush1.msra.mxu0 0.0
    %1891 = vmatprep.subr.mxu0 0.0
    %1892 = vmatpush1.msra.mxu0 0.0
    %1893 = vmatprep.subr.mxu0 0.0
    %1894 = vmatpush1.msra.mxu0 0.0
    %1895 = vmatprep.subr.mxu0 0.0
    %1896 = vmatpush1.msra.mxu0 0.0
    %1897 = vmatprep.subr.mxu0 0.0
    %1898 = vmatpush1.msra.mxu0 0.0
    %1899 = vmatprep.subr.mxu0 0.0
    %1900 = vmatpush1.msra.mxu0 0.0
    %1901 = vmatprep.subr.mxu0 0.0
    %1902 = vmatpush1.msra.mxu0 0.0
    %1903 = vmatprep.subr.mxu0 0.0
    %1904 = vmatpush1.msra.mxu0 0.0
    %1905 = vmatprep.subr.mxu0 0.0
    %1906 = vmatpush1.msra.mxu0 0.0
    %1907 = vmatprep.subr.mxu0 0.0
    %1908 = vmatpush1.msra.mxu0 0.0
    %1909 = vmatprep.subr.mxu0 0.0
    %1910 = vmatpush1.msra.mxu0 0.0
    %1911 = vmatprep.subr.mxu0 0.0
    %1912 = vmatpush1.msra.mxu0 %v1694
    %1913 = vmatprep.subr.mxu0 0.0
    %1914 = vmatpush2.msra.mxu0 0.0
    %1915 = vmatprep.subr.mxu0 0.0
    %1916 = vmatpush2.msra.mxu0 0.0
    %1917 = vmatprep.subr.mxu0 0.0
    %1918 = vmatpush2.msra.mxu0 0.0
    %1919 = vmatprep.subr.mxu0 0.0
    %1920 = vmatpush2.msra.mxu0 0.0
    %1921 = vmatprep.subr.mxu0 0.0
    %1922 = vmatpush2.msra.mxu0 0.0
    %1923 = vmatprep.subr.mxu0 0.0
    %1924 = vmatpush2.msra.mxu0 0.0
    %1925 = vmatprep.subr.mxu0 0.0
    %1926 = vmatpush2.msra.mxu0 0.0
    %1927 = vmatprep.subr.mxu0 0.0
    %1928 = vmatpush2.msra.mxu0 0.0
    %1929 = vmatprep.subr.mxu0 0.0
    %1930 = vmatpush2.msra.mxu0 0.0
    %1931 = vmatprep.subr.mxu0 0.0
    %1932 = vmatpush2.msra.mxu0 0.0
    %1933 = vmatprep.subr.mxu0 0.0
    %1934 = vmatpush2.msra.mxu0 0.0
    %1935 = vmatprep.subr.mxu0 0.0
    %1936 = vmatpush2.msra.mxu0 0.0
    %1937 = vmatprep.subr.mxu0 0.0
    %1938 = vmatpush2.msra.mxu0 0.0
    %1939 = vmatprep.subr.mxu0 0.0
    %1940 = vmatpush2.msra.mxu0 0.0
    %1941 = vmatprep.subr.mxu0 0.0
    %1942 = vmatpush2.msra.mxu0 0.0
    %1943 = vmatprep.subr.mxu0 0.0
    %1944 = vmatpush2.msra.mxu0 0.0
    %1945 = vmatprep.mubr.f32.mxu0 0.0
    %1946 = vmatmul.mubr.f32.gmra.mxu0 %v1879
    %v1947 = vpop.f32.mrf.mxu0
    %v1948 = vadd.f32 0.0, %v1947
    %v1949 = vpop.f32.mrf.mxu0
    %1950 = vdwg.mxu0
    %v1952 = vsel %vm294, %v1877, 0
    %1954 = vmatprep.subr.mxu0 0.0
    %1955 = vmatpush1.msra.mxu0 0.0
    %1956 = vmatprep.subr.mxu0 0.0
    %1957 = vmatpush1.msra.mxu0 0.0
    %1958 = vmatprep.subr.mxu0 0.0
    %1959 = vmatpush1.msra.mxu0 0.0
    %1960 = vmatprep.subr.mxu0 0.0
    %1961 = vmatpush1.msra.mxu0 0.0
    %1962 = vmatprep.subr.mxu0 0.0
    %1963 = vmatpush1.msra.mxu0 0.0
    %1964 = vmatprep.subr.mxu0 0.0
    %1965 = vmatpush1.msra.mxu0 0.0
    %1966 = vmatprep.subr.mxu0 0.0
    %1967 = vmatpush1.msra.mxu0 0.0
    %1968 = vmatprep.subr.mxu0 0.0
    %1969 = vmatpush1.msra.mxu0 0.0
    %1970 = vmatprep.subr.mxu0 0.0
    %1971 = vmatpush1.msra.mxu0 0.0
    %1972 = vmatprep.subr.mxu0 0.0
    %1973 = vmatpush1.msra.mxu0 0.0
    %1974 = vmatprep.subr.mxu0 0.0
    %1975 = vmatpush1.msra.mxu0 0.0
    %1976 = vmatprep.subr.mxu0 0.0
    %1977 = vmatpush1.msra.mxu0 0.0
    %1978 = vmatprep.subr.mxu0 0.0
    %1979 = vmatpush1.msra.mxu0 0.0
    %1980 = vmatprep.subr.mxu0 0.0
    %1981 = vmatpush1.msra.mxu0 0.0
    %1982 = vmatprep.subr.mxu0 0.0
    %1983 = vmatpush1.msra.mxu0 0.0
    %1984 = vmatprep.subr.mxu0 0.0
    %1985 = vmatpush1.msra.mxu0 %v1699
    %1986 = vmatprep.subr.mxu0 0.0
    %1987 = vmatpush2.msra.mxu0 0.0
    %1988 = vmatprep.subr.mxu0 0.0
    %1989 = vmatpush2.msra.mxu0 0.0
    %1990 = vmatprep.subr.mxu0 0.0
    %1991 = vmatpush2.msra.mxu0 0.0
    %1992 = vmatprep.subr.mxu0 0.0
    %1993 = vmatpush2.msra.mxu0 0.0
    %1994 = vmatprep.subr.mxu0 0.0
    %1995 = vmatpush2.msra.mxu0 0.0
    %1996 = vmatprep.subr.mxu0 0.0
    %1997 = vmatpush2.msra.mxu0 0.0
    %1998 = vmatprep.subr.mxu0 0.0
    %1999 = vmatpush2.msra.mxu0 0.0
    %2000 = vmatprep.subr.mxu0 0.0
    %2001 = vmatpush2.msra.mxu0 0.0
    %2002 = vmatprep.subr.mxu0 0.0
    %2003 = vmatpush2.msra.mxu0 0.0
    %2004 = vmatprep.subr.mxu0 0.0
    %2005 = vmatpush2.msra.mxu0 0.0
    %2006 = vmatprep.subr.mxu0 0.0
    %2007 = vmatpush2.msra.mxu0 0.0
    %2008 = vmatprep.subr.mxu0 0.0
    %2009 = vmatpush2.msra.mxu0 0.0
    %2010 = vmatprep.subr.mxu0 0.0
    %2011 = vmatpush2.msra.mxu0 0.0
    %2012 = vmatprep.subr.mxu0 0.0
    %2013 = vmatpush2.msra.mxu0 0.0
    %2014 = vmatprep.subr.mxu0 0.0
    %2015 = vmatpush2.msra.mxu0 0.0
    %2016 = vmatprep.subr.mxu0 0.0
    %2017 = vmatpush2.msra.mxu0 0.0
    %2018 = vmatprep.mubr.f32.mxu0 0.0
    %2019 = vmatmul.mubr.f32.gmra.mxu0 %v1952
    %v2020 = vpop.f32.mrf.mxu0
    %v2021 = vadd.f32 0.0, %v2020
    %v2022 = vpop.f32.mrf.mxu0
    %2023 = vdwg.mxu0
    %v2024 = vadd.f32 %v283, %v1948
    %v2025 = vadd.f32 %v288, %v2021
    %2026 = vmatprep.subr.mxu0 0.0
    %2027 = vmatpush1.msra.mxu0 0.0
    %2028 = vmatprep.subr.mxu0 0.0
    %2029 = vmatpush1.msra.mxu0 0.0
    %2030 = vmatprep.subr.mxu0 0.0
    %2031 = vmatpush1.msra.mxu0 0.0
    %2032 = vmatprep.subr.mxu0 0.0
    %2033 = vmatpush1.msra.mxu0 0.0
    %2034 = vmatprep.subr.mxu0 0.0
    %2035 = vmatpush1.msra.mxu0 0.0
    %2036 = vmatprep.subr.mxu0 0.0
    %2037 = vmatpush1.msra.mxu0 0.0
    %2038 = vmatprep.subr.mxu0 0.0
    %2039 = vmatpush1.msra.mxu0 0.0
    %2040 = vmatprep.subr.mxu0 0.0
    %2041 = vmatpush1.msra.mxu0 0.0
    %2042 = vmatprep.subr.mxu0 0.0
    %2043 = vmatpush1.msra.mxu0 0.0
    %2044 = vmatprep.subr.mxu0 0.0
    %2045 = vmatpush1.msra.mxu0 0.0
    %2046 = vmatprep.subr.mxu0 0.0
    %2047 = vmatpush1.msra.mxu0 0.0
    %2048 = vmatprep.subr.mxu0 0.0
    %2049 = vmatpush1.msra.mxu0 0.0
    %2050 = vmatprep.subr.mxu0 0.0
    %2051 = vmatpush1.msra.mxu0 %v1535
    %2052 = vmatprep.subr.mxu0 0.0
    %2053 = vmatpush1.msra.mxu0 %v1533
    %2054 = vmatprep.subr.mxu0 0.0
    %2055 = vmatpush1.msra.mxu0 %v1531
    %2056 = vmatprep.subr.mxu0 0.0
    %2057 = vmatpush1.msra.mxu0 %v1529
    %2058 = vmatprep.subr.mxu0 0.0
    %2059 = vmatpush2.msra.mxu0 0.0
    %2060 = vmatprep.subr.mxu0 0.0
    %2061 = vmatpush2.msra.mxu0 0.0
    %2062 = vmatprep.subr.mxu0 0.0
    %2063 = vmatpush2.msra.mxu0 0.0
    %2064 = vmatprep.subr.mxu0 0.0
    %2065 = vmatpush2.msra.mxu0 0.0
    %2066 = vmatprep.subr.mxu0 0.0
    %2067 = vmatpush2.msra.mxu0 0.0
    %2068 = vmatprep.subr.mxu0 0.0
    %2069 = vmatpush2.msra.mxu0 0.0
    %2070 = vmatprep.subr.mxu0 0.0
    %2071 = vmatpush2.msra.mxu0 0.0
    %2072 = vmatprep.subr.mxu0 0.0
    %2073 = vmatpush2.msra.mxu0 0.0
    %2074 = vmatprep.subr.mxu0 0.0
    %2075 = vmatpush2.msra.mxu0 0.0
    %2076 = vmatprep.subr.mxu0 0.0
    %2077 = vmatpush2.msra.mxu0 0.0
    %2078 = vmatprep.subr.mxu0 0.0
    %2079 = vmatpush2.msra.mxu0 0.0
    %2080 = vmatprep.subr.mxu0 0.0
    %2081 = vmatpush2.msra.mxu0 0.0
    %2082 = vmatprep.subr.mxu0 0.0
    %2083 = vmatpush2.msra.mxu0 0.0
    %2084 = vmatprep.subr.mxu0 0.0
    %2085 = vmatpush2.msra.mxu0 0.0
    %2086 = vmatprep.subr.mxu0 0.0
    %2087 = vmatpush2.msra.mxu0 0.0
    %2088 = vmatprep.subr.mxu0 0.0
    %2089 = vmatpush2.msra.mxu0 0.0
    %2090 = vmatprep.mubr.f32.mxu0 0.0
    %2091 = vmatmul.mubr.f32.gmra.mxu0 %v971
    %v2092 = vpop.f32.mrf.mxu0
    %v2093 = vadd.f32 0.0, %v2092
    %v2094 = vpop.f32.mrf.mxu0
    %2095 = vmatprep.mubr.f32.mxu0 0.0
    %2096 = vmatmul.mubr.f32.gmra.mxu0 %v974
    %v2097 = vpop.f32.mrf.mxu0
    %v2098 = vadd.f32 0.0, %v2097
    %v2099 = vpop.f32.mrf.mxu0
    %2100 = vdwg.mxu0
    %2101 = vmatprep.subr.mxu0 0.0
    %2102 = vmatpush1.msra.mxu0 0.0
    %2103 = vmatprep.subr.mxu0 0.0
    %2104 = vmatpush1.msra.mxu0 0.0
    %2105 = vmatprep.subr.mxu0 0.0
    %2106 = vmatpush1.msra.mxu0 0.0
    %2107 = vmatprep.subr.mxu0 0.0
    %2108 = vmatpush1.msra.mxu0 0.0
    %2109 = vmatprep.subr.mxu0 0.0
    %2110 = vmatpush1.msra.mxu0 0.0
    %2111 = vmatprep.subr.mxu0 0.0
    %2112 = vmatpush1.msra.mxu0 0.0
    %2113 = vmatprep.subr.mxu0 0.0
    %2114 = vmatpush1.msra.mxu0 0.0
    %2115 = vmatprep.subr.mxu0 0.0
    %2116 = vmatpush1.msra.mxu0 0.0
    %2117 = vmatprep.subr.mxu0 0.0
    %2118 = vmatpush1.msra.mxu0 0.0
    %2119 = vmatprep.subr.mxu0 0.0
    %2120 = vmatpush1.msra.mxu0 0.0
    %2121 = vmatprep.subr.mxu0 0.0
    %2122 = vmatpush1.msra.mxu0 0.0
    %2123 = vmatprep.subr.mxu0 0.0
    %2124 = vmatpush1.msra.mxu0 0.0
    %2125 = vmatprep.subr.mxu0 0.0
    %2126 = vmatpush1.msra.mxu0 %v1622
    %2127 = vmatprep.subr.mxu0 0.0
    %2128 = vmatpush1.msra.mxu0 %v1620
    %2129 = vmatprep.subr.mxu0 0.0
    %2130 = vmatpush1.msra.mxu0 %v1618
    %2131 = vmatprep.subr.mxu0 0.0
    %2132 = vmatpush1.msra.mxu0 %v1616
    %2133 = vmatprep.subr.mxu0 0.0
    %2134 = vmatpush2.msra.mxu0 0.0
    %2135 = vmatprep.subr.mxu0 0.0
    %2136 = vmatpush2.msra.mxu0 0.0
    %2137 = vmatprep.subr.mxu0 0.0
    %2138 = vmatpush2.msra.mxu0 0.0
    %2139 = vmatprep.subr.mxu0 0.0
    %2140 = vmatpush2.msra.mxu0 0.0
    %2141 = vmatprep.subr.mxu0 0.0
    %2142 = vmatpush2.msra.mxu0 0.0
    %2143 = vmatprep.subr.mxu0 0.0
    %2144 = vmatpush2.msra.mxu0 0.0
    %2145 = vmatprep.subr.mxu0 0.0
    %2146 = vmatpush2.msra.mxu0 0.0
    %2147 = vmatprep.subr.mxu0 0.0
    %2148 = vmatpush2.msra.mxu0 0.0
    %2149 = vmatprep.subr.mxu0 0.0
    %2150 = vmatpush2.msra.mxu0 0.0
    %2151 = vmatprep.subr.mxu0 0.0
    %2152 = vmatpush2.msra.mxu0 0.0
    %2153 = vmatprep.subr.mxu0 0.0
    %2154 = vmatpush2.msra.mxu0 0.0
    %2155 = vmatprep.subr.mxu0 0.0
    %2156 = vmatpush2.msra.mxu0 0.0
    %2157 = vmatprep.subr.mxu0 0.0
    %2158 = vmatpush2.msra.mxu0 0.0
    %2159 = vmatprep.subr.mxu0 0.0
    %2160 = vmatpush2.msra.mxu0 0.0
    %2161 = vmatprep.subr.mxu0 0.0
    %2162 = vmatpush2.msra.mxu0 0.0
    %2163 = vmatprep.subr.mxu0 0.0
    %2164 = vmatpush2.msra.mxu0 0.0
    %2165 = vmatprep.mubr.f32.mxu0 0.0
    %2166 = vmatmul.mubr.f32.gmra.mxu0 %v971
    %v2167 = vpop.f32.mrf.mxu0
    %v2168 = vadd.f32 0.0, %v2167
    %v2169 = vpop.f32.mrf.mxu0
    %2170 = vmatprep.mubr.f32.mxu0 0.0
    %2171 = vmatmul.mubr.f32.gmra.mxu0 %v974
    %v2172 = vpop.f32.mrf.mxu0
    %v2173 = vadd.f32 0.0, %v2172
    %v2174 = vpop.f32.mrf.mxu0
    %2175 = vdwg.mxu0
    %v2177 = vsel %vm380, %v2093, 0
    %2179 = vmatprep.subr.mxu0 0.0
    %2180 = vmatpush1.xpose.msra.mxu0 0.0
    %2181 = vmatprep.subr.mxu0 0.0
    %2182 = vmatpush1.xpose.msra.mxu0 0.0
    %2183 = vmatprep.subr.mxu0 0.0
    %2184 = vmatpush1.xpose.msra.mxu0 0.0
    %2185 = vmatprep.subr.mxu0 0.0
    %2186 = vmatpush1.xpose.msra.mxu0 0.0
    %2187 = vmatprep.subr.mxu0 0.0
    %2188 = vmatpush1.xpose.msra.mxu0 0.0
    %2189 = vmatprep.subr.mxu0 0.0
    %2190 = vmatpush1.xpose.msra.mxu0 0.0
    %2191 = vmatprep.subr.mxu0 0.0
    %2192 = vmatpush1.xpose.msra.mxu0 0.0
    %2193 = vmatprep.subr.mxu0 0.0
    %2194 = vmatpush1.xpose.msra.mxu0 0.0
    %2195 = vmatprep.subr.mxu0 0.0
    %2196 = vmatpush1.xpose.msra.mxu0 0.0
    %2197 = vmatprep.subr.mxu0 0.0
    %2198 = vmatpush1.xpose.msra.mxu0 0.0
    %2199 = vmatprep.subr.mxu0 0.0
    %2200 = vmatpush1.xpose.msra.mxu0 0.0
    %2201 = vmatprep.subr.mxu0 0.0
    %2202 = vmatpush1.xpose.msra.mxu0 0.0
    %2203 = vmatprep.subr.mxu0 0.0
    %2204 = vmatpush1.xpose.msra.mxu0 0.0
    %2205 = vmatprep.subr.mxu0 0.0
    %2206 = vmatpush1.xpose.msra.mxu0 0.0
    %2207 = vmatprep.subr.mxu0 0.0
    %2208 = vmatpush1.xpose.msra.mxu0 0.0
    %2209 = vmatprep.subr.mxu0 0.0
    %2210 = vmatpush1.xpose.msra.mxu0 %v2177
    %2211 = vmatprep.subr.mxu0 0.0
    %2212 = vmatpush2.xpose.msra.mxu0 0.0
    %2213 = vmatprep.subr.mxu0 0.0
    %2214 = vmatpush2.xpose.msra.mxu0 0.0
    %2215 = vmatprep.subr.mxu0 0.0
    %2216 = vmatpush2.xpose.msra.mxu0 0.0
    %2217 = vmatprep.subr.mxu0 0.0
    %2218 = vmatpush2.xpose.msra.mxu0 0.0
    %2219 = vmatprep.subr.mxu0 0.0
    %2220 = vmatpush2.xpose.msra.mxu0 0.0
    %2221 = vmatprep.subr.mxu0 0.0
    %2222 = vmatpush2.xpose.msra.mxu0 0.0
    %2223 = vmatprep.subr.mxu0 0.0
    %2224 = vmatpush2.xpose.msra.mxu0 0.0
    %2225 = vmatprep.subr.mxu0 0.0
    %2226 = vmatpush2.xpose.msra.mxu0 0.0
    %2227 = vmatprep.subr.mxu0 0.0
    %2228 = vmatpush2.xpose.msra.mxu0 0.0
    %2229 = vmatprep.subr.mxu0 0.0
    %2230 = vmatpush2.xpose.msra.mxu0 0.0
    %2231 = vmatprep.subr.mxu0 0.0
    %2232 = vmatpush2.xpose.msra.mxu0 0.0
    %2233 = vmatprep.subr.mxu0 0.0
    %2234 = vmatpush2.xpose.msra.mxu0 0.0
    %2235 = vmatprep.subr.mxu0 0.0
    %2236 = vmatpush2.xpose.msra.mxu0 0.0
    %2237 = vmatprep.subr.mxu0 0.0
    %2238 = vmatpush2.xpose.msra.mxu0 0.0
    %2239 = vmatprep.subr.mxu0 0.0
    %2240 = vmatpush2.xpose.msra.mxu0 0.0
    %2241 = vmatprep.subr.mxu0 0.0
    %2242 = vmatpush2.xpose.msra.mxu0 0.0
    %2243 = vmatprep.mubr.f32.mxu0 0.0
    %2244 = vmatmul.mubr.f32.gmra.mxu0 %v1703
    %v2245 = vpop.f32.mrf.mxu0
    %v2246 = vadd.f32 0.0, %v2245
    %v2247 = vpop.f32.mrf.mxu0
    %2248 = vdwg.mxu0
    %v2250 = vsel %vm380, %v2098, 0
    %2252 = vmatprep.subr.mxu0 0.0
    %2253 = vmatpush1.xpose.msra.mxu0 0.0
    %2254 = vmatprep.subr.mxu0 0.0
    %2255 = vmatpush1.xpose.msra.mxu0 0.0
    %2256 = vmatprep.subr.mxu0 0.0
    %2257 = vmatpush1.xpose.msra.mxu0 0.0
    %2258 = vmatprep.subr.mxu0 0.0
    %2259 = vmatpush1.xpose.msra.mxu0 0.0
    %2260 = vmatprep.subr.mxu0 0.0
    %2261 = vmatpush1.xpose.msra.mxu0 0.0
    %2262 = vmatprep.subr.mxu0 0.0
    %2263 = vmatpush1.xpose.msra.mxu0 0.0
    %2264 = vmatprep.subr.mxu0 0.0
    %2265 = vmatpush1.xpose.msra.mxu0 0.0
    %2266 = vmatprep.subr.mxu0 0.0
    %2267 = vmatpush1.xpose.msra.mxu0 0.0
    %2268 = vmatprep.subr.mxu0 0.0
    %2269 = vmatpush1.xpose.msra.mxu0 0.0
    %2270 = vmatprep.subr.mxu0 0.0
    %2271 = vmatpush1.xpose.msra.mxu0 0.0
    %2272 = vmatprep.subr.mxu0 0.0
    %2273 = vmatpush1.xpose.msra.mxu0 0.0
    %2274 = vmatprep.subr.mxu0 0.0
    %2275 = vmatpush1.xpose.msra.mxu0 0.0
    %2276 = vmatprep.subr.mxu0 0.0
    %2277 = vmatpush1.xpose.msra.mxu0 0.0
    %2278 = vmatprep.subr.mxu0 0.0
    %2279 = vmatpush1.xpose.msra.mxu0 0.0
    %2280 = vmatprep.subr.mxu0 0.0
    %2281 = vmatpush1.xpose.msra.mxu0 0.0
    %2282 = vmatprep.subr.mxu0 0.0
    %2283 = vmatpush1.xpose.msra.mxu0 %v2250
    %2284 = vmatprep.subr.mxu0 0.0
    %2285 = vmatpush2.xpose.msra.mxu0 0.0
    %2286 = vmatprep.subr.mxu0 0.0
    %2287 = vmatpush2.xpose.msra.mxu0 0.0
    %2288 = vmatprep.subr.mxu0 0.0
    %2289 = vmatpush2.xpose.msra.mxu0 0.0
    %2290 = vmatprep.subr.mxu0 0.0
    %2291 = vmatpush2.xpose.msra.mxu0 0.0
    %2292 = vmatprep.subr.mxu0 0.0
    %2293 = vmatpush2.xpose.msra.mxu0 0.0
    %2294 = vmatprep.subr.mxu0 0.0
    %2295 = vmatpush2.xpose.msra.mxu0 0.0
    %2296 = vmatprep.subr.mxu0 0.0
    %2297 = vmatpush2.xpose.msra.mxu0 0.0
    %2298 = vmatprep.subr.mxu0 0.0
    %2299 = vmatpush2.xpose.msra.mxu0 0.0
    %2300 = vmatprep.subr.mxu0 0.0
    %2301 = vmatpush2.xpose.msra.mxu0 0.0
    %2302 = vmatprep.subr.mxu0 0.0
    %2303 = vmatpush2.xpose.msra.mxu0 0.0
    %2304 = vmatprep.subr.mxu0 0.0
    %2305 = vmatpush2.xpose.msra.mxu0 0.0
    %2306 = vmatprep.subr.mxu0 0.0
    %2307 = vmatpush2.xpose.msra.mxu0 0.0
    %2308 = vmatprep.subr.mxu0 0.0
    %2309 = vmatpush2.xpose.msra.mxu0 0.0
    %2310 = vmatprep.subr.mxu0 0.0
    %2311 = vmatpush2.xpose.msra.mxu0 0.0
    %2312 = vmatprep.subr.mxu0 0.0
    %2313 = vmatpush2.xpose.msra.mxu0 0.0
    %2314 = vmatprep.subr.mxu0 0.0
    %2315 = vmatpush2.xpose.msra.mxu0 0.0
    %2316 = vmatprep.mubr.f32.mxu0 0.0
    %2317 = vmatmul.mubr.f32.gmra.mxu0 %v1779
    %v2318 = vpop.f32.mrf.mxu0
    %v2319 = vadd.f32 0.0, %v2318
    %v2320 = vpop.f32.mrf.mxu0
    %2321 = vdwg.mxu0
    %v2322 = vmul.f32 %v2246, 0.17677669
    %v2323 = vmul.f32 %v2319, 0.17677669
    %v2324 = vsel %vm294, %v2322, -inf
    %2325 = vmax.xlane.f32.xlu0 %v2324
    %v2326 = vpop.xlane.xlu0 %2325
    %v2327 = vsel %vm294, %v2323, -inf
    %2328 = vmax.xlane.f32.xlu0 %v2327
    %v2329 = vpop.xlane.xlu0 %2328
    %v2330 = vsub.f32 %v2322, %v2326
    %v2331 = vsub.f32 %v2323, %v2329
    %v2332 = vmul.f32 %v2330, 1.442695
    %v2333 = vpow.pop %v2332
    %v2334 = vmul.f32 %v2331, 1.442695
    %v2335 = vpow.pop %v2334
    %v2336 = vsel %vm294, %v2333, 0.0
    %2337 = vadd.xlane.f32.xlu0 %v2336
    %v2338 = vpop.xlane.xlu0 %2337
    %v2339 = vsel %vm294, %v2335, 0.0
    %2340 = vadd.xlane.f32.xlu0 %v2339
    %v2341 = vpop.xlane.xlu0 %2340
    %v2342 = vrcp.pop %v2338
    %v2343 = vrcp.pop %v2341
    %v2344 = vmul.f32 %v2333, %v2342
    %v2345 = vmul.f32 %v2335, %v2343
    %v2347 = vsel %vm294, %v2344, 0
    %2349 = vmatprep.subr.mxu0 0.0
    %2350 = vmatpush1.msra.mxu0 0.0
    %2351 = vmatprep.subr.mxu0 0.0
    %2352 = vmatpush1.msra.mxu0 0.0
    %2353 = vmatprep.subr.mxu0 0.0
    %2354 = vmatpush1.msra.mxu0 0.0
    %2355 = vmatprep.subr.mxu0 0.0
    %2356 = vmatpush1.msra.mxu0 0.0
    %2357 = vmatprep.subr.mxu0 0.0
    %2358 = vmatpush1.msra.mxu0 0.0
    %2359 = vmatprep.subr.mxu0 0.0
    %2360 = vmatpush1.msra.mxu0 0.0
    %2361 = vmatprep.subr.mxu0 0.0
    %2362 = vmatpush1.msra.mxu0 0.0
    %2363 = vmatprep.subr.mxu0 0.0
    %2364 = vmatpush1.msra.mxu0 0.0
    %2365 = vmatprep.subr.mxu0 0.0
    %2366 = vmatpush1.msra.mxu0 0.0
    %2367 = vmatprep.subr.mxu0 0.0
    %2368 = vmatpush1.msra.mxu0 0.0
    %2369 = vmatprep.subr.mxu0 0.0
    %2370 = vmatpush1.msra.mxu0 0.0
    %2371 = vmatprep.subr.mxu0 0.0
    %2372 = vmatpush1.msra.mxu0 0.0
    %2373 = vmatprep.subr.mxu0 0.0
    %2374 = vmatpush1.msra.mxu0 0.0
    %2375 = vmatprep.subr.mxu0 0.0
    %2376 = vmatpush1.msra.mxu0 0.0
    %2377 = vmatprep.subr.mxu0 0.0
    %2378 = vmatpush1.msra.mxu0 0.0
    %2379 = vmatprep.subr.mxu0 0.0
    %2380 = vmatpush1.msra.mxu0 %v2168
    %2381 = vmatprep.subr.mxu0 0.0
    %2382 = vmatpush2.msra.mxu0 0.0
    %2383 = vmatprep.subr.mxu0 0.0
    %2384 = vmatpush2.msra.mxu0 0.0
    %2385 = vmatprep.subr.mxu0 0.0
    %2386 = vmatpush2.msra.mxu0 0.0
    %2387 = vmatprep.subr.mxu0 0.0
    %2388 = vmatpush2.msra.mxu0 0.0
    %2389 = vmatprep.subr.mxu0 0.0
    %2390 = vmatpush2.msra.mxu0 0.0
    %2391 = vmatprep.subr.mxu0 0.0
    %2392 = vmatpush2.msra.mxu0 0.0
    %2393 = vmatprep.subr.mxu0 0.0
    %2394 = vmatpush2.msra.mxu0 0.0
    %2395 = vmatprep.subr.mxu0 0.0
    %2396 = vmatpush2.msra.mxu0 0.0
    %2397 = vmatprep.subr.mxu0 0.0
    %2398 = vmatpush2.msra.mxu0 0.0
    %2399 = vmatprep.subr.mxu0 0.0
    %2400 = vmatpush2.msra.mxu0 0.0
    %2401 = vmatprep.subr.mxu0 0.0
    %2402 = vmatpush2.msra.mxu0 0.0
    %2403 = vmatprep.subr.mxu0 0.0
    %2404 = vmatpush2.msra.mxu0 0.0
    %2405 = vmatprep.subr.mxu0 0.0
    %2406 = vmatpush2.msra.mxu0 0.0
    %2407 = vmatprep.subr.mxu0 0.0
    %2408 = vmatpush2.msra.mxu0 0.0
    %2409 = vmatprep.subr.mxu0 0.0
    %2410 = vmatpush2.msra.mxu0 0.0
    %2411 = vmatprep.subr.mxu0 0.0
    %2412 = vmatpush2.msra.mxu0 0.0
    %2413 = vmatprep.mubr.f32.mxu0 0.0
    %2414 = vmatmul.mubr.f32.gmra.mxu0 %v2347
    %v2415 = vpop.f32.mrf.mxu0
    %v2416 = vadd.f32 0.0, %v2415
    %v2417 = vpop.f32.mrf.mxu0
    %2418 = vdwg.mxu0
    %v2420 = vsel %vm294, %v2345, 0
    %2422 = vmatprep.subr.mxu0 0.0
    %2423 = vmatpush1.msra.mxu0 0.0
    %2424 = vmatprep.subr.mxu0 0.0
    %2425 = vmatpush1.msra.mxu0 0.0
    %2426 = vmatprep.subr.mxu0 0.0
    %2427 = vmatpush1.msra.mxu0 0.0
    %2428 = vmatprep.subr.mxu0 0.0
    %2429 = vmatpush1.msra.mxu0 0.0
    %2430 = vmatprep.subr.mxu0 0.0
    %2431 = vmatpush1.msra.mxu0 0.0
    %2432 = vmatprep.subr.mxu0 0.0
    %2433 = vmatpush1.msra.mxu0 0.0
    %2434 = vmatprep.subr.mxu0 0.0
    %2435 = vmatpush1.msra.mxu0 0.0
    %2436 = vmatprep.subr.mxu0 0.0
    %2437 = vmatpush1.msra.mxu0 0.0
    %2438 = vmatprep.subr.mxu0 0.0
    %2439 = vmatpush1.msra.mxu0 0.0
    %2440 = vmatprep.subr.mxu0 0.0
    %2441 = vmatpush1.msra.mxu0 0.0
    %2442 = vmatprep.subr.mxu0 0.0
    %2443 = vmatpush1.msra.mxu0 0.0
    %2444 = vmatprep.subr.mxu0 0.0
    %2445 = vmatpush1.msra.mxu0 0.0
    %2446 = vmatprep.subr.mxu0 0.0
    %2447 = vmatpush1.msra.mxu0 0.0
    %2448 = vmatprep.subr.mxu0 0.0
    %2449 = vmatpush1.msra.mxu0 0.0
    %2450 = vmatprep.subr.mxu0 0.0
    %2451 = vmatpush1.msra.mxu0 0.0
    %2452 = vmatprep.subr.mxu0 0.0
    %2453 = vmatpush1.msra.mxu0 %v2173
    %2454 = vmatprep.subr.mxu0 0.0
    %2455 = vmatpush2.msra.mxu0 0.0
    %2456 = vmatprep.subr.mxu0 0.0
    %2457 = vmatpush2.msra.mxu0 0.0
    %2458 = vmatprep.subr.mxu0 0.0
    %2459 = vmatpush2.msra.mxu0 0.0
    %2460 = vmatprep.subr.mxu0 0.0
    %2461 = vmatpush2.msra.mxu0 0.0
    %2462 = vmatprep.subr.mxu0 0.0
    %2463 = vmatpush2.msra.mxu0 0.0
    %2464 = vmatprep.subr.mxu0 0.0
    %2465 = vmatpush2.msra.mxu0 0.0
    %2466 = vmatprep.subr.mxu0 0.0
    %2467 = vmatpush2.msra.mxu0 0.0
    %2468 = vmatprep.subr.mxu0 0.0
    %2469 = vmatpush2.msra.mxu0 0.0
    %2470 = vmatprep.subr.mxu0 0.0
    %2471 = vmatpush2.msra.mxu0 0.0
    %2472 = vmatprep.subr.mxu0 0.0
    %2473 = vmatpush2.msra.mxu0 0.0
    %2474 = vmatprep.subr.mxu0 0.0
    %2475 = vmatpush2.msra.mxu0 0.0
    %2476 = vmatprep.subr.mxu0 0.0
    %2477 = vmatpush2.msra.mxu0 0.0
    %2478 = vmatprep.subr.mxu0 0.0
    %2479 = vmatpush2.msra.mxu0 0.0
    %2480 = vmatprep.subr.mxu0 0.0
    %2481 = vmatpush2.msra.mxu0 0.0
    %2482 = vmatprep.subr.mxu0 0.0
    %2483 = vmatpush2.msra.mxu0 0.0
    %2484 = vmatprep.subr.mxu0 0.0
    %2485 = vmatpush2.msra.mxu0 0.0
    %2486 = vmatprep.mubr.f32.mxu0 0.0
    %2487 = vmatmul.mubr.f32.gmra.mxu0 %v2420
    %v2488 = vpop.f32.mrf.mxu0
    %v2489 = vadd.f32 0.0, %v2488
    %v2490 = vpop.f32.mrf.mxu0
    %2491 = vdwg.mxu0
    %v2492 = vadd.f32 %v2024, %v2416
    %v2493 = vadd.f32 %v2025, %v2489
    %s2494 = scalar_lea.vmem %s6, 64
    %v2495 = vld [vmem:[%s2494] sm:$0xff]
    %v2496 = vld [vmem:[%s2494 + $0x8] sm:$0xff]
    %v2497 = vld [vmem:[%s2494 + $0x10] sm:$0xff]
    %v2498 = vld [vmem:[%s2494 + $0x18] sm:$0xff]
    %2499 = vmatprep.subr.mxu0 0.0
    %2500 = vmatpush1.msra.mxu0 0.0
    %2501 = vmatprep.subr.mxu0 0.0
    %2502 = vmatpush1.msra.mxu0 0.0
    %2503 = vmatprep.subr.mxu0 0.0
    %2504 = vmatpush1.msra.mxu0 0.0
    %2505 = vmatprep.subr.mxu0 0.0
    %2506 = vmatpush1.msra.mxu0 0.0
    %2507 = vmatprep.subr.mxu0 0.0
    %2508 = vmatpush1.msra.mxu0 0.0
    %2509 = vmatprep.subr.mxu0 0.0
    %2510 = vmatpush1.msra.mxu0 0.0
    %2511 = vmatprep.subr.mxu0 0.0
    %2512 = vmatpush1.msra.mxu0 0.0
    %2513 = vmatprep.subr.mxu0 0.0
    %2514 = vmatpush1.msra.mxu0 0.0
    %2515 = vmatprep.subr.mxu0 0.0
    %2516 = vmatpush1.msra.mxu0 0.0
    %2517 = vmatprep.subr.mxu0 0.0
    %2518 = vmatpush1.msra.mxu0 0.0
    %2519 = vmatprep.subr.mxu0 0.0
    %2520 = vmatpush1.msra.mxu0 0.0
    %2521 = vmatprep.subr.mxu0 0.0
    %2522 = vmatpush1.msra.mxu0 0.0
    %2523 = vmatprep.subr.mxu0 0.0
    %2524 = vmatpush1.msra.mxu0 %v2498
    %2525 = vmatprep.subr.mxu0 0.0
    %2526 = vmatpush1.msra.mxu0 %v2497
    %2527 = vmatprep.subr.mxu0 0.0
    %2528 = vmatpush1.msra.mxu0 %v2496
    %2529 = vmatprep.subr.mxu0 0.0
    %2530 = vmatpush1.msra.mxu0 %v2495
    %2531 = vmatprep.subr.mxu0 0.0
    %2532 = vmatpush2.msra.mxu0 0.0
    %2533 = vmatprep.subr.mxu0 0.0
    %2534 = vmatpush2.msra.mxu0 0.0
    %2535 = vmatprep.subr.mxu0 0.0
    %2536 = vmatpush2.msra.mxu0 0.0
    %2537 = vmatprep.subr.mxu0 0.0
    %2538 = vmatpush2.msra.mxu0 0.0
    %2539 = vmatprep.subr.mxu0 0.0
    %2540 = vmatpush2.msra.mxu0 0.0
    %2541 = vmatprep.subr.mxu0 0.0
    %2542 = vmatpush2.msra.mxu0 0.0
    %2543 = vmatprep.subr.mxu0 0.0
    %2544 = vmatpush2.msra.mxu0 0.0
    %2545 = vmatprep.subr.mxu0 0.0
    %2546 = vmatpush2.msra.mxu0 0.0
    %2547 = vmatprep.subr.mxu0 0.0
    %2548 = vmatpush2.msra.mxu0 0.0
    %2549 = vmatprep.subr.mxu0 0.0
    %2550 = vmatpush2.msra.mxu0 0.0
    %2551 = vmatprep.subr.mxu0 0.0
    %2552 = vmatpush2.msra.mxu0 0.0
    %2553 = vmatprep.subr.mxu0 0.0
    %2554 = vmatpush2.msra.mxu0 0.0
    %2555 = vmatprep.subr.mxu0 0.0
    %2556 = vmatpush2.msra.mxu0 0.0
    %2557 = vmatprep.subr.mxu0 0.0
    %2558 = vmatpush2.msra.mxu0 0.0
    %2559 = vmatprep.subr.mxu0 0.0
    %2560 = vmatpush2.msra.mxu0 0.0
    %2561 = vmatprep.subr.mxu0 0.0
    %2562 = vmatpush2.msra.mxu0 0.0
    %2563 = vmatprep.mubr.f32.mxu0 0.0
    %2564 = vmatmul.mubr.f32.gmra.mxu0 %v971
    %v2565 = vpop.f32.mrf.mxu0
    %v2566 = vadd.f32 0.0, %v2565
    %v2567 = vpop.f32.mrf.mxu0
    %2568 = vmatprep.mubr.f32.mxu0 0.0
    %2569 = vmatmul.mubr.f32.gmra.mxu0 %v974
    %v2570 = vpop.f32.mrf.mxu0
    %v2571 = vadd.f32 0.0, %v2570
    %v2572 = vpop.f32.mrf.mxu0
    %2573 = vdwg.mxu0
    %2578 = vrot.lane.b32.xlu0 %v2495, 96
    %v2579 = vpop.permute.xlu0 %2578
    %2580 = vrot.lane.b32.xlu0 %v2496, 96
    %v2581 = vpop.permute.xlu0 %2580
    %2582 = vrot.lane.b32.xlu0 %v2497, 96
    %v2583 = vpop.permute.xlu0 %2582
    %2584 = vrot.lane.b32.xlu0 %v2498, 96
    %v2585 = vpop.permute.xlu0 %2584
    %2590 = vmatprep.subr.mxu0 0.0
    %2591 = vmatpush1.msra.mxu0 0.0
    %2592 = vmatprep.subr.mxu0 0.0
    %2593 = vmatpush1.msra.mxu0 0.0
    %2594 = vmatprep.subr.mxu0 0.0
    %2595 = vmatpush1.msra.mxu0 0.0
    %2596 = vmatprep.subr.mxu0 0.0
    %2597 = vmatpush1.msra.mxu0 0.0
    %2598 = vmatprep.subr.mxu0 0.0
    %2599 = vmatpush1.msra.mxu0 0.0
    %2600 = vmatprep.subr.mxu0 0.0
    %2601 = vmatpush1.msra.mxu0 0.0
    %2602 = vmatprep.subr.mxu0 0.0
    %2603 = vmatpush1.msra.mxu0 0.0
    %2604 = vmatprep.subr.mxu0 0.0
    %2605 = vmatpush1.msra.mxu0 0.0
    %2606 = vmatprep.subr.mxu0 0.0
    %2607 = vmatpush1.msra.mxu0 0.0
    %2608 = vmatprep.subr.mxu0 0.0
    %2609 = vmatpush1.msra.mxu0 0.0
    %2610 = vmatprep.subr.mxu0 0.0
    %2611 = vmatpush1.msra.mxu0 0.0
    %2612 = vmatprep.subr.mxu0 0.0
    %2613 = vmatpush1.msra.mxu0 0.0
    %2614 = vmatprep.subr.mxu0 0.0
    %2615 = vmatpush1.msra.mxu0 %v2585
    %2616 = vmatprep.subr.mxu0 0.0
    %2617 = vmatpush1.msra.mxu0 %v2583
    %2618 = vmatprep.subr.mxu0 0.0
    %2619 = vmatpush1.msra.mxu0 %v2581
    %2620 = vmatprep.subr.mxu0 0.0
    %2621 = vmatpush1.msra.mxu0 %v2579
    %2622 = vmatprep.subr.mxu0 0.0
    %2623 = vmatpush2.msra.mxu0 0.0
    %2624 = vmatprep.subr.mxu0 0.0
    %2625 = vmatpush2.msra.mxu0 0.0
    %2626 = vmatprep.subr.mxu0 0.0
    %2627 = vmatpush2.msra.mxu0 0.0
    %2628 = vmatprep.subr.mxu0 0.0
    %2629 = vmatpush2.msra.mxu0 0.0
    %2630 = vmatprep.subr.mxu0 0.0
    %2631 = vmatpush2.msra.mxu0 0.0
    %2632 = vmatprep.subr.mxu0 0.0
    %2633 = vmatpush2.msra.mxu0 0.0
    %2634 = vmatprep.subr.mxu0 0.0
    %2635 = vmatpush2.msra.mxu0 0.0
    %2636 = vmatprep.subr.mxu0 0.0
    %2637 = vmatpush2.msra.mxu0 0.0
    %2638 = vmatprep.subr.mxu0 0.0
    %2639 = vmatpush2.msra.mxu0 0.0
    %2640 = vmatprep.subr.mxu0 0.0
    %2641 = vmatpush2.msra.mxu0 0.0
    %2642 = vmatprep.subr.mxu0 0.0
    %2643 = vmatpush2.msra.mxu0 0.0
    %2644 = vmatprep.subr.mxu0 0.0
    %2645 = vmatpush2.msra.mxu0 0.0
    %2646 = vmatprep.subr.mxu0 0.0
    %2647 = vmatpush2.msra.mxu0 0.0
    %2648 = vmatprep.subr.mxu0 0.0
    %2649 = vmatpush2.msra.mxu0 0.0
    %2650 = vmatprep.subr.mxu0 0.0
    %2651 = vmatpush2.msra.mxu0 0.0
    %2652 = vmatprep.subr.mxu0 0.0
    %2653 = vmatpush2.msra.mxu0 0.0
    %2654 = vmatprep.mubr.f32.mxu0 0.0
    %2655 = vmatmul.mubr.f32.gmra.mxu0 %v382
    %v2656 = vpop.f32.mrf.mxu0
    %v2657 = vadd.f32 0.0, %v2656
    %v2658 = vpop.f32.mrf.mxu0
    %2659 = vmatprep.mubr.f32.mxu0 0.0
    %2660 = vmatmul.mubr.f32.gmra.mxu0 %v385
    %v2661 = vpop.f32.mrf.mxu0
    %v2662 = vadd.f32 0.0, %v2661
    %v2663 = vpop.f32.mrf.mxu0
    %2664 = vdwg.mxu0
    %2665 = vrot.lane.b32.xlu0 %v2495, 64
    %v2666 = vpop.permute.xlu0 %2665
    %2667 = vrot.lane.b32.xlu0 %v2496, 64
    %v2668 = vpop.permute.xlu0 %2667
    %2669 = vrot.lane.b32.xlu0 %v2497, 64
    %v2670 = vpop.permute.xlu0 %2669
    %2671 = vrot.lane.b32.xlu0 %v2498, 64
    %v2672 = vpop.permute.xlu0 %2671
    %2677 = vmatprep.subr.mxu0 0.0
    %2678 = vmatpush1.msra.mxu0 0.0
    %2679 = vmatprep.subr.mxu0 0.0
    %2680 = vmatpush1.msra.mxu0 0.0
    %2681 = vmatprep.subr.mxu0 0.0
    %2682 = vmatpush1.msra.mxu0 0.0
    %2683 = vmatprep.subr.mxu0 0.0
    %2684 = vmatpush1.msra.mxu0 0.0
    %2685 = vmatprep.subr.mxu0 0.0
    %2686 = vmatpush1.msra.mxu0 0.0
    %2687 = vmatprep.subr.mxu0 0.0
    %2688 = vmatpush1.msra.mxu0 0.0
    %2689 = vmatprep.subr.mxu0 0.0
    %2690 = vmatpush1.msra.mxu0 0.0
    %2691 = vmatprep.subr.mxu0 0.0
    %2692 = vmatpush1.msra.mxu0 0.0
    %2693 = vmatprep.subr.mxu0 0.0
    %2694 = vmatpush1.msra.mxu0 0.0
    %2695 = vmatprep.subr.mxu0 0.0
    %2696 = vmatpush1.msra.mxu0 0.0
    %2697 = vmatprep.subr.mxu0 0.0
    %2698 = vmatpush1.msra.mxu0 0.0
    %2699 = vmatprep.subr.mxu0 0.0
    %2700 = vmatpush1.msra.mxu0 0.0
    %2701 = vmatprep.subr.mxu0 0.0
    %2702 = vmatpush1.msra.mxu0 %v2672
    %2703 = vmatprep.subr.mxu0 0.0
    %2704 = vmatpush1.msra.mxu0 %v2670
    %2705 = vmatprep.subr.mxu0 0.0
    %2706 = vmatpush1.msra.mxu0 %v2668
    %2707 = vmatprep.subr.mxu0 0.0
    %2708 = vmatpush1.msra.mxu0 %v2666
    %2709 = vmatprep.subr.mxu0 0.0
    %2710 = vmatpush2.msra.mxu0 0.0
    %2711 = vmatprep.subr.mxu0 0.0
    %2712 = vmatpush2.msra.mxu0 0.0
    %2713 = vmatprep.subr.mxu0 0.0
    %2714 = vmatpush2.msra.mxu0 0.0
    %2715 = vmatprep.subr.mxu0 0.0
    %2716 = vmatpush2.msra.mxu0 0.0
    %2717 = vmatprep.subr.mxu0 0.0
    %2718 = vmatpush2.msra.mxu0 0.0
    %2719 = vmatprep.subr.mxu0 0.0
    %2720 = vmatpush2.msra.mxu0 0.0
    %2721 = vmatprep.subr.mxu0 0.0
    %2722 = vmatpush2.msra.mxu0 0.0
    %2723 = vmatprep.subr.mxu0 0.0
    %2724 = vmatpush2.msra.mxu0 0.0
    %2725 = vmatprep.subr.mxu0 0.0
    %2726 = vmatpush2.msra.mxu0 0.0
    %2727 = vmatprep.subr.mxu0 0.0
    %2728 = vmatpush2.msra.mxu0 0.0
    %2729 = vmatprep.subr.mxu0 0.0
    %2730 = vmatpush2.msra.mxu0 0.0
    %2731 = vmatprep.subr.mxu0 0.0
    %2732 = vmatpush2.msra.mxu0 0.0
    %2733 = vmatprep.subr.mxu0 0.0
    %2734 = vmatpush2.msra.mxu0 0.0
    %2735 = vmatprep.subr.mxu0 0.0
    %2736 = vmatpush2.msra.mxu0 0.0
    %2737 = vmatprep.subr.mxu0 0.0
    %2738 = vmatpush2.msra.mxu0 0.0
    %2739 = vmatprep.subr.mxu0 0.0
    %2740 = vmatpush2.msra.mxu0 0.0
    %2741 = vmatprep.mubr.f32.mxu0 0.0
    %2742 = vmatmul.mubr.f32.gmra.mxu0 %v382
    %v2743 = vpop.f32.mrf.mxu0
    %v2744 = vadd.f32 0.0, %v2743
    %v2745 = vpop.f32.mrf.mxu0
    %2746 = vmatprep.mubr.f32.mxu0 0.0
    %2747 = vmatmul.mubr.f32.gmra.mxu0 %v385
    %v2748 = vpop.f32.mrf.mxu0
    %v2749 = vadd.f32 0.0, %v2748
    %v2750 = vpop.f32.mrf.mxu0
    %2751 = vdwg.mxu0
    %v2753 = vsel %vm380, %v2566, 0
    %v2756 = vsel %vm380, %v2657, 0
    %2758 = vmatprep.subr.mxu0 0.0
    %2759 = vmatpush1.xpose.msra.mxu0 0.0
    %2760 = vmatprep.subr.mxu0 0.0
    %2761 = vmatpush1.xpose.msra.mxu0 0.0
    %2762 = vmatprep.subr.mxu0 0.0
    %2763 = vmatpush1.xpose.msra.mxu0 0.0
    %2764 = vmatprep.subr.mxu0 0.0
    %2765 = vmatpush1.xpose.msra.mxu0 0.0
    %2766 = vmatprep.subr.mxu0 0.0
    %2767 = vmatpush1.xpose.msra.mxu0 0.0
    %2768 = vmatprep.subr.mxu0 0.0
    %2769 = vmatpush1.xpose.msra.mxu0 0.0
    %2770 = vmatprep.subr.mxu0 0.0
    %2771 = vmatpush1.xpose.msra.mxu0 0.0
    %2772 = vmatprep.subr.mxu0 0.0
    %2773 = vmatpush1.xpose.msra.mxu0 0.0
    %2774 = vmatprep.subr.mxu0 0.0
    %2775 = vmatpush1.xpose.msra.mxu0 0.0
    %2776 = vmatprep.subr.mxu0 0.0
    %2777 = vmatpush1.xpose.msra.mxu0 0.0
    %2778 = vmatprep.subr.mxu0 0.0
    %2779 = vmatpush1.xpose.msra.mxu0 0.0
    %2780 = vmatprep.subr.mxu0 0.0
    %2781 = vmatpush1.xpose.msra.mxu0 0.0
    %2782 = vmatprep.subr.mxu0 0.0
    %2783 = vmatpush1.xpose.msra.mxu0 0.0
    %2784 = vmatprep.subr.mxu0 0.0
    %2785 = vmatpush1.xpose.msra.mxu0 0.0
    %2786 = vmatprep.subr.mxu0 0.0
    %2787 = vmatpush1.xpose.msra.mxu0 0.0
    %2788 = vmatprep.subr.mxu0 0.0
    %2789 = vmatpush1.xpose.msra.mxu0 %v2756
    %2790 = vmatprep.subr.mxu0 0.0
    %2791 = vmatpush2.xpose.msra.mxu0 0.0
    %2792 = vmatprep.subr.mxu0 0.0
    %2793 = vmatpush2.xpose.msra.mxu0 0.0
    %2794 = vmatprep.subr.mxu0 0.0
    %2795 = vmatpush2.xpose.msra.mxu0 0.0
    %2796 = vmatprep.subr.mxu0 0.0
    %2797 = vmatpush2.xpose.msra.mxu0 0.0
    %2798 = vmatprep.subr.mxu0 0.0
    %2799 = vmatpush2.xpose.msra.mxu0 0.0
    %2800 = vmatprep.subr.mxu0 0.0
    %2801 = vmatpush2.xpose.msra.mxu0 0.0
    %2802 = vmatprep.subr.mxu0 0.0
    %2803 = vmatpush2.xpose.msra.mxu0 0.0
    %2804 = vmatprep.subr.mxu0 0.0
    %2805 = vmatpush2.xpose.msra.mxu0 0.0
    %2806 = vmatprep.subr.mxu0 0.0
    %2807 = vmatpush2.xpose.msra.mxu0 0.0
    %2808 = vmatprep.subr.mxu0 0.0
    %2809 = vmatpush2.xpose.msra.mxu0 0.0
    %2810 = vmatprep.subr.mxu0 0.0
    %2811 = vmatpush2.xpose.msra.mxu0 0.0
    %2812 = vmatprep.subr.mxu0 0.0
    %2813 = vmatpush2.xpose.msra.mxu0 0.0
    %2814 = vmatprep.subr.mxu0 0.0
    %2815 = vmatpush2.xpose.msra.mxu0 0.0
    %2816 = vmatprep.subr.mxu0 0.0
    %2817 = vmatpush2.xpose.msra.mxu0 0.0
    %2818 = vmatprep.subr.mxu0 0.0
    %2819 = vmatpush2.xpose.msra.mxu0 0.0
    %2820 = vmatprep.subr.mxu0 0.0
    %2821 = vmatpush2.xpose.msra.mxu0 0.0
    %2822 = vmatprep.mubr.f32.mxu0 0.0
    %2823 = vmatmul.mubr.f32.gmra.mxu0 %v2753
    %v2824 = vpop.f32.mrf.mxu0
    %v2825 = vadd.f32 0.0, %v2824
    %v2826 = vpop.f32.mrf.mxu0
    %2827 = vdwg.mxu0
    %v2829 = vsel %vm380, %v2571, 0
    %v2832 = vsel %vm380, %v2662, 0
    %2834 = vmatprep.subr.mxu0 0.0
    %2835 = vmatpush1.xpose.msra.mxu0 0.0
    %2836 = vmatprep.subr.mxu0 0.0
    %2837 = vmatpush1.xpose.msra.mxu0 0.0
    %2838 = vmatprep.subr.mxu0 0.0
    %2839 = vmatpush1.xpose.msra.mxu0 0.0
    %2840 = vmatprep.subr.mxu0 0.0
    %2841 = vmatpush1.xpose.msra.mxu0 0.0
    %2842 = vmatprep.subr.mxu0 0.0
    %2843 = vmatpush1.xpose.msra.mxu0 0.0
    %2844 = vmatprep.subr.mxu0 0.0
    %2845 = vmatpush1.xpose.msra.mxu0 0.0
    %2846 = vmatprep.subr.mxu0 0.0
    %2847 = vmatpush1.xpose.msra.mxu0 0.0
    %2848 = vmatprep.subr.mxu0 0.0
    %2849 = vmatpush1.xpose.msra.mxu0 0.0
    %2850 = vmatprep.subr.mxu0 0.0
    %2851 = vmatpush1.xpose.msra.mxu0 0.0
    %2852 = vmatprep.subr.mxu0 0.0
    %2853 = vmatpush1.xpose.msra.mxu0 0.0
    %2854 = vmatprep.subr.mxu0 0.0
    %2855 = vmatpush1.xpose.msra.mxu0 0.0
    %2856 = vmatprep.subr.mxu0 0.0
    %2857 = vmatpush1.xpose.msra.mxu0 0.0
    %2858 = vmatprep.subr.mxu0 0.0
    %2859 = vmatpush1.xpose.msra.mxu0 0.0
    %2860 = vmatprep.subr.mxu0 0.0
    %2861 = vmatpush1.xpose.msra.mxu0 0.0
    %2862 = vmatprep.subr.mxu0 0.0
    %2863 = vmatpush1.xpose.msra.mxu0 0.0
    %2864 = vmatprep.subr.mxu0 0.0
    %2865 = vmatpush1.xpose.msra.mxu0 %v2832
    %2866 = vmatprep.subr.mxu0 0.0
    %2867 = vmatpush2.xpose.msra.mxu0 0.0
    %2868 = vmatprep.subr.mxu0 0.0
    %2869 = vmatpush2.xpose.msra.mxu0 0.0
    %2870 = vmatprep.subr.mxu0 0.0
    %2871 = vmatpush2.xpose.msra.mxu0 0.0
    %2872 = vmatprep.subr.mxu0 0.0
    %2873 = vmatpush2.xpose.msra.mxu0 0.0
    %2874 = vmatprep.subr.mxu0 0.0
    %2875 = vmatpush2.xpose.msra.mxu0 0.0
    %2876 = vmatprep.subr.mxu0 0.0
    %2877 = vmatpush2.xpose.msra.mxu0 0.0
    %2878 = vmatprep.subr.mxu0 0.0
    %2879 = vmatpush2.xpose.msra.mxu0 0.0
    %2880 = vmatprep.subr.mxu0 0.0
    %2881 = vmatpush2.xpose.msra.mxu0 0.0
    %2882 = vmatprep.subr.mxu0 0.0
    %2883 = vmatpush2.xpose.msra.mxu0 0.0
    %2884 = vmatprep.subr.mxu0 0.0
    %2885 = vmatpush2.xpose.msra.mxu0 0.0
    %2886 = vmatprep.subr.mxu0 0.0
    %2887 = vmatpush2.xpose.msra.mxu0 0.0
    %2888 = vmatprep.subr.mxu0 0.0
    %2889 = vmatpush2.xpose.msra.mxu0 0.0
    %2890 = vmatprep.subr.mxu0 0.0
    %2891 = vmatpush2.xpose.msra.mxu0 0.0
    %2892 = vmatprep.subr.mxu0 0.0
    %2893 = vmatpush2.xpose.msra.mxu0 0.0
    %2894 = vmatprep.subr.mxu0 0.0
    %2895 = vmatpush2.xpose.msra.mxu0 0.0
    %2896 = vmatprep.subr.mxu0 0.0
    %2897 = vmatpush2.xpose.msra.mxu0 0.0
    %2898 = vmatprep.mubr.f32.mxu0 0.0
    %2899 = vmatmul.mubr.f32.gmra.mxu0 %v2829
    %v2900 = vpop.f32.mrf.mxu0
    %v2901 = vadd.f32 0.0, %v2900
    %v2902 = vpop.f32.mrf.mxu0
    %2903 = vdwg.mxu0
    %v2904 = vmul.f32 %v2825, 0.17677669
    %v2905 = vmul.f32 %v2901, 0.17677669
    %v2906 = vsel %vm294, %v2904, -inf
    %2907 = vmax.xlane.f32.xlu0 %v2906
    %v2908 = vpop.xlane.xlu0 %2907
    %v2909 = vsel %vm294, %v2905, -inf
    %2910 = vmax.xlane.f32.xlu0 %v2909
    %v2911 = vpop.xlane.xlu0 %2910
    %v2912 = vsub.f32 %v2904, %v2908
    %v2913 = vsub.f32 %v2905, %v2911
    %v2914 = vmul.f32 %v2912, 1.442695
    %v2915 = vpow.pop %v2914
    %v2916 = vmul.f32 %v2913, 1.442695
    %v2917 = vpow.pop %v2916
    %v2918 = vsel %vm294, %v2915, 0.0
    %2919 = vadd.xlane.f32.xlu0 %v2918
    %v2920 = vpop.xlane.xlu0 %2919
    %v2921 = vsel %vm294, %v2917, 0.0
    %2922 = vadd.xlane.f32.xlu0 %v2921
    %v2923 = vpop.xlane.xlu0 %2922
    %v2924 = vrcp.pop %v2920
    %v2925 = vrcp.pop %v2923
    %v2926 = vmul.f32 %v2915, %v2924
    %v2927 = vmul.f32 %v2917, %v2925
    %v2929 = vsel %vm294, %v2926, 0
    %2931 = vmatprep.subr.mxu0 0.0
    %2932 = vmatpush1.msra.mxu0 0.0
    %2933 = vmatprep.subr.mxu0 0.0
    %2934 = vmatpush1.msra.mxu0 0.0
    %2935 = vmatprep.subr.mxu0 0.0
    %2936 = vmatpush1.msra.mxu0 0.0
    %2937 = vmatprep.subr.mxu0 0.0
    %2938 = vmatpush1.msra.mxu0 0.0
    %2939 = vmatprep.subr.mxu0 0.0
    %2940 = vmatpush1.msra.mxu0 0.0
    %2941 = vmatprep.subr.mxu0 0.0
    %2942 = vmatpush1.msra.mxu0 0.0
    %2943 = vmatprep.subr.mxu0 0.0
    %2944 = vmatpush1.msra.mxu0 0.0
    %2945 = vmatprep.subr.mxu0 0.0
    %2946 = vmatpush1.msra.mxu0 0.0
    %2947 = vmatprep.subr.mxu0 0.0
    %2948 = vmatpush1.msra.mxu0 0.0
    %2949 = vmatprep.subr.mxu0 0.0
    %2950 = vmatpush1.msra.mxu0 0.0
    %2951 = vmatprep.subr.mxu0 0.0
    %2952 = vmatpush1.msra.mxu0 0.0
    %2953 = vmatprep.subr.mxu0 0.0
    %2954 = vmatpush1.msra.mxu0 0.0
    %2955 = vmatprep.subr.mxu0 0.0
    %2956 = vmatpush1.msra.mxu0 0.0
    %2957 = vmatprep.subr.mxu0 0.0
    %2958 = vmatpush1.msra.mxu0 0.0
    %2959 = vmatprep.subr.mxu0 0.0
    %2960 = vmatpush1.msra.mxu0 0.0
    %2961 = vmatprep.subr.mxu0 0.0
    %2962 = vmatpush1.msra.mxu0 %v2744
    %2963 = vmatprep.subr.mxu0 0.0
    %2964 = vmatpush2.msra.mxu0 0.0
    %2965 = vmatprep.subr.mxu0 0.0
    %2966 = vmatpush2.msra.mxu0 0.0
    %2967 = vmatprep.subr.mxu0 0.0
    %2968 = vmatpush2.msra.mxu0 0.0
    %2969 = vmatprep.subr.mxu0 0.0
    %2970 = vmatpush2.msra.mxu0 0.0
    %2971 = vmatprep.subr.mxu0 0.0
    %2972 = vmatpush2.msra.mxu0 0.0
    %2973 = vmatprep.subr.mxu0 0.0
    %2974 = vmatpush2.msra.mxu0 0.0
    %2975 = vmatprep.subr.mxu0 0.0
    %2976 = vmatpush2.msra.mxu0 0.0
    %2977 = vmatprep.subr.mxu0 0.0
    %2978 = vmatpush2.msra.mxu0 0.0
    %2979 = vmatprep.subr.mxu0 0.0
    %2980 = vmatpush2.msra.mxu0 0.0
    %2981 = vmatprep.subr.mxu0 0.0
    %2982 = vmatpush2.msra.mxu0 0.0
    %2983 = vmatprep.subr.mxu0 0.0
    %2984 = vmatpush2.msra.mxu0 0.0
    %2985 = vmatprep.subr.mxu0 0.0
    %2986 = vmatpush2.msra.mxu0 0.0
    %2987 = vmatprep.subr.mxu0 0.0
    %2988 = vmatpush2.msra.mxu0 0.0
    %2989 = vmatprep.subr.mxu0 0.0
    %2990 = vmatpush2.msra.mxu0 0.0
    %2991 = vmatprep.subr.mxu0 0.0
    %2992 = vmatpush2.msra.mxu0 0.0
    %2993 = vmatprep.subr.mxu0 0.0
    %2994 = vmatpush2.msra.mxu0 0.0
    %2995 = vmatprep.mubr.f32.mxu0 0.0
    %2996 = vmatmul.mubr.f32.gmra.mxu0 %v2929
    %v2997 = vpop.f32.mrf.mxu0
    %v2998 = vadd.f32 0.0, %v2997
    %v2999 = vpop.f32.mrf.mxu0
    %3000 = vdwg.mxu0
    %v3002 = vsel %vm294, %v2927, 0
    %3004 = vmatprep.subr.mxu0 0.0
    %3005 = vmatpush1.msra.mxu0 0.0
    %3006 = vmatprep.subr.mxu0 0.0
    %3007 = vmatpush1.msra.mxu0 0.0
    %3008 = vmatprep.subr.mxu0 0.0
    %3009 = vmatpush1.msra.mxu0 0.0
    %3010 = vmatprep.subr.mxu0 0.0
    %3011 = vmatpush1.msra.mxu0 0.0
    %3012 = vmatprep.subr.mxu0 0.0
    %3013 = vmatpush1.msra.mxu0 0.0
    %3014 = vmatprep.subr.mxu0 0.0
    %3015 = vmatpush1.msra.mxu0 0.0
    %3016 = vmatprep.subr.mxu0 0.0
    %3017 = vmatpush1.msra.mxu0 0.0
    %3018 = vmatprep.subr.mxu0 0.0
    %3019 = vmatpush1.msra.mxu0 0.0
    %3020 = vmatprep.subr.mxu0 0.0
    %3021 = vmatpush1.msra.mxu0 0.0
    %3022 = vmatprep.subr.mxu0 0.0
    %3023 = vmatpush1.msra.mxu0 0.0
    %3024 = vmatprep.subr.mxu0 0.0
    %3025 = vmatpush1.msra.mxu0 0.0
    %3026 = vmatprep.subr.mxu0 0.0
    %3027 = vmatpush1.msra.mxu0 0.0
    %3028 = vmatprep.subr.mxu0 0.0
    %3029 = vmatpush1.msra.mxu0 0.0
    %3030 = vmatprep.subr.mxu0 0.0
    %3031 = vmatpush1.msra.mxu0 0.0
    %3032 = vmatprep.subr.mxu0 0.0
    %3033 = vmatpush1.msra.mxu0 0.0
    %3034 = vmatprep.subr.mxu0 0.0
    %3035 = vmatpush1.msra.mxu0 %v2749
    %3036 = vmatprep.subr.mxu0 0.0
    %3037 = vmatpush2.msra.mxu0 0.0
    %3038 = vmatprep.subr.mxu0 0.0
    %3039 = vmatpush2.msra.mxu0 0.0
    %3040 = vmatprep.subr.mxu0 0.0
    %3041 = vmatpush2.msra.mxu0 0.0
    %3042 = vmatprep.subr.mxu0 0.0
    %3043 = vmatpush2.msra.mxu0 0.0
    %3044 = vmatprep.subr.mxu0 0.0
    %3045 = vmatpush2.msra.mxu0 0.0
    %3046 = vmatprep.subr.mxu0 0.0
    %3047 = vmatpush2.msra.mxu0 0.0
    %3048 = vmatprep.subr.mxu0 0.0
    %3049 = vmatpush2.msra.mxu0 0.0
    %3050 = vmatprep.subr.mxu0 0.0
    %3051 = vmatpush2.msra.mxu0 0.0
    %3052 = vmatprep.subr.mxu0 0.0
    %3053 = vmatpush2.msra.mxu0 0.0
    %3054 = vmatprep.subr.mxu0 0.0
    %3055 = vmatpush2.msra.mxu0 0.0
    %3056 = vmatprep.subr.mxu0 0.0
    %3057 = vmatpush2.msra.mxu0 0.0
    %3058 = vmatprep.subr.mxu0 0.0
    %3059 = vmatpush2.msra.mxu0 0.0
    %3060 = vmatprep.subr.mxu0 0.0
    %3061 = vmatpush2.msra.mxu0 0.0
    %3062 = vmatprep.subr.mxu0 0.0
    %3063 = vmatpush2.msra.mxu0 0.0
    %3064 = vmatprep.subr.mxu0 0.0
    %3065 = vmatpush2.msra.mxu0 0.0
    %3066 = vmatprep.subr.mxu0 0.0
    %3067 = vmatpush2.msra.mxu0 0.0
    %3068 = vmatprep.mubr.f32.mxu0 0.0
    %3069 = vmatmul.mubr.f32.gmra.mxu0 %v3002
    %v3070 = vpop.f32.mrf.mxu0
    %v3071 = vadd.f32 0.0, %v3070
    %v3072 = vpop.f32.mrf.mxu0
    %3073 = vdwg.mxu0
    %v3074 = vadd.f32 %v368, %v2998
    %v3075 = vadd.f32 %v373, %v3071
    %3076 = vmatprep.subr.mxu0 0.0
    %3077 = vmatpush1.msra.mxu0 0.0
    %3078 = vmatprep.subr.mxu0 0.0
    %3079 = vmatpush1.msra.mxu0 0.0
    %3080 = vmatprep.subr.mxu0 0.0
    %3081 = vmatpush1.msra.mxu0 0.0
    %3082 = vmatprep.subr.mxu0 0.0
    %3083 = vmatpush1.msra.mxu0 0.0
    %3084 = vmatprep.subr.mxu0 0.0
    %3085 = vmatpush1.msra.mxu0 0.0
    %3086 = vmatprep.subr.mxu0 0.0
    %3087 = vmatpush1.msra.mxu0 0.0
    %3088 = vmatprep.subr.mxu0 0.0
    %3089 = vmatpush1.msra.mxu0 0.0
    %3090 = vmatprep.subr.mxu0 0.0
    %3091 = vmatpush1.msra.mxu0 0.0
    %3092 = vmatprep.subr.mxu0 0.0
    %3093 = vmatpush1.msra.mxu0 0.0
    %3094 = vmatprep.subr.mxu0 0.0
    %3095 = vmatpush1.msra.mxu0 0.0
    %3096 = vmatprep.subr.mxu0 0.0
    %3097 = vmatpush1.msra.mxu0 0.0
    %3098 = vmatprep.subr.mxu0 0.0
    %3099 = vmatpush1.msra.mxu0 0.0
    %3100 = vmatprep.subr.mxu0 0.0
    %3101 = vmatpush1.msra.mxu0 %v2585
    %3102 = vmatprep.subr.mxu0 0.0
    %3103 = vmatpush1.msra.mxu0 %v2583
    %3104 = vmatprep.subr.mxu0 0.0
    %3105 = vmatpush1.msra.mxu0 %v2581
    %3106 = vmatprep.subr.mxu0 0.0
    %3107 = vmatpush1.msra.mxu0 %v2579
    %3108 = vmatprep.subr.mxu0 0.0
    %3109 = vmatpush2.msra.mxu0 0.0
    %3110 = vmatprep.subr.mxu0 0.0
    %3111 = vmatpush2.msra.mxu0 0.0
    %3112 = vmatprep.subr.mxu0 0.0
    %3113 = vmatpush2.msra.mxu0 0.0
    %3114 = vmatprep.subr.mxu0 0.0
    %3115 = vmatpush2.msra.mxu0 0.0
    %3116 = vmatprep.subr.mxu0 0.0
    %3117 = vmatpush2.msra.mxu0 0.0
    %3118 = vmatprep.subr.mxu0 0.0
    %3119 = vmatpush2.msra.mxu0 0.0
    %3120 = vmatprep.subr.mxu0 0.0
    %3121 = vmatpush2.msra.mxu0 0.0
    %3122 = vmatprep.subr.mxu0 0.0
    %3123 = vmatpush2.msra.mxu0 0.0
    %3124 = vmatprep.subr.mxu0 0.0
    %3125 = vmatpush2.msra.mxu0 0.0
    %3126 = vmatprep.subr.mxu0 0.0
    %3127 = vmatpush2.msra.mxu0 0.0
    %3128 = vmatprep.subr.mxu0 0.0
    %3129 = vmatpush2.msra.mxu0 0.0
    %3130 = vmatprep.subr.mxu0 0.0
    %3131 = vmatpush2.msra.mxu0 0.0
    %3132 = vmatprep.subr.mxu0 0.0
    %3133 = vmatpush2.msra.mxu0 0.0
    %3134 = vmatprep.subr.mxu0 0.0
    %3135 = vmatpush2.msra.mxu0 0.0
    %3136 = vmatprep.subr.mxu0 0.0
    %3137 = vmatpush2.msra.mxu0 0.0
    %3138 = vmatprep.subr.mxu0 0.0
    %3139 = vmatpush2.msra.mxu0 0.0
    %3140 = vmatprep.mubr.f32.mxu0 0.0
    %3141 = vmatmul.mubr.f32.gmra.mxu0 %v479
    %v3142 = vpop.f32.mrf.mxu0
    %v3143 = vadd.f32 0.0, %v3142
    %v3144 = vpop.f32.mrf.mxu0
    %3145 = vmatprep.mubr.f32.mxu0 0.0
    %3146 = vmatmul.mubr.f32.gmra.mxu0 %v482
    %v3147 = vpop.f32.mrf.mxu0
    %v3148 = vadd.f32 0.0, %v3147
    %v3149 = vpop.f32.mrf.mxu0
    %3150 = vdwg.mxu0
    %3151 = vmatprep.subr.mxu0 0.0
    %3152 = vmatpush1.msra.mxu0 0.0
    %3153 = vmatprep.subr.mxu0 0.0
    %3154 = vmatpush1.msra.mxu0 0.0
    %3155 = vmatprep.subr.mxu0 0.0
    %3156 = vmatpush1.msra.mxu0 0.0
    %3157 = vmatprep.subr.mxu0 0.0
    %3158 = vmatpush1.msra.mxu0 0.0
    %3159 = vmatprep.subr.mxu0 0.0
    %3160 = vmatpush1.msra.mxu0 0.0
    %3161 = vmatprep.subr.mxu0 0.0
    %3162 = vmatpush1.msra.mxu0 0.0
    %3163 = vmatprep.subr.mxu0 0.0
    %3164 = vmatpush1.msra.mxu0 0.0
    %3165 = vmatprep.subr.mxu0 0.0
    %3166 = vmatpush1.msra.mxu0 0.0
    %3167 = vmatprep.subr.mxu0 0.0
    %3168 = vmatpush1.msra.mxu0 0.0
    %3169 = vmatprep.subr.mxu0 0.0
    %3170 = vmatpush1.msra.mxu0 0.0
    %3171 = vmatprep.subr.mxu0 0.0
    %3172 = vmatpush1.msra.mxu0 0.0
    %3173 = vmatprep.subr.mxu0 0.0
    %3174 = vmatpush1.msra.mxu0 0.0
    %3175 = vmatprep.subr.mxu0 0.0
    %3176 = vmatpush1.msra.mxu0 %v2672
    %3177 = vmatprep.subr.mxu0 0.0
    %3178 = vmatpush1.msra.mxu0 %v2670
    %3179 = vmatprep.subr.mxu0 0.0
    %3180 = vmatpush1.msra.mxu0 %v2668
    %3181 = vmatprep.subr.mxu0 0.0
    %3182 = vmatpush1.msra.mxu0 %v2666
    %3183 = vmatprep.subr.mxu0 0.0
    %3184 = vmatpush2.msra.mxu0 0.0
    %3185 = vmatprep.subr.mxu0 0.0
    %3186 = vmatpush2.msra.mxu0 0.0
    %3187 = vmatprep.subr.mxu0 0.0
    %3188 = vmatpush2.msra.mxu0 0.0
    %3189 = vmatprep.subr.mxu0 0.0
    %3190 = vmatpush2.msra.mxu0 0.0
    %3191 = vmatprep.subr.mxu0 0.0
    %3192 = vmatpush2.msra.mxu0 0.0
    %3193 = vmatprep.subr.mxu0 0.0
    %3194 = vmatpush2.msra.mxu0 0.0
    %3195 = vmatprep.subr.mxu0 0.0
    %3196 = vmatpush2.msra.mxu0 0.0
    %3197 = vmatprep.subr.mxu0 0.0
    %3198 = vmatpush2.msra.mxu0 0.0
    %3199 = vmatprep.subr.mxu0 0.0
    %3200 = vmatpush2.msra.mxu0 0.0
    %3201 = vmatprep.subr.mxu0 0.0
    %3202 = vmatpush2.msra.mxu0 0.0
    %3203 = vmatprep.subr.mxu0 0.0
    %3204 = vmatpush2.msra.mxu0 0.0
    %3205 = vmatprep.subr.mxu0 0.0
    %3206 = vmatpush2.msra.mxu0 0.0
    %3207 = vmatprep.subr.mxu0 0.0
    %3208 = vmatpush2.msra.mxu0 0.0
    %3209 = vmatprep.subr.mxu0 0.0
    %3210 = vmatpush2.msra.mxu0 0.0
    %3211 = vmatprep.subr.mxu0 0.0
    %3212 = vmatpush2.msra.mxu0 0.0
    %3213 = vmatprep.subr.mxu0 0.0
    %3214 = vmatpush2.msra.mxu0 0.0
    %3215 = vmatprep.mubr.f32.mxu0 0.0
    %3216 = vmatmul.mubr.f32.gmra.mxu0 %v479
    %v3217 = vpop.f32.mrf.mxu0
    %v3218 = vadd.f32 0.0, %v3217
    %v3219 = vpop.f32.mrf.mxu0
    %3220 = vmatprep.mubr.f32.mxu0 0.0
    %3221 = vmatmul.mubr.f32.gmra.mxu0 %v482
    %v3222 = vpop.f32.mrf.mxu0
    %v3223 = vadd.f32 0.0, %v3222
    %v3224 = vpop.f32.mrf.mxu0
    %3225 = vdwg.mxu0
    %v3227 = vsel %vm380, %v3143, 0
    %3229 = vmatprep.subr.mxu0 0.0
    %3230 = vmatpush1.xpose.msra.mxu0 0.0
    %3231 = vmatprep.subr.mxu0 0.0
    %3232 = vmatpush1.xpose.msra.mxu0 0.0
    %3233 = vmatprep.subr.mxu0 0.0
    %3234 = vmatpush1.xpose.msra.mxu0 0.0
    %3235 = vmatprep.subr.mxu0 0.0
    %3236 = vmatpush1.xpose.msra.mxu0 0.0
    %3237 = vmatprep.subr.mxu0 0.0
    %3238 = vmatpush1.xpose.msra.mxu0 0.0
    %3239 = vmatprep.subr.mxu0 0.0
    %3240 = vmatpush1.xpose.msra.mxu0 0.0
    %3241 = vmatprep.subr.mxu0 0.0
    %3242 = vmatpush1.xpose.msra.mxu0 0.0
    %3243 = vmatprep.subr.mxu0 0.0
    %3244 = vmatpush1.xpose.msra.mxu0 0.0
    %3245 = vmatprep.subr.mxu0 0.0
    %3246 = vmatpush1.xpose.msra.mxu0 0.0
    %3247 = vmatprep.subr.mxu0 0.0
    %3248 = vmatpush1.xpose.msra.mxu0 0.0
    %3249 = vmatprep.subr.mxu0 0.0
    %3250 = vmatpush1.xpose.msra.mxu0 0.0
    %3251 = vmatprep.subr.mxu0 0.0
    %3252 = vmatpush1.xpose.msra.mxu0 0.0
    %3253 = vmatprep.subr.mxu0 0.0
    %3254 = vmatpush1.xpose.msra.mxu0 0.0
    %3255 = vmatprep.subr.mxu0 0.0
    %3256 = vmatpush1.xpose.msra.mxu0 0.0
    %3257 = vmatprep.subr.mxu0 0.0
    %3258 = vmatpush1.xpose.msra.mxu0 0.0
    %3259 = vmatprep.subr.mxu0 0.0
    %3260 = vmatpush1.xpose.msra.mxu0 %v3227
    %3261 = vmatprep.subr.mxu0 0.0
    %3262 = vmatpush2.xpose.msra.mxu0 0.0
    %3263 = vmatprep.subr.mxu0 0.0
    %3264 = vmatpush2.xpose.msra.mxu0 0.0
    %3265 = vmatprep.subr.mxu0 0.0
    %3266 = vmatpush2.xpose.msra.mxu0 0.0
    %3267 = vmatprep.subr.mxu0 0.0
    %3268 = vmatpush2.xpose.msra.mxu0 0.0
    %3269 = vmatprep.subr.mxu0 0.0
    %3270 = vmatpush2.xpose.msra.mxu0 0.0
    %3271 = vmatprep.subr.mxu0 0.0
    %3272 = vmatpush2.xpose.msra.mxu0 0.0
    %3273 = vmatprep.subr.mxu0 0.0
    %3274 = vmatpush2.xpose.msra.mxu0 0.0
    %3275 = vmatprep.subr.mxu0 0.0
    %3276 = vmatpush2.xpose.msra.mxu0 0.0
    %3277 = vmatprep.subr.mxu0 0.0
    %3278 = vmatpush2.xpose.msra.mxu0 0.0
    %3279 = vmatprep.subr.mxu0 0.0
    %3280 = vmatpush2.xpose.msra.mxu0 0.0
    %3281 = vmatprep.subr.mxu0 0.0
    %3282 = vmatpush2.xpose.msra.mxu0 0.0
    %3283 = vmatprep.subr.mxu0 0.0
    %3284 = vmatpush2.xpose.msra.mxu0 0.0
    %3285 = vmatprep.subr.mxu0 0.0
    %3286 = vmatpush2.xpose.msra.mxu0 0.0
    %3287 = vmatprep.subr.mxu0 0.0
    %3288 = vmatpush2.xpose.msra.mxu0 0.0
    %3289 = vmatprep.subr.mxu0 0.0
    %3290 = vmatpush2.xpose.msra.mxu0 0.0
    %3291 = vmatprep.subr.mxu0 0.0
    %3292 = vmatpush2.xpose.msra.mxu0 0.0
    %3293 = vmatprep.mubr.f32.mxu0 0.0
    %3294 = vmatmul.mubr.f32.gmra.mxu0 %v2753
    %v3295 = vpop.f32.mrf.mxu0
    %v3296 = vadd.f32 0.0, %v3295
    %v3297 = vpop.f32.mrf.mxu0
    %3298 = vdwg.mxu0
    %v3300 = vsel %vm380, %v3148, 0
    %3302 = vmatprep.subr.mxu0 0.0
    %3303 = vmatpush1.xpose.msra.mxu0 0.0
    %3304 = vmatprep.subr.mxu0 0.0
    %3305 = vmatpush1.xpose.msra.mxu0 0.0
    %3306 = vmatprep.subr.mxu0 0.0
    %3307 = vmatpush1.xpose.msra.mxu0 0.0
    %3308 = vmatprep.subr.mxu0 0.0
    %3309 = vmatpush1.xpose.msra.mxu0 0.0
    %3310 = vmatprep.subr.mxu0 0.0
    %3311 = vmatpush1.xpose.msra.mxu0 0.0
    %3312 = vmatprep.subr.mxu0 0.0
    %3313 = vmatpush1.xpose.msra.mxu0 0.0
    %3314 = vmatprep.subr.mxu0 0.0
    %3315 = vmatpush1.xpose.msra.mxu0 0.0
    %3316 = vmatprep.subr.mxu0 0.0
    %3317 = vmatpush1.xpose.msra.mxu0 0.0
    %3318 = vmatprep.subr.mxu0 0.0
    %3319 = vmatpush1.xpose.msra.mxu0 0.0
    %3320 = vmatprep.subr.mxu0 0.0
    %3321 = vmatpush1.xpose.msra.mxu0 0.0
    %3322 = vmatprep.subr.mxu0 0.0
    %3323 = vmatpush1.xpose.msra.mxu0 0.0
    %3324 = vmatprep.subr.mxu0 0.0
    %3325 = vmatpush1.xpose.msra.mxu0 0.0
    %3326 = vmatprep.subr.mxu0 0.0
    %3327 = vmatpush1.xpose.msra.mxu0 0.0
    %3328 = vmatprep.subr.mxu0 0.0
    %3329 = vmatpush1.xpose.msra.mxu0 0.0
    %3330 = vmatprep.subr.mxu0 0.0
    %3331 = vmatpush1.xpose.msra.mxu0 0.0
    %3332 = vmatprep.subr.mxu0 0.0
    %3333 = vmatpush1.xpose.msra.mxu0 %v3300
    %3334 = vmatprep.subr.mxu0 0.0
    %3335 = vmatpush2.xpose.msra.mxu0 0.0
    %3336 = vmatprep.subr.mxu0 0.0
    %3337 = vmatpush2.xpose.msra.mxu0 0.0
    %3338 = vmatprep.subr.mxu0 0.0
    %3339 = vmatpush2.xpose.msra.mxu0 0.0
    %3340 = vmatprep.subr.mxu0 0.0
    %3341 = vmatpush2.xpose.msra.mxu0 0.0
    %3342 = vmatprep.subr.mxu0 0.0
    %3343 = vmatpush2.xpose.msra.mxu0 0.0
    %3344 = vmatprep.subr.mxu0 0.0
    %3345 = vmatpush2.xpose.msra.mxu0 0.0
    %3346 = vmatprep.subr.mxu0 0.0
    %3347 = vmatpush2.xpose.msra.mxu0 0.0
    %3348 = vmatprep.subr.mxu0 0.0
    %3349 = vmatpush2.xpose.msra.mxu0 0.0
    %3350 = vmatprep.subr.mxu0 0.0
    %3351 = vmatpush2.xpose.msra.mxu0 0.0
    %3352 = vmatprep.subr.mxu0 0.0
    %3353 = vmatpush2.xpose.msra.mxu0 0.0
    %3354 = vmatprep.subr.mxu0 0.0
    %3355 = vmatpush2.xpose.msra.mxu0 0.0
    %3356 = vmatprep.subr.mxu0 0.0
    %3357 = vmatpush2.xpose.msra.mxu0 0.0
    %3358 = vmatprep.subr.mxu0 0.0
    %3359 = vmatpush2.xpose.msra.mxu0 0.0
    %3360 = vmatprep.subr.mxu0 0.0
    %3361 = vmatpush2.xpose.msra.mxu0 0.0
    %3362 = vmatprep.subr.mxu0 0.0
    %3363 = vmatpush2.xpose.msra.mxu0 0.0
    %3364 = vmatprep.subr.mxu0 0.0
    %3365 = vmatpush2.xpose.msra.mxu0 0.0
    %3366 = vmatprep.mubr.f32.mxu0 0.0
    %3367 = vmatmul.mubr.f32.gmra.mxu0 %v2829
    %v3368 = vpop.f32.mrf.mxu0
    %v3369 = vadd.f32 0.0, %v3368
    %v3370 = vpop.f32.mrf.mxu0
    %3371 = vdwg.mxu0
    %v3372 = vmul.f32 %v3296, 0.17677669
    %v3373 = vmul.f32 %v3369, 0.17677669
    %v3374 = vsel %vm294, %v3372, -inf
    %3375 = vmax.xlane.f32.xlu0 %v3374
    %v3376 = vpop.xlane.xlu0 %3375
    %v3377 = vsel %vm294, %v3373, -inf
    %3378 = vmax.xlane.f32.xlu0 %v3377
    %v3379 = vpop.xlane.xlu0 %3378
    %v3380 = vsub.f32 %v3372, %v3376
    %v3381 = vsub.f32 %v3373, %v3379
    %v3382 = vmul.f32 %v3380, 1.442695
    %v3383 = vpow.pop %v3382
    %v3384 = vmul.f32 %v3381, 1.442695
    %v3385 = vpow.pop %v3384
    %v3386 = vsel %vm294, %v3383, 0.0
    %3387 = vadd.xlane.f32.xlu0 %v3386
    %v3388 = vpop.xlane.xlu0 %3387
    %v3389 = vsel %vm294, %v3385, 0.0
    %3390 = vadd.xlane.f32.xlu0 %v3389
    %v3391 = vpop.xlane.xlu0 %3390
    %v3392 = vrcp.pop %v3388
    %v3393 = vrcp.pop %v3391
    %v3394 = vmul.f32 %v3383, %v3392
    %v3395 = vmul.f32 %v3385, %v3393
    %v3397 = vsel %vm294, %v3394, 0
    %3399 = vmatprep.subr.mxu0 0.0
    %3400 = vmatpush1.msra.mxu0 0.0
    %3401 = vmatprep.subr.mxu0 0.0
    %3402 = vmatpush1.msra.mxu0 0.0
    %3403 = vmatprep.subr.mxu0 0.0
    %3404 = vmatpush1.msra.mxu0 0.0
    %3405 = vmatprep.subr.mxu0 0.0
    %3406 = vmatpush1.msra.mxu0 0.0
    %3407 = vmatprep.subr.mxu0 0.0
    %3408 = vmatpush1.msra.mxu0 0.0
    %3409 = vmatprep.subr.mxu0 0.0
    %3410 = vmatpush1.msra.mxu0 0.0
    %3411 = vmatprep.subr.mxu0 0.0
    %3412 = vmatpush1.msra.mxu0 0.0
    %3413 = vmatprep.subr.mxu0 0.0
    %3414 = vmatpush1.msra.mxu0 0.0
    %3415 = vmatprep.subr.mxu0 0.0
    %3416 = vmatpush1.msra.mxu0 0.0
    %3417 = vmatprep.subr.mxu0 0.0
    %3418 = vmatpush1.msra.mxu0 0.0
    %3419 = vmatprep.subr.mxu0 0.0
    %3420 = vmatpush1.msra.mxu0 0.0
    %3421 = vmatprep.subr.mxu0 0.0
    %3422 = vmatpush1.msra.mxu0 0.0
    %3423 = vmatprep.subr.mxu0 0.0
    %3424 = vmatpush1.msra.mxu0 0.0
    %3425 = vmatprep.subr.mxu0 0.0
    %3426 = vmatpush1.msra.mxu0 0.0
    %3427 = vmatprep.subr.mxu0 0.0
    %3428 = vmatpush1.msra.mxu0 0.0
    %3429 = vmatprep.subr.mxu0 0.0
    %3430 = vmatpush1.msra.mxu0 %v3218
    %3431 = vmatprep.subr.mxu0 0.0
    %3432 = vmatpush2.msra.mxu0 0.0
    %3433 = vmatprep.subr.mxu0 0.0
    %3434 = vmatpush2.msra.mxu0 0.0
    %3435 = vmatprep.subr.mxu0 0.0
    %3436 = vmatpush2.msra.mxu0 0.0
    %3437 = vmatprep.subr.mxu0 0.0
    %3438 = vmatpush2.msra.mxu0 0.0
    %3439 = vmatprep.subr.mxu0 0.0
    %3440 = vmatpush2.msra.mxu0 0.0
    %3441 = vmatprep.subr.mxu0 0.0
    %3442 = vmatpush2.msra.mxu0 0.0
    %3443 = vmatprep.subr.mxu0 0.0
    %3444 = vmatpush2.msra.mxu0 0.0
    %3445 = vmatprep.subr.mxu0 0.0
    %3446 = vmatpush2.msra.mxu0 0.0
    %3447 = vmatprep.subr.mxu0 0.0
    %3448 = vmatpush2.msra.mxu0 0.0
    %3449 = vmatprep.subr.mxu0 0.0
    %3450 = vmatpush2.msra.mxu0 0.0
    %3451 = vmatprep.subr.mxu0 0.0
    %3452 = vmatpush2.msra.mxu0 0.0
    %3453 = vmatprep.subr.mxu0 0.0
    %3454 = vmatpush2.msra.mxu0 0.0
    %3455 = vmatprep.subr.mxu0 0.0
    %3456 = vmatpush2.msra.mxu0 0.0
    %3457 = vmatprep.subr.mxu0 0.0
    %3458 = vmatpush2.msra.mxu0 0.0
    %3459 = vmatprep.subr.mxu0 0.0
    %3460 = vmatpush2.msra.mxu0 0.0
    %3461 = vmatprep.subr.mxu0 0.0
    %3462 = vmatpush2.msra.mxu0 0.0
    %3463 = vmatprep.mubr.f32.mxu0 0.0
    %3464 = vmatmul.mubr.f32.gmra.mxu0 %v3397
    %v3465 = vpop.f32.mrf.mxu0
    %v3466 = vadd.f32 0.0, %v3465
    %v3467 = vpop.f32.mrf.mxu0
    %3468 = vdwg.mxu0
    %v3470 = vsel %vm294, %v3395, 0
    %3472 = vmatprep.subr.mxu0 0.0
    %3473 = vmatpush1.msra.mxu0 0.0
    %3474 = vmatprep.subr.mxu0 0.0
    %3475 = vmatpush1.msra.mxu0 0.0
    %3476 = vmatprep.subr.mxu0 0.0
    %3477 = vmatpush1.msra.mxu0 0.0
    %3478 = vmatprep.subr.mxu0 0.0
    %3479 = vmatpush1.msra.mxu0 0.0
    %3480 = vmatprep.subr.mxu0 0.0
    %3481 = vmatpush1.msra.mxu0 0.0
    %3482 = vmatprep.subr.mxu0 0.0
    %3483 = vmatpush1.msra.mxu0 0.0
    %3484 = vmatprep.subr.mxu0 0.0
    %3485 = vmatpush1.msra.mxu0 0.0
    %3486 = vmatprep.subr.mxu0 0.0
    %3487 = vmatpush1.msra.mxu0 0.0
    %3488 = vmatprep.subr.mxu0 0.0
    %3489 = vmatpush1.msra.mxu0 0.0
    %3490 = vmatprep.subr.mxu0 0.0
    %3491 = vmatpush1.msra.mxu0 0.0
    %3492 = vmatprep.subr.mxu0 0.0
    %3493 = vmatpush1.msra.mxu0 0.0
    %3494 = vmatprep.subr.mxu0 0.0
    %3495 = vmatpush1.msra.mxu0 0.0
    %3496 = vmatprep.subr.mxu0 0.0
    %3497 = vmatpush1.msra.mxu0 0.0
    %3498 = vmatprep.subr.mxu0 0.0
    %3499 = vmatpush1.msra.mxu0 0.0
    %3500 = vmatprep.subr.mxu0 0.0
    %3501 = vmatpush1.msra.mxu0 0.0
    %3502 = vmatprep.subr.mxu0 0.0
    %3503 = vmatpush1.msra.mxu0 %v3223
    %3504 = vmatprep.subr.mxu0 0.0
    %3505 = vmatpush2.msra.mxu0 0.0
    %3506 = vmatprep.subr.mxu0 0.0
    %3507 = vmatpush2.msra.mxu0 0.0
    %3508 = vmatprep.subr.mxu0 0.0
    %3509 = vmatpush2.msra.mxu0 0.0
    %3510 = vmatprep.subr.mxu0 0.0
    %3511 = vmatpush2.msra.mxu0 0.0
    %3512 = vmatprep.subr.mxu0 0.0
    %3513 = vmatpush2.msra.mxu0 0.0
    %3514 = vmatprep.subr.mxu0 0.0
    %3515 = vmatpush2.msra.mxu0 0.0
    %3516 = vmatprep.subr.mxu0 0.0
    %3517 = vmatpush2.msra.mxu0 0.0
    %3518 = vmatprep.subr.mxu0 0.0
    %3519 = vmatpush2.msra.mxu0 0.0
    %3520 = vmatprep.subr.mxu0 0.0
    %3521 = vmatpush2.msra.mxu0 0.0
    %3522 = vmatprep.subr.mxu0 0.0
    %3523 = vmatpush2.msra.mxu0 0.0
    %3524 = vmatprep.subr.mxu0 0.0
    %3525 = vmatpush2.msra.mxu0 0.0
    %3526 = vmatprep.subr.mxu0 0.0
    %3527 = vmatpush2.msra.mxu0 0.0
    %3528 = vmatprep.subr.mxu0 0.0
    %3529 = vmatpush2.msra.mxu0 0.0
    %3530 = vmatprep.subr.mxu0 0.0
    %3531 = vmatpush2.msra.mxu0 0.0
    %3532 = vmatprep.subr.mxu0 0.0
    %3533 = vmatpush2.msra.mxu0 0.0
    %3534 = vmatprep.subr.mxu0 0.0
    %3535 = vmatpush2.msra.mxu0 0.0
    %3536 = vmatprep.mubr.f32.mxu0 0.0
    %3537 = vmatmul.mubr.f32.gmra.mxu0 %v3470
    %v3538 = vpop.f32.mrf.mxu0
    %v3539 = vadd.f32 0.0, %v3538
    %v3540 = vpop.f32.mrf.mxu0
    %3541 = vdwg.mxu0
    %v3542 = vadd.f32 %v3074, %v3466
    %v3543 = vadd.f32 %v3075, %v3539
    %v3544 = vld [vmem:[#allocation10] sm:$0xff]
    %v3545 = vld [vmem:[#allocation10 + $0x8] sm:$0xff]
    %v3546 = vld [vmem:[#allocation10 + $0x10] sm:$0xff]
    %v3547 = vld [vmem:[#allocation10 + $0x18] sm:$0xff]
    %v3549 = vsel %vm380, %v1442, 0
    %v3552 = vsel %vm380, %v1443, 0
    %3554 = vmatprep.subr.mxu0 0.0
    %3555 = vmatpush1.msra.mxu0 0.0
    %3556 = vmatprep.subr.mxu0 0.0
    %3557 = vmatpush1.msra.mxu0 0.0
    %3558 = vmatprep.subr.mxu0 0.0
    %3559 = vmatpush1.msra.mxu0 0.0
    %3560 = vmatprep.subr.mxu0 0.0
    %3561 = vmatpush1.msra.mxu0 0.0
    %3562 = vmatprep.subr.mxu0 0.0
    %3563 = vmatpush1.msra.mxu0 0.0
    %3564 = vmatprep.subr.mxu0 0.0
    %3565 = vmatpush1.msra.mxu0 0.0
    %3566 = vmatprep.subr.mxu0 0.0
    %3567 = vmatpush1.msra.mxu0 0.0
    %3568 = vmatprep.subr.mxu0 0.0
    %3569 = vmatpush1.msra.mxu0 0.0
    %3570 = vmatprep.subr.mxu0 0.0
    %3571 = vmatpush1.msra.mxu0 0.0
    %3572 = vmatprep.subr.mxu0 0.0
    %3573 = vmatpush1.msra.mxu0 0.0
    %3574 = vmatprep.subr.mxu0 0.0
    %3575 = vmatpush1.msra.mxu0 0.0
    %3576 = vmatprep.subr.mxu0 0.0
    %3577 = vmatpush1.msra.mxu0 0.0
    %3578 = vmatprep.subr.mxu0 0.0
    %3579 = vmatpush1.msra.mxu0 %v3547
    %3580 = vmatprep.subr.mxu0 0.0
    %3581 = vmatpush1.msra.mxu0 %v3546
    %3582 = vmatprep.subr.mxu0 0.0
    %3583 = vmatpush1.msra.mxu0 %v3545
    %3584 = vmatprep.subr.mxu0 0.0
    %3585 = vmatpush1.msra.mxu0 %v3544
    %3586 = vmatprep.subr.mxu0 0.0
    %3587 = vmatpush2.msra.mxu0 0.0
    %3588 = vmatprep.subr.mxu0 0.0
    %3589 = vmatpush2.msra.mxu0 0.0
    %3590 = vmatprep.subr.mxu0 0.0
    %3591 = vmatpush2.msra.mxu0 0.0
    %3592 = vmatprep.subr.mxu0 0.0
    %3593 = vmatpush2.msra.mxu0 0.0
    %3594 = vmatprep.subr.mxu0 0.0
    %3595 = vmatpush2.msra.mxu0 0.0
    %3596 = vmatprep.subr.mxu0 0.0
    %3597 = vmatpush2.msra.mxu0 0.0
    %3598 = vmatprep.subr.mxu0 0.0
    %3599 = vmatpush2.msra.mxu0 0.0
    %3600 = vmatprep.subr.mxu0 0.0
    %3601 = vmatpush2.msra.mxu0 0.0
    %3602 = vmatprep.subr.mxu0 0.0
    %3603 = vmatpush2.msra.mxu0 0.0
    %3604 = vmatprep.subr.mxu0 0.0
    %3605 = vmatpush2.msra.mxu0 0.0
    %3606 = vmatprep.subr.mxu0 0.0
    %3607 = vmatpush2.msra.mxu0 0.0
    %3608 = vmatprep.subr.mxu0 0.0
    %3609 = vmatpush2.msra.mxu0 0.0
    %3610 = vmatprep.subr.mxu0 0.0
    %3611 = vmatpush2.msra.mxu0 0.0
    %3612 = vmatprep.subr.mxu0 0.0
    %3613 = vmatpush2.msra.mxu0 0.0
    %3614 = vmatprep.subr.mxu0 0.0
    %3615 = vmatpush2.msra.mxu0 0.0
    %3616 = vmatprep.subr.mxu0 0.0
    %3617 = vmatpush2.msra.mxu0 0.0
    %3618 = vmatprep.mubr.f32.mxu0 0.0
    %3619 = vmatmul.mubr.f32.gmra.mxu0 %v3549
    %v3620 = vpop.f32.mrf.mxu0
    %v3621 = vadd.f32 0.0, %v3620
    %v3622 = vpop.f32.mrf.mxu0
    %3623 = vmatprep.mubr.f32.mxu0 0.0
    %3624 = vmatmul.mubr.f32.gmra.mxu0 %v3552
    %v3625 = vpop.f32.mrf.mxu0
    %v3626 = vadd.f32 0.0, %v3625
    %v3627 = vpop.f32.mrf.mxu0
    %3628 = vdwg.mxu0
    %v3629 = vlaneseq
    %v3630 = vand.u32 %v3629, 127
    %v3631 = vlaneseq
    %v3632 = vshrl.u32 %v3631, 7
    %vm3633 = vcmask 31744
    %v3634 = vsel %vm3633, 1.0, 0.0
    %3635 = vadd.xlane.f32.xlu0 %v3634
    %v3636 = vpop.xlane.xlu0 %3635
    %v3637 = vrcp.pop %v3636
    %v3638 = vmul.f32 %v3637, %v3621
    %v3639 = vmul.f32 %v3637, %v3626
    %v3640 = vsel %vm119, %v3638, 0.0
    %v3641 = vrot.slane %v3640, 4
    %v3642 = vadd.f32 %v3640, %v3641
    %v3643 = vrot.slane %v3642, 2
    %v3644 = vadd.f32 %v3642, %v3643
    %v3645 = vrot.slane %v3644, 1
    %v3646 = vadd.f32 %v3644, %v3645
    %v3647 = vsel %vm119, %v3639, 0.0
    %v3648 = vrot.slane %v3647, 4
    %v3649 = vadd.f32 %v3647, %v3648
    %v3650 = vrot.slane %v3649, 2
    %v3651 = vadd.f32 %v3649, %v3650
    %v3652 = vrot.slane %v3651, 1
    %v3653 = vadd.f32 %v3651, %v3652
    %v3654 = vmul.f32 %v3646, %v3646
    %v3655 = vmul.f32 %v3653, %v3653
    %v3656 = vsel %vm119, %v3654, 0.0
    %3657 = vadd.xlane.f32.xlu0 %v3656
    %v3658 = vpop.xlane.xlu0 %3657
    %v3659 = vsel %vm119, %v3655, 0.0
    %3660 = vadd.xlane.f32.xlu0 %v3659
    %v3661 = vpop.xlane.xlu0 %3660
    %v3662 = vadd.f32 %v3658, 1.0
    %v3663 = vadd.f32 %v3661, 1.0
    %v3664 = vrcp.pop %v3662
    %v3665 = vmul.f32 %v3658, %v3664
    %v3666 = vrcp.pop %v3663
    %v3667 = vmul.f32 %v3661, %v3666
    %v3668 = vmul.f32 %v3665, %v3646
    %v3669 = vmul.f32 %v3667, %v3653
    %v3670 = vadd.f32 %v3658, 1e-08
    %v3671 = vadd.f32 %v3661, 1e-08
    %v3672 = vrsqrt.pop %v3670
    %v3673 = vmul.f32 %v3670, %v3672
    %vm3674 = vcmp.eq.f32.partialorder %v3670, inf
    %v3675 = vsel %vm3674, %v3670, %v3673
    %vm3676 = vcmp.eq.f32.partialorder %v3670, 0.0
    %v3677 = vand.u32 %v3670, 2147483648
    %v3678 = vsel %vm3676, %v3677, %v3675
    %v3679 = vrsqrt.pop %v3671
    %v3680 = vmul.f32 %v3671, %v3679
    %vm3681 = vcmp.eq.f32.partialorder %v3671, inf
    %v3682 = vsel %vm3681, %v3671, %v3680
    %vm3683 = vcmp.eq.f32.partialorder %v3671, 0.0
    %v3684 = vand.u32 %v3671, 2147483648
    %v3685 = vsel %vm3683, %v3684, %v3682
    %v3686 = vrcp.pop %v3678
    %v3687 = vmul.f32 %v3668, %v3686
    %v3688 = vrcp.pop %v3685
    %v3689 = vmul.f32 %v3669, %v3688
    %vm3690 = vcmask 261248
    %v3691 = vsel %vm3690, %v3638, 0.0
    %v3692 = vrot.slane %v3691, 4
    %v3693 = vadd.f32 %v3691, %v3692
    %v3694 = vrot.slane %v3693, 2
    %v3695 = vadd.f32 %v3693, %v3694
    %v3696 = vrot.slane %v3695, 1
    %v3697 = vadd.f32 %v3695, %v3696
    %v3698 = vsel %vm3690, %v3639, 0.0
    %v3699 = vrot.slane %v3698, 4
    %v3700 = vadd.f32 %v3698, %v3699
    %v3701 = vrot.slane %v3700, 2
    %v3702 = vadd.f32 %v3700, %v3701
    %v3703 = vrot.slane %v3702, 1
    %v3704 = vadd.f32 %v3702, %v3703
    %v3705 = vmul.f32 %v3697, %v3697
    %v3706 = vmul.f32 %v3704, %v3704
    %3709 = vrot.lane.b32.xlu0 %v3705, 112
    %v3710 = vpop.permute.xlu0 %3709
    %3711 = vrot.lane.b32.xlu0 %v3706, 112
    %v3712 = vpop.permute.xlu0 %3711
    %v3715 = vsel %vm119, %v3710, 0.0
    %3716 = vadd.xlane.f32.xlu0 %v3715
    %v3717 = vpop.xlane.xlu0 %3716
    %v3718 = vsel %vm119, %v3712, 0.0
    %3719 = vadd.xlane.f32.xlu0 %v3718
    %v3720 = vpop.xlane.xlu0 %3719
    %v3721 = vadd.f32 %v3717, 1.0
    %v3722 = vadd.f32 %v3720, 1.0
    %v3723 = vrcp.pop %v3721
    %v3724 = vmul.f32 %v3717, %v3723
    %v3725 = vrcp.pop %v3722
    %v3726 = vmul.f32 %v3720, %v3725
    %v3727 = vmul.f32 %v3724, %v3697
    %v3728 = vmul.f32 %v3726, %v3704
    %v3729 = vadd.f32 %v3717, 1e-08
    %v3730 = vadd.f32 %v3720, 1e-08
    %v3731 = vrsqrt.pop %v3729
    %v3732 = vmul.f32 %v3729, %v3731
    %vm3733 = vcmp.eq.f32.partialorder %v3729, inf
    %v3734 = vsel %vm3733, %v3729, %v3732
    %vm3735 = vcmp.eq.f32.partialorder %v3729, 0.0
    %v3736 = vand.u32 %v3729, 2147483648
    %v3737 = vsel %vm3735, %v3736, %v3734
    %v3738 = vrsqrt.pop %v3730
    %v3739 = vmul.f32 %v3730, %v3738
    %vm3740 = vcmp.eq.f32.partialorder %v3730, inf
    %v3741 = vsel %vm3740, %v3730, %v3739
    %vm3742 = vcmp.eq.f32.partialorder %v3730, 0.0
    %v3743 = vand.u32 %v3730, 2147483648
    %v3744 = vsel %vm3742, %v3743, %v3741
    %v3745 = vrcp.pop %v3737
    %v3746 = vmul.f32 %v3727, %v3745
    %v3747 = vrcp.pop %v3744
    %v3748 = vmul.f32 %v3728, %v3747
    %vm3749 = vcmask 392448
    %v3750 = vsel %vm3749, %v3638, 0.0
    %v3751 = vrot.slane %v3750, 4
    %v3752 = vadd.f32 %v3750, %v3751
    %v3753 = vrot.slane %v3752, 2
    %v3754 = vadd.f32 %v3752, %v3753
    %v3755 = vrot.slane %v3754, 1
    %v3756 = vadd.f32 %v3754, %v3755
    %v3757 = vsel %vm3749, %v3639, 0.0
    %v3758 = vrot.slane %v3757, 4
    %v3759 = vadd.f32 %v3757, %v3758
    %v3760 = vrot.slane %v3759, 2
    %v3761 = vadd.f32 %v3759, %v3760
    %v3762 = vrot.slane %v3761, 1
    %v3763 = vadd.f32 %v3761, %v3762
    %v3764 = vmul.f32 %v3756, %v3756
    %v3765 = vmul.f32 %v3763, %v3763
    %3768 = vrot.lane.b32.xlu0 %v3764, 96
    %v3769 = vpop.permute.xlu0 %3768
    %3770 = vrot.lane.b32.xlu0 %v3765, 96
    %v3771 = vpop.permute.xlu0 %3770
    %v3774 = vsel %vm119, %v3769, 0.0
    %3775 = vadd.xlane.f32.xlu0 %v3774
    %v3776 = vpop.xlane.xlu0 %3775
    %v3777 = vsel %vm119, %v3771, 0.0
    %3778 = vadd.xlane.f32.xlu0 %v3777
    %v3779 = vpop.xlane.xlu0 %3778
    %v3780 = vadd.f32 %v3776, 1.0
    %v3781 = vadd.f32 %v3779, 1.0
    %v3782 = vrcp.pop %v3780
    %v3783 = vmul.f32 %v3776, %v3782
    %v3784 = vrcp.pop %v3781
    %v3785 = vmul.f32 %v3779, %v3784
    %v3786 = vmul.f32 %v3783, %v3756
    %v3787 = vmul.f32 %v3785, %v3763
    %v3788 = vadd.f32 %v3776, 1e-08
    %v3789 = vadd.f32 %v3779, 1e-08
    %v3790 = vrsqrt.pop %v3788
    %v3791 = vmul.f32 %v3788, %v3790
    %vm3792 = vcmp.eq.f32.partialorder %v3788, inf
    %v3793 = vsel %vm3792, %v3788, %v3791
    %vm3794 = vcmp.eq.f32.partialorder %v3788, 0.0
    %v3795 = vand.u32 %v3788, 2147483648
    %v3796 = vsel %vm3794, %v3795, %v3793
    %v3797 = vrsqrt.pop %v3789
    %v3798 = vmul.f32 %v3789, %v3797
    %vm3799 = vcmp.eq.f32.partialorder %v3789, inf
    %v3800 = vsel %vm3799, %v3789, %v3798
    %vm3801 = vcmp.eq.f32.partialorder %v3789, 0.0
    %v3802 = vand.u32 %v3789, 2147483648
    %v3803 = vsel %vm3801, %v3802, %v3800
    %v3804 = vrcp.pop %v3796
    %v3805 = vmul.f32 %v3786, %v3804
    %v3806 = vrcp.pop %v3803
    %v3807 = vmul.f32 %v3787, %v3806
    %vm3808 = vcmask 523648
    %v3809 = vsel %vm3808, %v3638, 0.0
    %v3810 = vrot.slane %v3809, 4
    %v3811 = vadd.f32 %v3809, %v3810
    %v3812 = vrot.slane %v3811, 2
    %v3813 = vadd.f32 %v3811, %v3812
    %v3814 = vrot.slane %v3813, 1
    %v3815 = vadd.f32 %v3813, %v3814
    %v3816 = vsel %vm3808, %v3639, 0.0
    %v3817 = vrot.slane %v3816, 4
    %v3818 = vadd.f32 %v3816, %v3817
    %v3819 = vrot.slane %v3818, 2
    %v3820 = vadd.f32 %v3818, %v3819
    %v3821 = vrot.slane %v3820, 1
    %v3822 = vadd.f32 %v3820, %v3821
    %v3823 = vmul.f32 %v3815, %v3815
    %v3824 = vmul.f32 %v3822, %v3822
    %3827 = vrot.lane.b32.xlu0 %v3823, 80
    %v3828 = vpop.permute.xlu0 %3827
    %3829 = vrot.lane.b32.xlu0 %v3824, 80
    %v3830 = vpop.permute.xlu0 %3829
    %v3833 = vsel %vm119, %v3828, 0.0
    %3834 = vadd.xlane.f32.xlu0 %v3833
    %v3835 = vpop.xlane.xlu0 %3834
    %v3836 = vsel %vm119, %v3830, 0.0
    %3837 = vadd.xlane.f32.xlu0 %v3836
    %v3838 = vpop.xlane.xlu0 %3837
    %v3839 = vadd.f32 %v3835, 1.0
    %v3840 = vadd.f32 %v3838, 1.0
    %v3841 = vrcp.pop %v3839
    %v3842 = vmul.f32 %v3835, %v3841
    %v3843 = vrcp.pop %v3840
    %v3844 = vmul.f32 %v3838, %v3843
    %v3845 = vmul.f32 %v3842, %v3815
    %v3846 = vmul.f32 %v3844, %v3822
    %v3847 = vadd.f32 %v3835, 1e-08
    %v3848 = vadd.f32 %v3838, 1e-08
    %v3849 = vrsqrt.pop %v3847
    %v3850 = vmul.f32 %v3847, %v3849
    %vm3851 = vcmp.eq.f32.partialorder %v3847, inf
    %v3852 = vsel %vm3851, %v3847, %v3850
    %vm3853 = vcmp.eq.f32.partialorder %v3847, 0.0
    %v3854 = vand.u32 %v3847, 2147483648
    %v3855 = vsel %vm3853, %v3854, %v3852
    %v3856 = vrsqrt.pop %v3848
    %v3857 = vmul.f32 %v3848, %v3856
    %vm3858 = vcmp.eq.f32.partialorder %v3848, inf
    %v3859 = vsel %vm3858, %v3848, %v3857
    %vm3860 = vcmp.eq.f32.partialorder %v3848, 0.0
    %v3861 = vand.u32 %v3848, 2147483648
    %v3862 = vsel %vm3860, %v3861, %v3859
    %v3863 = vrcp.pop %v3855
    %v3864 = vmul.f32 %v3845, %v3863
    %v3865 = vrcp.pop %v3862
    %v3866 = vmul.f32 %v3846, %v3865
    %v3867 = vmul.f32 %v3621, %v3687
    %v3868 = vmul.f32 %v3626, %v3689
    %v3869 = vsel %vm119, %v3867, 0.0
    %3870 = vadd.xlane.f32.xlu0 %v3869
    %v3871 = vpop.xlane.xlu0 %3870
    %v3872 = vsel %vm119, %v3868, 0.0
    %3873 = vadd.xlane.f32.xlu0 %v3872
    %v3874 = vpop.xlane.xlu0 %3873
    %vm3875 = vcmp.eq.s32.totalorder %v3630, 0
    %v3876 = vsel %vm3875, %v3871, 0.0
    %v3877 = vsel %vm3875, %v3874, 0.0
    %v3878 = vadd.f32 %v3876, 0.0
    %v3879 = vadd.f32 %v3877, 0.0
    %v3880 = vmul.f32 %v3621, %v3746
    %v3881 = vmul.f32 %v3626, %v3748
    %3884 = vrot.lane.b32.xlu0 %v3880, 112
    %v3885 = vpop.permute.xlu0 %3884
    %3886 = vrot.lane.b32.xlu0 %v3881, 112
    %v3887 = vpop.permute.xlu0 %3886
    %v3890 = vsel %vm119, %v3885, 0.0
    %3891 = vadd.xlane.f32.xlu0 %v3890
    %v3892 = vpop.xlane.xlu0 %3891
    %v3893 = vsel %vm119, %v3887, 0.0
    %3894 = vadd.xlane.f32.xlu0 %v3893
    %v3895 = vpop.xlane.xlu0 %3894
    %vm3896 = vcmp.eq.s32.totalorder %v3630, 1
    %v3897 = vsel %vm3896, %v3892, 0.0
    %v3898 = vsel %vm3896, %v3895, 0.0
    %v3899 = vadd.f32 %v3878, %v3897
    %v3900 = vadd.f32 %v3879, %v3898
    %v3901 = vmul.f32 %v3621, %v3805
    %v3902 = vmul.f32 %v3626, %v3807
    %3905 = vrot.lane.b32.xlu0 %v3901, 96
    %v3906 = vpop.permute.xlu0 %3905
    %3907 = vrot.lane.b32.xlu0 %v3902, 96
    %v3908 = vpop.permute.xlu0 %3907
    %v3911 = vsel %vm119, %v3906, 0.0
    %3912 = vadd.xlane.f32.xlu0 %v3911
    %v3913 = vpop.xlane.xlu0 %3912
    %v3914 = vsel %vm119, %v3908, 0.0
    %3915 = vadd.xlane.f32.xlu0 %v3914
    %v3916 = vpop.xlane.xlu0 %3915
    %vm3917 = vcmp.eq.s32.totalorder %v3630, 2
    %v3918 = vsel %vm3917, %v3913, 0.0
    %v3919 = vsel %vm3917, %v3916, 0.0
    %v3920 = vadd.f32 %v3899, %v3918
    %v3921 = vadd.f32 %v3900, %v3919
    %v3922 = vmul.f32 %v3621, %v3864
    %v3923 = vmul.f32 %v3626, %v3866
    %3926 = vrot.lane.b32.xlu0 %v3922, 80
    %v3927 = vpop.permute.xlu0 %3926
    %3928 = vrot.lane.b32.xlu0 %v3923, 80
    %v3929 = vpop.permute.xlu0 %3928
    %v3932 = vsel %vm119, %v3927, 0.0
    %3933 = vadd.xlane.f32.xlu0 %v3932
    %v3934 = vpop.xlane.xlu0 %3933
    %v3935 = vsel %vm119, %v3929, 0.0
    %3936 = vadd.xlane.f32.xlu0 %v3935
    %v3937 = vpop.xlane.xlu0 %3936
    %vm3938 = vcmp.eq.s32.totalorder %v3630, 3
    %v3939 = vsel %vm3938, %v3934, 0.0
    %v3940 = vsel %vm3938, %v3937, 0.0
    %v3941 = vadd.f32 %v3920, %v3939
    %v3942 = vadd.f32 %v3921, %v3940
    %v3943 = vadd.f32 %v3941, 0.0
    %v3944 = vadd.f32 %v3942, 0.0
    %v3945 = vsel %vm3633, %v3943, -inf
    %3946 = vmax.xlane.f32.xlu0 %v3945
    %v3947 = vpop.xlane.xlu0 %3946
    %v3948 = vsel %vm3633, %v3944, -inf
    %3949 = vmax.xlane.f32.xlu0 %v3948
    %v3950 = vpop.xlane.xlu0 %3949
    %v3951 = vsub.f32 %v3943, %v3947
    %v3952 = vsub.f32 %v3944, %v3950
    %v3953 = vmul.f32 %v3951, 1.442695
    %v3954 = vpow.pop %v3953
    %v3955 = vmul.f32 %v3952, 1.442695
    %v3956 = vpow.pop %v3955
    %v3957 = vsel %vm3633, %v3954, 0.0
    %3958 = vadd.xlane.f32.xlu0 %v3957
    %v3959 = vpop.xlane.xlu0 %3958
    %v3960 = vsel %vm3633, %v3956, 0.0
    %3961 = vadd.xlane.f32.xlu0 %v3960
    %v3962 = vpop.xlane.xlu0 %3961
    %v3963 = vrcp.pop %v3959
    %v3964 = vrcp.pop %v3962
    %v3965 = vmul.f32 %v3954, %v3963
    %v3966 = vmul.f32 %v3956, %v3964
    %3968 = vset.pattern.permute.xlu0 0
    %3969 = vperm.xlu0 %3968, %v3965
    %v3970 = vpop.permute.xlu0 %3969
    %3973 = vset.pattern.permute.xlu0 0
    %3974 = vperm.xlu0 %3973, %v3966
    %v3975 = vpop.permute.xlu0 %3974
    %v3977 = vmul.f32 %v3970, %v3621
    %v3978 = vmul.f32 %v3975, %v3626
    %v3979 = vsel %vm119, %v3977, 0.0
    %v3980 = vrot.slane %v3979, 4
    %v3981 = vadd.f32 %v3979, %v3980
    %v3982 = vrot.slane %v3981, 2
    %v3983 = vadd.f32 %v3981, %v3982
    %v3984 = vrot.slane %v3983, 1
    %v3985 = vadd.f32 %v3983, %v3984
    %v3986 = vsel %vm119, %v3978, 0.0
    %v3987 = vrot.slane %v3986, 4
    %v3988 = vadd.f32 %v3986, %v3987
    %v3989 = vrot.slane %v3988, 2
    %v3990 = vadd.f32 %v3988, %v3989
    %v3991 = vrot.slane %v3990, 1
    %v3992 = vadd.f32 %v3990, %v3991
    %v3993 = vmul.f32 %v3985, %v3985
    %v3994 = vmul.f32 %v3992, %v3992
    %v3995 = vsel %vm119, %v3993, 0.0
    %3996 = vadd.xlane.f32.xlu0 %v3995
    %v3997 = vpop.xlane.xlu0 %3996
    %v3998 = vsel %vm119, %v3994, 0.0
    %3999 = vadd.xlane.f32.xlu0 %v3998
    %v4000 = vpop.xlane.xlu0 %3999
    %v4001 = vadd.f32 %v3997, 1.0
    %v4002 = vadd.f32 %v4000, 1.0
    %v4003 = vrcp.pop %v4001
    %v4004 = vmul.f32 %v3997, %v4003
    %v4005 = vrcp.pop %v4002
    %v4006 = vmul.f32 %v4000, %v4005
    %v4007 = vmul.f32 %v4004, %v3985
    %v4008 = vmul.f32 %v4006, %v3992
    %v4009 = vadd.f32 %v3997, 1e-08
    %v4010 = vadd.f32 %v4000, 1e-08
    %v4011 = vrsqrt.pop %v4009
    %v4012 = vmul.f32 %v4009, %v4011
    %vm4013 = vcmp.eq.f32.partialorder %v4009, inf
    %v4014 = vsel %vm4013, %v4009, %v4012
    %vm4015 = vcmp.eq.f32.partialorder %v4009, 0.0
    %v4016 = vand.u32 %v4009, 2147483648
    %v4017 = vsel %vm4015, %v4016, %v4014
    %v4018 = vrsqrt.pop %v4010
    %v4019 = vmul.f32 %v4010, %v4018
    %vm4020 = vcmp.eq.f32.partialorder %v4010, inf
    %v4021 = vsel %vm4020, %v4010, %v4019
    %vm4022 = vcmp.eq.f32.partialorder %v4010, 0.0
    %v4023 = vand.u32 %v4010, 2147483648
    %v4024 = vsel %vm4022, %v4023, %v4021
    %v4025 = vrcp.pop %v4017
    %v4026 = vmul.f32 %v4007, %v4025
    %v4027 = vrcp.pop %v4024
    %v4028 = vmul.f32 %v4008, %v4027
    %4029 = vset.pattern.permute.xlu0 1
    %4030 = vperm.xlu0 %4029, %v3965
    %v4031 = vpop.permute.xlu0 %4030
    %4033 = vset.pattern.permute.xlu0 1
    %4034 = vperm.xlu0 %4033, %v3966
    %v4035 = vpop.permute.xlu0 %4034
    %v4037 = vmul.f32 %v4031, %v3621
    %v4038 = vmul.f32 %v4035, %v3626
    %v4039 = vsel %vm3690, %v4037, 0.0
    %v4040 = vrot.slane %v4039, 4
    %v4041 = vadd.f32 %v4039, %v4040
    %v4042 = vrot.slane %v4041, 2
    %v4043 = vadd.f32 %v4041, %v4042
    %v4044 = vrot.slane %v4043, 1
    %v4045 = vadd.f32 %v4043, %v4044
    %v4046 = vsel %vm3690, %v4038, 0.0
    %v4047 = vrot.slane %v4046, 4
    %v4048 = vadd.f32 %v4046, %v4047
    %v4049 = vrot.slane %v4048, 2
    %v4050 = vadd.f32 %v4048, %v4049
    %v4051 = vrot.slane %v4050, 1
    %v4052 = vadd.f32 %v4050, %v4051
    %v4053 = vmul.f32 %v4045, %v4045
    %v4054 = vmul.f32 %v4052, %v4052
    %4057 = vrot.lane.b32.xlu0 %v4053, 112
    %v4058 = vpop.permute.xlu0 %4057
    %4059 = vrot.lane.b32.xlu0 %v4054, 112
    %v4060 = vpop.permute.xlu0 %4059
    %v4063 = vsel %vm119, %v4058, 0.0
    %4064 = vadd.xlane.f32.xlu0 %v4063
    %v4065 = vpop.xlane.xlu0 %4064
    %v4066 = vsel %vm119, %v4060, 0.0
    %4067 = vadd.xlane.f32.xlu0 %v4066
    %v4068 = vpop.xlane.xlu0 %4067
    %v4069 = vadd.f32 %v4065, 1.0
    %v4070 = vadd.f32 %v4068, 1.0
    %v4071 = vrcp.pop %v4069
    %v4072 = vmul.f32 %v4065, %v4071
    %v4073 = vrcp.pop %v4070
    %v4074 = vmul.f32 %v4068, %v4073
    %v4075 = vmul.f32 %v4072, %v4045
    %v4076 = vmul.f32 %v4074, %v4052
    %v4077 = vadd.f32 %v4065, 1e-08
    %v4078 = vadd.f32 %v4068, 1e-08
    %v4079 = vrsqrt.pop %v4077
    %v4080 = vmul.f32 %v4077, %v4079
    %vm4081 = vcmp.eq.f32.partialorder %v4077, inf
    %v4082 = vsel %vm4081, %v4077, %v4080
    %vm4083 = vcmp.eq.f32.partialorder %v4077, 0.0
    %v4084 = vand.u32 %v4077, 2147483648
    %v4085 = vsel %vm4083, %v4084, %v4082
    %v4086 = vrsqrt.pop %v4078
    %v4087 = vmul.f32 %v4078, %v4086
    %vm4088 = vcmp.eq.f32.partialorder %v4078, inf
    %v4089 = vsel %vm4088, %v4078, %v4087
    %vm4090 = vcmp.eq.f32.partialorder %v4078, 0.0
    %v4091 = vand.u32 %v4078, 2147483648
    %v4092 = vsel %vm4090, %v4091, %v4089
    %v4093 = vrcp.pop %v4085
    %v4094 = vmul.f32 %v4075, %v4093
    %v4095 = vrcp.pop %v4092
    %v4096 = vmul.f32 %v4076, %v4095
    %4097 = vset.pattern.permute.xlu0 2
    %4098 = vperm.xlu0 %4097, %v3965
    %v4099 = vpop.permute.xlu0 %4098
    %4101 = vset.pattern.permute.xlu0 2
    %4102 = vperm.xlu0 %4101, %v3966
    %v4103 = vpop.permute.xlu0 %4102
    %v4105 = vmul.f32 %v4099, %v3621
    %v4106 = vmul.f32 %v4103, %v3626
    %v4107 = vsel %vm3749, %v4105, 0.0
    %v4108 = vrot.slane %v4107, 4
    %v4109 = vadd.f32 %v4107, %v4108
    %v4110 = vrot.slane %v4109, 2
    %v4111 = vadd.f32 %v4109, %v4110
    %v4112 = vrot.slane %v4111, 1
    %v4113 = vadd.f32 %v4111, %v4112
    %v4114 = vsel %vm3749, %v4106, 0.0
    %v4115 = vrot.slane %v4114, 4
    %v4116 = vadd.f32 %v4114, %v4115
    %v4117 = vrot.slane %v4116, 2
    %v4118 = vadd.f32 %v4116, %v4117
    %v4119 = vrot.slane %v4118, 1
    %v4120 = vadd.f32 %v4118, %v4119
    %v4121 = vmul.f32 %v4113, %v4113
    %v4122 = vmul.f32 %v4120, %v4120
    %4125 = vrot.lane.b32.xlu0 %v4121, 96
    %v4126 = vpop.permute.xlu0 %4125
    %4127 = vrot.lane.b32.xlu0 %v4122, 96
    %v4128 = vpop.permute.xlu0 %4127
    %v4131 = vsel %vm119, %v4126, 0.0
    %4132 = vadd.xlane.f32.xlu0 %v4131
    %v4133 = vpop.xlane.xlu0 %4132
    %v4134 = vsel %vm119, %v4128, 0.0
    %4135 = vadd.xlane.f32.xlu0 %v4134
    %v4136 = vpop.xlane.xlu0 %4135
    %v4137 = vadd.f32 %v4133, 1.0
    %v4138 = vadd.f32 %v4136, 1.0
    %v4139 = vrcp.pop %v4137
    %v4140 = vmul.f32 %v4133, %v4139
    %v4141 = vrcp.pop %v4138
    %v4142 = vmul.f32 %v4136, %v4141
    %v4143 = vmul.f32 %v4140, %v4113
    %v4144 = vmul.f32 %v4142, %v4120
    %v4145 = vadd.f32 %v4133, 1e-08
    %v4146 = vadd.f32 %v4136, 1e-08
    %v4147 = vrsqrt.pop %v4145
    %v4148 = vmul.f32 %v4145, %v4147
    %vm4149 = vcmp.eq.f32.partialorder %v4145, inf
    %v4150 = vsel %vm4149, %v4145, %v4148
    %vm4151 = vcmp.eq.f32.partialorder %v4145, 0.0
    %v4152 = vand.u32 %v4145, 2147483648
    %v4153 = vsel %vm4151, %v4152, %v4150
    %v4154 = vrsqrt.pop %v4146
    %v4155 = vmul.f32 %v4146, %v4154
    %vm4156 = vcmp.eq.f32.partialorder %v4146, inf
    %v4157 = vsel %vm4156, %v4146, %v4155
    %vm4158 = vcmp.eq.f32.partialorder %v4146, 0.0
    %v4159 = vand.u32 %v4146, 2147483648
    %v4160 = vsel %vm4158, %v4159, %v4157
    %v4161 = vrcp.pop %v4153
    %v4162 = vmul.f32 %v4143, %v4161
    %v4163 = vrcp.pop %v4160
    %v4164 = vmul.f32 %v4144, %v4163
    %4165 = vset.pattern.permute.xlu0 3
    %4166 = vperm.xlu0 %4165, %v3965
    %v4167 = vpop.permute.xlu0 %4166
    %4169 = vset.pattern.permute.xlu0 3
    %4170 = vperm.xlu0 %4169, %v3966
    %v4171 = vpop.permute.xlu0 %4170
    %v4173 = vmul.f32 %v4167, %v3621
    %v4174 = vmul.f32 %v4171, %v3626
    %v4175 = vsel %vm3808, %v4173, 0.0
    %v4176 = vrot.slane %v4175, 4
    %v4177 = vadd.f32 %v4175, %v4176
    %v4178 = vrot.slane %v4177, 2
    %v4179 = vadd.f32 %v4177, %v4178
    %v4180 = vrot.slane %v4179, 1
    %v4181 = vadd.f32 %v4179, %v4180
    %v4182 = vsel %vm3808, %v4174, 0.0
    %v4183 = vrot.slane %v4182, 4
    %v4184 = vadd.f32 %v4182, %v4183
    %v4185 = vrot.slane %v4184, 2
    %v4186 = vadd.f32 %v4184, %v4185
    %v4187 = vrot.slane %v4186, 1
    %v4188 = vadd.f32 %v4186, %v4187
    %v4189 = vmul.f32 %v4181, %v4181
    %v4190 = vmul.f32 %v4188, %v4188
    %4193 = vrot.lane.b32.xlu0 %v4189, 80
    %v4194 = vpop.permute.xlu0 %4193
    %4195 = vrot.lane.b32.xlu0 %v4190, 80
    %v4196 = vpop.permute.xlu0 %4195
    %v4199 = vsel %vm119, %v4194, 0.0
    %4200 = vadd.xlane.f32.xlu0 %v4199
    %v4201 = vpop.xlane.xlu0 %4200
    %v4202 = vsel %vm119, %v4196, 0.0
    %4203 = vadd.xlane.f32.xlu0 %v4202
    %v4204 = vpop.xlane.xlu0 %4203
    %v4205 = vadd.f32 %v4201, 1.0
    %v4206 = vadd.f32 %v4204, 1.0
    %v4207 = vrcp.pop %v4205
    %v4208 = vmul.f32 %v4201, %v4207
    %v4209 = vrcp.pop %v4206
    %v4210 = vmul.f32 %v4204, %v4209
    %v4211 = vmul.f32 %v4208, %v4181
    %v4212 = vmul.f32 %v4210, %v4188
    %v4213 = vadd.f32 %v4201, 1e-08
    %v4214 = vadd.f32 %v4204, 1e-08
    %v4215 = vrsqrt.pop %v4213
    %v4216 = vmul.f32 %v4213, %v4215
    %vm4217 = vcmp.eq.f32.partialorder %v4213, inf
    %v4218 = vsel %vm4217, %v4213, %v4216
    %vm4219 = vcmp.eq.f32.partialorder %v4213, 0.0
    %v4220 = vand.u32 %v4213, 2147483648
    %v4221 = vsel %vm4219, %v4220, %v4218
    %v4222 = vrsqrt.pop %v4214
    %v4223 = vmul.f32 %v4214, %v4222
    %vm4224 = vcmp.eq.f32.partialorder %v4214, inf
    %v4225 = vsel %vm4224, %v4214, %v4223
    %vm4226 = vcmp.eq.f32.partialorder %v4214, 0.0
    %v4227 = vand.u32 %v4214, 2147483648
    %v4228 = vsel %vm4226, %v4227, %v4225
    %v4229 = vrcp.pop %v4221
    %v4230 = vmul.f32 %v4211, %v4229
    %v4231 = vrcp.pop %v4228
    %v4232 = vmul.f32 %v4212, %v4231
    %v4233 = vmul.f32 %v3621, %v4026
    %v4234 = vmul.f32 %v3626, %v4028
    %v4235 = vsel %vm119, %v4233, 0.0
    %4236 = vadd.xlane.f32.xlu0 %v4235
    %v4237 = vpop.xlane.xlu0 %4236
    %v4238 = vsel %vm119, %v4234, 0.0
    %4239 = vadd.xlane.f32.xlu0 %v4238
    %v4240 = vpop.xlane.xlu0 %4239
    %v4241 = vsel %vm3875, %v4237, 0.0
    %v4242 = vsel %vm3875, %v4240, 0.0
    %v4243 = vadd.f32 %v4241, 0.0
    %v4244 = vadd.f32 %v4242, 0.0
    %v4245 = vmul.f32 %v3621, %v4094
    %v4246 = vmul.f32 %v3626, %v4096
    %4249 = vrot.lane.b32.xlu0 %v4245, 112
    %v4250 = vpop.permute.xlu0 %4249
    %4251 = vrot.lane.b32.xlu0 %v4246, 112
    %v4252 = vpop.permute.xlu0 %4251
    %v4255 = vsel %vm119, %v4250, 0.0
    %4256 = vadd.xlane.f32.xlu0 %v4255
    %v4257 = vpop.xlane.xlu0 %4256
    %v4258 = vsel %vm119, %v4252, 0.0
    %4259 = vadd.xlane.f32.xlu0 %v4258
    %v4260 = vpop.xlane.xlu0 %4259
    %v4261 = vsel %vm3896, %v4257, 0.0
    %v4262 = vsel %vm3896, %v4260, 0.0
    %v4263 = vadd.f32 %v4243, %v4261
    %v4264 = vadd.f32 %v4244, %v4262
    %v4265 = vmul.f32 %v3621, %v4162
    %v4266 = vmul.f32 %v3626, %v4164
    %4269 = vrot.lane.b32.xlu0 %v4265, 96
    %v4270 = vpop.permute.xlu0 %4269
    %4271 = vrot.lane.b32.xlu0 %v4266, 96
    %v4272 = vpop.permute.xlu0 %4271
    %v4275 = vsel %vm119, %v4270, 0.0
    %4276 = vadd.xlane.f32.xlu0 %v4275
    %v4277 = vpop.xlane.xlu0 %4276
    %v4278 = vsel %vm119, %v4272, 0.0
    %4279 = vadd.xlane.f32.xlu0 %v4278
    %v4280 = vpop.xlane.xlu0 %4279
    %v4281 = vsel %vm3917, %v4277, 0.0
    %v4282 = vsel %vm3917, %v4280, 0.0
    %v4283 = vadd.f32 %v4263, %v4281
    %v4284 = vadd.f32 %v4264, %v4282
    %v4285 = vmul.f32 %v3621, %v4230
    %v4286 = vmul.f32 %v3626, %v4232
    %4289 = vrot.lane.b32.xlu0 %v4285, 80
    %v4290 = vpop.permute.xlu0 %4289
    %4291 = vrot.lane.b32.xlu0 %v4286, 80
    %v4292 = vpop.permute.xlu0 %4291
    %v4295 = vsel %vm119, %v4290, 0.0
    %4296 = vadd.xlane.f32.xlu0 %v4295
    %v4297 = vpop.xlane.xlu0 %4296
    %v4298 = vsel %vm119, %v4292, 0.0
    %4299 = vadd.xlane.f32.xlu0 %v4298
    %v4300 = vpop.xlane.xlu0 %4299
    %v4301 = vsel %vm3938, %v4297, 0.0
    %v4302 = vsel %vm3938, %v4300, 0.0
    %v4303 = vadd.f32 %v4283, %v4301
    %v4304 = vadd.f32 %v4284, %v4302
    %v4305 = vadd.f32 %v3943, %v4303
    %v4306 = vadd.f32 %v3944, %v4304
    %v4307 = vsel %vm3633, %v4305, -inf
    %4308 = vmax.xlane.f32.xlu0 %v4307
    %v4309 = vpop.xlane.xlu0 %4308
    %v4310 = vsel %vm3633, %v4306, -inf
    %4311 = vmax.xlane.f32.xlu0 %v4310
    %v4312 = vpop.xlane.xlu0 %4311
    %v4313 = vsub.f32 %v4305, %v4309
    %v4314 = vsub.f32 %v4306, %v4312
    %v4315 = vmul.f32 %v4313, 1.442695
    %v4316 = vpow.pop %v4315
    %v4317 = vmul.f32 %v4314, 1.442695
    %v4318 = vpow.pop %v4317
    %v4319 = vsel %vm3633, %v4316, 0.0
    %4320 = vadd.xlane.f32.xlu0 %v4319
    %v4321 = vpop.xlane.xlu0 %4320
    %v4322 = vsel %vm3633, %v4318, 0.0
    %4323 = vadd.xlane.f32.xlu0 %v4322
    %v4324 = vpop.xlane.xlu0 %4323
    %v4325 = vrcp.pop %v4321
    %v4326 = vrcp.pop %v4324
    %v4327 = vmul.f32 %v4316, %v4325
    %v4328 = vmul.f32 %v4318, %v4326
    %4330 = vset.pattern.permute.xlu0 0
    %4331 = vperm.xlu0 %4330, %v4327
    %v4332 = vpop.permute.xlu0 %4331
    %4335 = vset.pattern.permute.xlu0 0
    %4336 = vperm.xlu0 %4335, %v4328
    %v4337 = vpop.permute.xlu0 %4336
    %v4339 = vmul.f32 %v4332, %v3621
    %v4340 = vmul.f32 %v4337, %v3626
    %v4341 = vsel %vm119, %v4339, 0.0
    %v4342 = vrot.slane %v4341, 4
    %v4343 = vadd.f32 %v4341, %v4342
    %v4344 = vrot.slane %v4343, 2
    %v4345 = vadd.f32 %v4343, %v4344
    %v4346 = vrot.slane %v4345, 1
    %v4347 = vadd.f32 %v4345, %v4346
    %v4348 = vsel %vm119, %v4340, 0.0
    %v4349 = vrot.slane %v4348, 4
    %v4350 = vadd.f32 %v4348, %v4349
    %v4351 = vrot.slane %v4350, 2
    %v4352 = vadd.f32 %v4350, %v4351
    %v4353 = vrot.slane %v4352, 1
    %v4354 = vadd.f32 %v4352, %v4353
    %v4355 = vmul.f32 %v4347, %v4347
    %v4356 = vmul.f32 %v4354, %v4354
    %v4357 = vsel %vm119, %v4355, 0.0
    %4358 = vadd.xlane.f32.xlu0 %v4357
    %v4359 = vpop.xlane.xlu0 %4358
    %v4360 = vsel %vm119, %v4356, 0.0
    %4361 = vadd.xlane.f32.xlu0 %v4360
    %v4362 = vpop.xlane.xlu0 %4361
    %v4363 = vadd.f32 %v4359, 1.0
    %v4364 = vadd.f32 %v4362, 1.0
    %v4365 = vrcp.pop %v4363
    %v4366 = vmul.f32 %v4359, %v4365
    %v4367 = vrcp.pop %v4364
    %v4368 = vmul.f32 %v4362, %v4367
    %v4369 = vmul.f32 %v4366, %v4347
    %v4370 = vmul.f32 %v4368, %v4354
    %v4371 = vadd.f32 %v4359, 1e-08
    %v4372 = vadd.f32 %v4362, 1e-08
    %v4373 = vrsqrt.pop %v4371
    %v4374 = vmul.f32 %v4371, %v4373
    %vm4375 = vcmp.eq.f32.partialorder %v4371, inf
    %v4376 = vsel %vm4375, %v4371, %v4374
    %vm4377 = vcmp.eq.f32.partialorder %v4371, 0.0
    %v4378 = vand.u32 %v4371, 2147483648
    %v4379 = vsel %vm4377, %v4378, %v4376
    %v4380 = vrsqrt.pop %v4372
    %v4381 = vmul.f32 %v4372, %v4380
    %vm4382 = vcmp.eq.f32.partialorder %v4372, inf
    %v4383 = vsel %vm4382, %v4372, %v4381
    %vm4384 = vcmp.eq.f32.partialorder %v4372, 0.0
    %v4385 = vand.u32 %v4372, 2147483648
    %v4386 = vsel %vm4384, %v4385, %v4383
    %v4387 = vrcp.pop %v4379
    %v4388 = vmul.f32 %v4369, %v4387
    %v4389 = vrcp.pop %v4386
    %v4390 = vmul.f32 %v4370, %v4389
    %4391 = vset.pattern.permute.xlu0 1
    %4392 = vperm.xlu0 %4391, %v4327
    %v4393 = vpop.permute.xlu0 %4392
    %4395 = vset.pattern.permute.xlu0 1
    %4396 = vperm.xlu0 %4395, %v4328
    %v4397 = vpop.permute.xlu0 %4396
    %v4399 = vmul.f32 %v4393, %v3621
    %v4400 = vmul.f32 %v4397, %v3626
    %v4401 = vsel %vm3690, %v4399, 0.0
    %v4402 = vrot.slane %v4401, 4
    %v4403 = vadd.f32 %v4401, %v4402
    %v4404 = vrot.slane %v4403, 2
    %v4405 = vadd.f32 %v4403, %v4404
    %v4406 = vrot.slane %v4405, 1
    %v4407 = vadd.f32 %v4405, %v4406
    %v4408 = vsel %vm3690, %v4400, 0.0
    %v4409 = vrot.slane %v4408, 4
    %v4410 = vadd.f32 %v4408, %v4409
    %v4411 = vrot.slane %v4410, 2
    %v4412 = vadd.f32 %v4410, %v4411
    %v4413 = vrot.slane %v4412, 1
    %v4414 = vadd.f32 %v4412, %v4413
    %v4415 = vmul.f32 %v4407, %v4407
    %v4416 = vmul.f32 %v4414, %v4414
    %4419 = vrot.lane.b32.xlu0 %v4415, 112
    %v4420 = vpop.permute.xlu0 %4419
    %4421 = vrot.lane.b32.xlu0 %v4416, 112
    %v4422 = vpop.permute.xlu0 %4421
    %v4425 = vsel %vm119, %v4420, 0.0
    %4426 = vadd.xlane.f32.xlu0 %v4425
    %v4427 = vpop.xlane.xlu0 %4426
    %v4428 = vsel %vm119, %v4422, 0.0
    %4429 = vadd.xlane.f32.xlu0 %v4428
    %v4430 = vpop.xlane.xlu0 %4429
    %v4431 = vadd.f32 %v4427, 1.0
    %v4432 = vadd.f32 %v4430, 1.0
    %v4433 = vrcp.pop %v4431
    %v4434 = vmul.f32 %v4427, %v4433
    %v4435 = vrcp.pop %v4432
    %v4436 = vmul.f32 %v4430, %v4435
    %v4437 = vmul.f32 %v4434, %v4407
    %v4438 = vmul.f32 %v4436, %v4414
    %v4439 = vadd.f32 %v4427, 1e-08
    %v4440 = vadd.f32 %v4430, 1e-08
    %v4441 = vrsqrt.pop %v4439
    %v4442 = vmul.f32 %v4439, %v4441
    %vm4443 = vcmp.eq.f32.partialorder %v4439, inf
    %v4444 = vsel %vm4443, %v4439, %v4442
    %vm4445 = vcmp.eq.f32.partialorder %v4439, 0.0
    %v4446 = vand.u32 %v4439, 2147483648
    %v4447 = vsel %vm4445, %v4446, %v4444
    %v4448 = vrsqrt.pop %v4440
    %v4449 = vmul.f32 %v4440, %v4448
    %vm4450 = vcmp.eq.f32.partialorder %v4440, inf
    %v4451 = vsel %vm4450, %v4440, %v4449
    %vm4452 = vcmp.eq.f32.partialorder %v4440, 0.0
    %v4453 = vand.u32 %v4440, 2147483648
    %v4454 = vsel %vm4452, %v4453, %v4451
    %v4455 = vrcp.pop %v4447
    %v4456 = vmul.f32 %v4437, %v4455
    %v4457 = vrcp.pop %v4454
    %v4458 = vmul.f32 %v4438, %v4457
    %4459 = vset.pattern.permute.xlu0 2
    %4460 = vperm.xlu0 %4459, %v4327
    %v4461 = vpop.permute.xlu0 %4460
    %4463 = vset.pattern.permute.xlu0 2
    %4464 = vperm.xlu0 %4463, %v4328
    %v4465 = vpop.permute.xlu0 %4464
    %v4467 = vmul.f32 %v4461, %v3621
    %v4468 = vmul.f32 %v4465, %v3626
    %v4469 = vsel %vm3749, %v4467, 0.0
    %v4470 = vrot.slane %v4469, 4
    %v4471 = vadd.f32 %v4469, %v4470
    %v4472 = vrot.slane %v4471, 2
    %v4473 = vadd.f32 %v4471, %v4472
    %v4474 = vrot.slane %v4473, 1
    %v4475 = vadd.f32 %v4473, %v4474
    %v4476 = vsel %vm3749, %v4468, 0.0
    %v4477 = vrot.slane %v4476, 4
    %v4478 = vadd.f32 %v4476, %v4477
    %v4479 = vrot.slane %v4478, 2
    %v4480 = vadd.f32 %v4478, %v4479
    %v4481 = vrot.slane %v4480, 1
    %v4482 = vadd.f32 %v4480, %v4481
    %v4483 = vmul.f32 %v4475, %v4475
    %v4484 = vmul.f32 %v4482, %v4482
    %4487 = vrot.lane.b32.xlu0 %v4483, 96
    %v4488 = vpop.permute.xlu0 %4487
    %4489 = vrot.lane.b32.xlu0 %v4484, 96
    %v4490 = vpop.permute.xlu0 %4489
    %v4493 = vsel %vm119, %v4488, 0.0
    %4494 = vadd.xlane.f32.xlu0 %v4493
    %v4495 = vpop.xlane.xlu0 %4494
    %v4496 = vsel %vm119, %v4490, 0.0
    %4497 = vadd.xlane.f32.xlu0 %v4496
    %v4498 = vpop.xlane.xlu0 %4497
    %v4499 = vadd.f32 %v4495, 1.0
    %v4500 = vadd.f32 %v4498, 1.0
    %v4501 = vrcp.pop %v4499
    %v4502 = vmul.f32 %v4495, %v4501
    %v4503 = vrcp.pop %v4500
    %v4504 = vmul.f32 %v4498, %v4503
    %v4505 = vmul.f32 %v4502, %v4475
    %v4506 = vmul.f32 %v4504, %v4482
    %v4507 = vadd.f32 %v4495, 1e-08
    %v4508 = vadd.f32 %v4498, 1e-08
    %v4509 = vrsqrt.pop %v4507
    %v4510 = vmul.f32 %v4507, %v4509
    %vm4511 = vcmp.eq.f32.partialorder %v4507, inf
    %v4512 = vsel %vm4511, %v4507, %v4510
    %vm4513 = vcmp.eq.f32.partialorder %v4507, 0.0
    %v4514 = vand.u32 %v4507, 2147483648
    %v4515 = vsel %vm4513, %v4514, %v4512
    %v4516 = vrsqrt.pop %v4508
    %v4517 = vmul.f32 %v4508, %v4516
    %vm4518 = vcmp.eq.f32.partialorder %v4508, inf
    %v4519 = vsel %vm4518, %v4508, %v4517
    %vm4520 = vcmp.eq.f32.partialorder %v4508, 0.0
    %v4521 = vand.u32 %v4508, 2147483648
    %v4522 = vsel %vm4520, %v4521, %v4519
    %v4523 = vrcp.pop %v4515
    %v4524 = vmul.f32 %v4505, %v4523
    %v4525 = vrcp.pop %v4522
    %v4526 = vmul.f32 %v4506, %v4525
    %4527 = vset.pattern.permute.xlu0 3
    %4528 = vperm.xlu0 %4527, %v4327
    %v4529 = vpop.permute.xlu0 %4528
    %4531 = vset.pattern.permute.xlu0 3
    %4532 = vperm.xlu0 %4531, %v4328
    %v4533 = vpop.permute.xlu0 %4532
    %v4535 = vmul.f32 %v4529, %v3621
    %v4536 = vmul.f32 %v4533, %v3626
    %v4537 = vsel %vm3808, %v4535, 0.0
    %v4538 = vrot.slane %v4537, 4
    %v4539 = vadd.f32 %v4537, %v4538
    %v4540 = vrot.slane %v4539, 2
    %v4541 = vadd.f32 %v4539, %v4540
    %v4542 = vrot.slane %v4541, 1
    %v4543 = vadd.f32 %v4541, %v4542
    %v4544 = vsel %vm3808, %v4536, 0.0
    %v4545 = vrot.slane %v4544, 4
    %v4546 = vadd.f32 %v4544, %v4545
    %v4547 = vrot.slane %v4546, 2
    %v4548 = vadd.f32 %v4546, %v4547
    %v4549 = vrot.slane %v4548, 1
    %v4550 = vadd.f32 %v4548, %v4549
    %v4551 = vmul.f32 %v4543, %v4543
    %v4552 = vmul.f32 %v4550, %v4550
    %4555 = vrot.lane.b32.xlu0 %v4551, 80
    %v4556 = vpop.permute.xlu0 %4555
    %4557 = vrot.lane.b32.xlu0 %v4552, 80
    %v4558 = vpop.permute.xlu0 %4557
    %v4561 = vsel %vm119, %v4556, 0.0
    %4562 = vadd.xlane.f32.xlu0 %v4561
    %v4563 = vpop.xlane.xlu0 %4562
    %v4564 = vsel %vm119, %v4558, 0.0
    %4565 = vadd.xlane.f32.xlu0 %v4564
    %v4566 = vpop.xlane.xlu0 %4565
    %v4567 = vadd.f32 %v4563, 1.0
    %v4568 = vadd.f32 %v4566, 1.0
    %v4569 = vrcp.pop %v4567
    %v4570 = vmul.f32 %v4563, %v4569
    %v4571 = vrcp.pop %v4568
    %v4572 = vmul.f32 %v4566, %v4571
    %v4573 = vmul.f32 %v4570, %v4543
    %v4574 = vmul.f32 %v4572, %v4550
    %v4575 = vadd.f32 %v4563, 1e-08
    %v4576 = vadd.f32 %v4566, 1e-08
    %v4577 = vrsqrt.pop %v4575
    %v4578 = vmul.f32 %v4575, %v4577
    %vm4579 = vcmp.eq.f32.partialorder %v4575, inf
    %v4580 = vsel %vm4579, %v4575, %v4578
    %vm4581 = vcmp.eq.f32.partialorder %v4575, 0.0
    %v4582 = vand.u32 %v4575, 2147483648
    %v4583 = vsel %vm4581, %v4582, %v4580
    %v4584 = vrsqrt.pop %v4576
    %v4585 = vmul.f32 %v4576, %v4584
    %vm4586 = vcmp.eq.f32.partialorder %v4576, inf
    %v4587 = vsel %vm4586, %v4576, %v4585
    %vm4588 = vcmp.eq.f32.partialorder %v4576, 0.0
    %v4589 = vand.u32 %v4576, 2147483648
    %v4590 = vsel %vm4588, %v4589, %v4587
    %v4591 = vrcp.pop %v4583
    %v4592 = vmul.f32 %v4573, %v4591
    %v4593 = vrcp.pop %v4590
    %v4594 = vmul.f32 %v4574, %v4593
    %vm4595 = vcmp.eq.s32.totalorder %v3632, 0
    %v4596 = vsel %vm4595, %v4388, 0.0
    %v4597 = vsel %vm4595, %v4390, 0.0
    %v4598 = vadd.f32 %v4596, 0.0
    %v4599 = vadd.f32 %v4597, 0.0
    %vm4600 = vcmp.eq.s32.totalorder %v3632, 1
    %v4601 = vsel %vm4600, %v4456, 0.0
    %v4602 = vsel %vm4600, %v4458, 0.0
    %4605 = vrot.lane.b32.xlu0 %v4601, 112
    %v4606 = vpop.permute.xlu0 %4605
    %4607 = vrot.lane.b32.xlu0 %v4602, 112
    %v4608 = vpop.permute.xlu0 %4607
    %v4611 = vadd.f32 %v4598, %v4606
    %v4612 = vadd.f32 %v4599, %v4608
    %vm4613 = vcmp.eq.s32.totalorder %v3632, 2
    %v4614 = vsel %vm4613, %v4524, 0.0
    %v4615 = vsel %vm4613, %v4526, 0.0
    %4618 = vrot.lane.b32.xlu0 %v4614, 96
    %v4619 = vpop.permute.xlu0 %4618
    %4620 = vrot.lane.b32.xlu0 %v4615, 96
    %v4621 = vpop.permute.xlu0 %4620
    %v4624 = vadd.f32 %v4611, %v4619
    %v4625 = vadd.f32 %v4612, %v4621
    %vm4626 = vcmp.eq.s32.totalorder %v3632, 3
    %v4627 = vsel %vm4626, %v4592, 0.0
    %v4628 = vsel %vm4626, %v4594, 0.0
    %4631 = vrot.lane.b32.xlu0 %v4627, 80
    %v4632 = vpop.permute.xlu0 %4631
    %4633 = vrot.lane.b32.xlu0 %v4628, 80
    %v4634 = vpop.permute.xlu0 %4633
    %v4637 = vadd.f32 %v4624, %v4632
    %v4638 = vadd.f32 %v4625, %v4634
    %v4640 = vsel %vm119, %v4637, 0
    %4642 = vmatprep.subr.mxu0 0.0
    %4643 = vmatpush1.xpose.msra.mxu0 0.0
    %4644 = vmatprep.subr.mxu0 0.0
    %4645 = vmatpush1.xpose.msra.mxu0 0.0
    %4646 = vmatprep.subr.mxu0 0.0
    %4647 = vmatpush1.xpose.msra.mxu0 0.0
    %4648 = vmatprep.subr.mxu0 0.0
    %4649 = vmatpush1.xpose.msra.mxu0 0.0
    %4650 = vmatprep.subr.mxu0 0.0
    %4651 = vmatpush1.xpose.msra.mxu0 0.0
    %4652 = vmatprep.subr.mxu0 0.0
    %4653 = vmatpush1.xpose.msra.mxu0 0.0
    %4654 = vmatprep.subr.mxu0 0.0
    %4655 = vmatpush1.xpose.msra.mxu0 0.0
    %4656 = vmatprep.subr.mxu0 0.0
    %4657 = vmatpush1.xpose.msra.mxu0 0.0
    %4658 = vmatprep.subr.mxu0 0.0
    %4659 = vmatpush1.xpose.msra.mxu0 0.0
    %4660 = vmatprep.subr.mxu0 0.0
    %4661 = vmatpush1.xpose.msra.mxu0 0.0
    %4662 = vmatprep.subr.mxu0 0.0
    %4663 = vmatpush1.xpose.msra.mxu0 0.0
    %4664 = vmatprep.subr.mxu0 0.0
    %4665 = vmatpush1.xpose.msra.mxu0 0.0
    %4666 = vmatprep.subr.mxu0 0.0
    %4667 = vmatpush1.xpose.msra.mxu0 0.0
    %4668 = vmatprep.subr.mxu0 0.0
    %4669 = vmatpush1.xpose.msra.mxu0 0.0
    %4670 = vmatprep.subr.mxu0 0.0
    %4671 = vmatpush1.xpose.msra.mxu0 0.0
    %4672 = vmatprep.subr.mxu0 0.0
    %4673 = vmatpush1.xpose.msra.mxu0 %v4640
    %4674 = vmatprep.subr.mxu0 0.0
    %4675 = vmatpush2.xpose.msra.mxu0 0.0
    %4676 = vmatprep.subr.mxu0 0.0
    %4677 = vmatpush2.xpose.msra.mxu0 0.0
    %4678 = vmatprep.subr.mxu0 0.0
    %4679 = vmatpush2.xpose.msra.mxu0 0.0
    %4680 = vmatprep.subr.mxu0 0.0
    %4681 = vmatpush2.xpose.msra.mxu0 0.0
    %4682 = vmatprep.subr.mxu0 0.0
    %4683 = vmatpush2.xpose.msra.mxu0 0.0
    %4684 = vmatprep.subr.mxu0 0.0
    %4685 = vmatpush2.xpose.msra.mxu0 0.0
    %4686 = vmatprep.subr.mxu0 0.0
    %4687 = vmatpush2.xpose.msra.mxu0 0.0
    %4688 = vmatprep.subr.mxu0 0.0
    %4689 = vmatpush2.xpose.msra.mxu0 0.0
    %4690 = vmatprep.subr.mxu0 0.0
    %4691 = vmatpush2.xpose.msra.mxu0 0.0
    %4692 = vmatprep.subr.mxu0 0.0
    %4693 = vmatpush2.xpose.msra.mxu0 0.0
    %4694 = vmatprep.subr.mxu0 0.0
    %4695 = vmatpush2.xpose.msra.mxu0 0.0
    %4696 = vmatprep.subr.mxu0 0.0
    %4697 = vmatpush2.xpose.msra.mxu0 0.0
    %4698 = vmatprep.subr.mxu0 0.0
    %4699 = vmatpush2.xpose.msra.mxu0 0.0
    %4700 = vmatprep.subr.mxu0 0.0
    %4701 = vmatpush2.xpose.msra.mxu0 0.0
    %4702 = vmatprep.subr.mxu0 0.0
    %4703 = vmatpush2.xpose.msra.mxu0 0.0
    %4704 = vmatprep.subr.mxu0 0.0
    %4705 = vmatpush2.xpose.msra.mxu0 0.0
    %4706 = vmatprep.mubr.f32.mxu0 0.0
    %4707 = vmatmul.mubr.f32.gmra.mxu0 %v4640
    %v4708 = vpop.f32.mrf.mxu0
    %v4709 = vadd.f32 0.0, %v4708
    %v4710 = vpop.f32.mrf.mxu0
    %4711 = vdwg.mxu0
    %v4713 = vsel %vm119, %v4638, 0
    %4715 = vmatprep.subr.mxu0 0.0
    %4716 = vmatpush1.xpose.msra.mxu0 0.0
    %4717 = vmatprep.subr.mxu0 0.0
    %4718 = vmatpush1.xpose.msra.mxu0 0.0
    %4719 = vmatprep.subr.mxu0 0.0
    %4720 = vmatpush1.xpose.msra.mxu0 0.0
    %4721 = vmatprep.subr.mxu0 0.0
    %4722 = vmatpush1.xpose.msra.mxu0 0.0
    %4723 = vmatprep.subr.mxu0 0.0
    %4724 = vmatpush1.xpose.msra.mxu0 0.0
    %4725 = vmatprep.subr.mxu0 0.0
    %4726 = vmatpush1.xpose.msra.mxu0 0.0
    %4727 = vmatprep.subr.mxu0 0.0
    %4728 = vmatpush1.xpose.msra.mxu0 0.0
    %4729 = vmatprep.subr.mxu0 0.0
    %4730 = vmatpush1.xpose.msra.mxu0 0.0
    %4731 = vmatprep.subr.mxu0 0.0
    %4732 = vmatpush1.xpose.msra.mxu0 0.0
    %4733 = vmatprep.subr.mxu0 0.0
    %4734 = vmatpush1.xpose.msra.mxu0 0.0
    %4735 = vmatprep.subr.mxu0 0.0
    %4736 = vmatpush1.xpose.msra.mxu0 0.0
    %4737 = vmatprep.subr.mxu0 0.0
    %4738 = vmatpush1.xpose.msra.mxu0 0.0
    %4739 = vmatprep.subr.mxu0 0.0
    %4740 = vmatpush1.xpose.msra.mxu0 0.0
    %4741 = vmatprep.subr.mxu0 0.0
    %4742 = vmatpush1.xpose.msra.mxu0 0.0
    %4743 = vmatprep.subr.mxu0 0.0
    %4744 = vmatpush1.xpose.msra.mxu0 0.0
    %4745 = vmatprep.subr.mxu0 0.0
    %4746 = vmatpush1.xpose.msra.mxu0 %v4713
    %4747 = vmatprep.subr.mxu0 0.0
    %4748 = vmatpush2.xpose.msra.mxu0 0.0
    %4749 = vmatprep.subr.mxu0 0.0
    %4750 = vmatpush2.xpose.msra.mxu0 0.0
    %4751 = vmatprep.subr.mxu0 0.0
    %4752 = vmatpush2.xpose.msra.mxu0 0.0
    %4753 = vmatprep.subr.mxu0 0.0
    %4754 = vmatpush2.xpose.msra.mxu0 0.0
    %4755 = vmatprep.subr.mxu0 0.0
    %4756 = vmatpush2.xpose.msra.mxu0 0.0
    %4757 = vmatprep.subr.mxu0 0.0
    %4758 = vmatpush2.xpose.msra.mxu0 0.0
    %4759 = vmatprep.subr.mxu0 0.0
    %4760 = vmatpush2.xpose.msra.mxu0 0.0
    %4761 = vmatprep.subr.mxu0 0.0
    %4762 = vmatpush2.xpose.msra.mxu0 0.0
    %4763 = vmatprep.subr.mxu0 0.0
    %4764 = vmatpush2.xpose.msra.mxu0 0.0
    %4765 = vmatprep.subr.mxu0 0.0
    %4766 = vmatpush2.xpose.msra.mxu0 0.0
    %4767 = vmatprep.subr.mxu0 0.0
    %4768 = vmatpush2.xpose.msra.mxu0 0.0
    %4769 = vmatprep.subr.mxu0 0.0
    %4770 = vmatpush2.xpose.msra.mxu0 0.0
    %4771 = vmatprep.subr.mxu0 0.0
    %4772 = vmatpush2.xpose.msra.mxu0 0.0
    %4773 = vmatprep.subr.mxu0 0.0
    %4774 = vmatpush2.xpose.msra.mxu0 0.0
    %4775 = vmatprep.subr.mxu0 0.0
    %4776 = vmatpush2.xpose.msra.mxu0 0.0
    %4777 = vmatprep.subr.mxu0 0.0
    %4778 = vmatpush2.xpose.msra.mxu0 0.0
    %4779 = vmatprep.mubr.f32.mxu0 0.0
    %4780 = vmatmul.mubr.f32.gmra.mxu0 %v4713
    %v4781 = vpop.f32.mrf.mxu0
    %v4782 = vadd.f32 0.0, %v4781
    %v4783 = vpop.f32.mrf.mxu0
    %4784 = vdwg.mxu0
    %v4785 = vmul.f32 %v4709, 0.25
    %v4786 = vmul.f32 %v4782, 0.25
    %vm4787 = vcmask 27648
    %v4788 = vsel %vm4787, %v4785, -inf
    %4789 = vmax.xlane.f32.xlu0 %v4788
    %v4790 = vpop.xlane.xlu0 %4789
    %v4791 = vsel %vm4787, %v4786, -inf
    %4792 = vmax.xlane.f32.xlu0 %v4791
    %v4793 = vpop.xlane.xlu0 %4792
    %v4794 = vsub.f32 %v4785, %v4790
    %v4795 = vsub.f32 %v4786, %v4793
    %v4796 = vmul.f32 %v4794, 1.442695
    %v4797 = vpow.pop %v4796
    %v4798 = vmul.f32 %v4795, 1.442695
    %v4799 = vpow.pop %v4798
    %v4800 = vsel %vm4787, %v4797, 0.0
    %4801 = vadd.xlane.f32.xlu0 %v4800
    %v4802 = vpop.xlane.xlu0 %4801
    %v4803 = vsel %vm4787, %v4799, 0.0
    %4804 = vadd.xlane.f32.xlu0 %v4803
    %v4805 = vpop.xlane.xlu0 %4804
    %v4806 = vrcp.pop %v4802
    %v4807 = vrcp.pop %v4805
    %v4808 = vmul.f32 %v4797, %v4806
    %v4809 = vmul.f32 %v4799, %v4807
    %v4811 = vsel %vm3633, %v4808, 0
    %v4813 = vsel %vm212, %v4637, 0
    %4815 = vmatprep.subr.mxu0 0.0
    %4816 = vmatpush1.msra.mxu0 0.0
    %4817 = vmatprep.subr.mxu0 0.0
    %4818 = vmatpush1.msra.mxu0 0.0
    %4819 = vmatprep.subr.mxu0 0.0
    %4820 = vmatpush1.msra.mxu0 0.0
    %4821 = vmatprep.subr.mxu0 0.0
    %4822 = vmatpush1.msra.mxu0 0.0
    %4823 = vmatprep.subr.mxu0 0.0
    %4824 = vmatpush1.msra.mxu0 0.0
    %4825 = vmatprep.subr.mxu0 0.0
    %4826 = vmatpush1.msra.mxu0 0.0
    %4827 = vmatprep.subr.mxu0 0.0
    %4828 = vmatpush1.msra.mxu0 0.0
    %4829 = vmatprep.subr.mxu0 0.0
    %4830 = vmatpush1.msra.mxu0 0.0
    %4831 = vmatprep.subr.mxu0 0.0
    %4832 = vmatpush1.msra.mxu0 0.0
    %4833 = vmatprep.subr.mxu0 0.0
    %4834 = vmatpush1.msra.mxu0 0.0
    %4835 = vmatprep.subr.mxu0 0.0
    %4836 = vmatpush1.msra.mxu0 0.0
    %4837 = vmatprep.subr.mxu0 0.0
    %4838 = vmatpush1.msra.mxu0 0.0
    %4839 = vmatprep.subr.mxu0 0.0
    %4840 = vmatpush1.msra.mxu0 0.0
    %4841 = vmatprep.subr.mxu0 0.0
    %4842 = vmatpush1.msra.mxu0 0.0
    %4843 = vmatprep.subr.mxu0 0.0
    %4844 = vmatpush1.msra.mxu0 0.0
    %4845 = vmatprep.subr.mxu0 0.0
    %4846 = vmatpush1.msra.mxu0 %v4813
    %4847 = vmatprep.subr.mxu0 0.0
    %4848 = vmatpush2.msra.mxu0 0.0
    %4849 = vmatprep.subr.mxu0 0.0
    %4850 = vmatpush2.msra.mxu0 0.0
    %4851 = vmatprep.subr.mxu0 0.0
    %4852 = vmatpush2.msra.mxu0 0.0
    %4853 = vmatprep.subr.mxu0 0.0
    %4854 = vmatpush2.msra.mxu0 0.0
    %4855 = vmatprep.subr.mxu0 0.0
    %4856 = vmatpush2.msra.mxu0 0.0
    %4857 = vmatprep.subr.mxu0 0.0
    %4858 = vmatpush2.msra.mxu0 0.0
    %4859 = vmatprep.subr.mxu0 0.0
    %4860 = vmatpush2.msra.mxu0 0.0
    %4861 = vmatprep.subr.mxu0 0.0
    %4862 = vmatpush2.msra.mxu0 0.0
    %4863 = vmatprep.subr.mxu0 0.0
    %4864 = vmatpush2.msra.mxu0 0.0
    %4865 = vmatprep.subr.mxu0 0.0
    %4866 = vmatpush2.msra.mxu0 0.0
    %4867 = vmatprep.subr.mxu0 0.0
    %4868 = vmatpush2.msra.mxu0 0.0
    %4869 = vmatprep.subr.mxu0 0.0
    %4870 = vmatpush2.msra.mxu0 0.0
    %4871 = vmatprep.subr.mxu0 0.0
    %4872 = vmatpush2.msra.mxu0 0.0
    %4873 = vmatprep.subr.mxu0 0.0
    %4874 = vmatpush2.msra.mxu0 0.0
    %4875 = vmatprep.subr.mxu0 0.0
    %4876 = vmatpush2.msra.mxu0 0.0
    %4877 = vmatprep.subr.mxu0 0.0
    %4878 = vmatpush2.msra.mxu0 0.0
    %4879 = vmatprep.mubr.f32.mxu0 0.0
    %4880 = vmatmul.mubr.f32.gmra.mxu0 %v4811
    %v4881 = vpop.f32.mrf.mxu0
    %v4882 = vadd.f32 0.0, %v4881
    %v4883 = vpop.f32.mrf.mxu0
    %4884 = vdwg.mxu0
    %v4886 = vsel %vm3633, %v4809, 0
    %v4888 = vsel %vm212, %v4638, 0
    %4890 = vmatprep.subr.mxu0 0.0
    %4891 = vmatpush1.msra.mxu0 0.0
    %4892 = vmatprep.subr.mxu0 0.0
    %4893 = vmatpush1.msra.mxu0 0.0
    %4894 = vmatprep.subr.mxu0 0.0
    %4895 = vmatpush1.msra.mxu0 0.0
    %4896 = vmatprep.subr.mxu0 0.0
    %4897 = vmatpush1.msra.mxu0 0.0
    %4898 = vmatprep.subr.mxu0 0.0
    %4899 = vmatpush1.msra.mxu0 0.0
    %4900 = vmatprep.subr.mxu0 0.0
    %4901 = vmatpush1.msra.mxu0 0.0
    %4902 = vmatprep.subr.mxu0 0.0
    %4903 = vmatpush1.msra.mxu0 0.0
    %4904 = vmatprep.subr.mxu0 0.0
    %4905 = vmatpush1.msra.mxu0 0.0
    %4906 = vmatprep.subr.mxu0 0.0
    %4907 = vmatpush1.msra.mxu0 0.0
    %4908 = vmatprep.subr.mxu0 0.0
    %4909 = vmatpush1.msra.mxu0 0.0
    %4910 = vmatprep.subr.mxu0 0.0
    %4911 = vmatpush1.msra.mxu0 0.0
    %4912 = vmatprep.subr.mxu0 0.0
    %4913 = vmatpush1.msra.mxu0 0.0
    %4914 = vmatprep.subr.mxu0 0.0
    %4915 = vmatpush1.msra.mxu0 0.0
    %4916 = vmatprep.subr.mxu0 0.0
    %4917 = vmatpush1.msra.mxu0 0.0
    %4918 = vmatprep.subr.mxu0 0.0
    %4919 = vmatpush1.msra.mxu0 0.0
    %4920 = vmatprep.subr.mxu0 0.0
    %4921 = vmatpush1.msra.mxu0 %v4888
    %4922 = vmatprep.subr.mxu0 0.0
    %4923 = vmatpush2.msra.mxu0 0.0
    %4924 = vmatprep.subr.mxu0 0.0
    %4925 = vmatpush2.msra.mxu0 0.0
    %4926 = vmatprep.subr.mxu0 0.0
    %4927 = vmatpush2.msra.mxu0 0.0
    %4928 = vmatprep.subr.mxu0 0.0
    %4929 = vmatpush2.msra.mxu0 0.0
    %4930 = vmatprep.subr.mxu0 0.0
    %4931 = vmatpush2.msra.mxu0 0.0
    %4932 = vmatprep.subr.mxu0 0.0
    %4933 = vmatpush2.msra.mxu0 0.0
    %4934 = vmatprep.subr.mxu0 0.0
    %4935 = vmatpush2.msra.mxu0 0.0
    %4936 = vmatprep.subr.mxu0 0.0
    %4937 = vmatpush2.msra.mxu0 0.0
    %4938 = vmatprep.subr.mxu0 0.0
    %4939 = vmatpush2.msra.mxu0 0.0
    %4940 = vmatprep.subr.mxu0 0.0
    %4941 = vmatpush2.msra.mxu0 0.0
    %4942 = vmatprep.subr.mxu0 0.0
    %4943 = vmatpush2.msra.mxu0 0.0
    %4944 = vmatprep.subr.mxu0 0.0
    %4945 = vmatpush2.msra.mxu0 0.0
    %4946 = vmatprep.subr.mxu0 0.0
    %4947 = vmatpush2.msra.mxu0 0.0
    %4948 = vmatprep.subr.mxu0 0.0
    %4949 = vmatpush2.msra.mxu0 0.0
    %4950 = vmatprep.subr.mxu0 0.0
    %4951 = vmatpush2.msra.mxu0 0.0
    %4952 = vmatprep.subr.mxu0 0.0
    %4953 = vmatpush2.msra.mxu0 0.0
    %4954 = vmatprep.mubr.f32.mxu0 0.0
    %4955 = vmatmul.mubr.f32.gmra.mxu0 %v4886
    %v4956 = vpop.f32.mrf.mxu0
    %v4957 = vadd.f32 0.0, %v4956
    %v4958 = vpop.f32.mrf.mxu0
    %4959 = vdwg.mxu0
    %v4960 = vld [vmem:[%s8] sm:$0xff]
    %v4961 = vld [vmem:[%s8 + $0x8] sm:$0xff]
    %v4962 = vld [vmem:[%s9] sm:$0x1]
    %v4964 = vlaneseq
    %v4965 = vshrl.u32 %v4964, 7
    %v4966 = vsub.s32 0, %v4965
    %v4967 = vrot.slane %v4962, %v4966
    %v4970 = vsel %vm119, %v4882, 0
    %4972 = vmatprep.subr.mxu0 0.0
    %4973 = vmatpush1.msra.mxu0 0.0
    %4974 = vmatprep.subr.mxu0 0.0
    %4975 = vmatpush1.msra.mxu0 0.0
    %4976 = vmatprep.subr.mxu0 0.0
    %4977 = vmatpush1.msra.mxu0 0.0
    %4978 = vmatprep.subr.mxu0 0.0
    %4979 = vmatpush1.msra.mxu0 0.0
    %4980 = vmatprep.subr.mxu0 0.0
    %4981 = vmatpush1.msra.mxu0 0.0
    %4982 = vmatprep.subr.mxu0 0.0
    %4983 = vmatpush1.msra.mxu0 0.0
    %4984 = vmatprep.subr.mxu0 0.0
    %4985 = vmatpush1.msra.mxu0 0.0
    %4986 = vmatprep.subr.mxu0 0.0
    %4987 = vmatpush1.msra.mxu0 0.0
    %4988 = vmatprep.subr.mxu0 0.0
    %4989 = vmatpush1.msra.mxu0 0.0
    %4990 = vmatprep.subr.mxu0 0.0
    %4991 = vmatpush1.msra.mxu0 0.0
    %4992 = vmatprep.subr.mxu0 0.0
    %4993 = vmatpush1.msra.mxu0 0.0
    %4994 = vmatprep.subr.mxu0 0.0
    %4995 = vmatpush1.msra.mxu0 0.0
    %4996 = vmatprep.subr.mxu0 0.0
    %4997 = vmatpush1.msra.mxu0 0.0
    %4998 = vmatprep.subr.mxu0 0.0
    %4999 = vmatpush1.msra.mxu0 0.0
    %5000 = vmatprep.subr.mxu0 0.0
    %5001 = vmatpush1.msra.mxu0 %v4961
    %5002 = vmatprep.subr.mxu0 0.0
    %5003 = vmatpush1.msra.mxu0 %v4960
    %5004 = vmatprep.subr.mxu0 0.0
    %5005 = vmatpush2.msra.mxu0 0.0
    %5006 = vmatprep.subr.mxu0 0.0
    %5007 = vmatpush2.msra.mxu0 0.0
    %5008 = vmatprep.subr.mxu0 0.0
    %5009 = vmatpush2.msra.mxu0 0.0
    %5010 = vmatprep.subr.mxu0 0.0
    %5011 = vmatpush2.msra.mxu0 0.0
    %5012 = vmatprep.subr.mxu0 0.0
    %5013 = vmatpush2.msra.mxu0 0.0
    %5014 = vmatprep.subr.mxu0 0.0
    %5015 = vmatpush2.msra.mxu0 0.0
    %5016 = vmatprep.subr.mxu0 0.0
    %5017 = vmatpush2.msra.mxu0 0.0
    %5018 = vmatprep.subr.mxu0 0.0
    %5019 = vmatpush2.msra.mxu0 0.0
    %5020 = vmatprep.subr.mxu0 0.0
    %5021 = vmatpush2.msra.mxu0 0.0
    %5022 = vmatprep.subr.mxu0 0.0
    %5023 = vmatpush2.msra.mxu0 0.0
    %5024 = vmatprep.subr.mxu0 0.0
    %5025 = vmatpush2.msra.mxu0 0.0
    %5026 = vmatprep.subr.mxu0 0.0
    %5027 = vmatpush2.msra.mxu0 0.0
    %5028 = vmatprep.subr.mxu0 0.0
    %5029 = vmatpush2.msra.mxu0 0.0
    %5030 = vmatprep.subr.mxu0 0.0
    %5031 = vmatpush2.msra.mxu0 0.0
    %5032 = vmatprep.subr.mxu0 0.0
    %5033 = vmatpush2.msra.mxu0 0.0
    %5034 = vmatprep.subr.mxu0 0.0
    %5035 = vmatpush2.msra.mxu0 0.0
    %5036 = vmatprep.mubr.f32.mxu0 0.0
    %5037 = vmatmul.mubr.f32.gmra.mxu0 %v4970
    %v5038 = vpop.f32.mrf.mxu0
    %v5039 = vadd.f32 %v4967, %v5038
    %v5040 = vpop.f32.mrf.mxu0
    %5041 = vdwg.mxu0
    %v5043 = vsel %vm119, %v4957, 0
    %5045 = vmatprep.subr.mxu0 0.0
    %5046 = vmatpush1.msra.mxu0 0.0
    %5047 = vmatprep.subr.mxu0 0.0
    %5048 = vmatpush1.msra.mxu0 0.0
    %5049 = vmatprep.subr.mxu0 0.0
    %5050 = vmatpush1.msra.mxu0 0.0
    %5051 = vmatprep.subr.mxu0 0.0
    %5052 = vmatpush1.msra.mxu0 0.0
    %5053 = vmatprep.subr.mxu0 0.0
    %5054 = vmatpush1.msra.mxu0 0.0
    %5055 = vmatprep.subr.mxu0 0.0
    %5056 = vmatpush1.msra.mxu0 0.0
    %5057 = vmatprep.subr.mxu0 0.0
    %5058 = vmatpush1.msra.mxu0 0.0
    %5059 = vmatprep.subr.mxu0 0.0
    %5060 = vmatpush1.msra.mxu0 0.0
    %5061 = vmatprep.subr.mxu0 0.0
    %5062 = vmatpush1.msra.mxu0 0.0
    %5063 = vmatprep.subr.mxu0 0.0
    %5064 = vmatpush1.msra.mxu0 0.0
    %5065 = vmatprep.subr.mxu0 0.0
    %5066 = vmatpush1.msra.mxu0 0.0
    %5067 = vmatprep.subr.mxu0 0.0
    %5068 = vmatpush1.msra.mxu0 0.0
    %5069 = vmatprep.subr.mxu0 0.0
    %5070 = vmatpush1.msra.mxu0 0.0
    %5071 = vmatprep.subr.mxu0 0.0
    %5072 = vmatpush1.msra.mxu0 0.0
    %5073 = vmatprep.subr.mxu0 0.0
    %5074 = vmatpush1.msra.mxu0 %v4961
    %5075 = vmatprep.subr.mxu0 0.0
    %5076 = vmatpush1.msra.mxu0 %v4960
    %5077 = vmatprep.subr.mxu0 0.0
    %5078 = vmatpush2.msra.mxu0 0.0
    %5079 = vmatprep.subr.mxu0 0.0
    %5080 = vmatpush2.msra.mxu0 0.0
    %5081 = vmatprep.subr.mxu0 0.0
    %5082 = vmatpush2.msra.mxu0 0.0
    %5083 = vmatprep.subr.mxu0 0.0
    %5084 = vmatpush2.msra.mxu0 0.0
    %5085 = vmatprep.subr.mxu0 0.0
    %5086 = vmatpush2.msra.mxu0 0.0
    %5087 = vmatprep.subr.mxu0 0.0
    %5088 = vmatpush2.msra.mxu0 0.0
    %5089 = vmatprep.subr.mxu0 0.0
    %5090 = vmatpush2.msra.mxu0 0.0
    %5091 = vmatprep.subr.mxu0 0.0
    %5092 = vmatpush2.msra.mxu0 0.0
    %5093 = vmatprep.subr.mxu0 0.0
    %5094 = vmatpush2.msra.mxu0 0.0
    %5095 = vmatprep.subr.mxu0 0.0
    %5096 = vmatpush2.msra.mxu0 0.0
    %5097 = vmatprep.subr.mxu0 0.0
    %5098 = vmatpush2.msra.mxu0 0.0
    %5099 = vmatprep.subr.mxu0 0.0
    %5100 = vmatpush2.msra.mxu0 0.0
    %5101 = vmatprep.subr.mxu0 0.0
    %5102 = vmatpush2.msra.mxu0 0.0
    %5103 = vmatprep.subr.mxu0 0.0
    %5104 = vmatpush2.msra.mxu0 0.0
    %5105 = vmatprep.subr.mxu0 0.0
    %5106 = vmatpush2.msra.mxu0 0.0
    %5107 = vmatprep.subr.mxu0 0.0
    %5108 = vmatpush2.msra.mxu0 0.0
    %5109 = vmatprep.mubr.f32.mxu0 0.0
    %5110 = vmatmul.mubr.f32.gmra.mxu0 %v5043
    %v5111 = vpop.f32.mrf.mxu0
    %v5112 = vadd.f32 %v4967, %v5111
    %v5113 = vpop.f32.mrf.mxu0
    %5114 = vdwg.mxu0
    %v5115 = vmax.f32 %v5039, 0.0
    %v5116 = vmax.f32 %v5112, 0.0
    %vm5117 = vcmask 125952
    %v5118 = vsel %vm5117, %v5115, 0.0
    %v5119 = vrot.slane %v5118, 4
    %v5120 = vadd.f32 %v5118, %v5119
    %v5121 = vrot.slane %v5120, 2
    %v5122 = vadd.f32 %v5120, %v5121
    %v5123 = vrot.slane %v5122, 1
    %v5124 = vadd.f32 %v5122, %v5123
    %v5125 = vsel %vm5117, %v5116, 0.0
    %v5126 = vrot.slane %v5125, 4
    %v5127 = vadd.f32 %v5125, %v5126
    %v5128 = vrot.slane %v5127, 2
    %v5129 = vadd.f32 %v5127, %v5128
    %v5130 = vrot.slane %v5129, 1
    %v5131 = vadd.f32 %v5129, %v5130
    %v5132 = vrcp.pop 4.0
    %v5133 = vmul.f32 %v5124, %v5132
    %v5134 = vmul.f32 %v5131, %v5132
    %v5135 = vsel %vm5117, %v5115, -inf
    %v5136 = vrot.slane %v5135, 4
    %v5137 = vmax.f32 %v5135, %v5136
    %v5138 = vrot.slane %v5137, 2
    %v5139 = vmax.f32 %v5137, %v5138
    %v5140 = vrot.slane %v5139, 1
    %v5141 = vmax.f32 %v5139, %v5140
    %v5142 = vsel %vm5117, %v5116, -inf
    %v5143 = vrot.slane %v5142, 4
    %v5144 = vmax.f32 %v5142, %v5143
    %v5145 = vrot.slane %v5144, 2
    %v5146 = vmax.f32 %v5144, %v5145
    %v5147 = vrot.slane %v5146, 1
    %v5148 = vmax.f32 %v5146, %v5147
    %s5149 = scalar_lea.vmem [#allocation10], 32
    %v5150 = vld [vmem:[%s5149] sm:$0xff]
    %v5151 = vld [vmem:[%s5149 + $0x8] sm:$0xff]
    %v5152 = vld [vmem:[%s5149 + $0x10] sm:$0xff]
    %v5153 = vld [vmem:[%s5149 + $0x18] sm:$0xff]
    %v5155 = vsel %vm380, %v2492, 0
    %v5158 = vsel %vm380, %v2493, 0
    %5160 = vmatprep.subr.mxu0 0.0
    %5161 = vmatpush1.msra.mxu0 0.0
    %5162 = vmatprep.subr.mxu0 0.0
    %5163 = vmatpush1.msra.mxu0 0.0
    %5164 = vmatprep.subr.mxu0 0.0
    %5165 = vmatpush1.msra.mxu0 0.0
    %5166 = vmatprep.subr.mxu0 0.0
    %5167 = vmatpush1.msra.mxu0 0.0
    %5168 = vmatprep.subr.mxu0 0.0
    %5169 = vmatpush1.msra.mxu0 0.0
    %5170 = vmatprep.subr.mxu0 0.0
    %5171 = vmatpush1.msra.mxu0 0.0
    %5172 = vmatprep.subr.mxu0 0.0
    %5173 = vmatpush1.msra.mxu0 0.0
    %5174 = vmatprep.subr.mxu0 0.0
    %5175 = vmatpush1.msra.mxu0 0.0
    %5176 = vmatprep.subr.mxu0 0.0
    %5177 = vmatpush1.msra.mxu0 0.0
    %5178 = vmatprep.subr.mxu0 0.0
    %5179 = vmatpush1.msra.mxu0 0.0
    %5180 = vmatprep.subr.mxu0 0.0
    %5181 = vmatpush1.msra.mxu0 0.0
    %5182 = vmatprep.subr.mxu0 0.0
    %5183 = vmatpush1.msra.mxu0 0.0
    %5184 = vmatprep.subr.mxu0 0.0
    %5185 = vmatpush1.msra.mxu0 %v5153
    %5186 = vmatprep.subr.mxu0 0.0
    %5187 = vmatpush1.msra.mxu0 %v5152
    %5188 = vmatprep.subr.mxu0 0.0
    %5189 = vmatpush1.msra.mxu0 %v5151
    %5190 = vmatprep.subr.mxu0 0.0
    %5191 = vmatpush1.msra.mxu0 %v5150
    %5192 = vmatprep.subr.mxu0 0.0
    %5193 = vmatpush2.msra.mxu0 0.0
    %5194 = vmatprep.subr.mxu0 0.0
    %5195 = vmatpush2.msra.mxu0 0.0
    %5196 = vmatprep.subr.mxu0 0.0
    %5197 = vmatpush2.msra.mxu0 0.0
    %5198 = vmatprep.subr.mxu0 0.0
    %5199 = vmatpush2.msra.mxu0 0.0
    %5200 = vmatprep.subr.mxu0 0.0
    %5201 = vmatpush2.msra.mxu0 0.0
    %5202 = vmatprep.subr.mxu0 0.0
    %5203 = vmatpush2.msra.mxu0 0.0
    %5204 = vmatprep.subr.mxu0 0.0
    %5205 = vmatpush2.msra.mxu0 0.0
    %5206 = vmatprep.subr.mxu0 0.0
    %5207 = vmatpush2.msra.mxu0 0.0
    %5208 = vmatprep.subr.mxu0 0.0
    %5209 = vmatpush2.msra.mxu0 0.0
    %5210 = vmatprep.subr.mxu0 0.0
    %5211 = vmatpush2.msra.mxu0 0.0
    %5212 = vmatprep.subr.mxu0 0.0
    %5213 = vmatpush2.msra.mxu0 0.0
    %5214 = vmatprep.subr.mxu0 0.0
    %5215 = vmatpush2.msra.mxu0 0.0
    %5216 = vmatprep.subr.mxu0 0.0
    %5217 = vmatpush2.msra.mxu0 0.0
    %5218 = vmatprep.subr.mxu0 0.0
    %5219 = vmatpush2.msra.mxu0 0.0
    %5220 = vmatprep.subr.mxu0 0.0
    %5221 = vmatpush2.msra.mxu0 0.0
    %5222 = vmatprep.subr.mxu0 0.0
    %5223 = vmatpush2.msra.mxu0 0.0
    %5224 = vmatprep.mubr.f32.mxu0 0.0
    %5225 = vmatmul.mubr.f32.gmra.mxu0 %v5155
    %v5226 = vpop.f32.mrf.mxu0
    %v5227 = vadd.f32 0.0, %v5226
    %v5228 = vpop.f32.mrf.mxu0
    %5229 = vmatprep.mubr.f32.mxu0 0.0
    %5230 = vmatmul.mubr.f32.gmra.mxu0 %v5158
    %v5231 = vpop.f32.mrf.mxu0
    %v5232 = vadd.f32 0.0, %v5231
    %v5233 = vpop.f32.mrf.mxu0
    %5234 = vdwg.mxu0
    %v5235 = vmul.f32 %v3637, %v5227
    %v5236 = vmul.f32 %v3637, %v5232
    %v5237 = vsel %vm119, %v5235, 0.0
    %v5238 = vrot.slane %v5237, 4
    %v5239 = vadd.f32 %v5237, %v5238
    %v5240 = vrot.slane %v5239, 2
    %v5241 = vadd.f32 %v5239, %v5240
    %v5242 = vrot.slane %v5241, 1
    %v5243 = vadd.f32 %v5241, %v5242
    %v5244 = vsel %vm119, %v5236, 0.0
    %v5245 = vrot.slane %v5244, 4
    %v5246 = vadd.f32 %v5244, %v5245
    %v5247 = vrot.slane %v5246, 2
    %v5248 = vadd.f32 %v5246, %v5247
    %v5249 = vrot.slane %v5248, 1
    %v5250 = vadd.f32 %v5248, %v5249
    %v5251 = vmul.f32 %v5243, %v5243
    %v5252 = vmul.f32 %v5250, %v5250
    %v5253 = vsel %vm119, %v5251, 0.0
    %5254 = vadd.xlane.f32.xlu0 %v5253
    %v5255 = vpop.xlane.xlu0 %5254
    %v5256 = vsel %vm119, %v5252, 0.0
    %5257 = vadd.xlane.f32.xlu0 %v5256
    %v5258 = vpop.xlane.xlu0 %5257
    %v5259 = vadd.f32 %v5255, 1.0
    %v5260 = vadd.f32 %v5258, 1.0
    %v5261 = vrcp.pop %v5259
    %v5262 = vmul.f32 %v5255, %v5261
    %v5263 = vrcp.pop %v5260
    %v5264 = vmul.f32 %v5258, %v5263
    %v5265 = vmul.f32 %v5262, %v5243
    %v5266 = vmul.f32 %v5264, %v5250
    %v5267 = vadd.f32 %v5255, 1e-08
    %v5268 = vadd.f32 %v5258, 1e-08
    %v5269 = vrsqrt.pop %v5267
    %v5270 = vmul.f32 %v5267, %v5269
    %vm5271 = vcmp.eq.f32.partialorder %v5267, inf
    %v5272 = vsel %vm5271, %v5267, %v5270
    %vm5273 = vcmp.eq.f32.partialorder %v5267, 0.0
    %v5274 = vand.u32 %v5267, 2147483648
    %v5275 = vsel %vm5273, %v5274, %v5272
    %v5276 = vrsqrt.pop %v5268
    %v5277 = vmul.f32 %v5268, %v5276
    %vm5278 = vcmp.eq.f32.partialorder %v5268, inf
    %v5279 = vsel %vm5278, %v5268, %v5277
    %vm5280 = vcmp.eq.f32.partialorder %v5268, 0.0
    %v5281 = vand.u32 %v5268, 2147483648
    %v5282 = vsel %vm5280, %v5281, %v5279
    %v5283 = vrcp.pop %v5275
    %v5284 = vmul.f32 %v5265, %v5283
    %v5285 = vrcp.pop %v5282
    %v5286 = vmul.f32 %v5266, %v5285
    %v5287 = vsel %vm3690, %v5235, 0.0
    %v5288 = vrot.slane %v5287, 4
    %v5289 = vadd.f32 %v5287, %v5288
    %v5290 = vrot.slane %v5289, 2
    %v5291 = vadd.f32 %v5289, %v5290
    %v5292 = vrot.slane %v5291, 1
    %v5293 = vadd.f32 %v5291, %v5292
    %v5294 = vsel %vm3690, %v5236, 0.0
    %v5295 = vrot.slane %v5294, 4
    %v5296 = vadd.f32 %v5294, %v5295
    %v5297 = vrot.slane %v5296, 2
    %v5298 = vadd.f32 %v5296, %v5297
    %v5299 = vrot.slane %v5298, 1
    %v5300 = vadd.f32 %v5298, %v5299
    %v5301 = vmul.f32 %v5293, %v5293
    %v5302 = vmul.f32 %v5300, %v5300
    %5305 = vrot.lane.b32.xlu0 %v5301, 112
    %v5306 = vpop.permute.xlu0 %5305
    %5307 = vrot.lane.b32.xlu0 %v5302, 112
    %v5308 = vpop.permute.xlu0 %5307
    %v5311 = vsel %vm119, %v5306, 0.0
    %5312 = vadd.xlane.f32.xlu0 %v5311
    %v5313 = vpop.xlane.xlu0 %5312
    %v5314 = vsel %vm119, %v5308, 0.0
    %5315 = vadd.xlane.f32.xlu0 %v5314
    %v5316 = vpop.xlane.xlu0 %5315
    %v5317 = vadd.f32 %v5313, 1.0
    %v5318 = vadd.f32 %v5316, 1.0
    %v5319 = vrcp.pop %v5317
    %v5320 = vmul.f32 %v5313, %v5319
    %v5321 = vrcp.pop %v5318
    %v5322 = vmul.f32 %v5316, %v5321
    %v5323 = vmul.f32 %v5320, %v5293
    %v5324 = vmul.f32 %v5322, %v5300
    %v5325 = vadd.f32 %v5313, 1e-08
    %v5326 = vadd.f32 %v5316, 1e-08
    %v5327 = vrsqrt.pop %v5325
    %v5328 = vmul.f32 %v5325, %v5327
    %vm5329 = vcmp.eq.f32.partialorder %v5325, inf
    %v5330 = vsel %vm5329, %v5325, %v5328
    %vm5331 = vcmp.eq.f32.partialorder %v5325, 0.0
    %v5332 = vand.u32 %v5325, 2147483648
    %v5333 = vsel %vm5331, %v5332, %v5330
    %v5334 = vrsqrt.pop %v5326
    %v5335 = vmul.f32 %v5326, %v5334
    %vm5336 = vcmp.eq.f32.partialorder %v5326, inf
    %v5337 = vsel %vm5336, %v5326, %v5335
    %vm5338 = vcmp.eq.f32.partialorder %v5326, 0.0
    %v5339 = vand.u32 %v5326, 2147483648
    %v5340 = vsel %vm5338, %v5339, %v5337
    %v5341 = vrcp.pop %v5333
    %v5342 = vmul.f32 %v5323, %v5341
    %v5343 = vrcp.pop %v5340
    %v5344 = vmul.f32 %v5324, %v5343
    %v5345 = vsel %vm3749, %v5235, 0.0
    %v5346 = vrot.slane %v5345, 4
    %v5347 = vadd.f32 %v5345, %v5346
    %v5348 = vrot.slane %v5347, 2
    %v5349 = vadd.f32 %v5347, %v5348
    %v5350 = vrot.slane %v5349, 1
    %v5351 = vadd.f32 %v5349, %v5350
    %v5352 = vsel %vm3749, %v5236, 0.0
    %v5353 = vrot.slane %v5352, 4
    %v5354 = vadd.f32 %v5352, %v5353
    %v5355 = vrot.slane %v5354, 2
    %v5356 = vadd.f32 %v5354, %v5355
    %v5357 = vrot.slane %v5356, 1
    %v5358 = vadd.f32 %v5356, %v5357
    %v5359 = vmul.f32 %v5351, %v5351
    %v5360 = vmul.f32 %v5358, %v5358
    %5363 = vrot.lane.b32.xlu0 %v5359, 96
    %v5364 = vpop.permute.xlu0 %5363
    %5365 = vrot.lane.b32.xlu0 %v5360, 96
    %v5366 = vpop.permute.xlu0 %5365
    %v5369 = vsel %vm119, %v5364, 0.0
    %5370 = vadd.xlane.f32.xlu0 %v5369
    %v5371 = vpop.xlane.xlu0 %5370
    %v5372 = vsel %vm119, %v5366, 0.0
    %5373 = vadd.xlane.f32.xlu0 %v5372
    %v5374 = vpop.xlane.xlu0 %5373
    %v5375 = vadd.f32 %v5371, 1.0
    %v5376 = vadd.f32 %v5374, 1.0
    %v5377 = vrcp.pop %v5375
    %v5378 = vmul.f32 %v5371, %v5377
    %v5379 = vrcp.pop %v5376
    %v5380 = vmul.f32 %v5374, %v5379
    %v5381 = vmul.f32 %v5378, %v5351
    %v5382 = vmul.f32 %v5380, %v5358
    %v5383 = vadd.f32 %v5371, 1e-08
    %v5384 = vadd.f32 %v5374, 1e-08
    %v5385 = vrsqrt.pop %v5383
    %v5386 = vmul.f32 %v5383, %v5385
    %vm5387 = vcmp.eq.f32.partialorder %v5383, inf
    %v5388 = vsel %vm5387, %v5383, %v5386
    %vm5389 = vcmp.eq.f32.partialorder %v5383, 0.0
    %v5390 = vand.u32 %v5383, 2147483648
    %v5391 = vsel %vm5389, %v5390, %v5388
    %v5392 = vrsqrt.pop %v5384
    %v5393 = vmul.f32 %v5384, %v5392
    %vm5394 = vcmp.eq.f32.partialorder %v5384, inf
    %v5395 = vsel %vm5394, %v5384, %v5393
    %vm5396 = vcmp.eq.f32.partialorder %v5384, 0.0
    %v5397 = vand.u32 %v5384, 2147483648
    %v5398 = vsel %vm5396, %v5397, %v5395
    %v5399 = vrcp.pop %v5391
    %v5400 = vmul.f32 %v5381, %v5399
    %v5401 = vrcp.pop %v5398
    %v5402 = vmul.f32 %v5382, %v5401
    %v5403 = vsel %vm3808, %v5235, 0.0
    %v5404 = vrot.slane %v5403, 4
    %v5405 = vadd.f32 %v5403, %v5404
    %v5406 = vrot.slane %v5405, 2
    %v5407 = vadd.f32 %v5405, %v5406
    %v5408 = vrot.slane %v5407, 1
    %v5409 = vadd.f32 %v5407, %v5408
    %v5410 = vsel %vm3808, %v5236, 0.0
    %v5411 = vrot.slane %v5410, 4
    %v5412 = vadd.f32 %v5410, %v5411
    %v5413 = vrot.slane %v5412, 2
    %v5414 = vadd.f32 %v5412, %v5413
    %v5415 = vrot.slane %v5414, 1
    %v5416 = vadd.f32 %v5414, %v5415
    %v5417 = vmul.f32 %v5409, %v5409
    %v5418 = vmul.f32 %v5416, %v5416
    %5421 = vrot.lane.b32.xlu0 %v5417, 80
    %v5422 = vpop.permute.xlu0 %5421
    %5423 = vrot.lane.b32.xlu0 %v5418, 80
    %v5424 = vpop.permute.xlu0 %5423
    %v5427 = vsel %vm119, %v5422, 0.0
    %5428 = vadd.xlane.f32.xlu0 %v5427
    %v5429 = vpop.xlane.xlu0 %5428
    %v5430 = vsel %vm119, %v5424, 0.0
    %5431 = vadd.xlane.f32.xlu0 %v5430
    %v5432 = vpop.xlane.xlu0 %5431
    %v5433 = vadd.f32 %v5429, 1.0
    %v5434 = vadd.f32 %v5432, 1.0
    %v5435 = vrcp.pop %v5433
    %v5436 = vmul.f32 %v5429, %v5435
    %v5437 = vrcp.pop %v5434
    %v5438 = vmul.f32 %v5432, %v5437
    %v5439 = vmul.f32 %v5436, %v5409
    %v5440 = vmul.f32 %v5438, %v5416
    %v5441 = vadd.f32 %v5429, 1e-08
    %v5442 = vadd.f32 %v5432, 1e-08
    %v5443 = vrsqrt.pop %v5441
    %v5444 = vmul.f32 %v5441, %v5443
    %vm5445 = vcmp.eq.f32.partialorder %v5441, inf
    %v5446 = vsel %vm5445, %v5441, %v5444
    %vm5447 = vcmp.eq.f32.partialorder %v5441, 0.0
    %v5448 = vand.u32 %v5441, 2147483648
    %v5449 = vsel %vm5447, %v5448, %v5446
    %v5450 = vrsqrt.pop %v5442
    %v5451 = vmul.f32 %v5442, %v5450
    %vm5452 = vcmp.eq.f32.partialorder %v5442, inf
    %v5453 = vsel %vm5452, %v5442, %v5451
    %vm5454 = vcmp.eq.f32.partialorder %v5442, 0.0
    %v5455 = vand.u32 %v5442, 2147483648
    %v5456 = vsel %vm5454, %v5455, %v5453
    %v5457 = vrcp.pop %v5449
    %v5458 = vmul.f32 %v5439, %v5457
    %v5459 = vrcp.pop %v5456
    %v5460 = vmul.f32 %v5440, %v5459
    %v5461 = vmul.f32 %v5227, %v5284
    %v5462 = vmul.f32 %v5232, %v5286
    %v5463 = vsel %vm119, %v5461, 0.0
    %5464 = vadd.xlane.f32.xlu0 %v5463
    %v5465 = vpop.xlane.xlu0 %5464
    %v5466 = vsel %vm119, %v5462, 0.0
    %5467 = vadd.xlane.f32.xlu0 %v5466
    %v5468 = vpop.xlane.xlu0 %5467
    %v5469 = vsel %vm3875, %v5465, 0.0
    %v5470 = vsel %vm3875, %v5468, 0.0
    %v5471 = vadd.f32 %v5469, 0.0
    %v5472 = vadd.f32 %v5470, 0.0
    %v5473 = vmul.f32 %v5227, %v5342
    %v5474 = vmul.f32 %v5232, %v5344
    %5477 = vrot.lane.b32.xlu0 %v5473, 112
    %v5478 = vpop.permute.xlu0 %5477
    %5479 = vrot.lane.b32.xlu0 %v5474, 112
    %v5480 = vpop.permute.xlu0 %5479
    %v5483 = vsel %vm119, %v5478, 0.0
    %5484 = vadd.xlane.f32.xlu0 %v5483
    %v5485 = vpop.xlane.xlu0 %5484
    %v5486 = vsel %vm119, %v5480, 0.0
    %5487 = vadd.xlane.f32.xlu0 %v5486
    %v5488 = vpop.xlane.xlu0 %5487
    %v5489 = vsel %vm3896, %v5485, 0.0
    %v5490 = vsel %vm3896, %v5488, 0.0
    %v5491 = vadd.f32 %v5471, %v5489
    %v5492 = vadd.f32 %v5472, %v5490
    %v5493 = vmul.f32 %v5227, %v5400
    %v5494 = vmul.f32 %v5232, %v5402
    %5497 = vrot.lane.b32.xlu0 %v5493, 96
    %v5498 = vpop.permute.xlu0 %5497
    %5499 = vrot.lane.b32.xlu0 %v5494, 96
    %v5500 = vpop.permute.xlu0 %5499
    %v5503 = vsel %vm119, %v5498, 0.0
    %5504 = vadd.xlane.f32.xlu0 %v5503
    %v5505 = vpop.xlane.xlu0 %5504
    %v5506 = vsel %vm119, %v5500, 0.0
    %5507 = vadd.xlane.f32.xlu0 %v5506
    %v5508 = vpop.xlane.xlu0 %5507
    %v5509 = vsel %vm3917, %v5505, 0.0
    %v5510 = vsel %vm3917, %v5508, 0.0
    %v5511 = vadd.f32 %v5491, %v5509
    %v5512 = vadd.f32 %v5492, %v5510
    %v5513 = vmul.f32 %v5227, %v5458
    %v5514 = vmul.f32 %v5232, %v5460
    %5517 = vrot.lane.b32.xlu0 %v5513, 80
    %v5518 = vpop.permute.xlu0 %5517
    %5519 = vrot.lane.b32.xlu0 %v5514, 80
    %v5520 = vpop.permute.xlu0 %5519
    %v5523 = vsel %vm119, %v5518, 0.0
    %5524 = vadd.xlane.f32.xlu0 %v5523
    %v5525 = vpop.xlane.xlu0 %5524
    %v5526 = vsel %vm119, %v5520, 0.0
    %5527 = vadd.xlane.f32.xlu0 %v5526
    %v5528 = vpop.xlane.xlu0 %5527
    %v5529 = vsel %vm3938, %v5525, 0.0
    %v5530 = vsel %vm3938, %v5528, 0.0
    %v5531 = vadd.f32 %v5511, %v5529
    %v5532 = vadd.f32 %v5512, %v5530
    %v5533 = vadd.f32 %v5531, 0.0
    %v5534 = vadd.f32 %v5532, 0.0
    %v5535 = vsel %vm3633, %v5533, -inf
    %5536 = vmax.xlane.f32.xlu0 %v5535
    %v5537 = vpop.xlane.xlu0 %5536
    %v5538 = vsel %vm3633, %v5534, -inf
    %5539 = vmax.xlane.f32.xlu0 %v5538
    %v5540 = vpop.xlane.xlu0 %5539
    %v5541 = vsub.f32 %v5533, %v5537
    %v5542 = vsub.f32 %v5534, %v5540
    %v5543 = vmul.f32 %v5541, 1.442695
    %v5544 = vpow.pop %v5543
    %v5545 = vmul.f32 %v5542, 1.442695
    %v5546 = vpow.pop %v5545
    %v5547 = vsel %vm3633, %v5544, 0.0
    %5548 = vadd.xlane.f32.xlu0 %v5547
    %v5549 = vpop.xlane.xlu0 %5548
    %v5550 = vsel %vm3633, %v5546, 0.0
    %5551 = vadd.xlane.f32.xlu0 %v5550
    %v5552 = vpop.xlane.xlu0 %5551
    %v5553 = vrcp.pop %v5549
    %v5554 = vrcp.pop %v5552
    %v5555 = vmul.f32 %v5544, %v5553
    %v5556 = vmul.f32 %v5546, %v5554
    %5558 = vset.pattern.permute.xlu0 0
    %5559 = vperm.xlu0 %5558, %v5555
    %v5560 = vpop.permute.xlu0 %5559
    %5563 = vset.pattern.permute.xlu0 0
    %5564 = vperm.xlu0 %5563, %v5556
    %v5565 = vpop.permute.xlu0 %5564
    %v5567 = vmul.f32 %v5560, %v5227
    %v5568 = vmul.f32 %v5565, %v5232
    %v5569 = vsel %vm119, %v5567, 0.0
    %v5570 = vrot.slane %v5569, 4
    %v5571 = vadd.f32 %v5569, %v5570
    %v5572 = vrot.slane %v5571, 2
    %v5573 = vadd.f32 %v5571, %v5572
    %v5574 = vrot.slane %v5573, 1
    %v5575 = vadd.f32 %v5573, %v5574
    %v5576 = vsel %vm119, %v5568, 0.0
    %v5577 = vrot.slane %v5576, 4
    %v5578 = vadd.f32 %v5576, %v5577
    %v5579 = vrot.slane %v5578, 2
    %v5580 = vadd.f32 %v5578, %v5579
    %v5581 = vrot.slane %v5580, 1
    %v5582 = vadd.f32 %v5580, %v5581
    %v5583 = vmul.f32 %v5575, %v5575
    %v5584 = vmul.f32 %v5582, %v5582
    %v5585 = vsel %vm119, %v5583, 0.0
    %5586 = vadd.xlane.f32.xlu0 %v5585
    %v5587 = vpop.xlane.xlu0 %5586
    %v5588 = vsel %vm119, %v5584, 0.0
    %5589 = vadd.xlane.f32.xlu0 %v5588
    %v5590 = vpop.xlane.xlu0 %5589
    %v5591 = vadd.f32 %v5587, 1.0
    %v5592 = vadd.f32 %v5590, 1.0
    %v5593 = vrcp.pop %v5591
    %v5594 = vmul.f32 %v5587, %v5593
    %v5595 = vrcp.pop %v5592
    %v5596 = vmul.f32 %v5590, %v5595
    %v5597 = vmul.f32 %v5594, %v5575
    %v5598 = vmul.f32 %v5596, %v5582
    %v5599 = vadd.f32 %v5587, 1e-08
    %v5600 = vadd.f32 %v5590, 1e-08
    %v5601 = vrsqrt.pop %v5599
    %v5602 = vmul.f32 %v5599, %v5601
    %vm5603 = vcmp.eq.f32.partialorder %v5599, inf
    %v5604 = vsel %vm5603, %v5599, %v5602
    %vm5605 = vcmp.eq.f32.partialorder %v5599, 0.0
    %v5606 = vand.u32 %v5599, 2147483648
    %v5607 = vsel %vm5605, %v5606, %v5604
    %v5608 = vrsqrt.pop %v5600
    %v5609 = vmul.f32 %v5600, %v5608
    %vm5610 = vcmp.eq.f32.partialorder %v5600, inf
    %v5611 = vsel %vm5610, %v5600, %v5609
    %vm5612 = vcmp.eq.f32.partialorder %v5600, 0.0
    %v5613 = vand.u32 %v5600, 2147483648
    %v5614 = vsel %vm5612, %v5613, %v5611
    %v5615 = vrcp.pop %v5607
    %v5616 = vmul.f32 %v5597, %v5615
    %v5617 = vrcp.pop %v5614
    %v5618 = vmul.f32 %v5598, %v5617
    %5619 = vset.pattern.permute.xlu0 1
    %5620 = vperm.xlu0 %5619, %v5555
    %v5621 = vpop.permute.xlu0 %5620
    %5623 = vset.pattern.permute.xlu0 1
    %5624 = vperm.xlu0 %5623, %v5556
    %v5625 = vpop.permute.xlu0 %5624
    %v5627 = vmul.f32 %v5621, %v5227
    %v5628 = vmul.f32 %v5625, %v5232
    %v5629 = vsel %vm3690, %v5627, 0.0
    %v5630 = vrot.slane %v5629, 4
    %v5631 = vadd.f32 %v5629, %v5630
    %v5632 = vrot.slane %v5631, 2
    %v5633 = vadd.f32 %v5631, %v5632
    %v5634 = vrot.slane %v5633, 1
    %v5635 = vadd.f32 %v5633, %v5634
    %v5636 = vsel %vm3690, %v5628, 0.0
    %v5637 = vrot.slane %v5636, 4
    %v5638 = vadd.f32 %v5636, %v5637
    %v5639 = vrot.slane %v5638, 2
    %v5640 = vadd.f32 %v5638, %v5639
    %v5641 = vrot.slane %v5640, 1
    %v5642 = vadd.f32 %v5640, %v5641
    %v5643 = vmul.f32 %v5635, %v5635
    %v5644 = vmul.f32 %v5642, %v5642
    %5647 = vrot.lane.b32.xlu0 %v5643, 112
    %v5648 = vpop.permute.xlu0 %5647
    %5649 = vrot.lane.b32.xlu0 %v5644, 112
    %v5650 = vpop.permute.xlu0 %5649
    %v5653 = vsel %vm119, %v5648, 0.0
    %5654 = vadd.xlane.f32.xlu0 %v5653
    %v5655 = vpop.xlane.xlu0 %5654
    %v5656 = vsel %vm119, %v5650, 0.0
    %5657 = vadd.xlane.f32.xlu0 %v5656
    %v5658 = vpop.xlane.xlu0 %5657
    %v5659 = vadd.f32 %v5655, 1.0
    %v5660 = vadd.f32 %v5658, 1.0
    %v5661 = vrcp.pop %v5659
    %v5662 = vmul.f32 %v5655, %v5661
    %v5663 = vrcp.pop %v5660
    %v5664 = vmul.f32 %v5658, %v5663
    %v5665 = vmul.f32 %v5662, %v5635
    %v5666 = vmul.f32 %v5664, %v5642
    %v5667 = vadd.f32 %v5655, 1e-08
    %v5668 = vadd.f32 %v5658, 1e-08
    %v5669 = vrsqrt.pop %v5667
    %v5670 = vmul.f32 %v5667, %v5669
    %vm5671 = vcmp.eq.f32.partialorder %v5667, inf
    %v5672 = vsel %vm5671, %v5667, %v5670
    %vm5673 = vcmp.eq.f32.partialorder %v5667, 0.0
    %v5674 = vand.u32 %v5667, 2147483648
    %v5675 = vsel %vm5673, %v5674, %v5672
    %v5676 = vrsqrt.pop %v5668
    %v5677 = vmul.f32 %v5668, %v5676
    %vm5678 = vcmp.eq.f32.partialorder %v5668, inf
    %v5679 = vsel %vm5678, %v5668, %v5677
    %vm5680 = vcmp.eq.f32.partialorder %v5668, 0.0
    %v5681 = vand.u32 %v5668, 2147483648
    %v5682 = vsel %vm5680, %v5681, %v5679
    %v5683 = vrcp.pop %v5675
    %v5684 = vmul.f32 %v5665, %v5683
    %v5685 = vrcp.pop %v5682
    %v5686 = vmul.f32 %v5666, %v5685
    %5687 = vset.pattern.permute.xlu0 2
    %5688 = vperm.xlu0 %5687, %v5555
    %v5689 = vpop.permute.xlu0 %5688
    %5691 = vset.pattern.permute.xlu0 2
    %5692 = vperm.xlu0 %5691, %v5556
    %v5693 = vpop.permute.xlu0 %5692
    %v5695 = vmul.f32 %v5689, %v5227
    %v5696 = vmul.f32 %v5693, %v5232
    %v5697 = vsel %vm3749, %v5695, 0.0
    %v5698 = vrot.slane %v5697, 4
    %v5699 = vadd.f32 %v5697, %v5698
    %v5700 = vrot.slane %v5699, 2
    %v5701 = vadd.f32 %v5699, %v5700
    %v5702 = vrot.slane %v5701, 1
    %v5703 = vadd.f32 %v5701, %v5702
    %v5704 = vsel %vm3749, %v5696, 0.0
    %v5705 = vrot.slane %v5704, 4
    %v5706 = vadd.f32 %v5704, %v5705
    %v5707 = vrot.slane %v5706, 2
    %v5708 = vadd.f32 %v5706, %v5707
    %v5709 = vrot.slane %v5708, 1
    %v5710 = vadd.f32 %v5708, %v5709
    %v5711 = vmul.f32 %v5703, %v5703
    %v5712 = vmul.f32 %v5710, %v5710
    %5715 = vrot.lane.b32.xlu0 %v5711, 96
    %v5716 = vpop.permute.xlu0 %5715
    %5717 = vrot.lane.b32.xlu0 %v5712, 96
    %v5718 = vpop.permute.xlu0 %5717
    %v5721 = vsel %vm119, %v5716, 0.0
    %5722 = vadd.xlane.f32.xlu0 %v5721
    %v5723 = vpop.xlane.xlu0 %5722
    %v5724 = vsel %vm119, %v5718, 0.0
    %5725 = vadd.xlane.f32.xlu0 %v5724
    %v5726 = vpop.xlane.xlu0 %5725
    %v5727 = vadd.f32 %v5723, 1.0
    %v5728 = vadd.f32 %v5726, 1.0
    %v5729 = vrcp.pop %v5727
    %v5730 = vmul.f32 %v5723, %v5729
    %v5731 = vrcp.pop %v5728
    %v5732 = vmul.f32 %v5726, %v5731
    %v5733 = vmul.f32 %v5730, %v5703
    %v5734 = vmul.f32 %v5732, %v5710
    %v5735 = vadd.f32 %v5723, 1e-08
    %v5736 = vadd.f32 %v5726, 1e-08
    %v5737 = vrsqrt.pop %v5735
    %v5738 = vmul.f32 %v5735, %v5737
    %vm5739 = vcmp.eq.f32.partialorder %v5735, inf
    %v5740 = vsel %vm5739, %v5735, %v5738
    %vm5741 = vcmp.eq.f32.partialorder %v5735, 0.0
    %v5742 = vand.u32 %v5735, 2147483648
    %v5743 = vsel %vm5741, %v5742, %v5740
    %v5744 = vrsqrt.pop %v5736
    %v5745 = vmul.f32 %v5736, %v5744
    %vm5746 = vcmp.eq.f32.partialorder %v5736, inf
    %v5747 = vsel %vm5746, %v5736, %v5745
    %vm5748 = vcmp.eq.f32.partialorder %v5736, 0.0
    %v5749 = vand.u32 %v5736, 2147483648
    %v5750 = vsel %vm5748, %v5749, %v5747
    %v5751 = vrcp.pop %v5743
    %v5752 = vmul.f32 %v5733, %v5751
    %v5753 = vrcp.pop %v5750
    %v5754 = vmul.f32 %v5734, %v5753
    %5755 = vset.pattern.permute.xlu0 3
    %5756 = vperm.xlu0 %5755, %v5555
    %v5757 = vpop.permute.xlu0 %5756
    %5759 = vset.pattern.permute.xlu0 3
    %5760 = vperm.xlu0 %5759, %v5556
    %v5761 = vpop.permute.xlu0 %5760
    %v5763 = vmul.f32 %v5757, %v5227
    %v5764 = vmul.f32 %v5761, %v5232
    %v5765 = vsel %vm3808, %v5763, 0.0
    %v5766 = vrot.slane %v5765, 4
    %v5767 = vadd.f32 %v5765, %v5766
    %v5768 = vrot.slane %v5767, 2
    %v5769 = vadd.f32 %v5767, %v5768
    %v5770 = vrot.slane %v5769, 1
    %v5771 = vadd.f32 %v5769, %v5770
    %v5772 = vsel %vm3808, %v5764, 0.0
    %v5773 = vrot.slane %v5772, 4
    %v5774 = vadd.f32 %v5772, %v5773
    %v5775 = vrot.slane %v5774, 2
    %v5776 = vadd.f32 %v5774, %v5775
    %v5777 = vrot.slane %v5776, 1
    %v5778 = vadd.f32 %v5776, %v5777
    %v5779 = vmul.f32 %v5771, %v5771
    %v5780 = vmul.f32 %v5778, %v5778
    %5783 = vrot.lane.b32.xlu0 %v5779, 80
    %v5784 = vpop.permute.xlu0 %5783
    %5785 = vrot.lane.b32.xlu0 %v5780, 80
    %v5786 = vpop.permute.xlu0 %5785
    %v5789 = vsel %vm119, %v5784, 0.0
    %5790 = vadd.xlane.f32.xlu0 %v5789
    %v5791 = vpop.xlane.xlu0 %5790
    %v5792 = vsel %vm119, %v5786, 0.0
    %5793 = vadd.xlane.f32.xlu0 %v5792
    %v5794 = vpop.xlane.xlu0 %5793
    %v5795 = vadd.f32 %v5791, 1.0
    %v5796 = vadd.f32 %v5794, 1.0
    %v5797 = vrcp.pop %v5795
    %v5798 = vmul.f32 %v5791, %v5797
    %v5799 = vrcp.pop %v5796
    %v5800 = vmul.f32 %v5794, %v5799
    %v5801 = vmul.f32 %v5798, %v5771
    %v5802 = vmul.f32 %v5800, %v5778
    %v5803 = vadd.f32 %v5791, 1e-08
    %v5804 = vadd.f32 %v5794, 1e-08
    %v5805 = vrsqrt.pop %v5803
    %v5806 = vmul.f32 %v5803, %v5805
    %vm5807 = vcmp.eq.f32.partialorder %v5803, inf
    %v5808 = vsel %vm5807, %v5803, %v5806
    %vm5809 = vcmp.eq.f32.partialorder %v5803, 0.0
    %v5810 = vand.u32 %v5803, 2147483648
    %v5811 = vsel %vm5809, %v5810, %v5808
    %v5812 = vrsqrt.pop %v5804
    %v5813 = vmul.f32 %v5804, %v5812
    %vm5814 = vcmp.eq.f32.partialorder %v5804, inf
    %v5815 = vsel %vm5814, %v5804, %v5813
    %vm5816 = vcmp.eq.f32.partialorder %v5804, 0.0
    %v5817 = vand.u32 %v5804, 2147483648
    %v5818 = vsel %vm5816, %v5817, %v5815
    %v5819 = vrcp.pop %v5811
    %v5820 = vmul.f32 %v5801, %v5819
    %v5821 = vrcp.pop %v5818
    %v5822 = vmul.f32 %v5802, %v5821
    %v5823 = vmul.f32 %v5227, %v5616
    %v5824 = vmul.f32 %v5232, %v5618
    %v5825 = vsel %vm119, %v5823, 0.0
    %5826 = vadd.xlane.f32.xlu0 %v5825
    %v5827 = vpop.xlane.xlu0 %5826
    %v5828 = vsel %vm119, %v5824, 0.0
    %5829 = vadd.xlane.f32.xlu0 %v5828
    %v5830 = vpop.xlane.xlu0 %5829
    %v5831 = vsel %vm3875, %v5827, 0.0
    %v5832 = vsel %vm3875, %v5830, 0.0
    %v5833 = vadd.f32 %v5831, 0.0
    %v5834 = vadd.f32 %v5832, 0.0
    %v5835 = vmul.f32 %v5227, %v5684
    %v5836 = vmul.f32 %v5232, %v5686
    %5839 = vrot.lane.b32.xlu0 %v5835, 112
    %v5840 = vpop.permute.xlu0 %5839
    %5841 = vrot.lane.b32.xlu0 %v5836, 112
    %v5842 = vpop.permute.xlu0 %5841
    %v5845 = vsel %vm119, %v5840, 0.0
    %5846 = vadd.xlane.f32.xlu0 %v5845
    %v5847 = vpop.xlane.xlu0 %5846
    %v5848 = vsel %vm119, %v5842, 0.0
    %5849 = vadd.xlane.f32.xlu0 %v5848
    %v5850 = vpop.xlane.xlu0 %5849
    %v5851 = vsel %vm3896, %v5847, 0.0
    %v5852 = vsel %vm3896, %v5850, 0.0
    %v5853 = vadd.f32 %v5833, %v5851
    %v5854 = vadd.f32 %v5834, %v5852
    %v5855 = vmul.f32 %v5227, %v5752
    %v5856 = vmul.f32 %v5232, %v5754
    %5859 = vrot.lane.b32.xlu0 %v5855, 96
    %v5860 = vpop.permute.xlu0 %5859
    %5861 = vrot.lane.b32.xlu0 %v5856, 96
    %v5862 = vpop.permute.xlu0 %5861
    %v5865 = vsel %vm119, %v5860, 0.0
    %5866 = vadd.xlane.f32.xlu0 %v5865
    %v5867 = vpop.xlane.xlu0 %5866
    %v5868 = vsel %vm119, %v5862, 0.0
    %5869 = vadd.xlane.f32.xlu0 %v5868
    %v5870 = vpop.xlane.xlu0 %5869
    %v5871 = vsel %vm3917, %v5867, 0.0
    %v5872 = vsel %vm3917, %v5870, 0.0
    %v5873 = vadd.f32 %v5853, %v5871
    %v5874 = vadd.f32 %v5854, %v5872
    %v5875 = vmul.f32 %v5227, %v5820
    %v5876 = vmul.f32 %v5232, %v5822
    %5879 = vrot.lane.b32.xlu0 %v5875, 80
    %v5880 = vpop.permute.xlu0 %5879
    %5881 = vrot.lane.b32.xlu0 %v5876, 80
    %v5882 = vpop.permute.xlu0 %5881
    %v5885 = vsel %vm119, %v5880, 0.0
    %5886 = vadd.xlane.f32.xlu0 %v5885
    %v5887 = vpop.xlane.xlu0 %5886
    %v5888 = vsel %vm119, %v5882, 0.0
    %5889 = vadd.xlane.f32.xlu0 %v5888
    %v5890 = vpop.xlane.xlu0 %5889
    %v5891 = vsel %vm3938, %v5887, 0.0
    %v5892 = vsel %vm3938, %v5890, 0.0
    %v5893 = vadd.f32 %v5873, %v5891
    %v5894 = vadd.f32 %v5874, %v5892
    %v5895 = vadd.f32 %v5533, %v5893
    %v5896 = vadd.f32 %v5534, %v5894
    %v5897 = vsel %vm3633, %v5895, -inf
    %5898 = vmax.xlane.f32.xlu0 %v5897
    %v5899 = vpop.xlane.xlu0 %5898
    %v5900 = vsel %vm3633, %v5896, -inf
    %5901 = vmax.xlane.f32.xlu0 %v5900
    %v5902 = vpop.xlane.xlu0 %5901
    %v5903 = vsub.f32 %v5895, %v5899
    %v5904 = vsub.f32 %v5896, %v5902
    %v5905 = vmul.f32 %v5903, 1.442695
    %v5906 = vpow.pop %v5905
    %v5907 = vmul.f32 %v5904, 1.442695
    %v5908 = vpow.pop %v5907
    %v5909 = vsel %vm3633, %v5906, 0.0
    %5910 = vadd.xlane.f32.xlu0 %v5909
    %v5911 = vpop.xlane.xlu0 %5910
    %v5912 = vsel %vm3633, %v5908, 0.0
    %5913 = vadd.xlane.f32.xlu0 %v5912
    %v5914 = vpop.xlane.xlu0 %5913
    %v5915 = vrcp.pop %v5911
    %v5916 = vrcp.pop %v5914
    %v5917 = vmul.f32 %v5906, %v5915
    %v5918 = vmul.f32 %v5908, %v5916
    %5920 = vset.pattern.permute.xlu0 0
    %5921 = vperm.xlu0 %5920, %v5917
    %v5922 = vpop.permute.xlu0 %5921
    %5925 = vset.pattern.permute.xlu0 0
    %5926 = vperm.xlu0 %5925, %v5918
    %v5927 = vpop.permute.xlu0 %5926
    %v5929 = vmul.f32 %v5922, %v5227
    %v5930 = vmul.f32 %v5927, %v5232
    %v5931 = vsel %vm119, %v5929, 0.0
    %v5932 = vrot.slane %v5931, 4
    %v5933 = vadd.f32 %v5931, %v5932
    %v5934 = vrot.slane %v5933, 2
    %v5935 = vadd.f32 %v5933, %v5934
    %v5936 = vrot.slane %v5935, 1
    %v5937 = vadd.f32 %v5935, %v5936
    %v5938 = vsel %vm119, %v5930, 0.0
    %v5939 = vrot.slane %v5938, 4
    %v5940 = vadd.f32 %v5938, %v5939
    %v5941 = vrot.slane %v5940, 2
    %v5942 = vadd.f32 %v5940, %v5941
    %v5943 = vrot.slane %v5942, 1
    %v5944 = vadd.f32 %v5942, %v5943
    %v5945 = vmul.f32 %v5937, %v5937
    %v5946 = vmul.f32 %v5944, %v5944
    %v5947 = vsel %vm119, %v5945, 0.0
    %5948 = vadd.xlane.f32.xlu0 %v5947
    %v5949 = vpop.xlane.xlu0 %5948
    %v5950 = vsel %vm119, %v5946, 0.0
    %5951 = vadd.xlane.f32.xlu0 %v5950
    %v5952 = vpop.xlane.xlu0 %5951
    %v5953 = vadd.f32 %v5949, 1.0
    %v5954 = vadd.f32 %v5952, 1.0
    %v5955 = vrcp.pop %v5953
    %v5956 = vmul.f32 %v5949, %v5955
    %v5957 = vrcp.pop %v5954
    %v5958 = vmul.f32 %v5952, %v5957
    %v5959 = vmul.f32 %v5956, %v5937
    %v5960 = vmul.f32 %v5958, %v5944
    %v5961 = vadd.f32 %v5949, 1e-08
    %v5962 = vadd.f32 %v5952, 1e-08
    %v5963 = vrsqrt.pop %v5961
    %v5964 = vmul.f32 %v5961, %v5963
    %vm5965 = vcmp.eq.f32.partialorder %v5961, inf
    %v5966 = vsel %vm5965, %v5961, %v5964
    %vm5967 = vcmp.eq.f32.partialorder %v5961, 0.0
    %v5968 = vand.u32 %v5961, 2147483648
    %v5969 = vsel %vm5967, %v5968, %v5966
    %v5970 = vrsqrt.pop %v5962
    %v5971 = vmul.f32 %v5962, %v5970
    %vm5972 = vcmp.eq.f32.partialorder %v5962, inf
    %v5973 = vsel %vm5972, %v5962, %v5971
    %vm5974 = vcmp.eq.f32.partialorder %v5962, 0.0
    %v5975 = vand.u32 %v5962, 2147483648
    %v5976 = vsel %vm5974, %v5975, %v5973
    %v5977 = vrcp.pop %v5969
    %v5978 = vmul.f32 %v5959, %v5977
    %v5979 = vrcp.pop %v5976
    %v5980 = vmul.f32 %v5960, %v5979
    %5981 = vset.pattern.permute.xlu0 1
    %5982 = vperm.xlu0 %5981, %v5917
    %v5983 = vpop.permute.xlu0 %5982
    %5985 = vset.pattern.permute.xlu0 1
    %5986 = vperm.xlu0 %5985, %v5918
    %v5987 = vpop.permute.xlu0 %5986
    %v5989 = vmul.f32 %v5983, %v5227
    %v5990 = vmul.f32 %v5987, %v5232
    %v5991 = vsel %vm3690, %v5989, 0.0
    %v5992 = vrot.slane %v5991, 4
    %v5993 = vadd.f32 %v5991, %v5992
    %v5994 = vrot.slane %v5993, 2
    %v5995 = vadd.f32 %v5993, %v5994
    %v5996 = vrot.slane %v5995, 1
    %v5997 = vadd.f32 %v5995, %v5996
    %v5998 = vsel %vm3690, %v5990, 0.0
    %v5999 = vrot.slane %v5998, 4
    %v6000 = vadd.f32 %v5998, %v5999
    %v6001 = vrot.slane %v6000, 2
    %v6002 = vadd.f32 %v6000, %v6001
    %v6003 = vrot.slane %v6002, 1
    %v6004 = vadd.f32 %v6002, %v6003
    %v6005 = vmul.f32 %v5997, %v5997
    %v6006 = vmul.f32 %v6004, %v6004
    %6009 = vrot.lane.b32.xlu0 %v6005, 112
    %v6010 = vpop.permute.xlu0 %6009
    %6011 = vrot.lane.b32.xlu0 %v6006, 112
    %v6012 = vpop.permute.xlu0 %6011
    %v6015 = vsel %vm119, %v6010, 0.0
    %6016 = vadd.xlane.f32.xlu0 %v6015
    %v6017 = vpop.xlane.xlu0 %6016
    %v6018 = vsel %vm119, %v6012, 0.0
    %6019 = vadd.xlane.f32.xlu0 %v6018
    %v6020 = vpop.xlane.xlu0 %6019
    %v6021 = vadd.f32 %v6017, 1.0
    %v6022 = vadd.f32 %v6020, 1.0
    %v6023 = vrcp.pop %v6021
    %v6024 = vmul.f32 %v6017, %v6023
    %v6025 = vrcp.pop %v6022
    %v6026 = vmul.f32 %v6020, %v6025
    %v6027 = vmul.f32 %v6024, %v5997
    %v6028 = vmul.f32 %v6026, %v6004
    %v6029 = vadd.f32 %v6017, 1e-08
    %v6030 = vadd.f32 %v6020, 1e-08
    %v6031 = vrsqrt.pop %v6029
    %v6032 = vmul.f32 %v6029, %v6031
    %vm6033 = vcmp.eq.f32.partialorder %v6029, inf
    %v6034 = vsel %vm6033, %v6029, %v6032
    %vm6035 = vcmp.eq.f32.partialorder %v6029, 0.0
    %v6036 = vand.u32 %v6029, 2147483648
    %v6037 = vsel %vm6035, %v6036, %v6034
    %v6038 = vrsqrt.pop %v6030
    %v6039 = vmul.f32 %v6030, %v6038
    %vm6040 = vcmp.eq.f32.partialorder %v6030, inf
    %v6041 = vsel %vm6040, %v6030, %v6039
    %vm6042 = vcmp.eq.f32.partialorder %v6030, 0.0
    %v6043 = vand.u32 %v6030, 2147483648
    %v6044 = vsel %vm6042, %v6043, %v6041
    %v6045 = vrcp.pop %v6037
    %v6046 = vmul.f32 %v6027, %v6045
    %v6047 = vrcp.pop %v6044
    %v6048 = vmul.f32 %v6028, %v6047
    %6049 = vset.pattern.permute.xlu0 2
    %6050 = vperm.xlu0 %6049, %v5917
    %v6051 = vpop.permute.xlu0 %6050
    %6053 = vset.pattern.permute.xlu0 2
    %6054 = vperm.xlu0 %6053, %v5918
    %v6055 = vpop.permute.xlu0 %6054
    %v6057 = vmul.f32 %v6051, %v5227
    %v6058 = vmul.f32 %v6055, %v5232
    %v6059 = vsel %vm3749, %v6057, 0.0
    %v6060 = vrot.slane %v6059, 4
    %v6061 = vadd.f32 %v6059, %v6060
    %v6062 = vrot.slane %v6061, 2
    %v6063 = vadd.f32 %v6061, %v6062
    %v6064 = vrot.slane %v6063, 1
    %v6065 = vadd.f32 %v6063, %v6064
    %v6066 = vsel %vm3749, %v6058, 0.0
    %v6067 = vrot.slane %v6066, 4
    %v6068 = vadd.f32 %v6066, %v6067
    %v6069 = vrot.slane %v6068, 2
    %v6070 = vadd.f32 %v6068, %v6069
    %v6071 = vrot.slane %v6070, 1
    %v6072 = vadd.f32 %v6070, %v6071
    %v6073 = vmul.f32 %v6065, %v6065
    %v6074 = vmul.f32 %v6072, %v6072
    %6077 = vrot.lane.b32.xlu0 %v6073, 96
    %v6078 = vpop.permute.xlu0 %6077
    %6079 = vrot.lane.b32.xlu0 %v6074, 96
    %v6080 = vpop.permute.xlu0 %6079
    %v6083 = vsel %vm119, %v6078, 0.0
    %6084 = vadd.xlane.f32.xlu0 %v6083
    %v6085 = vpop.xlane.xlu0 %6084
    %v6086 = vsel %vm119, %v6080, 0.0
    %6087 = vadd.xlane.f32.xlu0 %v6086
    %v6088 = vpop.xlane.xlu0 %6087
    %v6089 = vadd.f32 %v6085, 1.0
    %v6090 = vadd.f32 %v6088, 1.0
    %v6091 = vrcp.pop %v6089
    %v6092 = vmul.f32 %v6085, %v6091
    %v6093 = vrcp.pop %v6090
    %v6094 = vmul.f32 %v6088, %v6093
    %v6095 = vmul.f32 %v6092, %v6065
    %v6096 = vmul.f32 %v6094, %v6072
    %v6097 = vadd.f32 %v6085, 1e-08
    %v6098 = vadd.f32 %v6088, 1e-08
    %v6099 = vrsqrt.pop %v6097
    %v6100 = vmul.f32 %v6097, %v6099
    %vm6101 = vcmp.eq.f32.partialorder %v6097, inf
    %v6102 = vsel %vm6101, %v6097, %v6100
    %vm6103 = vcmp.eq.f32.partialorder %v6097, 0.0
    %v6104 = vand.u32 %v6097, 2147483648
    %v6105 = vsel %vm6103, %v6104, %v6102
    %v6106 = vrsqrt.pop %v6098
    %v6107 = vmul.f32 %v6098, %v6106
    %vm6108 = vcmp.eq.f32.partialorder %v6098, inf
    %v6109 = vsel %vm6108, %v6098, %v6107
    %vm6110 = vcmp.eq.f32.partialorder %v6098, 0.0
    %v6111 = vand.u32 %v6098, 2147483648
    %v6112 = vsel %vm6110, %v6111, %v6109
    %v6113 = vrcp.pop %v6105
    %v6114 = vmul.f32 %v6095, %v6113
    %v6115 = vrcp.pop %v6112
    %v6116 = vmul.f32 %v6096, %v6115
    %6117 = vset.pattern.permute.xlu0 3
    %6118 = vperm.xlu0 %6117, %v5917
    %v6119 = vpop.permute.xlu0 %6118
    %6121 = vset.pattern.permute.xlu0 3
    %6122 = vperm.xlu0 %6121, %v5918
    %v6123 = vpop.permute.xlu0 %6122
    %v6125 = vmul.f32 %v6119, %v5227
    %v6126 = vmul.f32 %v6123, %v5232
    %v6127 = vsel %vm3808, %v6125, 0.0
    %v6128 = vrot.slane %v6127, 4
    %v6129 = vadd.f32 %v6127, %v6128
    %v6130 = vrot.slane %v6129, 2
    %v6131 = vadd.f32 %v6129, %v6130
    %v6132 = vrot.slane %v6131, 1
    %v6133 = vadd.f32 %v6131, %v6132
    %v6134 = vsel %vm3808, %v6126, 0.0
    %v6135 = vrot.slane %v6134, 4
    %v6136 = vadd.f32 %v6134, %v6135
    %v6137 = vrot.slane %v6136, 2
    %v6138 = vadd.f32 %v6136, %v6137
    %v6139 = vrot.slane %v6138, 1
    %v6140 = vadd.f32 %v6138, %v6139
    %v6141 = vmul.f32 %v6133, %v6133
    %v6142 = vmul.f32 %v6140, %v6140
    %6145 = vrot.lane.b32.xlu0 %v6141, 80
    %v6146 = vpop.permute.xlu0 %6145
    %6147 = vrot.lane.b32.xlu0 %v6142, 80
    %v6148 = vpop.permute.xlu0 %6147
    %v6151 = vsel %vm119, %v6146, 0.0
    %6152 = vadd.xlane.f32.xlu0 %v6151
    %v6153 = vpop.xlane.xlu0 %6152
    %v6154 = vsel %vm119, %v6148, 0.0
    %6155 = vadd.xlane.f32.xlu0 %v6154
    %v6156 = vpop.xlane.xlu0 %6155
    %v6157 = vadd.f32 %v6153, 1.0
    %v6158 = vadd.f32 %v6156, 1.0
    %v6159 = vrcp.pop %v6157
    %v6160 = vmul.f32 %v6153, %v6159
    %v6161 = vrcp.pop %v6158
    %v6162 = vmul.f32 %v6156, %v6161
    %v6163 = vmul.f32 %v6160, %v6133
    %v6164 = vmul.f32 %v6162, %v6140
    %v6165 = vadd.f32 %v6153, 1e-08
    %v6166 = vadd.f32 %v6156, 1e-08
    %v6167 = vrsqrt.pop %v6165
    %v6168 = vmul.f32 %v6165, %v6167
    %vm6169 = vcmp.eq.f32.partialorder %v6165, inf
    %v6170 = vsel %vm6169, %v6165, %v6168
    %vm6171 = vcmp.eq.f32.partialorder %v6165, 0.0
    %v6172 = vand.u32 %v6165, 2147483648
    %v6173 = vsel %vm6171, %v6172, %v6170
    %v6174 = vrsqrt.pop %v6166
    %v6175 = vmul.f32 %v6166, %v6174
    %vm6176 = vcmp.eq.f32.partialorder %v6166, inf
    %v6177 = vsel %vm6176, %v6166, %v6175
    %vm6178 = vcmp.eq.f32.partialorder %v6166, 0.0
    %v6179 = vand.u32 %v6166, 2147483648
    %v6180 = vsel %vm6178, %v6179, %v6177
    %v6181 = vrcp.pop %v6173
    %v6182 = vmul.f32 %v6163, %v6181
    %v6183 = vrcp.pop %v6180
    %v6184 = vmul.f32 %v6164, %v6183
    %v6185 = vsel %vm4595, %v5978, 0.0
    %v6186 = vsel %vm4595, %v5980, 0.0
    %v6187 = vadd.f32 %v6185, 0.0
    %v6188 = vadd.f32 %v6186, 0.0
    %v6189 = vsel %vm4600, %v6046, 0.0
    %v6190 = vsel %vm4600, %v6048, 0.0
    %6193 = vrot.lane.b32.xlu0 %v6189, 112
    %v6194 = vpop.permute.xlu0 %6193
    %6195 = vrot.lane.b32.xlu0 %v6190, 112
    %v6196 = vpop.permute.xlu0 %6195
    %v6199 = vadd.f32 %v6187, %v6194
    %v6200 = vadd.f32 %v6188, %v6196
    %v6201 = vsel %vm4613, %v6114, 0.0
    %v6202 = vsel %vm4613, %v6116, 0.0
    %6205 = vrot.lane.b32.xlu0 %v6201, 96
    %v6206 = vpop.permute.xlu0 %6205
    %6207 = vrot.lane.b32.xlu0 %v6202, 96
    %v6208 = vpop.permute.xlu0 %6207
    %v6211 = vadd.f32 %v6199, %v6206
    %v6212 = vadd.f32 %v6200, %v6208
    %v6213 = vsel %vm4626, %v6182, 0.0
    %v6214 = vsel %vm4626, %v6184, 0.0
    %6217 = vrot.lane.b32.xlu0 %v6213, 80
    %v6218 = vpop.permute.xlu0 %6217
    %6219 = vrot.lane.b32.xlu0 %v6214, 80
    %v6220 = vpop.permute.xlu0 %6219
    %v6223 = vadd.f32 %v6211, %v6218
    %v6224 = vadd.f32 %v6212, %v6220
    %v6226 = vsel %vm119, %v6223, 0
    %6228 = vmatprep.subr.mxu0 0.0
    %6229 = vmatpush1.xpose.msra.mxu0 0.0
    %6230 = vmatprep.subr.mxu0 0.0
    %6231 = vmatpush1.xpose.msra.mxu0 0.0
    %6232 = vmatprep.subr.mxu0 0.0
    %6233 = vmatpush1.xpose.msra.mxu0 0.0
    %6234 = vmatprep.subr.mxu0 0.0
    %6235 = vmatpush1.xpose.msra.mxu0 0.0
    %6236 = vmatprep.subr.mxu0 0.0
    %6237 = vmatpush1.xpose.msra.mxu0 0.0
    %6238 = vmatprep.subr.mxu0 0.0
    %6239 = vmatpush1.xpose.msra.mxu0 0.0
    %6240 = vmatprep.subr.mxu0 0.0
    %6241 = vmatpush1.xpose.msra.mxu0 0.0
    %6242 = vmatprep.subr.mxu0 0.0
    %6243 = vmatpush1.xpose.msra.mxu0 0.0
    %6244 = vmatprep.subr.mxu0 0.0
    %6245 = vmatpush1.xpose.msra.mxu0 0.0
    %6246 = vmatprep.subr.mxu0 0.0
    %6247 = vmatpush1.xpose.msra.mxu0 0.0
    %6248 = vmatprep.subr.mxu0 0.0
    %6249 = vmatpush1.xpose.msra.mxu0 0.0
    %6250 = vmatprep.subr.mxu0 0.0
    %6251 = vmatpush1.xpose.msra.mxu0 0.0
    %6252 = vmatprep.subr.mxu0 0.0
    %6253 = vmatpush1.xpose.msra.mxu0 0.0
    %6254 = vmatprep.subr.mxu0 0.0
    %6255 = vmatpush1.xpose.msra.mxu0 0.0
    %6256 = vmatprep.subr.mxu0 0.0
    %6257 = vmatpush1.xpose.msra.mxu0 0.0
    %6258 = vmatprep.subr.mxu0 0.0
    %6259 = vmatpush1.xpose.msra.mxu0 %v6226
    %6260 = vmatprep.subr.mxu0 0.0
    %6261 = vmatpush2.xpose.msra.mxu0 0.0
    %6262 = vmatprep.subr.mxu0 0.0
    %6263 = vmatpush2.xpose.msra.mxu0 0.0
    %6264 = vmatprep.subr.mxu0 0.0
    %6265 = vmatpush2.xpose.msra.mxu0 0.0
    %6266 = vmatprep.subr.mxu0 0.0
    %6267 = vmatpush2.xpose.msra.mxu0 0.0
    %6268 = vmatprep.subr.mxu0 0.0
    %6269 = vmatpush2.xpose.msra.mxu0 0.0
    %6270 = vmatprep.subr.mxu0 0.0
    %6271 = vmatpush2.xpose.msra.mxu0 0.0
    %6272 = vmatprep.subr.mxu0 0.0
    %6273 = vmatpush2.xpose.msra.mxu0 0.0
    %6274 = vmatprep.subr.mxu0 0.0
    %6275 = vmatpush2.xpose.msra.mxu0 0.0
    %6276 = vmatprep.subr.mxu0 0.0
    %6277 = vmatpush2.xpose.msra.mxu0 0.0
    %6278 = vmatprep.subr.mxu0 0.0
    %6279 = vmatpush2.xpose.msra.mxu0 0.0
    %6280 = vmatprep.subr.mxu0 0.0
    %6281 = vmatpush2.xpose.msra.mxu0 0.0
    %6282 = vmatprep.subr.mxu0 0.0
    %6283 = vmatpush2.xpose.msra.mxu0 0.0
    %6284 = vmatprep.subr.mxu0 0.0
    %6285 = vmatpush2.xpose.msra.mxu0 0.0
    %6286 = vmatprep.subr.mxu0 0.0
    %6287 = vmatpush2.xpose.msra.mxu0 0.0
    %6288 = vmatprep.subr.mxu0 0.0
    %6289 = vmatpush2.xpose.msra.mxu0 0.0
    %6290 = vmatprep.subr.mxu0 0.0
    %6291 = vmatpush2.xpose.msra.mxu0 0.0
    %6292 = vmatprep.mubr.f32.mxu0 0.0
    %6293 = vmatmul.mubr.f32.gmra.mxu0 %v6226
    %v6294 = vpop.f32.mrf.mxu0
    %v6295 = vadd.f32 0.0, %v6294
    %v6296 = vpop.f32.mrf.mxu0
    %6297 = vdwg.mxu0
    %v6299 = vsel %vm119, %v6224, 0
    %6301 = vmatprep.subr.mxu0 0.0
    %6302 = vmatpush1.xpose.msra.mxu0 0.0
    %6303 = vmatprep.subr.mxu0 0.0
    %6304 = vmatpush1.xpose.msra.mxu0 0.0
    %6305 = vmatprep.subr.mxu0 0.0
    %6306 = vmatpush1.xpose.msra.mxu0 0.0
    %6307 = vmatprep.subr.mxu0 0.0
    %6308 = vmatpush1.xpose.msra.mxu0 0.0
    %6309 = vmatprep.subr.mxu0 0.0
    %6310 = vmatpush1.xpose.msra.mxu0 0.0
    %6311 = vmatprep.subr.mxu0 0.0
    %6312 = vmatpush1.xpose.msra.mxu0 0.0
    %6313 = vmatprep.subr.mxu0 0.0
    %6314 = vmatpush1.xpose.msra.mxu0 0.0
    %6315 = vmatprep.subr.mxu0 0.0
    %6316 = vmatpush1.xpose.msra.mxu0 0.0
    %6317 = vmatprep.subr.mxu0 0.0
    %6318 = vmatpush1.xpose.msra.mxu0 0.0
    %6319 = vmatprep.subr.mxu0 0.0
    %6320 = vmatpush1.xpose.msra.mxu0 0.0
    %6321 = vmatprep.subr.mxu0 0.0
    %6322 = vmatpush1.xpose.msra.mxu0 0.0
    %6323 = vmatprep.subr.mxu0 0.0
    %6324 = vmatpush1.xpose.msra.mxu0 0.0
    %6325 = vmatprep.subr.mxu0 0.0
    %6326 = vmatpush1.xpose.msra.mxu0 0.0
    %6327 = vmatprep.subr.mxu0 0.0
    %6328 = vmatpush1.xpose.msra.mxu0 0.0
    %6329 = vmatprep.subr.mxu0 0.0
    %6330 = vmatpush1.xpose.msra.mxu0 0.0
    %6331 = vmatprep.subr.mxu0 0.0
    %6332 = vmatpush1.xpose.msra.mxu0 %v6299
    %6333 = vmatprep.subr.mxu0 0.0
    %6334 = vmatpush2.xpose.msra.mxu0 0.0
    %6335 = vmatprep.subr.mxu0 0.0
    %6336 = vmatpush2.xpose.msra.mxu0 0.0
    %6337 = vmatprep.subr.mxu0 0.0
    %6338 = vmatpush2.xpose.msra.mxu0 0.0
    %6339 = vmatprep.subr.mxu0 0.0
    %6340 = vmatpush2.xpose.msra.mxu0 0.0
    %6341 = vmatprep.subr.mxu0 0.0
    %6342 = vmatpush2.xpose.msra.mxu0 0.0
    %6343 = vmatprep.subr.mxu0 0.0
    %6344 = vmatpush2.xpose.msra.mxu0 0.0
    %6345 = vmatprep.subr.mxu0 0.0
    %6346 = vmatpush2.xpose.msra.mxu0 0.0
    %6347 = vmatprep.subr.mxu0 0.0
    %6348 = vmatpush2.xpose.msra.mxu0 0.0
    %6349 = vmatprep.subr.mxu0 0.0
    %6350 = vmatpush2.xpose.msra.mxu0 0.0
    %6351 = vmatprep.subr.mxu0 0.0
    %6352 = vmatpush2.xpose.msra.mxu0 0.0
    %6353 = vmatprep.subr.mxu0 0.0
    %6354 = vmatpush2.xpose.msra.mxu0 0.0
    %6355 = vmatprep.subr.mxu0 0.0
    %6356 = vmatpush2.xpose.msra.mxu0 0.0
    %6357 = vmatprep.subr.mxu0 0.0
    %6358 = vmatpush2.xpose.msra.mxu0 0.0
    %6359 = vmatprep.subr.mxu0 0.0
    %6360 = vmatpush2.xpose.msra.mxu0 0.0
    %6361 = vmatprep.subr.mxu0 0.0
    %6362 = vmatpush2.xpose.msra.mxu0 0.0
    %6363 = vmatprep.subr.mxu0 0.0
    %6364 = vmatpush2.xpose.msra.mxu0 0.0
    %6365 = vmatprep.mubr.f32.mxu0 0.0
    %6366 = vmatmul.mubr.f32.gmra.mxu0 %v6299
    %v6367 = vpop.f32.mrf.mxu0
    %v6368 = vadd.f32 0.0, %v6367
    %v6369 = vpop.f32.mrf.mxu0
    %6370 = vdwg.mxu0
    %v6371 = vmul.f32 %v6295, 0.25
    %v6372 = vmul.f32 %v6368, 0.25
    %v6373 = vsel %vm4787, %v6371, -inf
    %6374 = vmax.xlane.f32.xlu0 %v6373
    %v6375 = vpop.xlane.xlu0 %6374
    %v6376 = vsel %vm4787, %v6372, -inf
    %6377 = vmax.xlane.f32.xlu0 %v6376
    %v6378 = vpop.xlane.xlu0 %6377
    %v6379 = vsub.f32 %v6371, %v6375
    %v6380 = vsub.f32 %v6372, %v6378
    %v6381 = vmul.f32 %v6379, 1.442695
    %v6382 = vpow.pop %v6381
    %v6383 = vmul.f32 %v6380, 1.442695
    %v6384 = vpow.pop %v6383
    %v6385 = vsel %vm4787, %v6382, 0.0
    %6386 = vadd.xlane.f32.xlu0 %v6385
    %v6387 = vpop.xlane.xlu0 %6386
    %v6388 = vsel %vm4787, %v6384, 0.0
    %6389 = vadd.xlane.f32.xlu0 %v6388
    %v6390 = vpop.xlane.xlu0 %6389
    %v6391 = vrcp.pop %v6387
    %v6392 = vrcp.pop %v6390
    %v6393 = vmul.f32 %v6382, %v6391
    %v6394 = vmul.f32 %v6384, %v6392
    %v6396 = vsel %vm3633, %v6393, 0
    %v6398 = vsel %vm212, %v6223, 0
    %6400 = vmatprep.subr.mxu0 0.0
    %6401 = vmatpush1.msra.mxu0 0.0
    %6402 = vmatprep.subr.mxu0 0.0
    %6403 = vmatpush1.msra.mxu0 0.0
    %6404 = vmatprep.subr.mxu0 0.0
    %6405 = vmatpush1.msra.mxu0 0.0
    %6406 = vmatprep.subr.mxu0 0.0
    %6407 = vmatpush1.msra.mxu0 0.0
    %6408 = vmatprep.subr.mxu0 0.0
    %6409 = vmatpush1.msra.mxu0 0.0
    %6410 = vmatprep.subr.mxu0 0.0
    %6411 = vmatpush1.msra.mxu0 0.0
    %6412 = vmatprep.subr.mxu0 0.0
    %6413 = vmatpush1.msra.mxu0 0.0
    %6414 = vmatprep.subr.mxu0 0.0
    %6415 = vmatpush1.msra.mxu0 0.0
    %6416 = vmatprep.subr.mxu0 0.0
    %6417 = vmatpush1.msra.mxu0 0.0
    %6418 = vmatprep.subr.mxu0 0.0
    %6419 = vmatpush1.msra.mxu0 0.0
    %6420 = vmatprep.subr.mxu0 0.0
    %6421 = vmatpush1.msra.mxu0 0.0
    %6422 = vmatprep.subr.mxu0 0.0
    %6423 = vmatpush1.msra.mxu0 0.0
    %6424 = vmatprep.subr.mxu0 0.0
    %6425 = vmatpush1.msra.mxu0 0.0
    %6426 = vmatprep.subr.mxu0 0.0
    %6427 = vmatpush1.msra.mxu0 0.0
    %6428 = vmatprep.subr.mxu0 0.0
    %6429 = vmatpush1.msra.mxu0 0.0
    %6430 = vmatprep.subr.mxu0 0.0
    %6431 = vmatpush1.msra.mxu0 %v6398
    %6432 = vmatprep.subr.mxu0 0.0
    %6433 = vmatpush2.msra.mxu0 0.0
    %6434 = vmatprep.subr.mxu0 0.0
    %6435 = vmatpush2.msra.mxu0 0.0
    %6436 = vmatprep.subr.mxu0 0.0
    %6437 = vmatpush2.msra.mxu0 0.0
    %6438 = vmatprep.subr.mxu0 0.0
    %6439 = vmatpush2.msra.mxu0 0.0
    %6440 = vmatprep.subr.mxu0 0.0
    %6441 = vmatpush2.msra.mxu0 0.0
    %6442 = vmatprep.subr.mxu0 0.0
    %6443 = vmatpush2.msra.mxu0 0.0
    %6444 = vmatprep.subr.mxu0 0.0
    %6445 = vmatpush2.msra.mxu0 0.0
    %6446 = vmatprep.subr.mxu0 0.0
    %6447 = vmatpush2.msra.mxu0 0.0
    %6448 = vmatprep.subr.mxu0 0.0
    %6449 = vmatpush2.msra.mxu0 0.0
    %6450 = vmatprep.subr.mxu0 0.0
    %6451 = vmatpush2.msra.mxu0 0.0
    %6452 = vmatprep.subr.mxu0 0.0
    %6453 = vmatpush2.msra.mxu0 0.0
    %6454 = vmatprep.subr.mxu0 0.0
    %6455 = vmatpush2.msra.mxu0 0.0
    %6456 = vmatprep.subr.mxu0 0.0
    %6457 = vmatpush2.msra.mxu0 0.0
    %6458 = vmatprep.subr.mxu0 0.0
    %6459 = vmatpush2.msra.mxu0 0.0
    %6460 = vmatprep.subr.mxu0 0.0
    %6461 = vmatpush2.msra.mxu0 0.0
    %6462 = vmatprep.subr.mxu0 0.0
    %6463 = vmatpush2.msra.mxu0 0.0
    %6464 = vmatprep.mubr.f32.mxu0 0.0
    %6465 = vmatmul.mubr.f32.gmra.mxu0 %v6396
    %v6466 = vpop.f32.mrf.mxu0
    %v6467 = vadd.f32 0.0, %v6466
    %v6468 = vpop.f32.mrf.mxu0
    %6469 = vdwg.mxu0
    %v6471 = vsel %vm3633, %v6394, 0
    %v6473 = vsel %vm212, %v6224, 0
    %6475 = vmatprep.subr.mxu0 0.0
    %6476 = vmatpush1.msra.mxu0 0.0
    %6477 = vmatprep.subr.mxu0 0.0
    %6478 = vmatpush1.msra.mxu0 0.0
    %6479 = vmatprep.subr.mxu0 0.0
    %6480 = vmatpush1.msra.mxu0 0.0
    %6481 = vmatprep.subr.mxu0 0.0
    %6482 = vmatpush1.msra.mxu0 0.0
    %6483 = vmatprep.subr.mxu0 0.0
    %6484 = vmatpush1.msra.mxu0 0.0
    %6485 = vmatprep.subr.mxu0 0.0
    %6486 = vmatpush1.msra.mxu0 0.0
    %6487 = vmatprep.subr.mxu0 0.0
    %6488 = vmatpush1.msra.mxu0 0.0
    %6489 = vmatprep.subr.mxu0 0.0
    %6490 = vmatpush1.msra.mxu0 0.0
    %6491 = vmatprep.subr.mxu0 0.0
    %6492 = vmatpush1.msra.mxu0 0.0
    %6493 = vmatprep.subr.mxu0 0.0
    %6494 = vmatpush1.msra.mxu0 0.0
    %6495 = vmatprep.subr.mxu0 0.0
    %6496 = vmatpush1.msra.mxu0 0.0
    %6497 = vmatprep.subr.mxu0 0.0
    %6498 = vmatpush1.msra.mxu0 0.0
    %6499 = vmatprep.subr.mxu0 0.0
    %6500 = vmatpush1.msra.mxu0 0.0
    %6501 = vmatprep.subr.mxu0 0.0
    %6502 = vmatpush1.msra.mxu0 0.0
    %6503 = vmatprep.subr.mxu0 0.0
    %6504 = vmatpush1.msra.mxu0 0.0
    %6505 = vmatprep.subr.mxu0 0.0
    %6506 = vmatpush1.msra.mxu0 %v6473
    %6507 = vmatprep.subr.mxu0 0.0
    %6508 = vmatpush2.msra.mxu0 0.0
    %6509 = vmatprep.subr.mxu0 0.0
    %6510 = vmatpush2.msra.mxu0 0.0
    %6511 = vmatprep.subr.mxu0 0.0
    %6512 = vmatpush2.msra.mxu0 0.0
    %6513 = vmatprep.subr.mxu0 0.0
    %6514 = vmatpush2.msra.mxu0 0.0
    %6515 = vmatprep.subr.mxu0 0.0
    %6516 = vmatpush2.msra.mxu0 0.0
    %6517 = vmatprep.subr.mxu0 0.0
    %6518 = vmatpush2.msra.mxu0 0.0
    %6519 = vmatprep.subr.mxu0 0.0
    %6520 = vmatpush2.msra.mxu0 0.0
    %6521 = vmatprep.subr.mxu0 0.0
    %6522 = vmatpush2.msra.mxu0 0.0
    %6523 = vmatprep.subr.mxu0 0.0
    %6524 = vmatpush2.msra.mxu0 0.0
    %6525 = vmatprep.subr.mxu0 0.0
    %6526 = vmatpush2.msra.mxu0 0.0
    %6527 = vmatprep.subr.mxu0 0.0
    %6528 = vmatpush2.msra.mxu0 0.0
    %6529 = vmatprep.subr.mxu0 0.0
    %6530 = vmatpush2.msra.mxu0 0.0
    %6531 = vmatprep.subr.mxu0 0.0
    %6532 = vmatpush2.msra.mxu0 0.0
    %6533 = vmatprep.subr.mxu0 0.0
    %6534 = vmatpush2.msra.mxu0 0.0
    %6535 = vmatprep.subr.mxu0 0.0
    %6536 = vmatpush2.msra.mxu0 0.0
    %6537 = vmatprep.subr.mxu0 0.0
    %6538 = vmatpush2.msra.mxu0 0.0
    %6539 = vmatprep.mubr.f32.mxu0 0.0
    %6540 = vmatmul.mubr.f32.gmra.mxu0 %v6471
    %v6541 = vpop.f32.mrf.mxu0
    %v6542 = vadd.f32 0.0, %v6541
    %v6543 = vpop.f32.mrf.mxu0
    %6544 = vdwg.mxu0
    %s6545 = scalar_lea.vmem %s8, 16
    %v6546 = vld [vmem:[%s6545] sm:$0xff]
    %v6547 = vld [vmem:[%s6545 + $0x8] sm:$0xff]
    %s6548 = scalar_lea.vmem %s9, 1
    %v6549 = vld [vmem:[%s6548] sm:$0x1]
    %v6551 = vlaneseq
    %v6552 = vshrl.u32 %v6551, 7
    %v6553 = vsub.s32 0, %v6552
    %v6554 = vrot.slane %v6549, %v6553
    %v6557 = vsel %vm119, %v6467, 0
    %6559 = vmatprep.subr.mxu0 0.0
    %6560 = vmatpush1.msra.mxu0 0.0
    %6561 = vmatprep.subr.mxu0 0.0
    %6562 = vmatpush1.msra.mxu0 0.0
    %6563 = vmatprep.subr.mxu0 0.0
    %6564 = vmatpush1.msra.mxu0 0.0
    %6565 = vmatprep.subr.mxu0 0.0
    %6566 = vmatpush1.msra.mxu0 0.0
    %6567 = vmatprep.subr.mxu0 0.0
    %6568 = vmatpush1.msra.mxu0 0.0
    %6569 = vmatprep.subr.mxu0 0.0
    %6570 = vmatpush1.msra.mxu0 0.0
    %6571 = vmatprep.subr.mxu0 0.0
    %6572 = vmatpush1.msra.mxu0 0.0
    %6573 = vmatprep.subr.mxu0 0.0
    %6574 = vmatpush1.msra.mxu0 0.0
    %6575 = vmatprep.subr.mxu0 0.0
    %6576 = vmatpush1.msra.mxu0 0.0
    %6577 = vmatprep.subr.mxu0 0.0
    %6578 = vmatpush1.msra.mxu0 0.0
    %6579 = vmatprep.subr.mxu0 0.0
    %6580 = vmatpush1.msra.mxu0 0.0
    %6581 = vmatprep.subr.mxu0 0.0
    %6582 = vmatpush1.msra.mxu0 0.0
    %6583 = vmatprep.subr.mxu0 0.0
    %6584 = vmatpush1.msra.mxu0 0.0
    %6585 = vmatprep.subr.mxu0 0.0
    %6586 = vmatpush1.msra.mxu0 0.0
    %6587 = vmatprep.subr.mxu0 0.0
    %6588 = vmatpush1.msra.mxu0 %v6547
    %6589 = vmatprep.subr.mxu0 0.0
    %6590 = vmatpush1.msra.mxu0 %v6546
    %6591 = vmatprep.subr.mxu0 0.0
    %6592 = vmatpush2.msra.mxu0 0.0
    %6593 = vmatprep.subr.mxu0 0.0
    %6594 = vmatpush2.msra.mxu0 0.0
    %6595 = vmatprep.subr.mxu0 0.0
    %6596 = vmatpush2.msra.mxu0 0.0
    %6597 = vmatprep.subr.mxu0 0.0
    %6598 = vmatpush2.msra.mxu0 0.0
    %6599 = vmatprep.subr.mxu0 0.0
    %6600 = vmatpush2.msra.mxu0 0.0
    %6601 = vmatprep.subr.mxu0 0.0
    %6602 = vmatpush2.msra.mxu0 0.0
    %6603 = vmatprep.subr.mxu0 0.0
    %6604 = vmatpush2.msra.mxu0 0.0
    %6605 = vmatprep.subr.mxu0 0.0
    %6606 = vmatpush2.msra.mxu0 0.0
    %6607 = vmatprep.subr.mxu0 0.0
    %6608 = vmatpush2.msra.mxu0 0.0
    %6609 = vmatprep.subr.mxu0 0.0
    %6610 = vmatpush2.msra.mxu0 0.0
    %6611 = vmatprep.subr.mxu0 0.0
    %6612 = vmatpush2.msra.mxu0 0.0
    %6613 = vmatprep.subr.mxu0 0.0
    %6614 = vmatpush2.msra.mxu0 0.0
    %6615 = vmatprep.subr.mxu0 0.0
    %6616 = vmatpush2.msra.mxu0 0.0
    %6617 = vmatprep.subr.mxu0 0.0
    %6618 = vmatpush2.msra.mxu0 0.0
    %6619 = vmatprep.subr.mxu0 0.0
    %6620 = vmatpush2.msra.mxu0 0.0
    %6621 = vmatprep.subr.mxu0 0.0
    %6622 = vmatpush2.msra.mxu0 0.0
    %6623 = vmatprep.mubr.f32.mxu0 0.0
    %6624 = vmatmul.mubr.f32.gmra.mxu0 %v6557
    %v6625 = vpop.f32.mrf.mxu0
    %v6626 = vadd.f32 %v6554, %v6625
    %v6627 = vpop.f32.mrf.mxu0
    %6628 = vdwg.mxu0
    %v6630 = vsel %vm119, %v6542, 0
    %6632 = vmatprep.subr.mxu0 0.0
    %6633 = vmatpush1.msra.mxu0 0.0
    %6634 = vmatprep.subr.mxu0 0.0
    %6635 = vmatpush1.msra.mxu0 0.0
    %6636 = vmatprep.subr.mxu0 0.0
    %6637 = vmatpush1.msra.mxu0 0.0
    %6638 = vmatprep.subr.mxu0 0.0
    %6639 = vmatpush1.msra.mxu0 0.0
    %6640 = vmatprep.subr.mxu0 0.0
    %6641 = vmatpush1.msra.mxu0 0.0
    %6642 = vmatprep.subr.mxu0 0.0
    %6643 = vmatpush1.msra.mxu0 0.0
    %6644 = vmatprep.subr.mxu0 0.0
    %6645 = vmatpush1.msra.mxu0 0.0
    %6646 = vmatprep.subr.mxu0 0.0
    %6647 = vmatpush1.msra.mxu0 0.0
    %6648 = vmatprep.subr.mxu0 0.0
    %6649 = vmatpush1.msra.mxu0 0.0
    %6650 = vmatprep.subr.mxu0 0.0
    %6651 = vmatpush1.msra.mxu0 0.0
    %6652 = vmatprep.subr.mxu0 0.0
    %6653 = vmatpush1.msra.mxu0 0.0
    %6654 = vmatprep.subr.mxu0 0.0
    %6655 = vmatpush1.msra.mxu0 0.0
    %6656 = vmatprep.subr.mxu0 0.0
    %6657 = vmatpush1.msra.mxu0 0.0
    %6658 = vmatprep.subr.mxu0 0.0
    %6659 = vmatpush1.msra.mxu0 0.0
    %6660 = vmatprep.subr.mxu0 0.0
    %6661 = vmatpush1.msra.mxu0 %v6547
    %6662 = vmatprep.subr.mxu0 0.0
    %6663 = vmatpush1.msra.mxu0 %v6546
    %6664 = vmatprep.subr.mxu0 0.0
    %6665 = vmatpush2.msra.mxu0 0.0
    %6666 = vmatprep.subr.mxu0 0.0
    %6667 = vmatpush2.msra.mxu0 0.0
    %6668 = vmatprep.subr.mxu0 0.0
    %6669 = vmatpush2.msra.mxu0 0.0
    %6670 = vmatprep.subr.mxu0 0.0
    %6671 = vmatpush2.msra.mxu0 0.0
    %6672 = vmatprep.subr.mxu0 0.0
    %6673 = vmatpush2.msra.mxu0 0.0
    %6674 = vmatprep.subr.mxu0 0.0
    %6675 = vmatpush2.msra.mxu0 0.0
    %6676 = vmatprep.subr.mxu0 0.0
    %6677 = vmatpush2.msra.mxu0 0.0
    %6678 = vmatprep.subr.mxu0 0.0
    %6679 = vmatpush2.msra.mxu0 0.0
    %6680 = vmatprep.subr.mxu0 0.0
    %6681 = vmatpush2.msra.mxu0 0.0
    %6682 = vmatprep.subr.mxu0 0.0
    %6683 = vmatpush2.msra.mxu0 0.0
    %6684 = vmatprep.subr.mxu0 0.0
    %6685 = vmatpush2.msra.mxu0 0.0
    %6686 = vmatprep.subr.mxu0 0.0
    %6687 = vmatpush2.msra.mxu0 0.0
    %6688 = vmatprep.subr.mxu0 0.0
    %6689 = vmatpush2.msra.mxu0 0.0
    %6690 = vmatprep.subr.mxu0 0.0
    %6691 = vmatpush2.msra.mxu0 0.0
    %6692 = vmatprep.subr.mxu0 0.0
    %6693 = vmatpush2.msra.mxu0 0.0
    %6694 = vmatprep.subr.mxu0 0.0
    %6695 = vmatpush2.msra.mxu0 0.0
    %6696 = vmatprep.mubr.f32.mxu0 0.0
    %6697 = vmatmul.mubr.f32.gmra.mxu0 %v6630
    %v6698 = vpop.f32.mrf.mxu0
    %v6699 = vadd.f32 %v6554, %v6698
    %v6700 = vpop.f32.mrf.mxu0
    %6701 = vdwg.mxu0
    %v6702 = vmax.f32 %v6626, 0.0
    %v6703 = vmax.f32 %v6699, 0.0
    %v6704 = vsel %vm5117, %v6702, 0.0
    %v6705 = vrot.slane %v6704, 4
    %v6706 = vadd.f32 %v6704, %v6705
    %v6707 = vrot.slane %v6706, 2
    %v6708 = vadd.f32 %v6706, %v6707
    %v6709 = vrot.slane %v6708, 1
    %v6710 = vadd.f32 %v6708, %v6709
    %v6711 = vsel %vm5117, %v6703, 0.0
    %v6712 = vrot.slane %v6711, 4
    %v6713 = vadd.f32 %v6711, %v6712
    %v6714 = vrot.slane %v6713, 2
    %v6715 = vadd.f32 %v6713, %v6714
    %v6716 = vrot.slane %v6715, 1
    %v6717 = vadd.f32 %v6715, %v6716
    %v6718 = vmul.f32 %v6710, %v5132
    %v6719 = vmul.f32 %v6717, %v5132
    %v6720 = vsel %vm5117, %v6702, -inf
    %v6721 = vrot.slane %v6720, 4
    %v6722 = vmax.f32 %v6720, %v6721
    %v6723 = vrot.slane %v6722, 2
    %v6724 = vmax.f32 %v6722, %v6723
    %v6725 = vrot.slane %v6724, 1
    %v6726 = vmax.f32 %v6724, %v6725
    %v6727 = vsel %vm5117, %v6703, -inf
    %v6728 = vrot.slane %v6727, 4
    %v6729 = vmax.f32 %v6727, %v6728
    %v6730 = vrot.slane %v6729, 2
    %v6731 = vmax.f32 %v6729, %v6730
    %v6732 = vrot.slane %v6731, 1
    %v6733 = vmax.f32 %v6731, %v6732
    %s6734 = scalar_lea.vmem [#allocation10], 64
    %v6735 = vld [vmem:[%s6734] sm:$0xff]
    %v6736 = vld [vmem:[%s6734 + $0x8] sm:$0xff]
    %v6737 = vld [vmem:[%s6734 + $0x10] sm:$0xff]
    %v6738 = vld [vmem:[%s6734 + $0x18] sm:$0xff]
    %v6740 = vsel %vm380, %v3542, 0
    %v6743 = vsel %vm380, %v3543, 0
    %6745 = vmatprep.subr.mxu0 0.0
    %6746 = vmatpush1.msra.mxu0 0.0
    %6747 = vmatprep.subr.mxu0 0.0
    %6748 = vmatpush1.msra.mxu0 0.0
    %6749 = vmatprep.subr.mxu0 0.0
    %6750 = vmatpush1.msra.mxu0 0.0
    %6751 = vmatprep.subr.mxu0 0.0
    %6752 = vmatpush1.msra.mxu0 0.0
    %6753 = vmatprep.subr.mxu0 0.0
    %6754 = vmatpush1.msra.mxu0 0.0
    %6755 = vmatprep.subr.mxu0 0.0
    %6756 = vmatpush1.msra.mxu0 0.0
    %6757 = vmatprep.subr.mxu0 0.0
    %6758 = vmatpush1.msra.mxu0 0.0
    %6759 = vmatprep.subr.mxu0 0.0
    %6760 = vmatpush1.msra.mxu0 0.0
    %6761 = vmatprep.subr.mxu0 0.0
    %6762 = vmatpush1.msra.mxu0 0.0
    %6763 = vmatprep.subr.mxu0 0.0
    %6764 = vmatpush1.msra.mxu0 0.0
    %6765 = vmatprep.subr.mxu0 0.0
    %6766 = vmatpush1.msra.mxu0 0.0
    %6767 = vmatprep.subr.mxu0 0.0
    %6768 = vmatpush1.msra.mxu0 0.0
    %6769 = vmatprep.subr.mxu0 0.0
    %6770 = vmatpush1.msra.mxu0 %v6738
    %6771 = vmatprep.subr.mxu0 0.0
    %6772 = vmatpush1.msra.mxu0 %v6737
    %6773 = vmatprep.subr.mxu0 0.0
    %6774 = vmatpush1.msra.mxu0 %v6736
    %6775 = vmatprep.subr.mxu0 0.0
    %6776 = vmatpush1.msra.mxu0 %v6735
    %6777 = vmatprep.subr.mxu0 0.0
    %6778 = vmatpush2.msra.mxu0 0.0
    %6779 = vmatprep.subr.mxu0 0.0
    %6780 = vmatpush2.msra.mxu0 0.0
    %6781 = vmatprep.subr.mxu0 0.0
    %6782 = vmatpush2.msra.mxu0 0.0
    %6783 = vmatprep.subr.mxu0 0.0
    %6784 = vmatpush2.msra.mxu0 0.0
    %6785 = vmatprep.subr.mxu0 0.0
    %6786 = vmatpush2.msra.mxu0 0.0
    %6787 = vmatprep.subr.mxu0 0.0
    %6788 = vmatpush2.msra.mxu0 0.0
    %6789 = vmatprep.subr.mxu0 0.0
    %6790 = vmatpush2.msra.mxu0 0.0
    %6791 = vmatprep.subr.mxu0 0.0
    %6792 = vmatpush2.msra.mxu0 0.0
    %6793 = vmatprep.subr.mxu0 0.0
    %6794 = vmatpush2.msra.mxu0 0.0
    %6795 = vmatprep.subr.mxu0 0.0
    %6796 = vmatpush2.msra.mxu0 0.0
    %6797 = vmatprep.subr.mxu0 0.0
    %6798 = vmatpush2.msra.mxu0 0.0
    %6799 = vmatprep.subr.mxu0 0.0
    %6800 = vmatpush2.msra.mxu0 0.0
    %6801 = vmatprep.subr.mxu0 0.0
    %6802 = vmatpush2.msra.mxu0 0.0
    %6803 = vmatprep.subr.mxu0 0.0
    %6804 = vmatpush2.msra.mxu0 0.0
    %6805 = vmatprep.subr.mxu0 0.0
    %6806 = vmatpush2.msra.mxu0 0.0
    %6807 = vmatprep.subr.mxu0 0.0
    %6808 = vmatpush2.msra.mxu0 0.0
    %6809 = vmatprep.mubr.f32.mxu0 0.0
    %6810 = vmatmul.mubr.f32.gmra.mxu0 %v6740
    %v6811 = vpop.f32.mrf.mxu0
    %v6812 = vadd.f32 0.0, %v6811
    %v6813 = vpop.f32.mrf.mxu0
    %6814 = vmatprep.mubr.f32.mxu0 0.0
    %6815 = vmatmul.mubr.f32.gmra.mxu0 %v6743
    %v6816 = vpop.f32.mrf.mxu0
    %v6817 = vadd.f32 0.0, %v6816
    %v6818 = vpop.f32.mrf.mxu0
    %6819 = vdwg.mxu0
    %v6820 = vmul.f32 %v3637, %v6812
    %v6821 = vmul.f32 %v3637, %v6817
    %v6822 = vsel %vm119, %v6820, 0.0
    %v6823 = vrot.slane %v6822, 4
    %v6824 = vadd.f32 %v6822, %v6823
    %v6825 = vrot.slane %v6824, 2
    %v6826 = vadd.f32 %v6824, %v6825
    %v6827 = vrot.slane %v6826, 1
    %v6828 = vadd.f32 %v6826, %v6827
    %v6829 = vsel %vm119, %v6821, 0.0
    %v6830 = vrot.slane %v6829, 4
    %v6831 = vadd.f32 %v6829, %v6830
    %v6832 = vrot.slane %v6831, 2
    %v6833 = vadd.f32 %v6831, %v6832
    %v6834 = vrot.slane %v6833, 1
    %v6835 = vadd.f32 %v6833, %v6834
    %v6836 = vmul.f32 %v6828, %v6828
    %v6837 = vmul.f32 %v6835, %v6835
    %v6838 = vsel %vm119, %v6836, 0.0
    %6839 = vadd.xlane.f32.xlu0 %v6838
    %v6840 = vpop.xlane.xlu0 %6839
    %v6841 = vsel %vm119, %v6837, 0.0
    %6842 = vadd.xlane.f32.xlu0 %v6841
    %v6843 = vpop.xlane.xlu0 %6842
    %v6844 = vadd.f32 %v6840, 1.0
    %v6845 = vadd.f32 %v6843, 1.0
    %v6846 = vrcp.pop %v6844
    %v6847 = vmul.f32 %v6840, %v6846
    %v6848 = vrcp.pop %v6845
    %v6849 = vmul.f32 %v6843, %v6848
    %v6850 = vmul.f32 %v6847, %v6828
    %v6851 = vmul.f32 %v6849, %v6835
    %v6852 = vadd.f32 %v6840, 1e-08
    %v6853 = vadd.f32 %v6843, 1e-08
    %v6854 = vrsqrt.pop %v6852
    %v6855 = vmul.f32 %v6852, %v6854
    %vm6856 = vcmp.eq.f32.partialorder %v6852, inf
    %v6857 = vsel %vm6856, %v6852, %v6855
    %vm6858 = vcmp.eq.f32.partialorder %v6852, 0.0
    %v6859 = vand.u32 %v6852, 2147483648
    %v6860 = vsel %vm6858, %v6859, %v6857
    %v6861 = vrsqrt.pop %v6853
    %v6862 = vmul.f32 %v6853, %v6861
    %vm6863 = vcmp.eq.f32.partialorder %v6853, inf
    %v6864 = vsel %vm6863, %v6853, %v6862
    %vm6865 = vcmp.eq.f32.partialorder %v6853, 0.0
    %v6866 = vand.u32 %v6853, 2147483648
    %v6867 = vsel %vm6865, %v6866, %v6864
    %v6868 = vrcp.pop %v6860
    %v6869 = vmul.f32 %v6850, %v6868
    %v6870 = vrcp.pop %v6867
    %v6871 = vmul.f32 %v6851, %v6870
    %v6872 = vsel %vm3690, %v6820, 0.0
    %v6873 = vrot.slane %v6872, 4
    %v6874 = vadd.f32 %v6872, %v6873
    %v6875 = vrot.slane %v6874, 2
    %v6876 = vadd.f32 %v6874, %v6875
    %v6877 = vrot.slane %v6876, 1
    %v6878 = vadd.f32 %v6876, %v6877
    %v6879 = vsel %vm3690, %v6821, 0.0
    %v6880 = vrot.slane %v6879, 4
    %v6881 = vadd.f32 %v6879, %v6880
    %v6882 = vrot.slane %v6881, 2
    %v6883 = vadd.f32 %v6881, %v6882
    %v6884 = vrot.slane %v6883, 1
    %v6885 = vadd.f32 %v6883, %v6884
    %v6886 = vmul.f32 %v6878, %v6878
    %v6887 = vmul.f32 %v6885, %v6885
    %6890 = vrot.lane.b32.xlu0 %v6886, 112
    %v6891 = vpop.permute.xlu0 %6890
    %6892 = vrot.lane.b32.xlu0 %v6887, 112
    %v6893 = vpop.permute.xlu0 %6892
    %v6896 = vsel %vm119, %v6891, 0.0
    %6897 = vadd.xlane.f32.xlu0 %v6896
    %v6898 = vpop.xlane.xlu0 %6897
    %v6899 = vsel %vm119, %v6893, 0.0
    %6900 = vadd.xlane.f32.xlu0 %v6899
    %v6901 = vpop.xlane.xlu0 %6900
    %v6902 = vadd.f32 %v6898, 1.0
    %v6903 = vadd.f32 %v6901, 1.0
    %v6904 = vrcp.pop %v6902
    %v6905 = vmul.f32 %v6898, %v6904
    %v6906 = vrcp.pop %v6903
    %v6907 = vmul.f32 %v6901, %v6906
    %v6908 = vmul.f32 %v6905, %v6878
    %v6909 = vmul.f32 %v6907, %v6885
    %v6910 = vadd.f32 %v6898, 1e-08
    %v6911 = vadd.f32 %v6901, 1e-08
    %v6912 = vrsqrt.pop %v6910
    %v6913 = vmul.f32 %v6910, %v6912
    %vm6914 = vcmp.eq.f32.partialorder %v6910, inf
    %v6915 = vsel %vm6914, %v6910, %v6913
    %vm6916 = vcmp.eq.f32.partialorder %v6910, 0.0
    %v6917 = vand.u32 %v6910, 2147483648
    %v6918 = vsel %vm6916, %v6917, %v6915
    %v6919 = vrsqrt.pop %v6911
    %v6920 = vmul.f32 %v6911, %v6919
    %vm6921 = vcmp.eq.f32.partialorder %v6911, inf
    %v6922 = vsel %vm6921, %v6911, %v6920
    %vm6923 = vcmp.eq.f32.partialorder %v6911, 0.0
    %v6924 = vand.u32 %v6911, 2147483648
    %v6925 = vsel %vm6923, %v6924, %v6922
    %v6926 = vrcp.pop %v6918
    %v6927 = vmul.f32 %v6908, %v6926
    %v6928 = vrcp.pop %v6925
    %v6929 = vmul.f32 %v6909, %v6928
    %v6930 = vsel %vm3749, %v6820, 0.0
    %v6931 = vrot.slane %v6930, 4
    %v6932 = vadd.f32 %v6930, %v6931
    %v6933 = vrot.slane %v6932, 2
    %v6934 = vadd.f32 %v6932, %v6933
    %v6935 = vrot.slane %v6934, 1
    %v6936 = vadd.f32 %v6934, %v6935
    %v6937 = vsel %vm3749, %v6821, 0.0
    %v6938 = vrot.slane %v6937, 4
    %v6939 = vadd.f32 %v6937, %v6938
    %v6940 = vrot.slane %v6939, 2
    %v6941 = vadd.f32 %v6939, %v6940
    %v6942 = vrot.slane %v6941, 1
    %v6943 = vadd.f32 %v6941, %v6942
    %v6944 = vmul.f32 %v6936, %v6936
    %v6945 = vmul.f32 %v6943, %v6943
    %6948 = vrot.lane.b32.xlu0 %v6944, 96
    %v6949 = vpop.permute.xlu0 %6948
    %6950 = vrot.lane.b32.xlu0 %v6945, 96
    %v6951 = vpop.permute.xlu0 %6950
    %v6954 = vsel %vm119, %v6949, 0.0
    %6955 = vadd.xlane.f32.xlu0 %v6954
    %v6956 = vpop.xlane.xlu0 %6955
    %v6957 = vsel %vm119, %v6951, 0.0
    %6958 = vadd.xlane.f32.xlu0 %v6957
    %v6959 = vpop.xlane.xlu0 %6958
    %v6960 = vadd.f32 %v6956, 1.0
    %v6961 = vadd.f32 %v6959, 1.0
    %v6962 = vrcp.pop %v6960
    %v6963 = vmul.f32 %v6956, %v6962
    %v6964 = vrcp.pop %v6961
    %v6965 = vmul.f32 %v6959, %v6964
    %v6966 = vmul.f32 %v6963, %v6936
    %v6967 = vmul.f32 %v6965, %v6943
    %v6968 = vadd.f32 %v6956, 1e-08
    %v6969 = vadd.f32 %v6959, 1e-08
    %v6970 = vrsqrt.pop %v6968
    %v6971 = vmul.f32 %v6968, %v6970
    %vm6972 = vcmp.eq.f32.partialorder %v6968, inf
    %v6973 = vsel %vm6972, %v6968, %v6971
    %vm6974 = vcmp.eq.f32.partialorder %v6968, 0.0
    %v6975 = vand.u32 %v6968, 2147483648
    %v6976 = vsel %vm6974, %v6975, %v6973
    %v6977 = vrsqrt.pop %v6969
    %v6978 = vmul.f32 %v6969, %v6977
    %vm6979 = vcmp.eq.f32.partialorder %v6969, inf
    %v6980 = vsel %vm6979, %v6969, %v6978
    %vm6981 = vcmp.eq.f32.partialorder %v6969, 0.0
    %v6982 = vand.u32 %v6969, 2147483648
    %v6983 = vsel %vm6981, %v6982, %v6980
    %v6984 = vrcp.pop %v6976
    %v6985 = vmul.f32 %v6966, %v6984
    %v6986 = vrcp.pop %v6983
    %v6987 = vmul.f32 %v6967, %v6986
    %v6988 = vsel %vm3808, %v6820, 0.0
    %v6989 = vrot.slane %v6988, 4
    %v6990 = vadd.f32 %v6988, %v6989
    %v6991 = vrot.slane %v6990, 2
    %v6992 = vadd.f32 %v6990, %v6991
    %v6993 = vrot.slane %v6992, 1
    %v6994 = vadd.f32 %v6992, %v6993
    %v6995 = vsel %vm3808, %v6821, 0.0
    %v6996 = vrot.slane %v6995, 4
    %v6997 = vadd.f32 %v6995, %v6996
    %v6998 = vrot.slane %v6997, 2
    %v6999 = vadd.f32 %v6997, %v6998
    %v7000 = vrot.slane %v6999, 1
    %v7001 = vadd.f32 %v6999, %v7000
    %v7002 = vmul.f32 %v6994, %v6994
    %v7003 = vmul.f32 %v7001, %v7001
    %7006 = vrot.lane.b32.xlu0 %v7002, 80
    %v7007 = vpop.permute.xlu0 %7006
    %7008 = vrot.lane.b32.xlu0 %v7003, 80
    %v7009 = vpop.permute.xlu0 %7008
    %v7012 = vsel %vm119, %v7007, 0.0
    %7013 = vadd.xlane.f32.xlu0 %v7012
    %v7014 = vpop.xlane.xlu0 %7013
    %v7015 = vsel %vm119, %v7009, 0.0
    %7016 = vadd.xlane.f32.xlu0 %v7015
    %v7017 = vpop.xlane.xlu0 %7016
    %v7018 = vadd.f32 %v7014, 1.0
    %v7019 = vadd.f32 %v7017, 1.0
    %v7020 = vrcp.pop %v7018
    %v7021 = vmul.f32 %v7014, %v7020
    %v7022 = vrcp.pop %v7019
    %v7023 = vmul.f32 %v7017, %v7022
    %v7024 = vmul.f32 %v7021, %v6994
    %v7025 = vmul.f32 %v7023, %v7001
    %v7026 = vadd.f32 %v7014, 1e-08
    %v7027 = vadd.f32 %v7017, 1e-08
    %v7028 = vrsqrt.pop %v7026
    %v7029 = vmul.f32 %v7026, %v7028
    %vm7030 = vcmp.eq.f32.partialorder %v7026, inf
    %v7031 = vsel %vm7030, %v7026, %v7029
    %vm7032 = vcmp.eq.f32.partialorder %v7026, 0.0
    %v7033 = vand.u32 %v7026, 2147483648
    %v7034 = vsel %vm7032, %v7033, %v7031
    %v7035 = vrsqrt.pop %v7027
    %v7036 = vmul.f32 %v7027, %v7035
    %vm7037 = vcmp.eq.f32.partialorder %v7027, inf
    %v7038 = vsel %vm7037, %v7027, %v7036
    %vm7039 = vcmp.eq.f32.partialorder %v7027, 0.0
    %v7040 = vand.u32 %v7027, 2147483648
    %v7041 = vsel %vm7039, %v7040, %v7038
    %v7042 = vrcp.pop %v7034
    %v7043 = vmul.f32 %v7024, %v7042
    %v7044 = vrcp.pop %v7041
    %v7045 = vmul.f32 %v7025, %v7044
    %v7046 = vmul.f32 %v6812, %v6869
    %v7047 = vmul.f32 %v6817, %v6871
    %v7048 = vsel %vm119, %v7046, 0.0
    %7049 = vadd.xlane.f32.xlu0 %v7048
    %v7050 = vpop.xlane.xlu0 %7049
    %v7051 = vsel %vm119, %v7047, 0.0
    %7052 = vadd.xlane.f32.xlu0 %v7051
    %v7053 = vpop.xlane.xlu0 %7052
    %v7054 = vsel %vm3875, %v7050, 0.0
    %v7055 = vsel %vm3875, %v7053, 0.0
    %v7056 = vadd.f32 %v7054, 0.0
    %v7057 = vadd.f32 %v7055, 0.0
    %v7058 = vmul.f32 %v6812, %v6927
    %v7059 = vmul.f32 %v6817, %v6929
    %7062 = vrot.lane.b32.xlu0 %v7058, 112
    %v7063 = vpop.permute.xlu0 %7062
    %7064 = vrot.lane.b32.xlu0 %v7059, 112
    %v7065 = vpop.permute.xlu0 %7064
    %v7068 = vsel %vm119, %v7063, 0.0
    %7069 = vadd.xlane.f32.xlu0 %v7068
    %v7070 = vpop.xlane.xlu0 %7069
    %v7071 = vsel %vm119, %v7065, 0.0
    %7072 = vadd.xlane.f32.xlu0 %v7071
    %v7073 = vpop.xlane.xlu0 %7072
    %v7074 = vsel %vm3896, %v7070, 0.0
    %v7075 = vsel %vm3896, %v7073, 0.0
    %v7076 = vadd.f32 %v7056, %v7074
    %v7077 = vadd.f32 %v7057, %v7075
    %v7078 = vmul.f32 %v6812, %v6985
    %v7079 = vmul.f32 %v6817, %v6987
    %7082 = vrot.lane.b32.xlu0 %v7078, 96
    %v7083 = vpop.permute.xlu0 %7082
    %7084 = vrot.lane.b32.xlu0 %v7079, 96
    %v7085 = vpop.permute.xlu0 %7084
    %v7088 = vsel %vm119, %v7083, 0.0
    %7089 = vadd.xlane.f32.xlu0 %v7088
    %v7090 = vpop.xlane.xlu0 %7089
    %v7091 = vsel %vm119, %v7085, 0.0
    %7092 = vadd.xlane.f32.xlu0 %v7091
    %v7093 = vpop.xlane.xlu0 %7092
    %v7094 = vsel %vm3917, %v7090, 0.0
    %v7095 = vsel %vm3917, %v7093, 0.0
    %v7096 = vadd.f32 %v7076, %v7094
    %v7097 = vadd.f32 %v7077, %v7095
    %v7098 = vmul.f32 %v6812, %v7043
    %v7099 = vmul.f32 %v6817, %v7045
    %7102 = vrot.lane.b32.xlu0 %v7098, 80
    %v7103 = vpop.permute.xlu0 %7102
    %7104 = vrot.lane.b32.xlu0 %v7099, 80
    %v7105 = vpop.permute.xlu0 %7104
    %v7108 = vsel %vm119, %v7103, 0.0
    %7109 = vadd.xlane.f32.xlu0 %v7108
    %v7110 = vpop.xlane.xlu0 %7109
    %v7111 = vsel %vm119, %v7105, 0.0
    %7112 = vadd.xlane.f32.xlu0 %v7111
    %v7113 = vpop.xlane.xlu0 %7112
    %v7114 = vsel %vm3938, %v7110, 0.0
    %v7115 = vsel %vm3938, %v7113, 0.0
    %v7116 = vadd.f32 %v7096, %v7114
    %v7117 = vadd.f32 %v7097, %v7115
    %v7118 = vadd.f32 %v7116, 0.0
    %v7119 = vadd.f32 %v7117, 0.0
    %v7120 = vsel %vm3633, %v7118, -inf
    %7121 = vmax.xlane.f32.xlu0 %v7120
    %v7122 = vpop.xlane.xlu0 %7121
    %v7123 = vsel %vm3633, %v7119, -inf
    %7124 = vmax.xlane.f32.xlu0 %v7123
    %v7125 = vpop.xlane.xlu0 %7124
    %v7126 = vsub.f32 %v7118, %v7122
    %v7127 = vsub.f32 %v7119, %v7125
    %v7128 = vmul.f32 %v7126, 1.442695
    %v7129 = vpow.pop %v7128
    %v7130 = vmul.f32 %v7127, 1.442695
    %v7131 = vpow.pop %v7130
    %v7132 = vsel %vm3633, %v7129, 0.0
    %7133 = vadd.xlane.f32.xlu0 %v7132
    %v7134 = vpop.xlane.xlu0 %7133
    %v7135 = vsel %vm3633, %v7131, 0.0
    %7136 = vadd.xlane.f32.xlu0 %v7135
    %v7137 = vpop.xlane.xlu0 %7136
    %v7138 = vrcp.pop %v7134
    %v7139 = vrcp.pop %v7137
    %v7140 = vmul.f32 %v7129, %v7138
    %v7141 = vmul.f32 %v7131, %v7139
    %7143 = vset.pattern.permute.xlu0 0
    %7144 = vperm.xlu0 %7143, %v7140
    %v7145 = vpop.permute.xlu0 %7144
    %7148 = vset.pattern.permute.xlu0 0
    %7149 = vperm.xlu0 %7148, %v7141
    %v7150 = vpop.permute.xlu0 %7149
    %v7152 = vmul.f32 %v7145, %v6812
    %v7153 = vmul.f32 %v7150, %v6817
    %v7154 = vsel %vm119, %v7152, 0.0
    %v7155 = vrot.slane %v7154, 4
    %v7156 = vadd.f32 %v7154, %v7155
    %v7157 = vrot.slane %v7156, 2
    %v7158 = vadd.f32 %v7156, %v7157
    %v7159 = vrot.slane %v7158, 1
    %v7160 = vadd.f32 %v7158, %v7159
    %v7161 = vsel %vm119, %v7153, 0.0
    %v7162 = vrot.slane %v7161, 4
    %v7163 = vadd.f32 %v7161, %v7162
    %v7164 = vrot.slane %v7163, 2
    %v7165 = vadd.f32 %v7163, %v7164
    %v7166 = vrot.slane %v7165, 1
    %v7167 = vadd.f32 %v7165, %v7166
    %v7168 = vmul.f32 %v7160, %v7160
    %v7169 = vmul.f32 %v7167, %v7167
    %v7170 = vsel %vm119, %v7168, 0.0
    %7171 = vadd.xlane.f32.xlu0 %v7170
    %v7172 = vpop.xlane.xlu0 %7171
    %v7173 = vsel %vm119, %v7169, 0.0
    %7174 = vadd.xlane.f32.xlu0 %v7173
    %v7175 = vpop.xlane.xlu0 %7174
    %v7176 = vadd.f32 %v7172, 1.0
    %v7177 = vadd.f32 %v7175, 1.0
    %v7178 = vrcp.pop %v7176
    %v7179 = vmul.f32 %v7172, %v7178
    %v7180 = vrcp.pop %v7177
    %v7181 = vmul.f32 %v7175, %v7180
    %v7182 = vmul.f32 %v7179, %v7160
    %v7183 = vmul.f32 %v7181, %v7167
    %v7184 = vadd.f32 %v7172, 1e-08
    %v7185 = vadd.f32 %v7175, 1e-08
    %v7186 = vrsqrt.pop %v7184
    %v7187 = vmul.f32 %v7184, %v7186
    %vm7188 = vcmp.eq.f32.partialorder %v7184, inf
    %v7189 = vsel %vm7188, %v7184, %v7187
    %vm7190 = vcmp.eq.f32.partialorder %v7184, 0.0
    %v7191 = vand.u32 %v7184, 2147483648
    %v7192 = vsel %vm7190, %v7191, %v7189
    %v7193 = vrsqrt.pop %v7185
    %v7194 = vmul.f32 %v7185, %v7193
    %vm7195 = vcmp.eq.f32.partialorder %v7185, inf
    %v7196 = vsel %vm7195, %v7185, %v7194
    %vm7197 = vcmp.eq.f32.partialorder %v7185, 0.0
    %v7198 = vand.u32 %v7185, 2147483648
    %v7199 = vsel %vm7197, %v7198, %v7196
    %v7200 = vrcp.pop %v7192
    %v7201 = vmul.f32 %v7182, %v7200
    %v7202 = vrcp.pop %v7199
    %v7203 = vmul.f32 %v7183, %v7202
    %7204 = vset.pattern.permute.xlu0 1
    %7205 = vperm.xlu0 %7204, %v7140
    %v7206 = vpop.permute.xlu0 %7205
    %7208 = vset.pattern.permute.xlu0 1
    %7209 = vperm.xlu0 %7208, %v7141
    %v7210 = vpop.permute.xlu0 %7209
    %v7212 = vmul.f32 %v7206, %v6812
    %v7213 = vmul.f32 %v7210, %v6817
    %v7214 = vsel %vm3690, %v7212, 0.0
    %v7215 = vrot.slane %v7214, 4
    %v7216 = vadd.f32 %v7214, %v7215
    %v7217 = vrot.slane %v7216, 2
    %v7218 = vadd.f32 %v7216, %v7217
    %v7219 = vrot.slane %v7218, 1
    %v7220 = vadd.f32 %v7218, %v7219
    %v7221 = vsel %vm3690, %v7213, 0.0
    %v7222 = vrot.slane %v7221, 4
    %v7223 = vadd.f32 %v7221, %v7222
    %v7224 = vrot.slane %v7223, 2
    %v7225 = vadd.f32 %v7223, %v7224
    %v7226 = vrot.slane %v7225, 1
    %v7227 = vadd.f32 %v7225, %v7226
    %v7228 = vmul.f32 %v7220, %v7220
    %v7229 = vmul.f32 %v7227, %v7227
    %7232 = vrot.lane.b32.xlu0 %v7228, 112
    %v7233 = vpop.permute.xlu0 %7232
    %7234 = vrot.lane.b32.xlu0 %v7229, 112
    %v7235 = vpop.permute.xlu0 %7234
    %v7238 = vsel %vm119, %v7233, 0.0
    %7239 = vadd.xlane.f32.xlu0 %v7238
    %v7240 = vpop.xlane.xlu0 %7239
    %v7241 = vsel %vm119, %v7235, 0.0
    %7242 = vadd.xlane.f32.xlu0 %v7241
    %v7243 = vpop.xlane.xlu0 %7242
    %v7244 = vadd.f32 %v7240, 1.0
    %v7245 = vadd.f32 %v7243, 1.0
    %v7246 = vrcp.pop %v7244
    %v7247 = vmul.f32 %v7240, %v7246
    %v7248 = vrcp.pop %v7245
    %v7249 = vmul.f32 %v7243, %v7248
    %v7250 = vmul.f32 %v7247, %v7220
    %v7251 = vmul.f32 %v7249, %v7227
    %v7252 = vadd.f32 %v7240, 1e-08
    %v7253 = vadd.f32 %v7243, 1e-08
    %v7254 = vrsqrt.pop %v7252
    %v7255 = vmul.f32 %v7252, %v7254
    %vm7256 = vcmp.eq.f32.partialorder %v7252, inf
    %v7257 = vsel %vm7256, %v7252, %v7255
    %vm7258 = vcmp.eq.f32.partialorder %v7252, 0.0
    %v7259 = vand.u32 %v7252, 2147483648
    %v7260 = vsel %vm7258, %v7259, %v7257
    %v7261 = vrsqrt.pop %v7253
    %v7262 = vmul.f32 %v7253, %v7261
    %vm7263 = vcmp.eq.f32.partialorder %v7253, inf
    %v7264 = vsel %vm7263, %v7253, %v7262
    %vm7265 = vcmp.eq.f32.partialorder %v7253, 0.0
    %v7266 = vand.u32 %v7253, 2147483648
    %v7267 = vsel %vm7265, %v7266, %v7264
    %v7268 = vrcp.pop %v7260
    %v7269 = vmul.f32 %v7250, %v7268
    %v7270 = vrcp.pop %v7267
    %v7271 = vmul.f32 %v7251, %v7270
    %7272 = vset.pattern.permute.xlu0 2
    %7273 = vperm.xlu0 %7272, %v7140
    %v7274 = vpop.permute.xlu0 %7273
    %7276 = vset.pattern.permute.xlu0 2
    %7277 = vperm.xlu0 %7276, %v7141
    %v7278 = vpop.permute.xlu0 %7277
    %v7280 = vmul.f32 %v7274, %v6812
    %v7281 = vmul.f32 %v7278, %v6817
    %v7282 = vsel %vm3749, %v7280, 0.0
    %v7283 = vrot.slane %v7282, 4
    %v7284 = vadd.f32 %v7282, %v7283
    %v7285 = vrot.slane %v7284, 2
    %v7286 = vadd.f32 %v7284, %v7285
    %v7287 = vrot.slane %v7286, 1
    %v7288 = vadd.f32 %v7286, %v7287
    %v7289 = vsel %vm3749, %v7281, 0.0
    %v7290 = vrot.slane %v7289, 4
    %v7291 = vadd.f32 %v7289, %v7290
    %v7292 = vrot.slane %v7291, 2
    %v7293 = vadd.f32 %v7291, %v7292
    %v7294 = vrot.slane %v7293, 1
    %v7295 = vadd.f32 %v7293, %v7294
    %v7296 = vmul.f32 %v7288, %v7288
    %v7297 = vmul.f32 %v7295, %v7295
    %7300 = vrot.lane.b32.xlu0 %v7296, 96
    %v7301 = vpop.permute.xlu0 %7300
    %7302 = vrot.lane.b32.xlu0 %v7297, 96
    %v7303 = vpop.permute.xlu0 %7302
    %v7306 = vsel %vm119, %v7301, 0.0
    %7307 = vadd.xlane.f32.xlu0 %v7306
    %v7308 = vpop.xlane.xlu0 %7307
    %v7309 = vsel %vm119, %v7303, 0.0
    %7310 = vadd.xlane.f32.xlu0 %v7309
    %v7311 = vpop.xlane.xlu0 %7310
    %v7312 = vadd.f32 %v7308, 1.0
    %v7313 = vadd.f32 %v7311, 1.0
    %v7314 = vrcp.pop %v7312
    %v7315 = vmul.f32 %v7308, %v7314
    %v7316 = vrcp.pop %v7313
    %v7317 = vmul.f32 %v7311, %v7316
    %v7318 = vmul.f32 %v7315, %v7288
    %v7319 = vmul.f32 %v7317, %v7295
    %v7320 = vadd.f32 %v7308, 1e-08
    %v7321 = vadd.f32 %v7311, 1e-08
    %v7322 = vrsqrt.pop %v7320
    %v7323 = vmul.f32 %v7320, %v7322
    %vm7324 = vcmp.eq.f32.partialorder %v7320, inf
    %v7325 = vsel %vm7324, %v7320, %v7323
    %vm7326 = vcmp.eq.f32.partialorder %v7320, 0.0
    %v7327 = vand.u32 %v7320, 2147483648
    %v7328 = vsel %vm7326, %v7327, %v7325
    %v7329 = vrsqrt.pop %v7321
    %v7330 = vmul.f32 %v7321, %v7329
    %vm7331 = vcmp.eq.f32.partialorder %v7321, inf
    %v7332 = vsel %vm7331, %v7321, %v7330
    %vm7333 = vcmp.eq.f32.partialorder %v7321, 0.0
    %v7334 = vand.u32 %v7321, 2147483648
    %v7335 = vsel %vm7333, %v7334, %v7332
    %v7336 = vrcp.pop %v7328
    %v7337 = vmul.f32 %v7318, %v7336
    %v7338 = vrcp.pop %v7335
    %v7339 = vmul.f32 %v7319, %v7338
    %7340 = vset.pattern.permute.xlu0 3
    %7341 = vperm.xlu0 %7340, %v7140
    %v7342 = vpop.permute.xlu0 %7341
    %7344 = vset.pattern.permute.xlu0 3
    %7345 = vperm.xlu0 %7344, %v7141
    %v7346 = vpop.permute.xlu0 %7345
    %v7348 = vmul.f32 %v7342, %v6812
    %v7349 = vmul.f32 %v7346, %v6817
    %v7350 = vsel %vm3808, %v7348, 0.0
    %v7351 = vrot.slane %v7350, 4
    %v7352 = vadd.f32 %v7350, %v7351
    %v7353 = vrot.slane %v7352, 2
    %v7354 = vadd.f32 %v7352, %v7353
    %v7355 = vrot.slane %v7354, 1
    %v7356 = vadd.f32 %v7354, %v7355
    %v7357 = vsel %vm3808, %v7349, 0.0
    %v7358 = vrot.slane %v7357, 4
    %v7359 = vadd.f32 %v7357, %v7358
    %v7360 = vrot.slane %v7359, 2
    %v7361 = vadd.f32 %v7359, %v7360
    %v7362 = vrot.slane %v7361, 1
    %v7363 = vadd.f32 %v7361, %v7362
    %v7364 = vmul.f32 %v7356, %v7356
    %v7365 = vmul.f32 %v7363, %v7363
    %7368 = vrot.lane.b32.xlu0 %v7364, 80
    %v7369 = vpop.permute.xlu0 %7368
    %7370 = vrot.lane.b32.xlu0 %v7365, 80
    %v7371 = vpop.permute.xlu0 %7370
    %v7374 = vsel %vm119, %v7369, 0.0
    %7375 = vadd.xlane.f32.xlu0 %v7374
    %v7376 = vpop.xlane.xlu0 %7375
    %v7377 = vsel %vm119, %v7371, 0.0
    %7378 = vadd.xlane.f32.xlu0 %v7377
    %v7379 = vpop.xlane.xlu0 %7378
    %v7380 = vadd.f32 %v7376, 1.0
    %v7381 = vadd.f32 %v7379, 1.0
    %v7382 = vrcp.pop %v7380
    %v7383 = vmul.f32 %v7376, %v7382
    %v7384 = vrcp.pop %v7381
    %v7385 = vmul.f32 %v7379, %v7384
    %v7386 = vmul.f32 %v7383, %v7356
    %v7387 = vmul.f32 %v7385, %v7363
    %v7388 = vadd.f32 %v7376, 1e-08
    %v7389 = vadd.f32 %v7379, 1e-08
    %v7390 = vrsqrt.pop %v7388
    %v7391 = vmul.f32 %v7388, %v7390
    %vm7392 = vcmp.eq.f32.partialorder %v7388, inf
    %v7393 = vsel %vm7392, %v7388, %v7391
    %vm7394 = vcmp.eq.f32.partialorder %v7388, 0.0
    %v7395 = vand.u32 %v7388, 2147483648
    %v7396 = vsel %vm7394, %v7395, %v7393
    %v7397 = vrsqrt.pop %v7389
    %v7398 = vmul.f32 %v7389, %v7397
    %vm7399 = vcmp.eq.f32.partialorder %v7389, inf
    %v7400 = vsel %vm7399, %v7389, %v7398
    %vm7401 = vcmp.eq.f32.partialorder %v7389, 0.0
    %v7402 = vand.u32 %v7389, 2147483648
    %v7403 = vsel %vm7401, %v7402, %v7400
    %v7404 = vrcp.pop %v7396
    %v7405 = vmul.f32 %v7386, %v7404
    %v7406 = vrcp.pop %v7403
    %v7407 = vmul.f32 %v7387, %v7406
    %v7408 = vmul.f32 %v6812, %v7201
    %v7409 = vmul.f32 %v6817, %v7203
    %v7410 = vsel %vm119, %v7408, 0.0
    %7411 = vadd.xlane.f32.xlu0 %v7410
    %v7412 = vpop.xlane.xlu0 %7411
    %v7413 = vsel %vm119, %v7409, 0.0
    %7414 = vadd.xlane.f32.xlu0 %v7413
    %v7415 = vpop.xlane.xlu0 %7414
    %v7416 = vsel %vm3875, %v7412, 0.0
    %v7417 = vsel %vm3875, %v7415, 0.0
    %v7418 = vadd.f32 %v7416, 0.0
    %v7419 = vadd.f32 %v7417, 0.0
    %v7420 = vmul.f32 %v6812, %v7269
    %v7421 = vmul.f32 %v6817, %v7271
    %7424 = vrot.lane.b32.xlu0 %v7420, 112
    %v7425 = vpop.permute.xlu0 %7424
    %7426 = vrot.lane.b32.xlu0 %v7421, 112
    %v7427 = vpop.permute.xlu0 %7426
    %v7430 = vsel %vm119, %v7425, 0.0
    %7431 = vadd.xlane.f32.xlu0 %v7430
    %v7432 = vpop.xlane.xlu0 %7431
    %v7433 = vsel %vm119, %v7427, 0.0
    %7434 = vadd.xlane.f32.xlu0 %v7433
    %v7435 = vpop.xlane.xlu0 %7434
    %v7436 = vsel %vm3896, %v7432, 0.0
    %v7437 = vsel %vm3896, %v7435, 0.0
    %v7438 = vadd.f32 %v7418, %v7436
    %v7439 = vadd.f32 %v7419, %v7437
    %v7440 = vmul.f32 %v6812, %v7337
    %v7441 = vmul.f32 %v6817, %v7339
    %7444 = vrot.lane.b32.xlu0 %v7440, 96
    %v7445 = vpop.permute.xlu0 %7444
    %7446 = vrot.lane.b32.xlu0 %v7441, 96
    %v7447 = vpop.permute.xlu0 %7446
    %v7450 = vsel %vm119, %v7445, 0.0
    %7451 = vadd.xlane.f32.xlu0 %v7450
    %v7452 = vpop.xlane.xlu0 %7451
    %v7453 = vsel %vm119, %v7447, 0.0
    %7454 = vadd.xlane.f32.xlu0 %v7453
    %v7455 = vpop.xlane.xlu0 %7454
    %v7456 = vsel %vm3917, %v7452, 0.0
    %v7457 = vsel %vm3917, %v7455, 0.0
    %v7458 = vadd.f32 %v7438, %v7456
    %v7459 = vadd.f32 %v7439, %v7457
    %v7460 = vmul.f32 %v6812, %v7405
    %v7461 = vmul.f32 %v6817, %v7407
    %7464 = vrot.lane.b32.xlu0 %v7460, 80
    %v7465 = vpop.permute.xlu0 %7464
    %7466 = vrot.lane.b32.xlu0 %v7461, 80
    %v7467 = vpop.permute.xlu0 %7466
    %v7470 = vsel %vm119, %v7465, 0.0
    %7471 = vadd.xlane.f32.xlu0 %v7470
    %v7472 = vpop.xlane.xlu0 %7471
    %v7473 = vsel %vm119, %v7467, 0.0
    %7474 = vadd.xlane.f32.xlu0 %v7473
    %v7475 = vpop.xlane.xlu0 %7474
    %v7476 = vsel %vm3938, %v7472, 0.0
    %v7477 = vsel %vm3938, %v7475, 0.0
    %v7478 = vadd.f32 %v7458, %v7476
    %v7479 = vadd.f32 %v7459, %v7477
    %v7480 = vadd.f32 %v7118, %v7478
    %v7481 = vadd.f32 %v7119, %v7479
    %v7482 = vsel %vm3633, %v7480, -inf
    %7483 = vmax.xlane.f32.xlu0 %v7482
    %v7484 = vpop.xlane.xlu0 %7483
    %v7485 = vsel %vm3633, %v7481, -inf
    %7486 = vmax.xlane.f32.xlu0 %v7485
    %v7487 = vpop.xlane.xlu0 %7486
    %v7488 = vsub.f32 %v7480, %v7484
    %v7489 = vsub.f32 %v7481, %v7487
    %v7490 = vmul.f32 %v7488, 1.442695
    %v7491 = vpow.pop %v7490
    %v7492 = vmul.f32 %v7489, 1.442695
    %v7493 = vpow.pop %v7492
    %v7494 = vsel %vm3633, %v7491, 0.0
    %7495 = vadd.xlane.f32.xlu0 %v7494
    %v7496 = vpop.xlane.xlu0 %7495
    %v7497 = vsel %vm3633, %v7493, 0.0
    %7498 = vadd.xlane.f32.xlu0 %v7497
    %v7499 = vpop.xlane.xlu0 %7498
    %v7500 = vrcp.pop %v7496
    %v7501 = vrcp.pop %v7499
    %v7502 = vmul.f32 %v7491, %v7500
    %v7503 = vmul.f32 %v7493, %v7501
    %7505 = vset.pattern.permute.xlu0 0
    %7506 = vperm.xlu0 %7505, %v7502
    %v7507 = vpop.permute.xlu0 %7506
    %7510 = vset.pattern.permute.xlu0 0
    %7511 = vperm.xlu0 %7510, %v7503
    %v7512 = vpop.permute.xlu0 %7511
    %v7514 = vmul.f32 %v7507, %v6812
    %v7515 = vmul.f32 %v7512, %v6817
    %v7516 = vsel %vm119, %v7514, 0.0
    %v7517 = vrot.slane %v7516, 4
    %v7518 = vadd.f32 %v7516, %v7517
    %v7519 = vrot.slane %v7518, 2
    %v7520 = vadd.f32 %v7518, %v7519
    %v7521 = vrot.slane %v7520, 1
    %v7522 = vadd.f32 %v7520, %v7521
    %v7523 = vsel %vm119, %v7515, 0.0
    %v7524 = vrot.slane %v7523, 4
    %v7525 = vadd.f32 %v7523, %v7524
    %v7526 = vrot.slane %v7525, 2
    %v7527 = vadd.f32 %v7525, %v7526
    %v7528 = vrot.slane %v7527, 1
    %v7529 = vadd.f32 %v7527, %v7528
    %v7530 = vmul.f32 %v7522, %v7522
    %v7531 = vmul.f32 %v7529, %v7529
    %v7532 = vsel %vm119, %v7530, 0.0
    %7533 = vadd.xlane.f32.xlu0 %v7532
    %v7534 = vpop.xlane.xlu0 %7533
    %v7535 = vsel %vm119, %v7531, 0.0
    %7536 = vadd.xlane.f32.xlu0 %v7535
    %v7537 = vpop.xlane.xlu0 %7536
    %v7538 = vadd.f32 %v7534, 1.0
    %v7539 = vadd.f32 %v7537, 1.0
    %v7540 = vrcp.pop %v7538
    %v7541 = vmul.f32 %v7534, %v7540
    %v7542 = vrcp.pop %v7539
    %v7543 = vmul.f32 %v7537, %v7542
    %v7544 = vmul.f32 %v7541, %v7522
    %v7545 = vmul.f32 %v7543, %v7529
    %v7546 = vadd.f32 %v7534, 1e-08
    %v7547 = vadd.f32 %v7537, 1e-08
    %v7548 = vrsqrt.pop %v7546
    %v7549 = vmul.f32 %v7546, %v7548
    %vm7550 = vcmp.eq.f32.partialorder %v7546, inf
    %v7551 = vsel %vm7550, %v7546, %v7549
    %vm7552 = vcmp.eq.f32.partialorder %v7546, 0.0
    %v7553 = vand.u32 %v7546, 2147483648
    %v7554 = vsel %vm7552, %v7553, %v7551
    %v7555 = vrsqrt.pop %v7547
    %v7556 = vmul.f32 %v7547, %v7555
    %vm7557 = vcmp.eq.f32.partialorder %v7547, inf
    %v7558 = vsel %vm7557, %v7547, %v7556
    %vm7559 = vcmp.eq.f32.partialorder %v7547, 0.0
    %v7560 = vand.u32 %v7547, 2147483648
    %v7561 = vsel %vm7559, %v7560, %v7558
    %v7562 = vrcp.pop %v7554
    %v7563 = vmul.f32 %v7544, %v7562
    %v7564 = vrcp.pop %v7561
    %v7565 = vmul.f32 %v7545, %v7564
    %7566 = vset.pattern.permute.xlu0 1
    %7567 = vperm.xlu0 %7566, %v7502
    %v7568 = vpop.permute.xlu0 %7567
    %7570 = vset.pattern.permute.xlu0 1
    %7571 = vperm.xlu0 %7570, %v7503
    %v7572 = vpop.permute.xlu0 %7571
    %v7574 = vmul.f32 %v7568, %v6812
    %v7575 = vmul.f32 %v7572, %v6817
    %v7576 = vsel %vm3690, %v7574, 0.0
    %v7577 = vrot.slane %v7576, 4
    %v7578 = vadd.f32 %v7576, %v7577
    %v7579 = vrot.slane %v7578, 2
    %v7580 = vadd.f32 %v7578, %v7579
    %v7581 = vrot.slane %v7580, 1
    %v7582 = vadd.f32 %v7580, %v7581
    %v7583 = vsel %vm3690, %v7575, 0.0
    %v7584 = vrot.slane %v7583, 4
    %v7585 = vadd.f32 %v7583, %v7584
    %v7586 = vrot.slane %v7585, 2
    %v7587 = vadd.f32 %v7585, %v7586
    %v7588 = vrot.slane %v7587, 1
    %v7589 = vadd.f32 %v7587, %v7588
    %v7590 = vmul.f32 %v7582, %v7582
    %v7591 = vmul.f32 %v7589, %v7589
    %7594 = vrot.lane.b32.xlu0 %v7590, 112
    %v7595 = vpop.permute.xlu0 %7594
    %7596 = vrot.lane.b32.xlu0 %v7591, 112
    %v7597 = vpop.permute.xlu0 %7596
    %v7600 = vsel %vm119, %v7595, 0.0
    %7601 = vadd.xlane.f32.xlu0 %v7600
    %v7602 = vpop.xlane.xlu0 %7601
    %v7603 = vsel %vm119, %v7597, 0.0
    %7604 = vadd.xlane.f32.xlu0 %v7603
    %v7605 = vpop.xlane.xlu0 %7604
    %v7606 = vadd.f32 %v7602, 1.0
    %v7607 = vadd.f32 %v7605, 1.0
    %v7608 = vrcp.pop %v7606
    %v7609 = vmul.f32 %v7602, %v7608
    %v7610 = vrcp.pop %v7607
    %v7611 = vmul.f32 %v7605, %v7610
    %v7612 = vmul.f32 %v7609, %v7582
    %v7613 = vmul.f32 %v7611, %v7589
    %v7614 = vadd.f32 %v7602, 1e-08
    %v7615 = vadd.f32 %v7605, 1e-08
    %v7616 = vrsqrt.pop %v7614
    %v7617 = vmul.f32 %v7614, %v7616
    %vm7618 = vcmp.eq.f32.partialorder %v7614, inf
    %v7619 = vsel %vm7618, %v7614, %v7617
    %vm7620 = vcmp.eq.f32.partialorder %v7614, 0.0
    %v7621 = vand.u32 %v7614, 2147483648
    %v7622 = vsel %vm7620, %v7621, %v7619
    %v7623 = vrsqrt.pop %v7615
    %v7624 = vmul.f32 %v7615, %v7623
    %vm7625 = vcmp.eq.f32.partialorder %v7615, inf
    %v7626 = vsel %vm7625, %v7615, %v7624
    %vm7627 = vcmp.eq.f32.partialorder %v7615, 0.0
    %v7628 = vand.u32 %v7615, 2147483648
    %v7629 = vsel %vm7627, %v7628, %v7626
    %v7630 = vrcp.pop %v7622
    %v7631 = vmul.f32 %v7612, %v7630
    %v7632 = vrcp.pop %v7629
    %v7633 = vmul.f32 %v7613, %v7632
    %7634 = vset.pattern.permute.xlu0 2
    %7635 = vperm.xlu0 %7634, %v7502
    %v7636 = vpop.permute.xlu0 %7635
    %7638 = vset.pattern.permute.xlu0 2
    %7639 = vperm.xlu0 %7638, %v7503
    %v7640 = vpop.permute.xlu0 %7639
    %v7642 = vmul.f32 %v7636, %v6812
    %v7643 = vmul.f32 %v7640, %v6817
    %v7644 = vsel %vm3749, %v7642, 0.0
    %v7645 = vrot.slane %v7644, 4
    %v7646 = vadd.f32 %v7644, %v7645
    %v7647 = vrot.slane %v7646, 2
    %v7648 = vadd.f32 %v7646, %v7647
    %v7649 = vrot.slane %v7648, 1
    %v7650 = vadd.f32 %v7648, %v7649
    %v7651 = vsel %vm3749, %v7643, 0.0
    %v7652 = vrot.slane %v7651, 4
    %v7653 = vadd.f32 %v7651, %v7652
    %v7654 = vrot.slane %v7653, 2
    %v7655 = vadd.f32 %v7653, %v7654
    %v7656 = vrot.slane %v7655, 1
    %v7657 = vadd.f32 %v7655, %v7656
    %v7658 = vmul.f32 %v7650, %v7650
    %v7659 = vmul.f32 %v7657, %v7657
    %7662 = vrot.lane.b32.xlu0 %v7658, 96
    %v7663 = vpop.permute.xlu0 %7662
    %7664 = vrot.lane.b32.xlu0 %v7659, 96
    %v7665 = vpop.permute.xlu0 %7664
    %v7668 = vsel %vm119, %v7663, 0.0
    %7669 = vadd.xlane.f32.xlu0 %v7668
    %v7670 = vpop.xlane.xlu0 %7669
    %v7671 = vsel %vm119, %v7665, 0.0
    %7672 = vadd.xlane.f32.xlu0 %v7671
    %v7673 = vpop.xlane.xlu0 %7672
    %v7674 = vadd.f32 %v7670, 1.0
    %v7675 = vadd.f32 %v7673, 1.0
    %v7676 = vrcp.pop %v7674
    %v7677 = vmul.f32 %v7670, %v7676
    %v7678 = vrcp.pop %v7675
    %v7679 = vmul.f32 %v7673, %v7678
    %v7680 = vmul.f32 %v7677, %v7650
    %v7681 = vmul.f32 %v7679, %v7657
    %v7682 = vadd.f32 %v7670, 1e-08
    %v7683 = vadd.f32 %v7673, 1e-08
    %v7684 = vrsqrt.pop %v7682
    %v7685 = vmul.f32 %v7682, %v7684
    %vm7686 = vcmp.eq.f32.partialorder %v7682, inf
    %v7687 = vsel %vm7686, %v7682, %v7685
    %vm7688 = vcmp.eq.f32.partialorder %v7682, 0.0
    %v7689 = vand.u32 %v7682, 2147483648
    %v7690 = vsel %vm7688, %v7689, %v7687
    %v7691 = vrsqrt.pop %v7683
    %v7692 = vmul.f32 %v7683, %v7691
    %vm7693 = vcmp.eq.f32.partialorder %v7683, inf
    %v7694 = vsel %vm7693, %v7683, %v7692
    %vm7695 = vcmp.eq.f32.partialorder %v7683, 0.0
    %v7696 = vand.u32 %v7683, 2147483648
    %v7697 = vsel %vm7695, %v7696, %v7694
    %v7698 = vrcp.pop %v7690
    %v7699 = vmul.f32 %v7680, %v7698
    %v7700 = vrcp.pop %v7697
    %v7701 = vmul.f32 %v7681, %v7700
    %7702 = vset.pattern.permute.xlu0 3
    %7703 = vperm.xlu0 %7702, %v7502
    %v7704 = vpop.permute.xlu0 %7703
    %7706 = vset.pattern.permute.xlu0 3
    %7707 = vperm.xlu0 %7706, %v7503
    %v7708 = vpop.permute.xlu0 %7707
    %v7710 = vmul.f32 %v7704, %v6812
    %v7711 = vmul.f32 %v7708, %v6817
    %v7712 = vsel %vm3808, %v7710, 0.0
    %v7713 = vrot.slane %v7712, 4
    %v7714 = vadd.f32 %v7712, %v7713
    %v7715 = vrot.slane %v7714, 2
    %v7716 = vadd.f32 %v7714, %v7715
    %v7717 = vrot.slane %v7716, 1
    %v7718 = vadd.f32 %v7716, %v7717
    %v7719 = vsel %vm3808, %v7711, 0.0
    %v7720 = vrot.slane %v7719, 4
    %v7721 = vadd.f32 %v7719, %v7720
    %v7722 = vrot.slane %v7721, 2
    %v7723 = vadd.f32 %v7721, %v7722
    %v7724 = vrot.slane %v7723, 1
    %v7725 = vadd.f32 %v7723, %v7724
    %v7726 = vmul.f32 %v7718, %v7718
    %v7727 = vmul.f32 %v7725, %v7725
    %7730 = vrot.lane.b32.xlu0 %v7726, 80
    %v7731 = vpop.permute.xlu0 %7730
    %7732 = vrot.lane.b32.xlu0 %v7727, 80
    %v7733 = vpop.permute.xlu0 %7732
    %v7736 = vsel %vm119, %v7731, 0.0
    %7737 = vadd.xlane.f32.xlu0 %v7736
    %v7738 = vpop.xlane.xlu0 %7737
    %v7739 = vsel %vm119, %v7733, 0.0
    %7740 = vadd.xlane.f32.xlu0 %v7739
    %v7741 = vpop.xlane.xlu0 %7740
    %v7742 = vadd.f32 %v7738, 1.0
    %v7743 = vadd.f32 %v7741, 1.0
    %v7744 = vrcp.pop %v7742
    %v7745 = vmul.f32 %v7738, %v7744
    %v7746 = vrcp.pop %v7743
    %v7747 = vmul.f32 %v7741, %v7746
    %v7748 = vmul.f32 %v7745, %v7718
    %v7749 = vmul.f32 %v7747, %v7725
    %v7750 = vadd.f32 %v7738, 1e-08
    %v7751 = vadd.f32 %v7741, 1e-08
    %v7752 = vrsqrt.pop %v7750
    %v7753 = vmul.f32 %v7750, %v7752
    %vm7754 = vcmp.eq.f32.partialorder %v7750, inf
    %v7755 = vsel %vm7754, %v7750, %v7753
    %vm7756 = vcmp.eq.f32.partialorder %v7750, 0.0
    %v7757 = vand.u32 %v7750, 2147483648
    %v7758 = vsel %vm7756, %v7757, %v7755
    %v7759 = vrsqrt.pop %v7751
    %v7760 = vmul.f32 %v7751, %v7759
    %vm7761 = vcmp.eq.f32.partialorder %v7751, inf
    %v7762 = vsel %vm7761, %v7751, %v7760
    %vm7763 = vcmp.eq.f32.partialorder %v7751, 0.0
    %v7764 = vand.u32 %v7751, 2147483648
    %v7765 = vsel %vm7763, %v7764, %v7762
    %v7766 = vrcp.pop %v7758
    %v7767 = vmul.f32 %v7748, %v7766
    %v7768 = vrcp.pop %v7765
    %v7769 = vmul.f32 %v7749, %v7768
    %v7770 = vsel %vm4595, %v7563, 0.0
    %v7771 = vsel %vm4595, %v7565, 0.0
    %v7772 = vadd.f32 %v7770, 0.0
    %v7773 = vadd.f32 %v7771, 0.0
    %v7774 = vsel %vm4600, %v7631, 0.0
    %v7775 = vsel %vm4600, %v7633, 0.0
    %7778 = vrot.lane.b32.xlu0 %v7774, 112
    %v7779 = vpop.permute.xlu0 %7778
    %7780 = vrot.lane.b32.xlu0 %v7775, 112
    %v7781 = vpop.permute.xlu0 %7780
    %v7784 = vadd.f32 %v7772, %v7779
    %v7785 = vadd.f32 %v7773, %v7781
    %v7786 = vsel %vm4613, %v7699, 0.0
    %v7787 = vsel %vm4613, %v7701, 0.0
    %7790 = vrot.lane.b32.xlu0 %v7786, 96
    %v7791 = vpop.permute.xlu0 %7790
    %7792 = vrot.lane.b32.xlu0 %v7787, 96
    %v7793 = vpop.permute.xlu0 %7792
    %v7796 = vadd.f32 %v7784, %v7791
    %v7797 = vadd.f32 %v7785, %v7793
    %v7798 = vsel %vm4626, %v7767, 0.0
    %v7799 = vsel %vm4626, %v7769, 0.0
    %7802 = vrot.lane.b32.xlu0 %v7798, 80
    %v7803 = vpop.permute.xlu0 %7802
    %7804 = vrot.lane.b32.xlu0 %v7799, 80
    %v7805 = vpop.permute.xlu0 %7804
    %v7808 = vadd.f32 %v7796, %v7803
    %v7809 = vadd.f32 %v7797, %v7805
    %v7811 = vsel %vm119, %v7808, 0
    %7813 = vmatprep.subr.mxu0 0.0
    %7814 = vmatpush1.xpose.msra.mxu0 0.0
    %7815 = vmatprep.subr.mxu0 0.0
    %7816 = vmatpush1.xpose.msra.mxu0 0.0
    %7817 = vmatprep.subr.mxu0 0.0
    %7818 = vmatpush1.xpose.msra.mxu0 0.0
    %7819 = vmatprep.subr.mxu0 0.0
    %7820 = vmatpush1.xpose.msra.mxu0 0.0
    %7821 = vmatprep.subr.mxu0 0.0
    %7822 = vmatpush1.xpose.msra.mxu0 0.0
    %7823 = vmatprep.subr.mxu0 0.0
    %7824 = vmatpush1.xpose.msra.mxu0 0.0
    %7825 = vmatprep.subr.mxu0 0.0
    %7826 = vmatpush1.xpose.msra.mxu0 0.0
    %7827 = vmatprep.subr.mxu0 0.0
    %7828 = vmatpush1.xpose.msra.mxu0 0.0
    %7829 = vmatprep.subr.mxu0 0.0
    %7830 = vmatpush1.xpose.msra.mxu0 0.0
    %7831 = vmatprep.subr.mxu0 0.0
    %7832 = vmatpush1.xpose.msra.mxu0 0.0
    %7833 = vmatprep.subr.mxu0 0.0
    %7834 = vmatpush1.xpose.msra.mxu0 0.0
    %7835 = vmatprep.subr.mxu0 0.0
    %7836 = vmatpush1.xpose.msra.mxu0 0.0
    %7837 = vmatprep.subr.mxu0 0.0
    %7838 = vmatpush1.xpose.msra.mxu0 0.0
    %7839 = vmatprep.subr.mxu0 0.0
    %7840 = vmatpush1.xpose.msra.mxu0 0.0
    %7841 = vmatprep.subr.mxu0 0.0
    %7842 = vmatpush1.xpose.msra.mxu0 0.0
    %7843 = vmatprep.subr.mxu0 0.0
    %7844 = vmatpush1.xpose.msra.mxu0 %v7811
    %7845 = vmatprep.subr.mxu0 0.0
    %7846 = vmatpush2.xpose.msra.mxu0 0.0
    %7847 = vmatprep.subr.mxu0 0.0
    %7848 = vmatpush2.xpose.msra.mxu0 0.0
    %7849 = vmatprep.subr.mxu0 0.0
    %7850 = vmatpush2.xpose.msra.mxu0 0.0
    %7851 = vmatprep.subr.mxu0 0.0
    %7852 = vmatpush2.xpose.msra.mxu0 0.0
    %7853 = vmatprep.subr.mxu0 0.0
    %7854 = vmatpush2.xpose.msra.mxu0 0.0
    %7855 = vmatprep.subr.mxu0 0.0
    %7856 = vmatpush2.xpose.msra.mxu0 0.0
    %7857 = vmatprep.subr.mxu0 0.0
    %7858 = vmatpush2.xpose.msra.mxu0 0.0
    %7859 = vmatprep.subr.mxu0 0.0
    %7860 = vmatpush2.xpose.msra.mxu0 0.0
    %7861 = vmatprep.subr.mxu0 0.0
    %7862 = vmatpush2.xpose.msra.mxu0 0.0
    %7863 = vmatprep.subr.mxu0 0.0
    %7864 = vmatpush2.xpose.msra.mxu0 0.0
    %7865 = vmatprep.subr.mxu0 0.0
    %7866 = vmatpush2.xpose.msra.mxu0 0.0
    %7867 = vmatprep.subr.mxu0 0.0
    %7868 = vmatpush2.xpose.msra.mxu0 0.0
    %7869 = vmatprep.subr.mxu0 0.0
    %7870 = vmatpush2.xpose.msra.mxu0 0.0
    %7871 = vmatprep.subr.mxu0 0.0
    %7872 = vmatpush2.xpose.msra.mxu0 0.0
    %7873 = vmatprep.subr.mxu0 0.0
    %7874 = vmatpush2.xpose.msra.mxu0 0.0
    %7875 = vmatprep.subr.mxu0 0.0
    %7876 = vmatpush2.xpose.msra.mxu0 0.0
    %7877 = vmatprep.mubr.f32.mxu0 0.0
    %7878 = vmatmul.mubr.f32.gmra.mxu0 %v7811
    %v7879 = vpop.f32.mrf.mxu0
    %v7880 = vadd.f32 0.0, %v7879
    %v7881 = vpop.f32.mrf.mxu0
    %7882 = vdwg.mxu0
    %v7884 = vsel %vm119, %v7809, 0
    %7886 = vmatprep.subr.mxu0 0.0
    %7887 = vmatpush1.xpose.msra.mxu0 0.0
    %7888 = vmatprep.subr.mxu0 0.0
    %7889 = vmatpush1.xpose.msra.mxu0 0.0
    %7890 = vmatprep.subr.mxu0 0.0
    %7891 = vmatpush1.xpose.msra.mxu0 0.0
    %7892 = vmatprep.subr.mxu0 0.0
    %7893 = vmatpush1.xpose.msra.mxu0 0.0
    %7894 = vmatprep.subr.mxu0 0.0
    %7895 = vmatpush1.xpose.msra.mxu0 0.0
    %7896 = vmatprep.subr.mxu0 0.0
    %7897 = vmatpush1.xpose.msra.mxu0 0.0
    %7898 = vmatprep.subr.mxu0 0.0
    %7899 = vmatpush1.xpose.msra.mxu0 0.0
    %7900 = vmatprep.subr.mxu0 0.0
    %7901 = vmatpush1.xpose.msra.mxu0 0.0
    %7902 = vmatprep.subr.mxu0 0.0
    %7903 = vmatpush1.xpose.msra.mxu0 0.0
    %7904 = vmatprep.subr.mxu0 0.0
    %7905 = vmatpush1.xpose.msra.mxu0 0.0
    %7906 = vmatprep.subr.mxu0 0.0
    %7907 = vmatpush1.xpose.msra.mxu0 0.0
    %7908 = vmatprep.subr.mxu0 0.0
    %7909 = vmatpush1.xpose.msra.mxu0 0.0
    %7910 = vmatprep.subr.mxu0 0.0
    %7911 = vmatpush1.xpose.msra.mxu0 0.0
    %7912 = vmatprep.subr.mxu0 0.0
    %7913 = vmatpush1.xpose.msra.mxu0 0.0
    %7914 = vmatprep.subr.mxu0 0.0
    %7915 = vmatpush1.xpose.msra.mxu0 0.0
    %7916 = vmatprep.subr.mxu0 0.0
    %7917 = vmatpush1.xpose.msra.mxu0 %v7884
    %7918 = vmatprep.subr.mxu0 0.0
    %7919 = vmatpush2.xpose.msra.mxu0 0.0
    %7920 = vmatprep.subr.mxu0 0.0
    %7921 = vmatpush2.xpose.msra.mxu0 0.0
    %7922 = vmatprep.subr.mxu0 0.0
    %7923 = vmatpush2.xpose.msra.mxu0 0.0
    %7924 = vmatprep.subr.mxu0 0.0
    %7925 = vmatpush2.xpose.msra.mxu0 0.0
    %7926 = vmatprep.subr.mxu0 0.0
    %7927 = vmatpush2.xpose.msra.mxu0 0.0
    %7928 = vmatprep.subr.mxu0 0.0
    %7929 = vmatpush2.xpose.msra.mxu0 0.0
    %7930 = vmatprep.subr.mxu0 0.0
    %7931 = vmatpush2.xpose.msra.mxu0 0.0
    %7932 = vmatprep.subr.mxu0 0.0
    %7933 = vmatpush2.xpose.msra.mxu0 0.0
    %7934 = vmatprep.subr.mxu0 0.0
    %7935 = vmatpush2.xpose.msra.mxu0 0.0
    %7936 = vmatprep.subr.mxu0 0.0
    %7937 = vmatpush2.xpose.msra.mxu0 0.0
    %7938 = vmatprep.subr.mxu0 0.0
    %7939 = vmatpush2.xpose.msra.mxu0 0.0
    %7940 = vmatprep.subr.mxu0 0.0
    %7941 = vmatpush2.xpose.msra.mxu0 0.0
    %7942 = vmatprep.subr.mxu0 0.0
    %7943 = vmatpush2.xpose.msra.mxu0 0.0
    %7944 = vmatprep.subr.mxu0 0.0
    %7945 = vmatpush2.xpose.msra.mxu0 0.0
    %7946 = vmatprep.subr.mxu0 0.0
    %7947 = vmatpush2.xpose.msra.mxu0 0.0
    %7948 = vmatprep.subr.mxu0 0.0
    %7949 = vmatpush2.xpose.msra.mxu0 0.0
    %7950 = vmatprep.mubr.f32.mxu0 0.0
    %7951 = vmatmul.mubr.f32.gmra.mxu0 %v7884
    %v7952 = vpop.f32.mrf.mxu0
    %v7953 = vadd.f32 0.0, %v7952
    %v7954 = vpop.f32.mrf.mxu0
    %7955 = vdwg.mxu0
    %v7956 = vmul.f32 %v7880, 0.25
    %v7957 = vmul.f32 %v7953, 0.25
    %v7958 = vsel %vm4787, %v7956, -inf
    %7959 = vmax.xlane.f32.xlu0 %v7958
    %v7960 = vpop.xlane.xlu0 %7959
    %v7961 = vsel %vm4787, %v7957, -inf
    %7962 = vmax.xlane.f32.xlu0 %v7961
    %v7963 = vpop.xlane.xlu0 %7962
    %v7964 = vsub.f32 %v7956, %v7960
    %v7965 = vsub.f32 %v7957, %v7963
    %v7966 = vmul.f32 %v7964, 1.442695
    %v7967 = vpow.pop %v7966
    %v7968 = vmul.f32 %v7965, 1.442695
    %v7969 = vpow.pop %v7968
    %v7970 = vsel %vm4787, %v7967, 0.0
    %7971 = vadd.xlane.f32.xlu0 %v7970
    %v7972 = vpop.xlane.xlu0 %7971
    %v7973 = vsel %vm4787, %v7969, 0.0
    %7974 = vadd.xlane.f32.xlu0 %v7973
    %v7975 = vpop.xlane.xlu0 %7974
    %v7976 = vrcp.pop %v7972
    %v7977 = vrcp.pop %v7975
    %v7978 = vmul.f32 %v7967, %v7976
    %v7979 = vmul.f32 %v7969, %v7977
    %v7981 = vsel %vm3633, %v7978, 0
    %v7983 = vsel %vm212, %v7808, 0
    %7985 = vmatprep.subr.mxu0 0.0
    %7986 = vmatpush1.msra.mxu0 0.0
    %7987 = vmatprep.subr.mxu0 0.0
    %7988 = vmatpush1.msra.mxu0 0.0
    %7989 = vmatprep.subr.mxu0 0.0
    %7990 = vmatpush1.msra.mxu0 0.0
    %7991 = vmatprep.subr.mxu0 0.0
    %7992 = vmatpush1.msra.mxu0 0.0
    %7993 = vmatprep.subr.mxu0 0.0
    %7994 = vmatpush1.msra.mxu0 0.0
    %7995 = vmatprep.subr.mxu0 0.0
    %7996 = vmatpush1.msra.mxu0 0.0
    %7997 = vmatprep.subr.mxu0 0.0
    %7998 = vmatpush1.msra.mxu0 0.0
    %7999 = vmatprep.subr.mxu0 0.0
    %8000 = vmatpush1.msra.mxu0 0.0
    %8001 = vmatprep.subr.mxu0 0.0
    %8002 = vmatpush1.msra.mxu0 0.0
    %8003 = vmatprep.subr.mxu0 0.0
    %8004 = vmatpush1.msra.mxu0 0.0
    %8005 = vmatprep.subr.mxu0 0.0
    %8006 = vmatpush1.msra.mxu0 0.0
    %8007 = vmatprep.subr.mxu0 0.0
    %8008 = vmatpush1.msra.mxu0 0.0
    %8009 = vmatprep.subr.mxu0 0.0
    %8010 = vmatpush1.msra.mxu0 0.0
    %8011 = vmatprep.subr.mxu0 0.0
    %8012 = vmatpush1.msra.mxu0 0.0
    %8013 = vmatprep.subr.mxu0 0.0
    %8014 = vmatpush1.msra.mxu0 0.0
    %8015 = vmatprep.subr.mxu0 0.0
    %8016 = vmatpush1.msra.mxu0 %v7983
    %8017 = vmatprep.subr.mxu0 0.0
    %8018 = vmatpush2.msra.mxu0 0.0
    %8019 = vmatprep.subr.mxu0 0.0
    %8020 = vmatpush2.msra.mxu0 0.0
    %8021 = vmatprep.subr.mxu0 0.0
    %8022 = vmatpush2.msra.mxu0 0.0
    %8023 = vmatprep.subr.mxu0 0.0
    %8024 = vmatpush2.msra.mxu0 0.0
    %8025 = vmatprep.subr.mxu0 0.0
    %8026 = vmatpush2.msra.mxu0 0.0
    %8027 = vmatprep.subr.mxu0 0.0
    %8028 = vmatpush2.msra.mxu0 0.0
    %8029 = vmatprep.subr.mxu0 0.0
    %8030 = vmatpush2.msra.mxu0 0.0
    %8031 = vmatprep.subr.mxu0 0.0
    %8032 = vmatpush2.msra.mxu0 0.0
    %8033 = vmatprep.subr.mxu0 0.0
    %8034 = vmatpush2.msra.mxu0 0.0
    %8035 = vmatprep.subr.mxu0 0.0
    %8036 = vmatpush2.msra.mxu0 0.0
    %8037 = vmatprep.subr.mxu0 0.0
    %8038 = vmatpush2.msra.mxu0 0.0
    %8039 = vmatprep.subr.mxu0 0.0
    %8040 = vmatpush2.msra.mxu0 0.0
    %8041 = vmatprep.subr.mxu0 0.0
    %8042 = vmatpush2.msra.mxu0 0.0
    %8043 = vmatprep.subr.mxu0 0.0
    %8044 = vmatpush2.msra.mxu0 0.0
    %8045 = vmatprep.subr.mxu0 0.0
    %8046 = vmatpush2.msra.mxu0 0.0
    %8047 = vmatprep.subr.mxu0 0.0
    %8048 = vmatpush2.msra.mxu0 0.0
    %8049 = vmatprep.mubr.f32.mxu0 0.0
    %8050 = vmatmul.mubr.f32.gmra.mxu0 %v7981
    %v8051 = vpop.f32.mrf.mxu0
    %v8052 = vadd.f32 0.0, %v8051
    %v8053 = vpop.f32.mrf.mxu0
    %8054 = vdwg.mxu0
    %v8056 = vsel %vm3633, %v7979, 0
    %v8058 = vsel %vm212, %v7809, 0
    %8060 = vmatprep.subr.mxu0 0.0
    %8061 = vmatpush1.msra.mxu0 0.0
    %8062 = vmatprep.subr.mxu0 0.0
    %8063 = vmatpush1.msra.mxu0 0.0
    %8064 = vmatprep.subr.mxu0 0.0
    %8065 = vmatpush1.msra.mxu0 0.0
    %8066 = vmatprep.subr.mxu0 0.0
    %8067 = vmatpush1.msra.mxu0 0.0
    %8068 = vmatprep.subr.mxu0 0.0
    %8069 = vmatpush1.msra.mxu0 0.0
    %8070 = vmatprep.subr.mxu0 0.0
    %8071 = vmatpush1.msra.mxu0 0.0
    %8072 = vmatprep.subr.mxu0 0.0
    %8073 = vmatpush1.msra.mxu0 0.0
    %8074 = vmatprep.subr.mxu0 0.0
    %8075 = vmatpush1.msra.mxu0 0.0
    %8076 = vmatprep.subr.mxu0 0.0
    %8077 = vmatpush1.msra.mxu0 0.0
    %8078 = vmatprep.subr.mxu0 0.0
    %8079 = vmatpush1.msra.mxu0 0.0
    %8080 = vmatprep.subr.mxu0 0.0
    %8081 = vmatpush1.msra.mxu0 0.0
    %8082 = vmatprep.subr.mxu0 0.0
    %8083 = vmatpush1.msra.mxu0 0.0
    %8084 = vmatprep.subr.mxu0 0.0
    %8085 = vmatpush1.msra.mxu0 0.0
    %8086 = vmatprep.subr.mxu0 0.0
    %8087 = vmatpush1.msra.mxu0 0.0
    %8088 = vmatprep.subr.mxu0 0.0
    %8089 = vmatpush1.msra.mxu0 0.0
    %8090 = vmatprep.subr.mxu0 0.0
    %8091 = vmatpush1.msra.mxu0 %v8058
    %8092 = vmatprep.subr.mxu0 0.0
    %8093 = vmatpush2.msra.mxu0 0.0
    %8094 = vmatprep.subr.mxu0 0.0
    %8095 = vmatpush2.msra.mxu0 0.0
    %8096 = vmatprep.subr.mxu0 0.0
    %8097 = vmatpush2.msra.mxu0 0.0
    %8098 = vmatprep.subr.mxu0 0.0
    %8099 = vmatpush2.msra.mxu0 0.0
    %8100 = vmatprep.subr.mxu0 0.0
    %8101 = vmatpush2.msra.mxu0 0.0
    %8102 = vmatprep.subr.mxu0 0.0
    %8103 = vmatpush2.msra.mxu0 0.0
    %8104 = vmatprep.subr.mxu0 0.0
    %8105 = vmatpush2.msra.mxu0 0.0
    %8106 = vmatprep.subr.mxu0 0.0
    %8107 = vmatpush2.msra.mxu0 0.0
    %8108 = vmatprep.subr.mxu0 0.0
    %8109 = vmatpush2.msra.mxu0 0.0
    %8110 = vmatprep.subr.mxu0 0.0
    %8111 = vmatpush2.msra.mxu0 0.0
    %8112 = vmatprep.subr.mxu0 0.0
    %8113 = vmatpush2.msra.mxu0 0.0
    %8114 = vmatprep.subr.mxu0 0.0
    %8115 = vmatpush2.msra.mxu0 0.0
    %8116 = vmatprep.subr.mxu0 0.0
    %8117 = vmatpush2.msra.mxu0 0.0
    %8118 = vmatprep.subr.mxu0 0.0
    %8119 = vmatpush2.msra.mxu0 0.0
    %8120 = vmatprep.subr.mxu0 0.0
    %8121 = vmatpush2.msra.mxu0 0.0
    %8122 = vmatprep.subr.mxu0 0.0
    %8123 = vmatpush2.msra.mxu0 0.0
    %8124 = vmatprep.mubr.f32.mxu0 0.0
    %8125 = vmatmul.mubr.f32.gmra.mxu0 %v8056
    %v8126 = vpop.f32.mrf.mxu0
    %v8127 = vadd.f32 0.0, %v8126
    %v8128 = vpop.f32.mrf.mxu0
    %8129 = vdwg.mxu0
    %s8130 = scalar_lea.vmem %s8, 32
    %v8131 = vld [vmem:[%s8130] sm:$0xff]
    %v8132 = vld [vmem:[%s8130 + $0x8] sm:$0xff]
    %s8133 = scalar_lea.vmem %s9, 2
    %v8134 = vld [vmem:[%s8133] sm:$0x1]
    %v8136 = vlaneseq
    %v8137 = vshrl.u32 %v8136, 7
    %v8138 = vsub.s32 0, %v8137
    %v8139 = vrot.slane %v8134, %v8138
    %v8142 = vsel %vm119, %v8052, 0
    %8144 = vmatprep.subr.mxu0 0.0
    %8145 = vmatpush1.msra.mxu0 0.0
    %8146 = vmatprep.subr.mxu0 0.0
    %8147 = vmatpush1.msra.mxu0 0.0
    %8148 = vmatprep.subr.mxu0 0.0
    %8149 = vmatpush1.msra.mxu0 0.0
    %8150 = vmatprep.subr.mxu0 0.0
    %8151 = vmatpush1.msra.mxu0 0.0
    %8152 = vmatprep.subr.mxu0 0.0
    %8153 = vmatpush1.msra.mxu0 0.0
    %8154 = vmatprep.subr.mxu0 0.0
    %8155 = vmatpush1.msra.mxu0 0.0
    %8156 = vmatprep.subr.mxu0 0.0
    %8157 = vmatpush1.msra.mxu0 0.0
    %8158 = vmatprep.subr.mxu0 0.0
    %8159 = vmatpush1.msra.mxu0 0.0
    %8160 = vmatprep.subr.mxu0 0.0
    %8161 = vmatpush1.msra.mxu0 0.0
    %8162 = vmatprep.subr.mxu0 0.0
    %8163 = vmatpush1.msra.mxu0 0.0
    %8164 = vmatprep.subr.mxu0 0.0
    %8165 = vmatpush1.msra.mxu0 0.0
    %8166 = vmatprep.subr.mxu0 0.0
    %8167 = vmatpush1.msra.mxu0 0.0
    %8168 = vmatprep.subr.mxu0 0.0
    %8169 = vmatpush1.msra.mxu0 0.0
    %8170 = vmatprep.subr.mxu0 0.0
    %8171 = vmatpush1.msra.mxu0 0.0
    %8172 = vmatprep.subr.mxu0 0.0
    %8173 = vmatpush1.msra.mxu0 %v8132
    %8174 = vmatprep.subr.mxu0 0.0
    %8175 = vmatpush1.msra.mxu0 %v8131
    %8176 = vmatprep.subr.mxu0 0.0
    %8177 = vmatpush2.msra.mxu0 0.0
    %8178 = vmatprep.subr.mxu0 0.0
    %8179 = vmatpush2.msra.mxu0 0.0
    %8180 = vmatprep.subr.mxu0 0.0
    %8181 = vmatpush2.msra.mxu0 0.0
    %8182 = vmatprep.subr.mxu0 0.0
    %8183 = vmatpush2.msra.mxu0 0.0
    %8184 = vmatprep.subr.mxu0 0.0
    %8185 = vmatpush2.msra.mxu0 0.0
    %8186 = vmatprep.subr.mxu0 0.0
    %8187 = vmatpush2.msra.mxu0 0.0
    %8188 = vmatprep.subr.mxu0 0.0
    %8189 = vmatpush2.msra.mxu0 0.0
    %8190 = vmatprep.subr.mxu0 0.0
    %8191 = vmatpush2.msra.mxu0 0.0
    %8192 = vmatprep.subr.mxu0 0.0
    %8193 = vmatpush2.msra.mxu0 0.0
    %8194 = vmatprep.subr.mxu0 0.0
    %8195 = vmatpush2.msra.mxu0 0.0
    %8196 = vmatprep.subr.mxu0 0.0
    %8197 = vmatpush2.msra.mxu0 0.0
    %8198 = vmatprep.subr.mxu0 0.0
    %8199 = vmatpush2.msra.mxu0 0.0
    %8200 = vmatprep.subr.mxu0 0.0
    %8201 = vmatpush2.msra.mxu0 0.0
    %8202 = vmatprep.subr.mxu0 0.0
    %8203 = vmatpush2.msra.mxu0 0.0
    %8204 = vmatprep.subr.mxu0 0.0
    %8205 = vmatpush2.msra.mxu0 0.0
    %8206 = vmatprep.subr.mxu0 0.0
    %8207 = vmatpush2.msra.mxu0 0.0
    %8208 = vmatprep.mubr.f32.mxu0 0.0
    %8209 = vmatmul.mubr.f32.gmra.mxu0 %v8142
    %v8210 = vpop.f32.mrf.mxu0
    %v8211 = vadd.f32 %v8139, %v8210
    %v8212 = vpop.f32.mrf.mxu0
    %8213 = vdwg.mxu0
    %v8215 = vsel %vm119, %v8127, 0
    %8217 = vmatprep.subr.mxu0 0.0
    %8218 = vmatpush1.msra.mxu0 0.0
    %8219 = vmatprep.subr.mxu0 0.0
    %8220 = vmatpush1.msra.mxu0 0.0
    %8221 = vmatprep.subr.mxu0 0.0
    %8222 = vmatpush1.msra.mxu0 0.0
    %8223 = vmatprep.subr.mxu0 0.0
    %8224 = vmatpush1.msra.mxu0 0.0
    %8225 = vmatprep.subr.mxu0 0.0
    %8226 = vmatpush1.msra.mxu0 0.0
    %8227 = vmatprep.subr.mxu0 0.0
    %8228 = vmatpush1.msra.mxu0 0.0
    %8229 = vmatprep.subr.mxu0 0.0
    %8230 = vmatpush1.msra.mxu0 0.0
    %8231 = vmatprep.subr.mxu0 0.0
    %8232 = vmatpush1.msra.mxu0 0.0
    %8233 = vmatprep.subr.mxu0 0.0
    %8234 = vmatpush1.msra.mxu0 0.0
    %8235 = vmatprep.subr.mxu0 0.0
    %8236 = vmatpush1.msra.mxu0 0.0
    %8237 = vmatprep.subr.mxu0 0.0
    %8238 = vmatpush1.msra.mxu0 0.0
    %8239 = vmatprep.subr.mxu0 0.0
    %8240 = vmatpush1.msra.mxu0 0.0
    %8241 = vmatprep.subr.mxu0 0.0
    %8242 = vmatpush1.msra.mxu0 0.0
    %8243 = vmatprep.subr.mxu0 0.0
    %8244 = vmatpush1.msra.mxu0 0.0
    %8245 = vmatprep.subr.mxu0 0.0
    %8246 = vmatpush1.msra.mxu0 %v8132
    %8247 = vmatprep.subr.mxu0 0.0
    %8248 = vmatpush1.msra.mxu0 %v8131
    %8249 = vmatprep.subr.mxu0 0.0
    %8250 = vmatpush2.msra.mxu0 0.0
    %8251 = vmatprep.subr.mxu0 0.0
    %8252 = vmatpush2.msra.mxu0 0.0
    %8253 = vmatprep.subr.mxu0 0.0
    %8254 = vmatpush2.msra.mxu0 0.0
    %8255 = vmatprep.subr.mxu0 0.0
    %8256 = vmatpush2.msra.mxu0 0.0
    %8257 = vmatprep.subr.mxu0 0.0
    %8258 = vmatpush2.msra.mxu0 0.0
    %8259 = vmatprep.subr.mxu0 0.0
    %8260 = vmatpush2.msra.mxu0 0.0
    %8261 = vmatprep.subr.mxu0 0.0
    %8262 = vmatpush2.msra.mxu0 0.0
    %8263 = vmatprep.subr.mxu0 0.0
    %8264 = vmatpush2.msra.mxu0 0.0
    %8265 = vmatprep.subr.mxu0 0.0
    %8266 = vmatpush2.msra.mxu0 0.0
    %8267 = vmatprep.subr.mxu0 0.0
    %8268 = vmatpush2.msra.mxu0 0.0
    %8269 = vmatprep.subr.mxu0 0.0
    %8270 = vmatpush2.msra.mxu0 0.0
    %8271 = vmatprep.subr.mxu0 0.0
    %8272 = vmatpush2.msra.mxu0 0.0
    %8273 = vmatprep.subr.mxu0 0.0
    %8274 = vmatpush2.msra.mxu0 0.0
    %8275 = vmatprep.subr.mxu0 0.0
    %8276 = vmatpush2.msra.mxu0 0.0
    %8277 = vmatprep.subr.mxu0 0.0
    %8278 = vmatpush2.msra.mxu0 0.0
    %8279 = vmatprep.subr.mxu0 0.0
    %8280 = vmatpush2.msra.mxu0 0.0
    %8281 = vmatprep.mubr.f32.mxu0 0.0
    %8282 = vmatmul.mubr.f32.gmra.mxu0 %v8215
    %v8283 = vpop.f32.mrf.mxu0
    %v8284 = vadd.f32 %v8139, %v8283
    %v8285 = vpop.f32.mrf.mxu0
    %8286 = vdwg.mxu0
    %v8287 = vmax.f32 %v8211, 0.0
    %v8288 = vmax.f32 %v8284, 0.0
    %v8289 = vsel %vm5117, %v8287, 0.0
    %v8290 = vrot.slane %v8289, 4
    %v8291 = vadd.f32 %v8289, %v8290
    %v8292 = vrot.slane %v8291, 2
    %v8293 = vadd.f32 %v8291, %v8292
    %v8294 = vrot.slane %v8293, 1
    %v8295 = vadd.f32 %v8293, %v8294
    %v8296 = vsel %vm5117, %v8288, 0.0
    %v8297 = vrot.slane %v8296, 4
    %v8298 = vadd.f32 %v8296, %v8297
    %v8299 = vrot.slane %v8298, 2
    %v8300 = vadd.f32 %v8298, %v8299
    %v8301 = vrot.slane %v8300, 1
    %v8302 = vadd.f32 %v8300, %v8301
    %v8303 = vmul.f32 %v8295, %v5132
    %v8304 = vmul.f32 %v8302, %v5132
    %v8305 = vsel %vm5117, %v8287, -inf
    %v8306 = vrot.slane %v8305, 4
    %v8307 = vmax.f32 %v8305, %v8306
    %v8308 = vrot.slane %v8307, 2
    %v8309 = vmax.f32 %v8307, %v8308
    %v8310 = vrot.slane %v8309, 1
    %v8311 = vmax.f32 %v8309, %v8310
    %v8312 = vsel %vm5117, %v8288, -inf
    %v8313 = vrot.slane %v8312, 4
    %v8314 = vmax.f32 %v8312, %v8313
    %v8315 = vrot.slane %v8314, 2
    %v8316 = vmax.f32 %v8314, %v8315
    %v8317 = vrot.slane %v8316, 1
    %v8318 = vmax.f32 %v8316, %v8317
    %v8319 = vmul.f32 %v5133, %v5133
    %v8320 = vmul.f32 %v5134, %v5134
    %v8321 = vmul.f32 %v5141, %v5141
    %v8322 = vmul.f32 %v5148, %v5148
    %v8323 = vadd.f32 %v8319, %v8321
    %v8324 = vadd.f32 %v8320, %v8322
    %vm8327 = vcmask 1041409
    %v8328 = vsel %vm8327, %v8324, %v8323
    %vm8330 = vcmask 123904
    %v8331 = vsel %vm8330, %v8328, 0.0
    %8332 = vadd.xlane.f32.xlu0 %v8331
    %v8333 = vpop.xlane.xlu0 %8332
    %v8334 = vmul.f32 %v8333, 0.17677669
    %v8335 = vmul.f32 %v5133, %v6718
    %v8336 = vmul.f32 %v5134, %v6719
    %v8337 = vmul.f32 %v5141, %v6726
    %v8338 = vmul.f32 %v5148, %v6733
    %v8339 = vadd.f32 %v8335, %v8337
    %v8340 = vadd.f32 %v8336, %v8338
    %v8343 = vsel %vm8327, %v8340, %v8339
    %v8345 = vsel %vm8330, %v8343, 0.0
    %8346 = vadd.xlane.f32.xlu0 %v8345
    %v8347 = vpop.xlane.xlu0 %8346
    %v8348 = vmul.f32 %v8347, 0.17677669
    %v8349 = vmul.f32 %v5133, %v8303
    %v8350 = vmul.f32 %v5134, %v8304
    %v8351 = vmul.f32 %v5141, %v8311
    %v8352 = vmul.f32 %v5148, %v8318
    %v8353 = vadd.f32 %v8349, %v8351
    %v8354 = vadd.f32 %v8350, %v8352
    %v8357 = vsel %vm8327, %v8354, %v8353
    %v8359 = vsel %vm8330, %v8357, 0.0
    %8360 = vadd.xlane.f32.xlu0 %v8359
    %v8361 = vpop.xlane.xlu0 %8360
    %v8362 = vmul.f32 %v8361, 0.17677669
    %v8363 = vmul.f32 %v6718, %v6718
    %v8364 = vmul.f32 %v6719, %v6719
    %v8365 = vmul.f32 %v6726, %v6726
    %v8366 = vmul.f32 %v6733, %v6733
    %v8367 = vadd.f32 %v8363, %v8365
    %v8368 = vadd.f32 %v8364, %v8366
    %v8371 = vsel %vm8327, %v8368, %v8367
    %v8373 = vsel %vm8330, %v8371, 0.0
    %8374 = vadd.xlane.f32.xlu0 %v8373
    %v8375 = vpop.xlane.xlu0 %8374
    %v8376 = vmul.f32 %v8375, 0.17677669
    %v8377 = vmul.f32 %v6718, %v8303
    %v8378 = vmul.f32 %v6719, %v8304
    %v8379 = vmul.f32 %v6726, %v8311
    %v8380 = vmul.f32 %v6733, %v8318
    %v8381 = vadd.f32 %v8377, %v8379
    %v8382 = vadd.f32 %v8378, %v8380
    %v8385 = vsel %vm8327, %v8382, %v8381
    %v8387 = vsel %vm8330, %v8385, 0.0
    %8388 = vadd.xlane.f32.xlu0 %v8387
    %v8389 = vpop.xlane.xlu0 %8388
    %v8390 = vmul.f32 %v8389, 0.17677669
    %v8391 = vmul.f32 %v8303, %v8303
    %v8392 = vmul.f32 %v8304, %v8304
    %v8393 = vmul.f32 %v8311, %v8311
    %v8394 = vmul.f32 %v8318, %v8318
    %v8395 = vadd.f32 %v8391, %v8393
    %v8396 = vadd.f32 %v8392, %v8394
    %v8399 = vsel %vm8327, %v8396, %v8395
    %v8401 = vsel %vm8330, %v8399, 0.0
    %8402 = vadd.xlane.f32.xlu0 %v8401
    %v8403 = vpop.xlane.xlu0 %8402
    %v8404 = vmul.f32 %v8403, 0.17677669
    %v8405 = vld [vmem:[%s10] sm:$0xff]
    %v8406 = vld [vmem:[%s10 + $0x8] sm:$0xff]
    %v8407 = vld [vmem:[%s10 + $0x10] sm:$0xff]
    %v8408 = vld [vmem:[%s10 + $0x18] sm:$0xff]
    %v8409 = vld [vmem:[%s10 + $0x20] sm:$0xff]
    %v8410 = vld [vmem:[%s10 + $0x28] sm:$0xff]
    %v8411 = vld [vmem:[%s10 + $0x30] sm:$0xff]
    %v8412 = vld [vmem:[%s10 + $0x38] sm:$0xff]
    %v8413 = vld [vmem:[%s10 + $0x40] sm:$0xff]
    %v8414 = vld [vmem:[%s10 + $0x48] sm:$0xff]
    %v8415 = vld [vmem:[%s10 + $0x50] sm:$0xff]
    %v8416 = vld [vmem:[%s10 + $0x58] sm:$0xff]
    %v8417 = vld [vmem:[%s11] sm:$0x1]
    %v8419 = vlaneseq
    %v8420 = vshrl.u32 %v8419, 7
    %v8421 = vsub.s32 0, %v8420
    %v8422 = vrot.slane %v8417, %v8421
    %v8424 = vadd.f32 %v8422, 0.0
    %v8425 = vsel %vm3875, %v8334, 0.0
    %v8426 = vadd.f32 %v8425, 0.0
    %v8427 = vsel %vm3896, %v8348, 0.0
    %v8428 = vadd.f32 %v8426, %v8427
    %v8429 = vsel %vm3917, %v8362, 0.0
    %v8430 = vadd.f32 %v8428, %v8429
    %vm8431 = vcmask 17408
    %v8432 = vsel %vm8431, %v8430, -inf
    %8433 = vmax.xlane.f32.xlu0 %v8432
    %v8434 = vpop.xlane.xlu0 %8433
    %v8435 = vsub.f32 %v8430, %v8434
    %v8436 = vmul.f32 %v8435, 1.442695
    %v8437 = vpow.pop %v8436
    %v8438 = vsel %vm8431, %v8437, 0.0
    %8439 = vadd.xlane.f32.xlu0 %v8438
    %v8440 = vpop.xlane.xlu0 %8439
    %v8441 = vrcp.pop %v8440
    %v8442 = vmul.f32 %v8437, %v8441
    %8444 = vset.pattern.permute.xlu0 0
    %8445 = vperm.xlu0 %8444, %v8442
    %v8446 = vpop.permute.xlu0 %8445
    %v8450 = vsel %vm8327, %v5134, %v5133
    %v8452 = vmul.f32 %v8446, %v8450
    %v8453 = vadd.f32 %v8452, 0.0
    %8454 = vset.pattern.permute.xlu0 1
    %8455 = vperm.xlu0 %8454, %v8442
    %v8456 = vpop.permute.xlu0 %8455
    %v8460 = vsel %vm8327, %v6719, %v6718
    %v8462 = vmul.f32 %v8456, %v8460
    %v8463 = vadd.f32 %v8453, %v8462
    %8464 = vset.pattern.permute.xlu0 2
    %8465 = vperm.xlu0 %8464, %v8442
    %v8466 = vpop.permute.xlu0 %8465
    %v8470 = vsel %vm8327, %v8304, %v8303
    %v8472 = vmul.f32 %v8466, %v8470
    %v8473 = vadd.f32 %v8463, %v8472
    %v8476 = vsel %vm8327, %v5148, %v5141
    %v8478 = vmul.f32 %v8446, %v8476
    %v8479 = vadd.f32 %v8478, 0.0
    %v8482 = vsel %vm8327, %v6733, %v6726
    %v8484 = vmul.f32 %v8456, %v8482
    %v8485 = vadd.f32 %v8479, %v8484
    %v8488 = vsel %vm8327, %v8318, %v8311
    %v8490 = vmul.f32 %v8466, %v8488
    %v8491 = vadd.f32 %v8485, %v8490
    %v8493 = vsel %vm119, %v8473, 0
    %8495 = vmatprep.subr.mxu0 0.0
    %8496 = vmatpush1.msra.mxu0 0.0
    %8497 = vmatprep.subr.mxu0 0.0
    %8498 = vmatpush1.msra.mxu0 0.0
    %8499 = vmatprep.subr.mxu0 0.0
    %8500 = vmatpush1.msra.mxu0 0.0
    %8501 = vmatprep.subr.mxu0 0.0
    %8502 = vmatpush1.msra.mxu0 0.0
    %8503 = vmatprep.subr.mxu0 0.0
    %8504 = vmatpush1.msra.mxu0 0.0
    %8505 = vmatprep.subr.mxu0 0.0
    %8506 = vmatpush1.msra.mxu0 0.0
    %8507 = vmatprep.subr.mxu0 0.0
    %8508 = vmatpush1.msra.mxu0 0.0
    %8509 = vmatprep.subr.mxu0 0.0
    %8510 = vmatpush1.msra.mxu0 0.0
    %8511 = vmatprep.subr.mxu0 0.0
    %8512 = vmatpush1.msra.mxu0 0.0
    %8513 = vmatprep.subr.mxu0 0.0
    %8514 = vmatpush1.msra.mxu0 0.0
    %8515 = vmatprep.subr.mxu0 0.0
    %8516 = vmatpush1.msra.mxu0 0.0
    %8517 = vmatprep.subr.mxu0 0.0
    %8518 = vmatpush1.msra.mxu0 0.0
    %8519 = vmatprep.subr.mxu0 0.0
    %8520 = vmatpush1.msra.mxu0 0.0
    %8521 = vmatprep.subr.mxu0 0.0
    %8522 = vmatpush1.msra.mxu0 0.0
    %8523 = vmatprep.subr.mxu0 0.0
    %8524 = vmatpush1.msra.mxu0 %v8406
    %8525 = vmatprep.subr.mxu0 0.0
    %8526 = vmatpush1.msra.mxu0 %v8405
    %8527 = vmatprep.subr.mxu0 0.0
    %8528 = vmatpush2.msra.mxu0 0.0
    %8529 = vmatprep.subr.mxu0 0.0
    %8530 = vmatpush2.msra.mxu0 0.0
    %8531 = vmatprep.subr.mxu0 0.0
    %8532 = vmatpush2.msra.mxu0 0.0
    %8533 = vmatprep.subr.mxu0 0.0
    %8534 = vmatpush2.msra.mxu0 0.0
    %8535 = vmatprep.subr.mxu0 0.0
    %8536 = vmatpush2.msra.mxu0 0.0
    %8537 = vmatprep.subr.mxu0 0.0
    %8538 = vmatpush2.msra.mxu0 0.0
    %8539 = vmatprep.subr.mxu0 0.0
    %8540 = vmatpush2.msra.mxu0 0.0
    %8541 = vmatprep.subr.mxu0 0.0
    %8542 = vmatpush2.msra.mxu0 0.0
    %8543 = vmatprep.subr.mxu0 0.0
    %8544 = vmatpush2.msra.mxu0 0.0
    %8545 = vmatprep.subr.mxu0 0.0
    %8546 = vmatpush2.msra.mxu0 0.0
    %8547 = vmatprep.subr.mxu0 0.0
    %8548 = vmatpush2.msra.mxu0 0.0
    %8549 = vmatprep.subr.mxu0 0.0
    %8550 = vmatpush2.msra.mxu0 0.0
    %8551 = vmatprep.subr.mxu0 0.0
    %8552 = vmatpush2.msra.mxu0 0.0
    %8553 = vmatprep.subr.mxu0 0.0
    %8554 = vmatpush2.msra.mxu0 0.0
    %8555 = vmatprep.subr.mxu0 0.0
    %8556 = vmatpush2.msra.mxu0 0.0
    %8557 = vmatprep.subr.mxu0 0.0
    %8558 = vmatpush2.msra.mxu0 0.0
    %8559 = vmatprep.mubr.f32.mxu0 0.0
    %8560 = vmatmul.mubr.f32.gmra.mxu0 %v8493
    %v8561 = vpop.f32.mrf.mxu0
    %v8562 = vadd.f32 0.0, %v8561
    %v8563 = vpop.f32.mrf.mxu0
    %8564 = vdwg.mxu0
    %v8565 = vadd.f32 %v8424, %v8562
    %v8567 = vsel %vm119, %v8491, 0
    %8569 = vmatprep.subr.mxu0 0.0
    %8570 = vmatpush1.msra.mxu0 0.0
    %8571 = vmatprep.subr.mxu0 0.0
    %8572 = vmatpush1.msra.mxu0 0.0
    %8573 = vmatprep.subr.mxu0 0.0
    %8574 = vmatpush1.msra.mxu0 0.0
    %8575 = vmatprep.subr.mxu0 0.0
    %8576 = vmatpush1.msra.mxu0 0.0
    %8577 = vmatprep.subr.mxu0 0.0
    %8578 = vmatpush1.msra.mxu0 0.0
    %8579 = vmatprep.subr.mxu0 0.0
    %8580 = vmatpush1.msra.mxu0 0.0
    %8581 = vmatprep.subr.mxu0 0.0
    %8582 = vmatpush1.msra.mxu0 0.0
    %8583 = vmatprep.subr.mxu0 0.0
    %8584 = vmatpush1.msra.mxu0 0.0
    %8585 = vmatprep.subr.mxu0 0.0
    %8586 = vmatpush1.msra.mxu0 0.0
    %8587 = vmatprep.subr.mxu0 0.0
    %8588 = vmatpush1.msra.mxu0 0.0
    %8589 = vmatprep.subr.mxu0 0.0
    %8590 = vmatpush1.msra.mxu0 0.0
    %8591 = vmatprep.subr.mxu0 0.0
    %8592 = vmatpush1.msra.mxu0 0.0
    %8593 = vmatprep.subr.mxu0 0.0
    %8594 = vmatpush1.msra.mxu0 0.0
    %8595 = vmatprep.subr.mxu0 0.0
    %8596 = vmatpush1.msra.mxu0 0.0
    %8597 = vmatprep.subr.mxu0 0.0
    %8598 = vmatpush1.msra.mxu0 %v8408
    %8599 = vmatprep.subr.mxu0 0.0
    %8600 = vmatpush1.msra.mxu0 %v8407
    %8601 = vmatprep.subr.mxu0 0.0
    %8602 = vmatpush2.msra.mxu0 0.0
    %8603 = vmatprep.subr.mxu0 0.0
    %8604 = vmatpush2.msra.mxu0 0.0
    %8605 = vmatprep.subr.mxu0 0.0
    %8606 = vmatpush2.msra.mxu0 0.0
    %8607 = vmatprep.subr.mxu0 0.0
    %8608 = vmatpush2.msra.mxu0 0.0
    %8609 = vmatprep.subr.mxu0 0.0
    %8610 = vmatpush2.msra.mxu0 0.0
    %8611 = vmatprep.subr.mxu0 0.0
    %8612 = vmatpush2.msra.mxu0 0.0
    %8613 = vmatprep.subr.mxu0 0.0
    %8614 = vmatpush2.msra.mxu0 0.0
    %8615 = vmatprep.subr.mxu0 0.0
    %8616 = vmatpush2.msra.mxu0 0.0
    %8617 = vmatprep.subr.mxu0 0.0
    %8618 = vmatpush2.msra.mxu0 0.0
    %8619 = vmatprep.subr.mxu0 0.0
    %8620 = vmatpush2.msra.mxu0 0.0
    %8621 = vmatprep.subr.mxu0 0.0
    %8622 = vmatpush2.msra.mxu0 0.0
    %8623 = vmatprep.subr.mxu0 0.0
    %8624 = vmatpush2.msra.mxu0 0.0
    %8625 = vmatprep.subr.mxu0 0.0
    %8626 = vmatpush2.msra.mxu0 0.0
    %8627 = vmatprep.subr.mxu0 0.0
    %8628 = vmatpush2.msra.mxu0 0.0
    %8629 = vmatprep.subr.mxu0 0.0
    %8630 = vmatpush2.msra.mxu0 0.0
    %8631 = vmatprep.subr.mxu0 0.0
    %8632 = vmatpush2.msra.mxu0 0.0
    %8633 = vmatprep.mubr.f32.mxu0 0.0
    %8634 = vmatmul.mubr.f32.gmra.mxu0 %v8567
    %v8635 = vpop.f32.mrf.mxu0
    %v8636 = vadd.f32 0.0, %v8635
    %v8637 = vpop.f32.mrf.mxu0
    %8638 = vdwg.mxu0
    %v8639 = vadd.f32 %v8565, %v8636
    %v8640 = vsel %vm3875, %v8348, 0.0
    %v8641 = vadd.f32 %v8640, 0.0
    %v8642 = vsel %vm3896, %v8376, 0.0
    %v8643 = vadd.f32 %v8641, %v8642
    %v8644 = vsel %vm3917, %v8390, 0.0
    %v8645 = vadd.f32 %v8643, %v8644
    %v8646 = vsel %vm8431, %v8645, -inf
    %8647 = vmax.xlane.f32.xlu0 %v8646
    %v8648 = vpop.xlane.xlu0 %8647
    %v8649 = vsub.f32 %v8645, %v8648
    %v8650 = vmul.f32 %v8649, 1.442695
    %v8651 = vpow.pop %v8650
    %v8652 = vsel %vm8431, %v8651, 0.0
    %8653 = vadd.xlane.f32.xlu0 %v8652
    %v8654 = vpop.xlane.xlu0 %8653
    %v8655 = vrcp.pop %v8654
    %v8656 = vmul.f32 %v8651, %v8655
    %8658 = vset.pattern.permute.xlu0 0
    %8659 = vperm.xlu0 %8658, %v8656
    %v8660 = vpop.permute.xlu0 %8659
    %v8662 = vmul.f32 %v8660, %v8450
    %v8663 = vadd.f32 %v8662, 0.0
    %8664 = vset.pattern.permute.xlu0 1
    %8665 = vperm.xlu0 %8664, %v8656
    %v8666 = vpop.permute.xlu0 %8665
    %v8668 = vmul.f32 %v8666, %v8460
    %v8669 = vadd.f32 %v8663, %v8668
    %8670 = vset.pattern.permute.xlu0 2
    %8671 = vperm.xlu0 %8670, %v8656
    %v8672 = vpop.permute.xlu0 %8671
    %v8674 = vmul.f32 %v8672, %v8470
    %v8675 = vadd.f32 %v8669, %v8674
    %v8676 = vmul.f32 %v8660, %v8476
    %v8677 = vadd.f32 %v8676, 0.0
    %v8678 = vmul.f32 %v8666, %v8482
    %v8679 = vadd.f32 %v8677, %v8678
    %v8680 = vmul.f32 %v8672, %v8488
    %v8681 = vadd.f32 %v8679, %v8680
    %v8683 = vsel %vm119, %v8675, 0
    %8685 = vmatprep.subr.mxu0 0.0
    %8686 = vmatpush1.msra.mxu0 0.0
    %8687 = vmatprep.subr.mxu0 0.0
    %8688 = vmatpush1.msra.mxu0 0.0
    %8689 = vmatprep.subr.mxu0 0.0
    %8690 = vmatpush1.msra.mxu0 0.0
    %8691 = vmatprep.subr.mxu0 0.0
    %8692 = vmatpush1.msra.mxu0 0.0
    %8693 = vmatprep.subr.mxu0 0.0
    %8694 = vmatpush1.msra.mxu0 0.0
    %8695 = vmatprep.subr.mxu0 0.0
    %8696 = vmatpush1.msra.mxu0 0.0
    %8697 = vmatprep.subr.mxu0 0.0
    %8698 = vmatpush1.msra.mxu0 0.0
    %8699 = vmatprep.subr.mxu0 0.0
    %8700 = vmatpush1.msra.mxu0 0.0
    %8701 = vmatprep.subr.mxu0 0.0
    %8702 = vmatpush1.msra.mxu0 0.0
    %8703 = vmatprep.subr.mxu0 0.0
    %8704 = vmatpush1.msra.mxu0 0.0
    %8705 = vmatprep.subr.mxu0 0.0
    %8706 = vmatpush1.msra.mxu0 0.0
    %8707 = vmatprep.subr.mxu0 0.0
    %8708 = vmatpush1.msra.mxu0 0.0
    %8709 = vmatprep.subr.mxu0 0.0
    %8710 = vmatpush1.msra.mxu0 0.0
    %8711 = vmatprep.subr.mxu0 0.0
    %8712 = vmatpush1.msra.mxu0 0.0
    %8713 = vmatprep.subr.mxu0 0.0
    %8714 = vmatpush1.msra.mxu0 %v8410
    %8715 = vmatprep.subr.mxu0 0.0
    %8716 = vmatpush1.msra.mxu0 %v8409
    %8717 = vmatprep.subr.mxu0 0.0
    %8718 = vmatpush2.msra.mxu0 0.0
    %8719 = vmatprep.subr.mxu0 0.0
    %8720 = vmatpush2.msra.mxu0 0.0
    %8721 = vmatprep.subr.mxu0 0.0
    %8722 = vmatpush2.msra.mxu0 0.0
    %8723 = vmatprep.subr.mxu0 0.0
    %8724 = vmatpush2.msra.mxu0 0.0
    %8725 = vmatprep.subr.mxu0 0.0
    %8726 = vmatpush2.msra.mxu0 0.0
    %8727 = vmatprep.subr.mxu0 0.0
    %8728 = vmatpush2.msra.mxu0 0.0
    %8729 = vmatprep.subr.mxu0 0.0
    %8730 = vmatpush2.msra.mxu0 0.0
    %8731 = vmatprep.subr.mxu0 0.0
    %8732 = vmatpush2.msra.mxu0 0.0
    %8733 = vmatprep.subr.mxu0 0.0
    %8734 = vmatpush2.msra.mxu0 0.0
    %8735 = vmatprep.subr.mxu0 0.0
    %8736 = vmatpush2.msra.mxu0 0.0
    %8737 = vmatprep.subr.mxu0 0.0
    %8738 = vmatpush2.msra.mxu0 0.0
    %8739 = vmatprep.subr.mxu0 0.0
    %8740 = vmatpush2.msra.mxu0 0.0
    %8741 = vmatprep.subr.mxu0 0.0
    %8742 = vmatpush2.msra.mxu0 0.0
    %8743 = vmatprep.subr.mxu0 0.0
    %8744 = vmatpush2.msra.mxu0 0.0
    %8745 = vmatprep.subr.mxu0 0.0
    %8746 = vmatpush2.msra.mxu0 0.0
    %8747 = vmatprep.subr.mxu0 0.0
    %8748 = vmatpush2.msra.mxu0 0.0
    %8749 = vmatprep.mubr.f32.mxu0 0.0
    %8750 = vmatmul.mubr.f32.gmra.mxu0 %v8683
    %v8751 = vpop.f32.mrf.mxu0
    %v8752 = vadd.f32 0.0, %v8751
    %v8753 = vpop.f32.mrf.mxu0
    %8754 = vdwg.mxu0
    %v8755 = vadd.f32 %v8639, %v8752
    %v8757 = vsel %vm119, %v8681, 0
    %8759 = vmatprep.subr.mxu0 0.0
    %8760 = vmatpush1.msra.mxu0 0.0
    %8761 = vmatprep.subr.mxu0 0.0
    %8762 = vmatpush1.msra.mxu0 0.0
    %8763 = vmatprep.subr.mxu0 0.0
    %8764 = vmatpush1.msra.mxu0 0.0
    %8765 = vmatprep.subr.mxu0 0.0
    %8766 = vmatpush1.msra.mxu0 0.0
    %8767 = vmatprep.subr.mxu0 0.0
    %8768 = vmatpush1.msra.mxu0 0.0
    %8769 = vmatprep.subr.mxu0 0.0
    %8770 = vmatpush1.msra.mxu0 0.0
    %8771 = vmatprep.subr.mxu0 0.0
    %8772 = vmatpush1.msra.mxu0 0.0
    %8773 = vmatprep.subr.mxu0 0.0
    %8774 = vmatpush1.msra.mxu0 0.0
    %8775 = vmatprep.subr.mxu0 0.0
    %8776 = vmatpush1.msra.mxu0 0.0
    %8777 = vmatprep.subr.mxu0 0.0
    %8778 = vmatpush1.msra.mxu0 0.0
    %8779 = vmatprep.subr.mxu0 0.0
    %8780 = vmatpush1.msra.mxu0 0.0
    %8781 = vmatprep.subr.mxu0 0.0
    %8782 = vmatpush1.msra.mxu0 0.0
    %8783 = vmatprep.subr.mxu0 0.0
    %8784 = vmatpush1.msra.mxu0 0.0
    %8785 = vmatprep.subr.mxu0 0.0
    %8786 = vmatpush1.msra.mxu0 0.0
    %8787 = vmatprep.subr.mxu0 0.0
    %8788 = vmatpush1.msra.mxu0 %v8412
    %8789 = vmatprep.subr.mxu0 0.0
    %8790 = vmatpush1.msra.mxu0 %v8411
    %8791 = vmatprep.subr.mxu0 0.0
    %8792 = vmatpush2.msra.mxu0 0.0
    %8793 = vmatprep.subr.mxu0 0.0
    %8794 = vmatpush2.msra.mxu0 0.0
    %8795 = vmatprep.subr.mxu0 0.0
    %8796 = vmatpush2.msra.mxu0 0.0
    %8797 = vmatprep.subr.mxu0 0.0
    %8798 = vmatpush2.msra.mxu0 0.0
    %8799 = vmatprep.subr.mxu0 0.0
    %8800 = vmatpush2.msra.mxu0 0.0
    %8801 = vmatprep.subr.mxu0 0.0
    %8802 = vmatpush2.msra.mxu0 0.0
    %8803 = vmatprep.subr.mxu0 0.0
    %8804 = vmatpush2.msra.mxu0 0.0
    %8805 = vmatprep.subr.mxu0 0.0
    %8806 = vmatpush2.msra.mxu0 0.0
    %8807 = vmatprep.subr.mxu0 0.0
    %8808 = vmatpush2.msra.mxu0 0.0
    %8809 = vmatprep.subr.mxu0 0.0
    %8810 = vmatpush2.msra.mxu0 0.0
    %8811 = vmatprep.subr.mxu0 0.0
    %8812 = vmatpush2.msra.mxu0 0.0
    %8813 = vmatprep.subr.mxu0 0.0
    %8814 = vmatpush2.msra.mxu0 0.0
    %8815 = vmatprep.subr.mxu0 0.0
    %8816 = vmatpush2.msra.mxu0 0.0
    %8817 = vmatprep.subr.mxu0 0.0
    %8818 = vmatpush2.msra.mxu0 0.0
    %8819 = vmatprep.subr.mxu0 0.0
    %8820 = vmatpush2.msra.mxu0 0.0
    %8821 = vmatprep.subr.mxu0 0.0
    %8822 = vmatpush2.msra.mxu0 0.0
    %8823 = vmatprep.mubr.f32.mxu0 0.0
    %8824 = vmatmul.mubr.f32.gmra.mxu0 %v8757
    %v8825 = vpop.f32.mrf.mxu0
    %v8826 = vadd.f32 0.0, %v8825
    %v8827 = vpop.f32.mrf.mxu0
    %8828 = vdwg.mxu0
    %v8829 = vadd.f32 %v8755, %v8826
    %v8830 = vsel %vm3875, %v8362, 0.0
    %v8831 = vadd.f32 %v8830, 0.0
    %v8832 = vsel %vm3896, %v8390, 0.0
    %v8833 = vadd.f32 %v8831, %v8832
    %v8834 = vsel %vm3917, %v8404, 0.0
    %v8835 = vadd.f32 %v8833, %v8834
    %v8836 = vsel %vm8431, %v8835, -inf
    %8837 = vmax.xlane.f32.xlu0 %v8836
    %v8838 = vpop.xlane.xlu0 %8837
    %v8839 = vsub.f32 %v8835, %v8838
    %v8840 = vmul.f32 %v8839, 1.442695
    %v8841 = vpow.pop %v8840
    %v8842 = vsel %vm8431, %v8841, 0.0
    %8843 = vadd.xlane.f32.xlu0 %v8842
    %v8844 = vpop.xlane.xlu0 %8843
    %v8845 = vrcp.pop %v8844
    %v8846 = vmul.f32 %v8841, %v8845
    %8848 = vset.pattern.permute.xlu0 0
    %8849 = vperm.xlu0 %8848, %v8846
    %v8850 = vpop.permute.xlu0 %8849
    %v8852 = vmul.f32 %v8850, %v8450
    %v8853 = vadd.f32 %v8852, 0.0
    %8854 = vset.pattern.permute.xlu0 1
    %8855 = vperm.xlu0 %8854, %v8846
    %v8856 = vpop.permute.xlu0 %8855
    %v8858 = vmul.f32 %v8856, %v8460
    %v8859 = vadd.f32 %v8853, %v8858
    %8860 = vset.pattern.permute.xlu0 2
    %8861 = vperm.xlu0 %8860, %v8846
    %v8862 = vpop.permute.xlu0 %8861
    %v8864 = vmul.f32 %v8862, %v8470
    %v8865 = vadd.f32 %v8859, %v8864
    %v8866 = vmul.f32 %v8850, %v8476
    %v8867 = vadd.f32 %v8866, 0.0
    %v8868 = vmul.f32 %v8856, %v8482
    %v8869 = vadd.f32 %v8867, %v8868
    %v8870 = vmul.f32 %v8862, %v8488
    %v8871 = vadd.f32 %v8869, %v8870
    %v8873 = vsel %vm119, %v8865, 0
    %8875 = vmatprep.subr.mxu0 0.0
    %8876 = vmatpush1.msra.mxu0 0.0
    %8877 = vmatprep.subr.mxu0 0.0
    %8878 = vmatpush1.msra.mxu0 0.0
    %8879 = vmatprep.subr.mxu0 0.0
    %8880 = vmatpush1.msra.mxu0 0.0
    %8881 = vmatprep.subr.mxu0 0.0
    %8882 = vmatpush1.msra.mxu0 0.0
    %8883 = vmatprep.subr.mxu0 0.0
    %8884 = vmatpush1.msra.mxu0 0.0
    %8885 = vmatprep.subr.mxu0 0.0
    %8886 = vmatpush1.msra.mxu0 0.0
    %8887 = vmatprep.subr.mxu0 0.0
    %8888 = vmatpush1.msra.mxu0 0.0
    %8889 = vmatprep.subr.mxu0 0.0
    %8890 = vmatpush1.msra.mxu0 0.0
    %8891 = vmatprep.subr.mxu0 0.0
    %8892 = vmatpush1.msra.mxu0 0.0
    %8893 = vmatprep.subr.mxu0 0.0
    %8894 = vmatpush1.msra.mxu0 0.0
    %8895 = vmatprep.subr.mxu0 0.0
    %8896 = vmatpush1.msra.mxu0 0.0
    %8897 = vmatprep.subr.mxu0 0.0
    %8898 = vmatpush1.msra.mxu0 0.0
    %8899 = vmatprep.subr.mxu0 0.0
    %8900 = vmatpush1.msra.mxu0 0.0
    %8901 = vmatprep.subr.mxu0 0.0
    %8902 = vmatpush1.msra.mxu0 0.0
    %8903 = vmatprep.subr.mxu0 0.0
    %8904 = vmatpush1.msra.mxu0 %v8414
    %8905 = vmatprep.subr.mxu0 0.0
    %8906 = vmatpush1.msra.mxu0 %v8413
    %8907 = vmatprep.subr.mxu0 0.0
    %8908 = vmatpush2.msra.mxu0 0.0
    %8909 = vmatprep.subr.mxu0 0.0
    %8910 = vmatpush2.msra.mxu0 0.0
    %8911 = vmatprep.subr.mxu0 0.0
    %8912 = vmatpush2.msra.mxu0 0.0
    %8913 = vmatprep.subr.mxu0 0.0
    %8914 = vmatpush2.msra.mxu0 0.0
    %8915 = vmatprep.subr.mxu0 0.0
    %8916 = vmatpush2.msra.mxu0 0.0
    %8917 = vmatprep.subr.mxu0 0.0
    %8918 = vmatpush2.msra.mxu0 0.0
    %8919 = vmatprep.subr.mxu0 0.0
    %8920 = vmatpush2.msra.mxu0 0.0
    %8921 = vmatprep.subr.mxu0 0.0
    %8922 = vmatpush2.msra.mxu0 0.0
    %8923 = vmatprep.subr.mxu0 0.0
    %8924 = vmatpush2.msra.mxu0 0.0
    %8925 = vmatprep.subr.mxu0 0.0
    %8926 = vmatpush2.msra.mxu0 0.0
    %8927 = vmatprep.subr.mxu0 0.0
    %8928 = vmatpush2.msra.mxu0 0.0
    %8929 = vmatprep.subr.mxu0 0.0
    %8930 = vmatpush2.msra.mxu0 0.0
    %8931 = vmatprep.subr.mxu0 0.0
    %8932 = vmatpush2.msra.mxu0 0.0
    %8933 = vmatprep.subr.mxu0 0.0
    %8934 = vmatpush2.msra.mxu0 0.0
    %8935 = vmatprep.subr.mxu0 0.0
    %8936 = vmatpush2.msra.mxu0 0.0
    %8937 = vmatprep.subr.mxu0 0.0
    %8938 = vmatpush2.msra.mxu0 0.0
    %8939 = vmatprep.mubr.f32.mxu0 0.0
    %8940 = vmatmul.mubr.f32.gmra.mxu0 %v8873
    %v8941 = vpop.f32.mrf.mxu0
    %v8942 = vadd.f32 0.0, %v8941
    %v8943 = vpop.f32.mrf.mxu0
    %8944 = vdwg.mxu0
    %v8945 = vadd.f32 %v8829, %v8942
    %v8947 = vsel %vm119, %v8871, 0
    %8949 = vmatprep.subr.mxu0 0.0
    %8950 = vmatpush1.msra.mxu0 0.0
    %8951 = vmatprep.subr.mxu0 0.0
    %8952 = vmatpush1.msra.mxu0 0.0
    %8953 = vmatprep.subr.mxu0 0.0
    %8954 = vmatpush1.msra.mxu0 0.0
    %8955 = vmatprep.subr.mxu0 0.0
    %8956 = vmatpush1.msra.mxu0 0.0
    %8957 = vmatprep.subr.mxu0 0.0
    %8958 = vmatpush1.msra.mxu0 0.0
    %8959 = vmatprep.subr.mxu0 0.0
    %8960 = vmatpush1.msra.mxu0 0.0
    %8961 = vmatprep.subr.mxu0 0.0
    %8962 = vmatpush1.msra.mxu0 0.0
    %8963 = vmatprep.subr.mxu0 0.0
    %8964 = vmatpush1.msra.mxu0 0.0
    %8965 = vmatprep.subr.mxu0 0.0
    %8966 = vmatpush1.msra.mxu0 0.0
    %8967 = vmatprep.subr.mxu0 0.0
    %8968 = vmatpush1.msra.mxu0 0.0
    %8969 = vmatprep.subr.mxu0 0.0
    %8970 = vmatpush1.msra.mxu0 0.0
    %8971 = vmatprep.subr.mxu0 0.0
    %8972 = vmatpush1.msra.mxu0 0.0
    %8973 = vmatprep.subr.mxu0 0.0
    %8974 = vmatpush1.msra.mxu0 0.0
    %8975 = vmatprep.subr.mxu0 0.0
    %8976 = vmatpush1.msra.mxu0 0.0
    %8977 = vmatprep.subr.mxu0 0.0
    %8978 = vmatpush1.msra.mxu0 %v8416
    %8979 = vmatprep.subr.mxu0 0.0
    %8980 = vmatpush1.msra.mxu0 %v8415
    %8981 = vmatprep.subr.mxu0 0.0
    %8982 = vmatpush2.msra.mxu0 0.0
    %8983 = vmatprep.subr.mxu0 0.0
    %8984 = vmatpush2.msra.mxu0 0.0
    %8985 = vmatprep.subr.mxu0 0.0
    %8986 = vmatpush2.msra.mxu0 0.0
    %8987 = vmatprep.subr.mxu0 0.0
    %8988 = vmatpush2.msra.mxu0 0.0
    %8989 = vmatprep.subr.mxu0 0.0
    %8990 = vmatpush2.msra.mxu0 0.0
    %8991 = vmatprep.subr.mxu0 0.0
    %8992 = vmatpush2.msra.mxu0 0.0
    %8993 = vmatprep.subr.mxu0 0.0
    %8994 = vmatpush2.msra.mxu0 0.0
    %8995 = vmatprep.subr.mxu0 0.0
    %8996 = vmatpush2.msra.mxu0 0.0
    %8997 = vmatprep.subr.mxu0 0.0
    %8998 = vmatpush2.msra.mxu0 0.0
    %8999 = vmatprep.subr.mxu0 0.0
    %9000 = vmatpush2.msra.mxu0 0.0
    %9001 = vmatprep.subr.mxu0 0.0
    %9002 = vmatpush2.msra.mxu0 0.0
    %9003 = vmatprep.subr.mxu0 0.0
    %9004 = vmatpush2.msra.mxu0 0.0
    %9005 = vmatprep.subr.mxu0 0.0
    %9006 = vmatpush2.msra.mxu0 0.0
    %9007 = vmatprep.subr.mxu0 0.0
    %9008 = vmatpush2.msra.mxu0 0.0
    %9009 = vmatprep.subr.mxu0 0.0
    %9010 = vmatpush2.msra.mxu0 0.0
    %9011 = vmatprep.subr.mxu0 0.0
    %9012 = vmatpush2.msra.mxu0 0.0
    %9013 = vmatprep.mubr.f32.mxu0 0.0
    %9014 = vmatmul.mubr.f32.gmra.mxu0 %v8947
    %v9015 = vpop.f32.mrf.mxu0
    %v9016 = vadd.f32 0.0, %v9015
    %v9017 = vpop.f32.mrf.mxu0
    %9018 = vdwg.mxu0
    %v9019 = vadd.f32 %v8945, %v9016
    %v9020 = vtanh.pop %v9019
    %v9021 = vld [vmem:[%s12] sm:$0xff]
    %v9022 = vld [vmem:[%s12 + $0x8] sm:$0xff]
    %v9023 = vld [vmem:[%s12 + $0x10] sm:$0xff]
    %v9024 = vld [vmem:[%s12 + $0x18] sm:$0xff]
    %v9025 = vld [vmem:[#allocation2] sm:$0x1]
    %v9027 = vlaneseq
    %v9028 = vshrl.u32 %v9027, 7
    %v9029 = vsub.s32 0, %v9028
    %v9030 = vrot.slane %v9025, %v9029
    %v9033 = vsel %vm380, %v9020, 0
    %9035 = vmatprep.subr.mxu0 0.0
    %9036 = vmatpush1.msra.mxu0 0.0
    %9037 = vmatprep.subr.mxu0 0.0
    %9038 = vmatpush1.msra.mxu0 0.0
    %9039 = vmatprep.subr.mxu0 0.0
    %9040 = vmatpush1.msra.mxu0 0.0
    %9041 = vmatprep.subr.mxu0 0.0
    %9042 = vmatpush1.msra.mxu0 0.0
    %9043 = vmatprep.subr.mxu0 0.0
    %9044 = vmatpush1.msra.mxu0 0.0
    %9045 = vmatprep.subr.mxu0 0.0
    %9046 = vmatpush1.msra.mxu0 0.0
    %9047 = vmatprep.subr.mxu0 0.0
    %9048 = vmatpush1.msra.mxu0 0.0
    %9049 = vmatprep.subr.mxu0 0.0
    %9050 = vmatpush1.msra.mxu0 0.0
    %9051 = vmatprep.subr.mxu0 0.0
    %9052 = vmatpush1.msra.mxu0 0.0
    %9053 = vmatprep.subr.mxu0 0.0
    %9054 = vmatpush1.msra.mxu0 0.0
    %9055 = vmatprep.subr.mxu0 0.0
    %9056 = vmatpush1.msra.mxu0 0.0
    %9057 = vmatprep.subr.mxu0 0.0
    %9058 = vmatpush1.msra.mxu0 0.0
    %9059 = vmatprep.subr.mxu0 0.0
    %9060 = vmatpush1.msra.mxu0 %v9024
    %9061 = vmatprep.subr.mxu0 0.0
    %9062 = vmatpush1.msra.mxu0 %v9023
    %9063 = vmatprep.subr.mxu0 0.0
    %9064 = vmatpush1.msra.mxu0 %v9022
    %9065 = vmatprep.subr.mxu0 0.0
    %9066 = vmatpush1.msra.mxu0 %v9021
    %9067 = vmatprep.subr.mxu0 0.0
    %9068 = vmatpush2.msra.mxu0 0.0
    %9069 = vmatprep.subr.mxu0 0.0
    %9070 = vmatpush2.msra.mxu0 0.0
    %9071 = vmatprep.subr.mxu0 0.0
    %9072 = vmatpush2.msra.mxu0 0.0
    %9073 = vmatprep.subr.mxu0 0.0
    %9074 = vmatpush2.msra.mxu0 0.0
    %9075 = vmatprep.subr.mxu0 0.0
    %9076 = vmatpush2.msra.mxu0 0.0
    %9077 = vmatprep.subr.mxu0 0.0
    %9078 = vmatpush2.msra.mxu0 0.0
    %9079 = vmatprep.subr.mxu0 0.0
    %9080 = vmatpush2.msra.mxu0 0.0
    %9081 = vmatprep.subr.mxu0 0.0
    %9082 = vmatpush2.msra.mxu0 0.0
    %9083 = vmatprep.subr.mxu0 0.0
    %9084 = vmatpush2.msra.mxu0 0.0
    %9085 = vmatprep.subr.mxu0 0.0
    %9086 = vmatpush2.msra.mxu0 0.0
    %9087 = vmatprep.subr.mxu0 0.0
    %9088 = vmatpush2.msra.mxu0 0.0
    %9089 = vmatprep.subr.mxu0 0.0
    %9090 = vmatpush2.msra.mxu0 0.0
    %9091 = vmatprep.subr.mxu0 0.0
    %9092 = vmatpush2.msra.mxu0 0.0
    %9093 = vmatprep.subr.mxu0 0.0
    %9094 = vmatpush2.msra.mxu0 0.0
    %9095 = vmatprep.subr.mxu0 0.0
    %9096 = vmatpush2.msra.mxu0 0.0
    %9097 = vmatprep.subr.mxu0 0.0
    %9098 = vmatpush2.msra.mxu0 0.0
    %9099 = vmatprep.mubr.f32.mxu0 0.0
    %9100 = vmatmul.mubr.f32.gmra.mxu0 %v9033
    %v9101 = vpop.f32.mrf.mxu0
    %v9102 = vadd.f32 %v9030, %v9101
    %v9103 = vpop.f32.mrf.mxu0
    %9104 = vdwg.mxu0
    %v9105 = vmul.f32 %v9102, 10.0
    %vm9106 = vcmask 1024
    %9107 = vst.msk [vmem:[%s14] sm:$0x3] %vm9106, %v9105
    // Predicated region
    $region78: #{gcn_caps_forward.1} parent=1 // pred_check
      _
    $region79: #{gcn_caps_forward.1} parent=1 // pred_check_branch
      %9109 = sbr.rel (0) target = $region81
    $region80: #{gcn_caps_forward.1} parent=1 // pred_region
      _
    $region81: #{gcn_caps_forward.1} parent=1 // pred_fallthru
      _
    // Predicated region
    $region82: #{gcn_caps_forward.1} parent=1 // pred_check
      _
    $region83: #{gcn_caps_forward.1} parent=1 // pred_check_branch
      %9111 = sbr.rel (0) target = $region85
    $region84: #{gcn_caps_forward.1} parent=1 // pred_region
      _
    $region85: #{gcn_caps_forward.1} parent=1 // pred_fallthru
      _
    %9112 = vsyncpa [#allocation4], 1
    %9113 = vsyncpa [#allocation6], 1
    %9114 = vsyncpa [#allocation9], 1

</llo_original>
